<compile_context>
chip_gen: v6e
topology: v6e:2x2x1
jax: 0.10.0
libtpu: 0.0.40
codegen_flags: <defaults>
</compile_context>

<pallas_src>
import functools
import math

import jax
import jax.numpy as jnp
import numpy as np
from jax.experimental import pallas as pl
from jax.experimental.pallas import tpu as pltpu


# ----------------------------- in-kernel helpers ---------------------------- #

def _layer_norm(x, g, b, eps=1e-5):
    m = jnp.mean(x, axis=-1, keepdims=True)
    var = jnp.mean(jnp.square(x - m), axis=-1, keepdims=True)
    return (x - m) * jax.lax.rsqrt(var + eps) * g + b


def _mha(q, k, v, o_w, o_b, nheads, mask):
    """Multi-head attention + output projection on VMEM-resident values.

    The 1/sqrt(dh) scale is already folded into the Q projection weights on the
    host.  `mask` is an additive (Lq, Lk) mask keeping the folded batch elements
    from attending across each other.  Per-head rows of the output projection
    are accumulated, so no lane-dim concat of head outputs is needed.
    """
    lq, d = q.shape
    dh = d // nheads
    out = jnp.zeros((lq, o_w.shape[1]), jnp.float32)
    for hh in range(nheads):
        sl = slice(hh * dh, (hh + 1) * dh)
        s = jax.lax.dot_general(q[:, sl], k[:, sl], (((1,), (1,)), ((), ())),
                                preferred_element_type=jnp.float32)
        s = s + mask
        m = jnp.max(s, axis=-1, keepdims=True)
        p = jnp.exp(s - m)
        p = p * pl.reciprocal(jnp.sum(p, axis=-1, keepdims=True), approx=False)
        o_h = jnp.dot(p, v[:, sl], preferred_element_type=jnp.float32)
        out = out + jnp.dot(o_h, o_w[sl, :], preferred_element_type=jnp.float32)
    return out + o_b


# ------------------------------- fused kernel ------------------------------- #

def fused_actor_kernel(src_ref, pos_ref, prop_ref, act_ref, qpos_ref, *rest,
                       layout, nheads, batch, seq, nq, enc_layers, dec_layers):
    out_ref = rest[-1]
    stacks = rest[:-1]

    def P(name):                      # static lookup into the packed weight slabs
        slab, idx = layout[name]
        return stacks[slab][idx]

    f32 = jnp.float32
    B, S, NQ = batch, seq, nq
    src = src_ref[...].astype(f32)    # (B*S, h)       image tokens, batch-major
    pos = pos_ref[...].astype(f32)    # (B*(S+1), h)   matching positional embeds
    prop = prop_ref[...].astype(f32)  # (B, h)         zero-padded proprio
    acts = act_ref[...].astype(f32)   # (B*NQ, h)      zero-padded gt actions
    qpos = qpos_ref[...].astype(f32)  # (B*NQ, h)      query pos embeds (tiled)

    h = src.shape[1]
    Lm = B * (S + 1)
    Lt = B * NQ

    # ---- additive block-diagonal masks so the folded batch never mixes ----
    NEG = jnp.float32(-1e30)

    def mem_bid(idx):
        bid = jnp.zeros_like(idx)
        for bb in range(B):
            bid = jnp.where((idx >= bb * S) & (idx < (bb + 1) * S), bb, bid)
            bid = jnp.where(idx == B * S + bb, bb, bid)
        return bid

    def tgt_bid(idx):
        bid = jnp.zeros_like(idx)
        for bb in range(B):
            bid = jnp.where((idx >= bb * NQ) & (idx < (bb + 1) * NQ), bb, bid)
        return bid

    def make_mask(nrow, ncol, row_fn, col_fn):
        ri = jax.lax.broadcasted_iota(jnp.int32, (nrow, ncol), 0)
        ci = jax.lax.broadcasted_iota(jnp.int32, (nrow, ncol), 1)
        return jnp.where(row_fn(ri) == col_fn(ci), 0.0, NEG).astype(f32)

    mask_mm = make_mask(Lm, Lm, mem_bid, mem_bid)   # encoder self-attention
    mask_tt = make_mask(Lt, Lt, tgt_bid, tgt_bid)   # decoder self-attention
    mask_tm = make_mask(Lt, Lm, tgt_bid, mem_bid)   # decoder cross-attention

    # ---- shared action2embed linear (also produces x_gt) ----
    a2e_w, a2e_b = P("a2e_w"), P("a2e_b")
    prop_embed = jnp.dot(prop, a2e_w, preferred_element_type=f32) + a2e_b    # (B, h)
    act_embed = jnp.dot(acts, a2e_w, preferred_element_type=f32) + a2e_b     # (B*NQ, h)

    # memory tokens: [src_b0 .. src_b{B-1}, prop_b0 .. prop_b{B-1}]
    x = jnp.concatenate([src, prop_embed], axis=0)                           # (Lm, h)

    # ------------------------------ encoder (pre-norm) ------------------------------
    for i in range(enc_layers):
        x2 = _layer_norm(x, P(f"enc_ln1_g_{i}"), P(f"enc_ln1_b_{i}"))
        qk = jnp.dot(x2 + pos, P(f"enc_qk_w_{i}"),
                     preferred_element_type=f32) + P(f"enc_qk_b_{i}")
        v = jnp.dot(x2, P(f"enc_v_w_{i}"),
                    preferred_element_type=f32) + P(f"enc_v_b_{i}")
        x = x + _mha(qk[:, :h], qk[:, h:], v,
                     P(f"enc_o_w_{i}"), P(f"enc_o_b_{i}"), nheads, mask_mm)
        x2 = _layer_norm(x, P(f"enc_ln2_g_{i}"), P(f"enc_ln2_b_{i}"))
        hdn = jnp.maximum(jnp.dot(x2, P(f"enc_ff1_w_{i}"),
                                  preferred_element_type=f32)
                          + P(f"enc_ff1_b_{i}"), 0.0)
        x = x + jnp.dot(hdn, P(f"enc_ff2_w_{i}"),
                        preferred_element_type=f32) + P(f"enc_ff2_b_{i}")
    memory = _layer_norm(x, P("enc_norm_g"), P("enc_norm_b"))
    mem_pos = memory + pos

    # loop-invariant decoder cross-attention K/V for ALL layers in one wide matmul
    k_all = jnp.dot(mem_pos, P("dec_ca_k_w_cat"),
                    preferred_element_type=f32) + P("dec_ca_k_b_cat")        # (Lm, D*h)
    v_all = jnp.dot(memory, P("dec_ca_v_w_cat"),
                    preferred_element_type=f32) + P("dec_ca_v_b_cat")        # (Lm, D*h)

    # ------------------------------ decoder (pre-norm) ------------------------------
    tgt = act_embed
    for i in range(dec_layers):
        # self-attention
        t2 = _layer_norm(tgt, P(f"dec_ln1_g_{i}"), P(f"dec_ln1_b_{i}"))
        qk = jnp.dot(t2 + qpos, P(f"dec_sa_qk_w_{i}"),
                     preferred_element_type=f32) + P(f"dec_sa_qk_b_{i}")
        v = jnp.dot(t2, P(f"dec_sa_v_w_{i}"),
                    preferred_element_type=f32) + P(f"dec_sa_v_b_{i}")
        tgt = tgt + _mha(qk[:, :h], qk[:, h:], v,
                         P(f"dec_sa_o_w_{i}"), P(f"dec_sa_o_b_{i}"), nheads, mask_tt)

        # cross-attention (K/V hoisted above)
        t2 = _layer_norm(tgt, P(f"dec_ln2_g_{i}"), P(f"dec_ln2_b_{i}"))
        q = jnp.dot(t2 + qpos, P(f"dec_ca_q_w_{i}"),
                    preferred_element_type=f32) + P(f"dec_ca_q_b_{i}")
        tgt = tgt + _mha(q, k_all[:, i * h:(i + 1) * h], v_all[:, i * h:(i + 1) * h],
                         P(f"dec_ca_o_w_{i}"), P(f"dec_ca_o_b_{i}"), nheads, mask_tm)

        # feed-forward
        t2 = _layer_norm(tgt, P(f"dec_ln3_g_{i}"), P(f"dec_ln3_b_{i}"))
        hdn = jnp.maximum(jnp.dot(t2, P(f"dec_ff1_w_{i}"),
                                  preferred_element_type=f32)
                          + P(f"dec_ff1_b_{i}"), 0.0)
        tgt = tgt + jnp.dot(hdn, P(f"dec_ff2_w_{i}"),
                            preferred_element_type=f32) + P(f"dec_ff2_b_{i}")

    hs = _layer_norm(tgt, P("dec_norm_g"), P("dec_norm_b"))                  # (Lt, h)
    a_hat = jnp.dot(hs, P("e2a_w"),
                    preferred_element_type=f32) + P("e2a_b")                 # (Lt, h); cols [:action_dim] valid

    # single merged output block (one write-back DMA): [a_hat | x_hat | x_gt]
    out_ref[0] = a_hat.astype(out_ref.dtype)
    out_ref[1] = hs.astype(out_ref.dtype)
    out_ref[2] = act_embed.astype(out_ref.dtype)


# ------------------------------- host wrappers ------------------------------- #

def build_sinusoidal_pos_embed(num_pos, hidden_dim):
    position = np.arange(num_pos)[:, None].astype(np.float32)
    div_term = np.exp(np.arange(0, hidden_dim, 2).astype(np.float32)
                      * -(np.log(10000.0) / hidden_dim))
    pe = np.zeros((num_pos, hidden_dim), dtype=np.float32)
    pe[:, 0::2] = np.sin(position * div_term)
    pe[:, 1::2] = np.cos(position * div_term)
    return jnp.asarray(pe)                      # (num_queries, hidden)


def init_params(key, *, hidden, ffn_dim, enc_layers, dec_layers, action_dim):
    keys = iter(jax.random.split(key, 256))

    def rnd(shape):
        return 0.02 * jax.random.normal(next(keys), shape, jnp.float32)

    def zeros(shape):
        return jnp.zeros(shape, jnp.float32)

    def ones(shape):
        return jnp.ones(shape, jnp.float32)

    E, D, h, f = enc_layers, dec_layers, hidden, ffn_dim
    return {
        "mem_pos_embed": jax.random.normal(next(keys), (1, 1, h), jnp.float32),
        "a2e_w": rnd((action_dim, h)), "a2e_b": zeros((1, h)),
        "e2a_w": rnd((h, action_dim)), "e2a_b": zeros((1, action_dim)),
        # encoder stacks (leading axis = layer)
        "enc_qkv_w": rnd((E, h, 3 * h)), "enc_qkv_b": zeros((E, 1, 3 * h)),
        "enc_o_w": rnd((E, h, h)), "enc_o_b": zeros((E, 1, h)),
        "enc_ln1_g": ones((E, 1, h)), "enc_ln1_b": zeros((E, 1, h)),
        "enc_ln2_g": ones((E, 1, h)), "enc_ln2_b": zeros((E, 1, h)),
        "enc_ff1_w": rnd((E, h, f)), "enc_ff1_b": zeros((E, 1, f)),
        "enc_ff2_w": rnd((E, f, h)), "enc_ff2_b": zeros((E, 1, h)),
        "enc_norm_g": ones((1, h)), "enc_norm_b": zeros((1, h)),
        # decoder stacks
        "dec_sa_qkv_w": rnd((D, h, 3 * h)), "dec_sa_qkv_b": zeros((D, 1, 3 * h)),
        "dec_sa_o_w": rnd((D, h, h)), "dec_sa_o_b": zeros((D, 1, h)),
        "dec_ca_q_w": rnd((D, h, h)), "dec_ca_q_b": zeros((D, 1, h)),
        "dec_ca_k_w": rnd((D, h, h)), "dec_ca_k_b": zeros((D, 1, h)),
        "dec_ca_v_w": rnd((D, h, h)), "dec_ca_v_b": zeros((D, 1, h)),
        "dec_ca_o_w": rnd((D, h, h)), "dec_ca_o_b": zeros((D, 1, h)),
        "dec_ln1_g": ones((D, 1, h)), "dec_ln1_b": zeros((D, 1, h)),
        "dec_ln2_g": ones((D, 1, h)), "dec_ln2_b": zeros((D, 1, h)),
        "dec_ln3_g": ones((D, 1, h)), "dec_ln3_b": zeros((D, 1, h)),
        "dec_ff1_w": rnd((D, h, f)), "dec_ff1_b": zeros((D, 1, f)),
        "dec_ff2_w": rnd((D, f, h)), "dec_ff2_b": zeros((D, 1, h)),
        "dec_norm_g": ones((1, h)), "dec_norm_b": zeros((1, h)),
    }


def pack_params(params, *, hidden, nheads, action_dim):
    """Host-side packing: split fused QKV, fold the softmax scale into Q, concat
    the decoder cross-attention K/V weights across layers, zero-pad the action
    linears to (hidden, hidden), and group everything by shape into a handful of
    stacked slabs (a few DMAs instead of ~42 tiny inputs)."""
    h = hidden
    scale = 1.0 / math.sqrt(h // nheads)
    E = params["enc_qkv_w"].shape[0]
    D = params["dec_sa_qkv_w"].shape[0]

    entries = []

    def add(name, arr):
        entries.append((name, jnp.asarray(arr, jnp.float32)))

    # action2embed / embed2action, zero-padded so they join the (h, h) slab.
    a2e_w = jnp.zeros((h, h), jnp.float32).at[:action_dim, :].set(params["a2e_w"])
    e2a_w = jnp.zeros((h, h), jnp.float32).at[:, :action_dim].set(params["e2a_w"])
    e2a_b = jnp.zeros((1, h), jnp.float32).at[:, :action_dim].set(params["e2a_b"])
    add("a2e_w", a2e_w); add("a2e_b", params["a2e_b"])
    add("e2a_w", e2a_w); add("e2a_b", e2a_b)

    def split_qkv(w, bias):   # (h,3h)/(1,3h) -> Wqk (scale folded into Q part), Wv
        wqk = jnp.concatenate([w[:, :h] * scale, w[:, h:2 * h]], axis=1)
        bqk = jnp.concatenate([bias[:, :h] * scale, bias[:, h:2 * h]], axis=1)
        return wqk, bqk, w[:, 2 * h:], bias[:, 2 * h:]

    for i in range(E):
        wqk, bqk, wv, bv = split_qkv(params["enc_qkv_w"][i], params["enc_qkv_b"][i])
        add(f"enc_qk_w_{i}", wqk); add(f"enc_qk_b_{i}", bqk)
        add(f"enc_v_w_{i}", wv); add(f"enc_v_b_{i}", bv)
        add(f"enc_o_w_{i}", params["enc_o_w"][i]); add(f"enc_o_b_{i}", params["enc_o_b"][i])
        add(f"enc_ln1_g_{i}", params["enc_ln1_g"][i]); add(f"enc_ln1_b_{i}", params["enc_ln1_b"][i])
        add(f"enc_ln2_g_{i}", params["enc_ln2_g"][i]); add(f"enc_ln2_b_{i}", params["enc_ln2_b"][i])
        add(f"enc_ff1_w_{i}", params["enc_ff1_w"][i]); add(f"enc_ff1_b_{i}", params["enc_ff1_b"][i])
        add(f"enc_ff2_w_{i}", params["enc_ff2_w"][i]); add(f"enc_ff2_b_{i}", params["enc_ff2_b"][i])
    add("enc_norm_g", params["enc_norm_g"]); add("enc_norm_b", params["enc_norm_b"])

    for i in range(D):
        wqk, bqk, wv, bv = split_qkv(params["dec_sa_qkv_w"][i], params["dec_sa_qkv_b"][i])
        add(f"dec_sa_qk_w_{i}", wqk); add(f"dec_sa_qk_b_{i}", bqk)
        add(f"dec_sa_v_w_{i}", wv); add(f"dec_sa_v_b_{i}", bv)
        add(f"dec_sa_o_w_{i}", params["dec_sa_o_w"][i]); add(f"dec_sa_o_b_{i}", params["dec_sa_o_b"][i])
        add(f"dec_ca_q_w_{i}", params["dec_ca_q_w"][i] * scale)
        add(f"dec_ca_q_b_{i}", params["dec_ca_q_b"][i] * scale)
        add(f"dec_ca_o_w_{i}", params["dec_ca_o_w"][i]); add(f"dec_ca_o_b_{i}", params["dec_ca_o_b"][i])
        add(f"dec_ln1_g_{i}", params["dec_ln1_g"][i]); add(f"dec_ln1_b_{i}", params["dec_ln1_b"][i])
        add(f"dec_ln2_g_{i}", params["dec_ln2_g"][i]); add(f"dec_ln2_b_{i}", params["dec_ln2_b"][i])
        add(f"dec_ln3_g_{i}", params["dec_ln3_g"][i]); add(f"dec_ln3_b_{i}", params["dec_ln3_b"][i])
        add(f"dec_ff1_w_{i}", params["dec_ff1_w"][i]); add(f"dec_ff1_b_{i}", params["dec_ff1_b"][i])
        add(f"dec_ff2_w_{i}", params["dec_ff2_w"][i]); add(f"dec_ff2_b_{i}", params["dec_ff2_b"][i])
    # loop-invariant cross-attention K/V projections, concatenated across layers
    add("dec_ca_k_w_cat", jnp.concatenate([params["dec_ca_k_w"][i] for i in range(D)], axis=1))
    add("dec_ca_k_b_cat", jnp.concatenate([params["dec_ca_k_b"][i] for i in range(D)], axis=1))
    add("dec_ca_v_w_cat", jnp.concatenate([params["dec_ca_v_w"][i] for i in range(D)], axis=1))
    add("dec_ca_v_b_cat", jnp.concatenate([params["dec_ca_v_b"][i] for i in range(D)], axis=1))
    add("dec_norm_g", params["dec_norm_g"]); add("dec_norm_b", params["dec_norm_b"])

    shapes, groups, layout = [], {}, {}
    for name, arr in entries:
        shp = tuple(arr.shape)
        if shp not in groups:
            groups[shp] = []
            shapes.append(shp)
        layout[name] = (shapes.index(shp), len(groups[shp]))
        groups[shp].append(arr)
    stacks = tuple(jnp.stack(groups[s], axis=0) for s in shapes)
    return stacks, layout, E, D


def actor_forward(params, img_feat, img_pos_embed, proprio, actions, *,
                  hidden, nheads, num_queries, action_dim):
    """Mirrors ActorModel.forward (training branch): returns (a_hat, x_hat, x_gt)."""
    b, c, v, l = img_feat.shape
    s = v * l

    # Fold batch along sublanes (batch-major rows): single kernel invocation.
    src2d = img_feat.reshape(b, c, s).transpose(0, 2, 1).reshape(b * s, c)
    img_pos2d = img_pos_embed.reshape(b, c, s).transpose(0, 2, 1).reshape(b * s, c)
    mem_pos = jnp.broadcast_to(params["mem_pos_embed"].reshape(1, c), (b, c))
    pos2d = jnp.concatenate([img_pos2d, mem_pos], axis=0)            # (b*(s+1), h)

    qpos = build_sinusoidal_pos_embed(num_queries, hidden)           # (nq, h)
    qpos2d = jnp.tile(qpos, (b, 1))                                  # (b*nq, h)

    prop2d = proprio.reshape(b, -1).astype(jnp.float32)
    prop_pad = jnp.pad(prop2d, ((0, 0), (0, hidden - prop2d.shape[1])))
    act2d = actions.reshape(b * num_queries, -1).astype(jnp.float32)
    act_pad = jnp.pad(act2d, ((0, 0), (0, hidden - act2d.shape[1])))

    stacks, layout, enc_layers, dec_layers = pack_params(
        params, hidden=hidden, nheads=nheads, action_dim=action_dim)

    kern = functools.partial(
        fused_actor_kernel, layout=layout, nheads=nheads, batch=b, seq=s,
        nq=num_queries, enc_layers=enc_layers, dec_layers=dec_layers)

    out = pl.pallas_call(
        kern,
        out_shape=jax.ShapeDtypeStruct((3, b * num_queries, hidden), jnp.float32),
        compiler_params=pltpu.CompilerParams(vmem_limit_bytes=32 * 1024 * 1024),
    )(src2d, pos2d, prop_pad, act_pad, qpos2d, *stacks)

    a_hat = out[0, :, :action_dim].reshape(b, num_queries, action_dim)
    x_hat = out[1].reshape(b, num_queries, hidden)
    x_gt = out[2].reshape(b, num_queries, hidden)
    return a_hat, x_hat, x_gt


# ----------------------------------- main ----------------------------------- #

if __name__ == "__main__":
    HIDDEN = 32
    NHEADS = 4
    FFN = 64
    ENC_LAYERS = 2
    DEC_LAYERS = 2
    STATE_DIM = 8
    ACTION_DIM = 8
    NUM_QUERIES = 8
    B, V, L = 2, 2, 4          # image-feature grid: (b, hidden, v, l), seq = v*l = 8

    key = jax.random.PRNGKey(0)
    k_par, k_img, k_pos, k_prop, k_act = jax.random.split(key, 5)

    params = init_params(k_par, hidden=HIDDEN, ffn_dim=FFN, enc_layers=ENC_LAYERS,
                         dec_layers=DEC_LAYERS, action_dim=ACTION_DIM)

    img_feat = jax.random.normal(k_img, (B, HIDDEN, V, L), jnp.float32)
    img_pos_embed = jax.random.normal(k_pos, (B, HIDDEN, V, L), jnp.float32)
    proprio = jax.random.normal(k_prop, (B, 1, STATE_DIM), jnp.float32)
    actions = jax.random.normal(k_act, (B, NUM_QUERIES, ACTION_DIM), jnp.float32)

    fwd = jax.jit(functools.partial(
        actor_forward,
        hidden=HIDDEN, nheads=NHEADS, num_queries=NUM_QUERIES, action_dim=ACTION_DIM))

    a_hat, x_hat, x_gt = fwd(params, img_feat, img_pos_embed, proprio, actions)
    jax.block_until_ready((a_hat, x_hat, x_gt))

    assert a_hat.shape == (B, NUM_QUERIES, ACTION_DIM)
    assert x_hat.shape == (B, NUM_QUERIES, HIDDEN)
    assert x_gt.shape == (B, NUM_QUERIES, HIDDEN)
    assert bool(jnp.all(jnp.isfinite(a_hat)))
    assert bool(jnp.all(jnp.isfinite(x_hat)))
    assert bool(jnp.all(jnp.isfinite(x_gt)))
    print("KERNEL_OK")
</pallas_src>

<mosaic_0001>
module attributes {stable_mosaic.version = 11 : i64} {
  func.func @fused_actor_kernel(%arg0: memref<16x32xf32, #tpu.memory_space<vmem>>, %arg1: memref<18x32xf32, #tpu.memory_space<vmem>>, %arg2: memref<2x32xf32, #tpu.memory_space<vmem>>, %arg3: memref<16x32xf32, #tpu.memory_space<vmem>>, %arg4: memref<16x32xf32, #tpu.memory_space<vmem>>, %arg5: memref<14x32x32xf32, #tpu.memory_space<vmem>>, %arg6: memref<42x1x32xf32, #tpu.memory_space<vmem>>, %arg7: memref<10x32x64xf32, #tpu.memory_space<vmem>>, %arg8: memref<10x1x64xf32, #tpu.memory_space<vmem>>, %arg9: memref<4x64x32xf32, #tpu.memory_space<vmem>>, %arg10: memref<3x16x32xf32, #tpu.memory_space<vmem>>) attributes {dimension_semantics = [], scalar_prefetch = 0 : i64, scratch_operands = 0 : i64, tpu.core_type = #tpu.core_type<tc>} {
    %c0 = arith.constant 0 : index
    %c0_0 = arith.constant 0 : index
    %0 = vector.load %arg0[%c0, %c0_0] : memref<16x32xf32, #tpu.memory_space<vmem>>, vector<16x32xf32>
    %c0_1 = arith.constant 0 : index
    %c0_2 = arith.constant 0 : index
    %1 = vector.load %arg1[%c0_1, %c0_2] : memref<18x32xf32, #tpu.memory_space<vmem>>, vector<18x32xf32>
    %c0_3 = arith.constant 0 : index
    %c0_4 = arith.constant 0 : index
    %2 = vector.load %arg2[%c0_3, %c0_4] : memref<2x32xf32, #tpu.memory_space<vmem>>, vector<2x32xf32>
    %c0_5 = arith.constant 0 : index
    %c0_6 = arith.constant 0 : index
    %3 = vector.load %arg3[%c0_5, %c0_6] : memref<16x32xf32, #tpu.memory_space<vmem>>, vector<16x32xf32>
    %c0_7 = arith.constant 0 : index
    %c0_8 = arith.constant 0 : index
    %4 = vector.load %arg4[%c0_7, %c0_8] : memref<16x32xf32, #tpu.memory_space<vmem>>, vector<16x32xf32>
    %5 = tpu.iota {dimensions = array<i32: 0>} : vector<18x18xi32>
    %6 = tpu.iota {dimensions = array<i32: 1>} : vector<18x18xi32>
    %c0_i32 = arith.constant 0 : i32
    %7 = vector.broadcast %c0_i32 : i32 to vector<18x18xi32>
    %c0_i32_9 = arith.constant 0 : i32
    %8 = vector.broadcast %c0_i32_9 : i32 to vector<18x18xi32>
    %9 = arith.cmpi sge, %5, %8 : vector<18x18xi32>
    %c8_i32 = arith.constant 8 : i32
    %10 = vector.broadcast %c8_i32 : i32 to vector<18x18xi32>
    %11 = arith.cmpi slt, %5, %10 : vector<18x18xi32>
    %12 = arith.andi %9, %11 : vector<18x18xi1>
    %c0_i32_10 = arith.constant 0 : i32
    %13 = vector.broadcast %c0_i32_10 : i32 to vector<18x18xi32>
    %14 = arith.select %12, %13, %7 : vector<18x18xi1>, vector<18x18xi32>
    %c16_i32 = arith.constant 16 : i32
    %15 = vector.broadcast %c16_i32 : i32 to vector<18x18xi32>
    %16 = arith.cmpi eq, %5, %15 : vector<18x18xi32>
    %c0_i32_11 = arith.constant 0 : i32
    %17 = vector.broadcast %c0_i32_11 : i32 to vector<18x18xi32>
    %18 = arith.select %16, %17, %14 : vector<18x18xi1>, vector<18x18xi32>
    %c8_i32_12 = arith.constant 8 : i32
    %19 = vector.broadcast %c8_i32_12 : i32 to vector<18x18xi32>
    %20 = arith.cmpi sge, %5, %19 : vector<18x18xi32>
    %c16_i32_13 = arith.constant 16 : i32
    %21 = vector.broadcast %c16_i32_13 : i32 to vector<18x18xi32>
    %22 = arith.cmpi slt, %5, %21 : vector<18x18xi32>
    %23 = arith.andi %20, %22 : vector<18x18xi1>
    %c1_i32 = arith.constant 1 : i32
    %24 = vector.broadcast %c1_i32 : i32 to vector<18x18xi32>
    %25 = arith.select %23, %24, %18 : vector<18x18xi1>, vector<18x18xi32>
    %c17_i32 = arith.constant 17 : i32
    %26 = vector.broadcast %c17_i32 : i32 to vector<18x18xi32>
    %27 = arith.cmpi eq, %5, %26 : vector<18x18xi32>
    %c1_i32_14 = arith.constant 1 : i32
    %28 = vector.broadcast %c1_i32_14 : i32 to vector<18x18xi32>
    %29 = arith.select %27, %28, %25 : vector<18x18xi1>, vector<18x18xi32>
    %c0_i32_15 = arith.constant 0 : i32
    %30 = vector.broadcast %c0_i32_15 : i32 to vector<18x18xi32>
    %c0_i32_16 = arith.constant 0 : i32
    %31 = vector.broadcast %c0_i32_16 : i32 to vector<18x18xi32>
    %32 = arith.cmpi sge, %6, %31 : vector<18x18xi32>
    %c8_i32_17 = arith.constant 8 : i32
    %33 = vector.broadcast %c8_i32_17 : i32 to vector<18x18xi32>
    %34 = arith.cmpi slt, %6, %33 : vector<18x18xi32>
    %35 = arith.andi %32, %34 : vector<18x18xi1>
    %c0_i32_18 = arith.constant 0 : i32
    %36 = vector.broadcast %c0_i32_18 : i32 to vector<18x18xi32>
    %37 = arith.select %35, %36, %30 : vector<18x18xi1>, vector<18x18xi32>
    %c16_i32_19 = arith.constant 16 : i32
    %38 = vector.broadcast %c16_i32_19 : i32 to vector<18x18xi32>
    %39 = arith.cmpi eq, %6, %38 : vector<18x18xi32>
    %c0_i32_20 = arith.constant 0 : i32
    %40 = vector.broadcast %c0_i32_20 : i32 to vector<18x18xi32>
    %41 = arith.select %39, %40, %37 : vector<18x18xi1>, vector<18x18xi32>
    %c8_i32_21 = arith.constant 8 : i32
    %42 = vector.broadcast %c8_i32_21 : i32 to vector<18x18xi32>
    %43 = arith.cmpi sge, %6, %42 : vector<18x18xi32>
    %c16_i32_22 = arith.constant 16 : i32
    %44 = vector.broadcast %c16_i32_22 : i32 to vector<18x18xi32>
    %45 = arith.cmpi slt, %6, %44 : vector<18x18xi32>
    %46 = arith.andi %43, %45 : vector<18x18xi1>
    %c1_i32_23 = arith.constant 1 : i32
    %47 = vector.broadcast %c1_i32_23 : i32 to vector<18x18xi32>
    %48 = arith.select %46, %47, %41 : vector<18x18xi1>, vector<18x18xi32>
    %c17_i32_24 = arith.constant 17 : i32
    %49 = vector.broadcast %c17_i32_24 : i32 to vector<18x18xi32>
    %50 = arith.cmpi eq, %6, %49 : vector<18x18xi32>
    %c1_i32_25 = arith.constant 1 : i32
    %51 = vector.broadcast %c1_i32_25 : i32 to vector<18x18xi32>
    %52 = arith.select %50, %51, %48 : vector<18x18xi1>, vector<18x18xi32>
    %53 = arith.cmpi eq, %29, %52 : vector<18x18xi32>
    %cst = arith.constant 0.000000e+00 : f32
    %cst_26 = arith.constant -1.000000e+30 : f32
    %54 = vector.broadcast %cst : f32 to vector<18x18xf32>
    %55 = vector.broadcast %cst_26 : f32 to vector<18x18xf32>
    %56 = arith.select %53, %54, %55 : vector<18x18xi1>, vector<18x18xf32>
    %57 = tpu.iota {dimensions = array<i32: 0>} : vector<16x16xi32>
    %58 = tpu.iota {dimensions = array<i32: 1>} : vector<16x16xi32>
    %c0_i32_27 = arith.constant 0 : i32
    %59 = vector.broadcast %c0_i32_27 : i32 to vector<16x16xi32>
    %c0_i32_28 = arith.constant 0 : i32
    %60 = vector.broadcast %c0_i32_28 : i32 to vector<16x16xi32>
    %61 = arith.cmpi sge, %57, %60 : vector<16x16xi32>
    %c8_i32_29 = arith.constant 8 : i32
    %62 = vector.broadcast %c8_i32_29 : i32 to vector<16x16xi32>
    %63 = arith.cmpi slt, %57, %62 : vector<16x16xi32>
    %64 = arith.andi %61, %63 : vector<16x16xi1>
    %c0_i32_30 = arith.constant 0 : i32
    %65 = vector.broadcast %c0_i32_30 : i32 to vector<16x16xi32>
    %66 = arith.select %64, %65, %59 : vector<16x16xi1>, vector<16x16xi32>
    %c8_i32_31 = arith.constant 8 : i32
    %67 = vector.broadcast %c8_i32_31 : i32 to vector<16x16xi32>
    %68 = arith.cmpi sge, %57, %67 : vector<16x16xi32>
    %c16_i32_32 = arith.constant 16 : i32
    %69 = vector.broadcast %c16_i32_32 : i32 to vector<16x16xi32>
    %70 = arith.cmpi slt, %57, %69 : vector<16x16xi32>
    %71 = arith.andi %68, %70 : vector<16x16xi1>
    %c1_i32_33 = arith.constant 1 : i32
    %72 = vector.broadcast %c1_i32_33 : i32 to vector<16x16xi32>
    %73 = arith.select %71, %72, %66 : vector<16x16xi1>, vector<16x16xi32>
    %c0_i32_34 = arith.constant 0 : i32
    %74 = vector.broadcast %c0_i32_34 : i32 to vector<16x16xi32>
    %c0_i32_35 = arith.constant 0 : i32
    %75 = vector.broadcast %c0_i32_35 : i32 to vector<16x16xi32>
    %76 = arith.cmpi sge, %58, %75 : vector<16x16xi32>
    %c8_i32_36 = arith.constant 8 : i32
    %77 = vector.broadcast %c8_i32_36 : i32 to vector<16x16xi32>
    %78 = arith.cmpi slt, %58, %77 : vector<16x16xi32>
    %79 = arith.andi %76, %78 : vector<16x16xi1>
    %c0_i32_37 = arith.constant 0 : i32
    %80 = vector.broadcast %c0_i32_37 : i32 to vector<16x16xi32>
    %81 = arith.select %79, %80, %74 : vector<16x16xi1>, vector<16x16xi32>
    %c8_i32_38 = arith.constant 8 : i32
    %82 = vector.broadcast %c8_i32_38 : i32 to vector<16x16xi32>
    %83 = arith.cmpi sge, %58, %82 : vector<16x16xi32>
    %c16_i32_39 = arith.constant 16 : i32
    %84 = vector.broadcast %c16_i32_39 : i32 to vector<16x16xi32>
    %85 = arith.cmpi slt, %58, %84 : vector<16x16xi32>
    %86 = arith.andi %83, %85 : vector<16x16xi1>
    %c1_i32_40 = arith.constant 1 : i32
    %87 = vector.broadcast %c1_i32_40 : i32 to vector<16x16xi32>
    %88 = arith.select %86, %87, %81 : vector<16x16xi1>, vector<16x16xi32>
    %89 = arith.cmpi eq, %73, %88 : vector<16x16xi32>
    %cst_41 = arith.constant 0.000000e+00 : f32
    %cst_42 = arith.constant -1.000000e+30 : f32
    %90 = vector.broadcast %cst_41 : f32 to vector<16x16xf32>
    %91 = vector.broadcast %cst_42 : f32 to vector<16x16xf32>
    %92 = arith.select %89, %90, %91 : vector<16x16xi1>, vector<16x16xf32>
    %93 = tpu.iota {dimensions = array<i32: 0>} : vector<16x18xi32>
    %94 = tpu.iota {dimensions = array<i32: 1>} : vector<16x18xi32>
    %c0_i32_43 = arith.constant 0 : i32
    %95 = vector.broadcast %c0_i32_43 : i32 to vector<16x18xi32>
    %c0_i32_44 = arith.constant 0 : i32
    %96 = vector.broadcast %c0_i32_44 : i32 to vector<16x18xi32>
    %97 = arith.cmpi sge, %93, %96 : vector<16x18xi32>
    %c8_i32_45 = arith.constant 8 : i32
    %98 = vector.broadcast %c8_i32_45 : i32 to vector<16x18xi32>
    %99 = arith.cmpi slt, %93, %98 : vector<16x18xi32>
    %100 = arith.andi %97, %99 : vector<16x18xi1>
    %c0_i32_46 = arith.constant 0 : i32
    %101 = vector.broadcast %c0_i32_46 : i32 to vector<16x18xi32>
    %102 = arith.select %100, %101, %95 : vector<16x18xi1>, vector<16x18xi32>
    %c8_i32_47 = arith.constant 8 : i32
    %103 = vector.broadcast %c8_i32_47 : i32 to vector<16x18xi32>
    %104 = arith.cmpi sge, %93, %103 : vector<16x18xi32>
    %c16_i32_48 = arith.constant 16 : i32
    %105 = vector.broadcast %c16_i32_48 : i32 to vector<16x18xi32>
    %106 = arith.cmpi slt, %93, %105 : vector<16x18xi32>
    %107 = arith.andi %104, %106 : vector<16x18xi1>
    %c1_i32_49 = arith.constant 1 : i32
    %108 = vector.broadcast %c1_i32_49 : i32 to vector<16x18xi32>
    %109 = arith.select %107, %108, %102 : vector<16x18xi1>, vector<16x18xi32>
    %c0_i32_50 = arith.constant 0 : i32
    %110 = vector.broadcast %c0_i32_50 : i32 to vector<16x18xi32>
    %c0_i32_51 = arith.constant 0 : i32
    %111 = vector.broadcast %c0_i32_51 : i32 to vector<16x18xi32>
    %112 = arith.cmpi sge, %94, %111 : vector<16x18xi32>
    %c8_i32_52 = arith.constant 8 : i32
    %113 = vector.broadcast %c8_i32_52 : i32 to vector<16x18xi32>
    %114 = arith.cmpi slt, %94, %113 : vector<16x18xi32>
    %115 = arith.andi %112, %114 : vector<16x18xi1>
    %c0_i32_53 = arith.constant 0 : i32
    %116 = vector.broadcast %c0_i32_53 : i32 to vector<16x18xi32>
    %117 = arith.select %115, %116, %110 : vector<16x18xi1>, vector<16x18xi32>
    %c16_i32_54 = arith.constant 16 : i32
    %118 = vector.broadcast %c16_i32_54 : i32 to vector<16x18xi32>
    %119 = arith.cmpi eq, %94, %118 : vector<16x18xi32>
    %c0_i32_55 = arith.constant 0 : i32
    %120 = vector.broadcast %c0_i32_55 : i32 to vector<16x18xi32>
    %121 = arith.select %119, %120, %117 : vector<16x18xi1>, vector<16x18xi32>
    %c8_i32_56 = arith.constant 8 : i32
    %122 = vector.broadcast %c8_i32_56 : i32 to vector<16x18xi32>
    %123 = arith.cmpi sge, %94, %122 : vector<16x18xi32>
    %c16_i32_57 = arith.constant 16 : i32
    %124 = vector.broadcast %c16_i32_57 : i32 to vector<16x18xi32>
    %125 = arith.cmpi slt, %94, %124 : vector<16x18xi32>
    %126 = arith.andi %123, %125 : vector<16x18xi1>
    %c1_i32_58 = arith.constant 1 : i32
    %127 = vector.broadcast %c1_i32_58 : i32 to vector<16x18xi32>
    %128 = arith.select %126, %127, %121 : vector<16x18xi1>, vector<16x18xi32>
    %c17_i32_59 = arith.constant 17 : i32
    %129 = vector.broadcast %c17_i32_59 : i32 to vector<16x18xi32>
    %130 = arith.cmpi eq, %94, %129 : vector<16x18xi32>
    %c1_i32_60 = arith.constant 1 : i32
    %131 = vector.broadcast %c1_i32_60 : i32 to vector<16x18xi32>
    %132 = arith.select %130, %131, %128 : vector<16x18xi1>, vector<16x18xi32>
    %133 = arith.cmpi eq, %109, %132 : vector<16x18xi32>
    %cst_61 = arith.constant 0.000000e+00 : f32
    %cst_62 = arith.constant -1.000000e+30 : f32
    %134 = vector.broadcast %cst_61 : f32 to vector<16x18xf32>
    %135 = vector.broadcast %cst_62 : f32 to vector<16x18xf32>
    %136 = arith.select %133, %134, %135 : vector<16x18xi1>, vector<16x18xf32>
    %c0_63 = arith.constant 0 : index
    %c0_64 = arith.constant 0 : index
    %c0_65 = arith.constant 0 : index
    %137 = vector.load %arg5[%c0_63, %c0_64, %c0_65] : memref<14x32x32xf32, #tpu.memory_space<vmem>>, vector<1x32x32xf32>
    %138 = vector.shape_cast %137 : vector<1x32x32xf32> to vector<32x32xf32>
    %c0_66 = arith.constant 0 : index
    %c0_67 = arith.constant 0 : index
    %c0_68 = arith.constant 0 : index
    %139 = vector.load %arg6[%c0_66, %c0_67, %c0_68] : memref<42x1x32xf32, #tpu.memory_space<vmem>>, vector<1x1x32xf32>
    %140 = vector.shape_cast %139 : vector<1x1x32xf32> to vector<1x32xf32>
    %cst_69 = arith.constant dense<0.000000e+00> : vector<2x32xf32>
    %141 = tpu.matmul %2, %138, %cst_69 {dimension_numbers = #tpu.dot_dimension_numbers<[1], [0], [0], [1], [0, 0, 1, 1], [], []>} : vector<2x32xf32>, vector<32x32xf32>, vector<2x32xf32> -> vector<2x32xf32>
    %142 = vector.broadcast %140 : vector<1x32xf32> to vector<2x32xf32>
    %143 = arith.addf %141, %142 : vector<2x32xf32>
    %cst_70 = arith.constant dense<0.000000e+00> : vector<16x32xf32>
    %144 = tpu.matmul %3, %138, %cst_70 {dimension_numbers = #tpu.dot_dimension_numbers<[1], [0], [0], [1], [0, 0, 1, 1], [], []>} : vector<16x32xf32>, vector<32x32xf32>, vector<16x32xf32> -> vector<16x32xf32>
    %145 = vector.broadcast %140 : vector<1x32xf32> to vector<16x32xf32>
    %146 = arith.addf %144, %145 : vector<16x32xf32>
    %147 = tpu.concatenate %0, %143 in 0 : vector<16x32xf32>, vector<2x32xf32> -> vector<18x32xf32>
    %c4 = arith.constant 4 : index
    %c0_71 = arith.constant 0 : index
    %c0_72 = arith.constant 0 : index
    %148 = vector.load %arg6[%c4, %c0_71, %c0_72] : memref<42x1x32xf32, #tpu.memory_space<vmem>>, vector<1x1x32xf32>
    %149 = vector.shape_cast %148 : vector<1x1x32xf32> to vector<1x32xf32>
    %c5 = arith.constant 5 : index
    %c0_73 = arith.constant 0 : index
    %c0_74 = arith.constant 0 : index
    %150 = vector.load %arg6[%c5, %c0_73, %c0_74] : memref<42x1x32xf32, #tpu.memory_space<vmem>>, vector<1x1x32xf32>
    %151 = vector.shape_cast %150 : vector<1x1x32xf32> to vector<1x32xf32>
    %cst_75 = arith.constant dense<0.000000e+00> : vector<18xf32>
    %152 = vector.multi_reduction <add>, %147, %cst_75 [1] : vector<18x32xf32> to vector<18xf32>
    %153 = vector.shape_cast %152 : vector<18xf32> to vector<18x1xf32>
    %cst_76 = arith.constant 3.200000e+01 : f32
    %154 = vector.broadcast %cst_76 : f32 to vector<18x1xf32>
    %155 = arith.divf %153, %154 : vector<18x1xf32>
    %156 = vector.broadcast %155 : vector<18x1xf32> to vector<18x32xf32>
    %157 = arith.subf %147, %156 : vector<18x32xf32>
    %158 = arith.mulf %157, %157 : vector<18x32xf32>
    %cst_77 = arith.constant dense<0.000000e+00> : vector<18xf32>
    %159 = vector.multi_reduction <add>, %158, %cst_77 [1] : vector<18x32xf32> to vector<18xf32>
    %160 = vector.shape_cast %159 : vector<18xf32> to vector<18x1xf32>
    %cst_78 = arith.constant 3.200000e+01 : f32
    %161 = vector.broadcast %cst_78 : f32 to vector<18x1xf32>
    %162 = arith.divf %160, %161 : vector<18x1xf32>
    %163 = vector.broadcast %155 : vector<18x1xf32> to vector<18x32xf32>
    %164 = arith.subf %147, %163 : vector<18x32xf32>
    %cst_79 = arith.constant 9.99999974E-6 : f32
    %165 = vector.broadcast %cst_79 : f32 to vector<18x1xf32>
    %166 = arith.addf %162, %165 : vector<18x1xf32>
    %167 = math.rsqrt %166 : vector<18x1xf32>
    %168 = vector.broadcast %167 : vector<18x1xf32> to vector<18x32xf32>
    %169 = arith.mulf %164, %168 : vector<18x32xf32>
    %170 = vector.broadcast %149 : vector<1x32xf32> to vector<18x32xf32>
    %171 = arith.mulf %169, %170 : vector<18x32xf32>
    %172 = vector.broadcast %151 : vector<1x32xf32> to vector<18x32xf32>
    %173 = arith.addf %171, %172 : vector<18x32xf32>
    %174 = arith.addf %173, %1 : vector<18x32xf32>
    %c0_80 = arith.constant 0 : index
    %c0_81 = arith.constant 0 : index
    %c0_82 = arith.constant 0 : index
    %175 = vector.load %arg7[%c0_80, %c0_81, %c0_82] : memref<10x32x64xf32, #tpu.memory_space<vmem>>, vector<1x32x64xf32>
    %176 = vector.shape_cast %175 : vector<1x32x64xf32> to vector<32x64xf32>
    %cst_83 = arith.constant dense<0.000000e+00> : vector<18x64xf32>
    %177 = tpu.matmul %174, %176, %cst_83 {dimension_numbers = #tpu.dot_dimension_numbers<[1], [0], [0], [1], [0, 0, 1, 1], [], []>} : vector<18x32xf32>, vector<32x64xf32>, vector<18x64xf32> -> vector<18x64xf32>
    %c0_84 = arith.constant 0 : index
    %c0_85 = arith.constant 0 : index
    %c0_86 = arith.constant 0 : index
    %178 = vector.load %arg8[%c0_84, %c0_85, %c0_86] : memref<10x1x64xf32, #tpu.memory_space<vmem>>, vector<1x1x64xf32>
    %179 = vector.shape_cast %178 : vector<1x1x64xf32> to vector<1x64xf32>
    %180 = vector.broadcast %179 : vector<1x64xf32> to vector<18x64xf32>
    %181 = arith.addf %177, %180 : vector<18x64xf32>
    %c2 = arith.constant 2 : index
    %c0_87 = arith.constant 0 : index
    %c0_88 = arith.constant 0 : index
    %182 = vector.load %arg5[%c2, %c0_87, %c0_88] : memref<14x32x32xf32, #tpu.memory_space<vmem>>, vector<1x32x32xf32>
    %183 = vector.shape_cast %182 : vector<1x32x32xf32> to vector<32x32xf32>
    %cst_89 = arith.constant dense<0.000000e+00> : vector<18x32xf32>
    %184 = tpu.matmul %173, %183, %cst_89 {dimension_numbers = #tpu.dot_dimension_numbers<[1], [0], [0], [1], [0, 0, 1, 1], [], []>} : vector<18x32xf32>, vector<32x32xf32>, vector<18x32xf32> -> vector<18x32xf32>
    %c2_90 = arith.constant 2 : index
    %c0_91 = arith.constant 0 : index
    %c0_92 = arith.constant 0 : index
    %185 = vector.load %arg6[%c2_90, %c0_91, %c0_92] : memref<42x1x32xf32, #tpu.memory_space<vmem>>, vector<1x1x32xf32>
    %186 = vector.shape_cast %185 : vector<1x1x32xf32> to vector<1x32xf32>
    %187 = vector.broadcast %186 : vector<1x32xf32> to vector<18x32xf32>
    %188 = arith.addf %184, %187 : vector<18x32xf32>
    %189 = vector.extract_strided_slice %181 {offsets = [0, 0], sizes = [18, 32], strides = [1, 1]} : vector<18x64xf32> to vector<18x32xf32>
    %190 = vector.extract_strided_slice %181 {offsets = [0, 32], sizes = [18, 32], strides = [1, 1]} : vector<18x64xf32> to vector<18x32xf32>
    %c3 = arith.constant 3 : index
    %c0_93 = arith.constant 0 : index
    %c0_94 = arith.constant 0 : index
    %191 = vector.load %arg5[%c3, %c0_93, %c0_94] : memref<14x32x32xf32, #tpu.memory_space<vmem>>, vector<1x32x32xf32>
    %192 = vector.shape_cast %191 : vector<1x32x32xf32> to vector<32x32xf32>
    %c3_95 = arith.constant 3 : index
    %c0_96 = arith.constant 0 : index
    %c0_97 = arith.constant 0 : index
    %193 = vector.load %arg6[%c3_95, %c0_96, %c0_97] : memref<42x1x32xf32, #tpu.memory_space<vmem>>, vector<1x1x32xf32>
    %194 = vector.shape_cast %193 : vector<1x1x32xf32> to vector<1x32xf32>
    %cst_98 = arith.constant 0.000000e+00 : f32
    %195 = vector.broadcast %cst_98 : f32 to vector<18x32xf32>
    %196 = vector.extract_strided_slice %189 {offsets = [0, 0], sizes = [18, 8], strides = [1, 1]} : vector<18x32xf32> to vector<18x8xf32>
    %197 = vector.extract_strided_slice %190 {offsets = [0, 0], sizes = [18, 8], strides = [1, 1]} : vector<18x32xf32> to vector<18x8xf32>
    %cst_99 = arith.constant dense<0.000000e+00> : vector<18x18xf32>
    %198 = tpu.matmul %196, %197, %cst_99 {dimension_numbers = #tpu.dot_dimension_numbers<[1], [1], [0], [0], [0, 0, 1, 0], [], []>} : vector<18x8xf32>, vector<18x8xf32>, vector<18x18xf32> -> vector<18x18xf32>
    %199 = arith.addf %198, %56 : vector<18x18xf32>
    %cst_100 = arith.constant dense<0xFF800000> : vector<18xf32>
    %200 = vector.multi_reduction <maximumf>, %199, %cst_100 [1] : vector<18x18xf32> to vector<18xf32>
    %201 = vector.shape_cast %200 : vector<18xf32> to vector<18x1xf32>
    %202 = vector.broadcast %201 : vector<18x1xf32> to vector<18x18xf32>
    %203 = arith.subf %199, %202 : vector<18x18xf32>
    %204 = math.exp %203 : vector<18x18xf32>
    %cst_101 = arith.constant dense<0.000000e+00> : vector<18xf32>
    %205 = vector.multi_reduction <add>, %204, %cst_101 [1] : vector<18x18xf32> to vector<18xf32>
    %206 = vector.shape_cast %205 : vector<18xf32> to vector<18x1xf32>
    %207 = tpu.reciprocal %206 : vector<18x1xf32> -> vector<18x1xf32>
    %208 = vector.broadcast %207 : vector<18x1xf32> to vector<18x18xf32>
    %209 = arith.mulf %204, %208 : vector<18x18xf32>
    %210 = vector.extract_strided_slice %188 {offsets = [0, 0], sizes = [18, 8], strides = [1, 1]} : vector<18x32xf32> to vector<18x8xf32>
    %cst_102 = arith.constant dense<0.000000e+00> : vector<18x8xf32>
    %211 = tpu.matmul %209, %210, %cst_102 {dimension_numbers = #tpu.dot_dimension_numbers<[1], [0], [0], [1], [0, 0, 1, 1], [], []>} : vector<18x18xf32>, vector<18x8xf32>, vector<18x8xf32> -> vector<18x8xf32>
    %212 = vector.extract_strided_slice %192 {offsets = [0, 0], sizes = [8, 32], strides = [1, 1]} : vector<32x32xf32> to vector<8x32xf32>
    %cst_103 = arith.constant dense<0.000000e+00> : vector<18x32xf32>
    %213 = tpu.matmul %211, %212, %cst_103 {dimension_numbers = #tpu.dot_dimension_numbers<[1], [0], [0], [1], [0, 0, 1, 1], [], []>} : vector<18x8xf32>, vector<8x32xf32>, vector<18x32xf32> -> vector<18x32xf32>
    %214 = arith.addf %195, %213 : vector<18x32xf32>
    %215 = vector.extract_strided_slice %189 {offsets = [0, 8], sizes = [18, 8], strides = [1, 1]} : vector<18x32xf32> to vector<18x8xf32>
    %216 = vector.extract_strided_slice %190 {offsets = [0, 8], sizes = [18, 8], strides = [1, 1]} : vector<18x32xf32> to vector<18x8xf32>
    %cst_104 = arith.constant dense<0.000000e+00> : vector<18x18xf32>
    %217 = tpu.matmul %215, %216, %cst_104 {dimension_numbers = #tpu.dot_dimension_numbers<[1], [1], [0], [0], [0, 0, 1, 0], [], []>} : vector<18x8xf32>, vector<18x8xf32>, vector<18x18xf32> -> vector<18x18xf32>
    %218 = arith.addf %217, %56 : vector<18x18xf32>
    %cst_105 = arith.constant dense<0xFF800000> : vector<18xf32>
    %219 = vector.multi_reduction <maximumf>, %218, %cst_105 [1] : vector<18x18xf32> to vector<18xf32>
    %220 = vector.shape_cast %219 : vector<18xf32> to vector<18x1xf32>
    %221 = vector.broadcast %220 : vector<18x1xf32> to vector<18x18xf32>
    %222 = arith.subf %218, %221 : vector<18x18xf32>
    %223 = math.exp %222 : vector<18x18xf32>
    %cst_106 = arith.constant dense<0.000000e+00> : vector<18xf32>
    %224 = vector.multi_reduction <add>, %223, %cst_106 [1] : vector<18x18xf32> to vector<18xf32>
    %225 = vector.shape_cast %224 : vector<18xf32> to vector<18x1xf32>
    %226 = tpu.reciprocal %225 : vector<18x1xf32> -> vector<18x1xf32>
    %227 = vector.broadcast %226 : vector<18x1xf32> to vector<18x18xf32>
    %228 = arith.mulf %223, %227 : vector<18x18xf32>
    %229 = vector.extract_strided_slice %188 {offsets = [0, 8], sizes = [18, 8], strides = [1, 1]} : vector<18x32xf32> to vector<18x8xf32>
    %cst_107 = arith.constant dense<0.000000e+00> : vector<18x8xf32>
    %230 = tpu.matmul %228, %229, %cst_107 {dimension_numbers = #tpu.dot_dimension_numbers<[1], [0], [0], [1], [0, 0, 1, 1], [], []>} : vector<18x18xf32>, vector<18x8xf32>, vector<18x8xf32> -> vector<18x8xf32>
    %231 = vector.extract_strided_slice %192 {offsets = [8, 0], sizes = [8, 32], strides = [1, 1]} : vector<32x32xf32> to vector<8x32xf32>
    %cst_108 = arith.constant dense<0.000000e+00> : vector<18x32xf32>
    %232 = tpu.matmul %230, %231, %cst_108 {dimension_numbers = #tpu.dot_dimension_numbers<[1], [0], [0], [1], [0, 0, 1, 1], [], []>} : vector<18x8xf32>, vector<8x32xf32>, vector<18x32xf32> -> vector<18x32xf32>
    %233 = arith.addf %214, %232 : vector<18x32xf32>
    %234 = vector.extract_strided_slice %189 {offsets = [0, 16], sizes = [18, 8], strides = [1, 1]} : vector<18x32xf32> to vector<18x8xf32>
    %235 = vector.extract_strided_slice %190 {offsets = [0, 16], sizes = [18, 8], strides = [1, 1]} : vector<18x32xf32> to vector<18x8xf32>
    %cst_109 = arith.constant dense<0.000000e+00> : vector<18x18xf32>
    %236 = tpu.matmul %234, %235, %cst_109 {dimension_numbers = #tpu.dot_dimension_numbers<[1], [1], [0], [0], [0, 0, 1, 0], [], []>} : vector<18x8xf32>, vector<18x8xf32>, vector<18x18xf32> -> vector<18x18xf32>
    %237 = arith.addf %236, %56 : vector<18x18xf32>
    %cst_110 = arith.constant dense<0xFF800000> : vector<18xf32>
    %238 = vector.multi_reduction <maximumf>, %237, %cst_110 [1] : vector<18x18xf32> to vector<18xf32>
    %239 = vector.shape_cast %238 : vector<18xf32> to vector<18x1xf32>
    %240 = vector.broadcast %239 : vector<18x1xf32> to vector<18x18xf32>
    %241 = arith.subf %237, %240 : vector<18x18xf32>
    %242 = math.exp %241 : vector<18x18xf32>
    %cst_111 = arith.constant dense<0.000000e+00> : vector<18xf32>
    %243 = vector.multi_reduction <add>, %242, %cst_111 [1] : vector<18x18xf32> to vector<18xf32>
    %244 = vector.shape_cast %243 : vector<18xf32> to vector<18x1xf32>
    %245 = tpu.reciprocal %244 : vector<18x1xf32> -> vector<18x1xf32>
    %246 = vector.broadcast %245 : vector<18x1xf32> to vector<18x18xf32>
    %247 = arith.mulf %242, %246 : vector<18x18xf32>
    %248 = vector.extract_strided_slice %188 {offsets = [0, 16], sizes = [18, 8], strides = [1, 1]} : vector<18x32xf32> to vector<18x8xf32>
    %cst_112 = arith.constant dense<0.000000e+00> : vector<18x8xf32>
    %249 = tpu.matmul %247, %248, %cst_112 {dimension_numbers = #tpu.dot_dimension_numbers<[1], [0], [0], [1], [0, 0, 1, 1], [], []>} : vector<18x18xf32>, vector<18x8xf32>, vector<18x8xf32> -> vector<18x8xf32>
    %250 = vector.extract_strided_slice %192 {offsets = [16, 0], sizes = [8, 32], strides = [1, 1]} : vector<32x32xf32> to vector<8x32xf32>
    %cst_113 = arith.constant dense<0.000000e+00> : vector<18x32xf32>
    %251 = tpu.matmul %249, %250, %cst_113 {dimension_numbers = #tpu.dot_dimension_numbers<[1], [0], [0], [1], [0, 0, 1, 1], [], []>} : vector<18x8xf32>, vector<8x32xf32>, vector<18x32xf32> -> vector<18x32xf32>
    %252 = arith.addf %233, %251 : vector<18x32xf32>
    %253 = vector.extract_strided_slice %189 {offsets = [0, 24], sizes = [18, 8], strides = [1, 1]} : vector<18x32xf32> to vector<18x8xf32>
    %254 = vector.extract_strided_slice %190 {offsets = [0, 24], sizes = [18, 8], strides = [1, 1]} : vector<18x32xf32> to vector<18x8xf32>
    %cst_114 = arith.constant dense<0.000000e+00> : vector<18x18xf32>
    %255 = tpu.matmul %253, %254, %cst_114 {dimension_numbers = #tpu.dot_dimension_numbers<[1], [1], [0], [0], [0, 0, 1, 0], [], []>} : vector<18x8xf32>, vector<18x8xf32>, vector<18x18xf32> -> vector<18x18xf32>
    %256 = arith.addf %255, %56 : vector<18x18xf32>
    %cst_115 = arith.constant dense<0xFF800000> : vector<18xf32>
    %257 = vector.multi_reduction <maximumf>, %256, %cst_115 [1] : vector<18x18xf32> to vector<18xf32>
    %258 = vector.shape_cast %257 : vector<18xf32> to vector<18x1xf32>
    %259 = vector.broadcast %258 : vector<18x1xf32> to vector<18x18xf32>
    %260 = arith.subf %256, %259 : vector<18x18xf32>
    %261 = math.exp %260 : vector<18x18xf32>
    %cst_116 = arith.constant dense<0.000000e+00> : vector<18xf32>
    %262 = vector.multi_reduction <add>, %261, %cst_116 [1] : vector<18x18xf32> to vector<18xf32>
    %263 = vector.shape_cast %262 : vector<18xf32> to vector<18x1xf32>
    %264 = tpu.reciprocal %263 : vector<18x1xf32> -> vector<18x1xf32>
    %265 = vector.broadcast %264 : vector<18x1xf32> to vector<18x18xf32>
    %266 = arith.mulf %261, %265 : vector<18x18xf32>
    %267 = vector.extract_strided_slice %188 {offsets = [0, 24], sizes = [18, 8], strides = [1, 1]} : vector<18x32xf32> to vector<18x8xf32>
    %cst_117 = arith.constant dense<0.000000e+00> : vector<18x8xf32>
    %268 = tpu.matmul %266, %267, %cst_117 {dimension_numbers = #tpu.dot_dimension_numbers<[1], [0], [0], [1], [0, 0, 1, 1], [], []>} : vector<18x18xf32>, vector<18x8xf32>, vector<18x8xf32> -> vector<18x8xf32>
    %269 = vector.extract_strided_slice %192 {offsets = [24, 0], sizes = [8, 32], strides = [1, 1]} : vector<32x32xf32> to vector<8x32xf32>
    %cst_118 = arith.constant dense<0.000000e+00> : vector<18x32xf32>
    %270 = tpu.matmul %268, %269, %cst_118 {dimension_numbers = #tpu.dot_dimension_numbers<[1], [0], [0], [1], [0, 0, 1, 1], [], []>} : vector<18x8xf32>, vector<8x32xf32>, vector<18x32xf32> -> vector<18x32xf32>
    %271 = arith.addf %252, %270 : vector<18x32xf32>
    %272 = vector.broadcast %194 : vector<1x32xf32> to vector<18x32xf32>
    %273 = arith.addf %271, %272 : vector<18x32xf32>
    %274 = arith.addf %147, %273 : vector<18x32xf32>
    %c6 = arith.constant 6 : index
    %c0_119 = arith.constant 0 : index
    %c0_120 = arith.constant 0 : index
    %275 = vector.load %arg6[%c6, %c0_119, %c0_120] : memref<42x1x32xf32, #tpu.memory_space<vmem>>, vector<1x1x32xf32>
    %276 = vector.shape_cast %275 : vector<1x1x32xf32> to vector<1x32xf32>
    %c7 = arith.constant 7 : index
    %c0_121 = arith.constant 0 : index
    %c0_122 = arith.constant 0 : index
    %277 = vector.load %arg6[%c7, %c0_121, %c0_122] : memref<42x1x32xf32, #tpu.memory_space<vmem>>, vector<1x1x32xf32>
    %278 = vector.shape_cast %277 : vector<1x1x32xf32> to vector<1x32xf32>
    %cst_123 = arith.constant dense<0.000000e+00> : vector<18xf32>
    %279 = vector.multi_reduction <add>, %274, %cst_123 [1] : vector<18x32xf32> to vector<18xf32>
    %280 = vector.shape_cast %279 : vector<18xf32> to vector<18x1xf32>
    %cst_124 = arith.constant 3.200000e+01 : f32
    %281 = vector.broadcast %cst_124 : f32 to vector<18x1xf32>
    %282 = arith.divf %280, %281 : vector<18x1xf32>
    %283 = vector.broadcast %282 : vector<18x1xf32> to vector<18x32xf32>
    %284 = arith.subf %274, %283 : vector<18x32xf32>
    %285 = arith.mulf %284, %284 : vector<18x32xf32>
    %cst_125 = arith.constant dense<0.000000e+00> : vector<18xf32>
    %286 = vector.multi_reduction <add>, %285, %cst_125 [1] : vector<18x32xf32> to vector<18xf32>
    %287 = vector.shape_cast %286 : vector<18xf32> to vector<18x1xf32>
    %cst_126 = arith.constant 3.200000e+01 : f32
    %288 = vector.broadcast %cst_126 : f32 to vector<18x1xf32>
    %289 = arith.divf %287, %288 : vector<18x1xf32>
    %290 = vector.broadcast %282 : vector<18x1xf32> to vector<18x32xf32>
    %291 = arith.subf %274, %290 : vector<18x32xf32>
    %cst_127 = arith.constant 9.99999974E-6 : f32
    %292 = vector.broadcast %cst_127 : f32 to vector<18x1xf32>
    %293 = arith.addf %289, %292 : vector<18x1xf32>
    %294 = math.rsqrt %293 : vector<18x1xf32>
    %295 = vector.broadcast %294 : vector<18x1xf32> to vector<18x32xf32>
    %296 = arith.mulf %291, %295 : vector<18x32xf32>
    %297 = vector.broadcast %276 : vector<1x32xf32> to vector<18x32xf32>
    %298 = arith.mulf %296, %297 : vector<18x32xf32>
    %299 = vector.broadcast %278 : vector<1x32xf32> to vector<18x32xf32>
    %300 = arith.addf %298, %299 : vector<18x32xf32>
    %c1 = arith.constant 1 : index
    %c0_128 = arith.constant 0 : index
    %c0_129 = arith.constant 0 : index
    %301 = vector.load %arg7[%c1, %c0_128, %c0_129] : memref<10x32x64xf32, #tpu.memory_space<vmem>>, vector<1x32x64xf32>
    %302 = vector.shape_cast %301 : vector<1x32x64xf32> to vector<32x64xf32>
    %cst_130 = arith.constant dense<0.000000e+00> : vector<18x64xf32>
    %303 = tpu.matmul %300, %302, %cst_130 {dimension_numbers = #tpu.dot_dimension_numbers<[1], [0], [0], [1], [0, 0, 1, 1], [], []>} : vector<18x32xf32>, vector<32x64xf32>, vector<18x64xf32> -> vector<18x64xf32>
    %c1_131 = arith.constant 1 : index
    %c0_132 = arith.constant 0 : index
    %c0_133 = arith.constant 0 : index
    %304 = vector.load %arg8[%c1_131, %c0_132, %c0_133] : memref<10x1x64xf32, #tpu.memory_space<vmem>>, vector<1x1x64xf32>
    %305 = vector.shape_cast %304 : vector<1x1x64xf32> to vector<1x64xf32>
    %306 = vector.broadcast %305 : vector<1x64xf32> to vector<18x64xf32>
    %307 = arith.addf %303, %306 : vector<18x64xf32>
    %cst_134 = arith.constant 0.000000e+00 : f32
    %308 = vector.broadcast %cst_134 : f32 to vector<18x64xf32>
    %309 = arith.maximumf %307, %308 : vector<18x64xf32>
    %c0_135 = arith.constant 0 : index
    %c0_136 = arith.constant 0 : index
    %c0_137 = arith.constant 0 : index
    %310 = vector.load %arg9[%c0_135, %c0_136, %c0_137] : memref<4x64x32xf32, #tpu.memory_space<vmem>>, vector<1x64x32xf32>
    %311 = vector.shape_cast %310 : vector<1x64x32xf32> to vector<64x32xf32>
    %cst_138 = arith.constant dense<0.000000e+00> : vector<18x32xf32>
    %312 = tpu.matmul %309, %311, %cst_138 {dimension_numbers = #tpu.dot_dimension_numbers<[1], [0], [0], [1], [0, 0, 1, 1], [], []>} : vector<18x64xf32>, vector<64x32xf32>, vector<18x32xf32> -> vector<18x32xf32>
    %313 = arith.addf %274, %312 : vector<18x32xf32>
    %c8 = arith.constant 8 : index
    %c0_139 = arith.constant 0 : index
    %c0_140 = arith.constant 0 : index
    %314 = vector.load %arg6[%c8, %c0_139, %c0_140] : memref<42x1x32xf32, #tpu.memory_space<vmem>>, vector<1x1x32xf32>
    %315 = vector.shape_cast %314 : vector<1x1x32xf32> to vector<1x32xf32>
    %316 = vector.broadcast %315 : vector<1x32xf32> to vector<18x32xf32>
    %317 = arith.addf %313, %316 : vector<18x32xf32>
    %c11 = arith.constant 11 : index
    %c0_141 = arith.constant 0 : index
    %c0_142 = arith.constant 0 : index
    %318 = vector.load %arg6[%c11, %c0_141, %c0_142] : memref<42x1x32xf32, #tpu.memory_space<vmem>>, vector<1x1x32xf32>
    %319 = vector.shape_cast %318 : vector<1x1x32xf32> to vector<1x32xf32>
    %c12 = arith.constant 12 : index
    %c0_143 = arith.constant 0 : index
    %c0_144 = arith.constant 0 : index
    %320 = vector.load %arg6[%c12, %c0_143, %c0_144] : memref<42x1x32xf32, #tpu.memory_space<vmem>>, vector<1x1x32xf32>
    %321 = vector.shape_cast %320 : vector<1x1x32xf32> to vector<1x32xf32>
    %cst_145 = arith.constant dense<0.000000e+00> : vector<18xf32>
    %322 = vector.multi_reduction <add>, %317, %cst_145 [1] : vector<18x32xf32> to vector<18xf32>
    %323 = vector.shape_cast %322 : vector<18xf32> to vector<18x1xf32>
    %cst_146 = arith.constant 3.200000e+01 : f32
    %324 = vector.broadcast %cst_146 : f32 to vector<18x1xf32>
    %325 = arith.divf %323, %324 : vector<18x1xf32>
    %326 = vector.broadcast %325 : vector<18x1xf32> to vector<18x32xf32>
    %327 = arith.subf %317, %326 : vector<18x32xf32>
    %328 = arith.mulf %327, %327 : vector<18x32xf32>
    %cst_147 = arith.constant dense<0.000000e+00> : vector<18xf32>
    %329 = vector.multi_reduction <add>, %328, %cst_147 [1] : vector<18x32xf32> to vector<18xf32>
    %330 = vector.shape_cast %329 : vector<18xf32> to vector<18x1xf32>
    %cst_148 = arith.constant 3.200000e+01 : f32
    %331 = vector.broadcast %cst_148 : f32 to vector<18x1xf32>
    %332 = arith.divf %330, %331 : vector<18x1xf32>
    %333 = vector.broadcast %325 : vector<18x1xf32> to vector<18x32xf32>
    %334 = arith.subf %317, %333 : vector<18x32xf32>
    %cst_149 = arith.constant 9.99999974E-6 : f32
    %335 = vector.broadcast %cst_149 : f32 to vector<18x1xf32>
    %336 = arith.addf %332, %335 : vector<18x1xf32>
    %337 = math.rsqrt %336 : vector<18x1xf32>
    %338 = vector.broadcast %337 : vector<18x1xf32> to vector<18x32xf32>
    %339 = arith.mulf %334, %338 : vector<18x32xf32>
    %340 = vector.broadcast %319 : vector<1x32xf32> to vector<18x32xf32>
    %341 = arith.mulf %339, %340 : vector<18x32xf32>
    %342 = vector.broadcast %321 : vector<1x32xf32> to vector<18x32xf32>
    %343 = arith.addf %341, %342 : vector<18x32xf32>
    %344 = arith.addf %343, %1 : vector<18x32xf32>
    %c2_150 = arith.constant 2 : index
    %c0_151 = arith.constant 0 : index
    %c0_152 = arith.constant 0 : index
    %345 = vector.load %arg7[%c2_150, %c0_151, %c0_152] : memref<10x32x64xf32, #tpu.memory_space<vmem>>, vector<1x32x64xf32>
    %346 = vector.shape_cast %345 : vector<1x32x64xf32> to vector<32x64xf32>
    %cst_153 = arith.constant dense<0.000000e+00> : vector<18x64xf32>
    %347 = tpu.matmul %344, %346, %cst_153 {dimension_numbers = #tpu.dot_dimension_numbers<[1], [0], [0], [1], [0, 0, 1, 1], [], []>} : vector<18x32xf32>, vector<32x64xf32>, vector<18x64xf32> -> vector<18x64xf32>
    %c2_154 = arith.constant 2 : index
    %c0_155 = arith.constant 0 : index
    %c0_156 = arith.constant 0 : index
    %348 = vector.load %arg8[%c2_154, %c0_155, %c0_156] : memref<10x1x64xf32, #tpu.memory_space<vmem>>, vector<1x1x64xf32>
    %349 = vector.shape_cast %348 : vector<1x1x64xf32> to vector<1x64xf32>
    %350 = vector.broadcast %349 : vector<1x64xf32> to vector<18x64xf32>
    %351 = arith.addf %347, %350 : vector<18x64xf32>
    %c4_157 = arith.constant 4 : index
    %c0_158 = arith.constant 0 : index
    %c0_159 = arith.constant 0 : index
    %352 = vector.load %arg5[%c4_157, %c0_158, %c0_159] : memref<14x32x32xf32, #tpu.memory_space<vmem>>, vector<1x32x32xf32>
    %353 = vector.shape_cast %352 : vector<1x32x32xf32> to vector<32x32xf32>
    %cst_160 = arith.constant dense<0.000000e+00> : vector<18x32xf32>
    %354 = tpu.matmul %343, %353, %cst_160 {dimension_numbers = #tpu.dot_dimension_numbers<[1], [0], [0], [1], [0, 0, 1, 1], [], []>} : vector<18x32xf32>, vector<32x32xf32>, vector<18x32xf32> -> vector<18x32xf32>
    %c9 = arith.constant 9 : index
    %c0_161 = arith.constant 0 : index
    %c0_162 = arith.constant 0 : index
    %355 = vector.load %arg6[%c9, %c0_161, %c0_162] : memref<42x1x32xf32, #tpu.memory_space<vmem>>, vector<1x1x32xf32>
    %356 = vector.shape_cast %355 : vector<1x1x32xf32> to vector<1x32xf32>
    %357 = vector.broadcast %356 : vector<1x32xf32> to vector<18x32xf32>
    %358 = arith.addf %354, %357 : vector<18x32xf32>
    %359 = vector.extract_strided_slice %351 {offsets = [0, 0], sizes = [18, 32], strides = [1, 1]} : vector<18x64xf32> to vector<18x32xf32>
    %360 = vector.extract_strided_slice %351 {offsets = [0, 32], sizes = [18, 32], strides = [1, 1]} : vector<18x64xf32> to vector<18x32xf32>
    %c5_163 = arith.constant 5 : index
    %c0_164 = arith.constant 0 : index
    %c0_165 = arith.constant 0 : index
    %361 = vector.load %arg5[%c5_163, %c0_164, %c0_165] : memref<14x32x32xf32, #tpu.memory_space<vmem>>, vector<1x32x32xf32>
    %362 = vector.shape_cast %361 : vector<1x32x32xf32> to vector<32x32xf32>
    %c10 = arith.constant 10 : index
    %c0_166 = arith.constant 0 : index
    %c0_167 = arith.constant 0 : index
    %363 = vector.load %arg6[%c10, %c0_166, %c0_167] : memref<42x1x32xf32, #tpu.memory_space<vmem>>, vector<1x1x32xf32>
    %364 = vector.shape_cast %363 : vector<1x1x32xf32> to vector<1x32xf32>
    %cst_168 = arith.constant 0.000000e+00 : f32
    %365 = vector.broadcast %cst_168 : f32 to vector<18x32xf32>
    %366 = vector.extract_strided_slice %359 {offsets = [0, 0], sizes = [18, 8], strides = [1, 1]} : vector<18x32xf32> to vector<18x8xf32>
    %367 = vector.extract_strided_slice %360 {offsets = [0, 0], sizes = [18, 8], strides = [1, 1]} : vector<18x32xf32> to vector<18x8xf32>
    %cst_169 = arith.constant dense<0.000000e+00> : vector<18x18xf32>
    %368 = tpu.matmul %366, %367, %cst_169 {dimension_numbers = #tpu.dot_dimension_numbers<[1], [1], [0], [0], [0, 0, 1, 0], [], []>} : vector<18x8xf32>, vector<18x8xf32>, vector<18x18xf32> -> vector<18x18xf32>
    %369 = arith.addf %368, %56 : vector<18x18xf32>
    %cst_170 = arith.constant dense<0xFF800000> : vector<18xf32>
    %370 = vector.multi_reduction <maximumf>, %369, %cst_170 [1] : vector<18x18xf32> to vector<18xf32>
    %371 = vector.shape_cast %370 : vector<18xf32> to vector<18x1xf32>
    %372 = vector.broadcast %371 : vector<18x1xf32> to vector<18x18xf32>
    %373 = arith.subf %369, %372 : vector<18x18xf32>
    %374 = math.exp %373 : vector<18x18xf32>
    %cst_171 = arith.constant dense<0.000000e+00> : vector<18xf32>
    %375 = vector.multi_reduction <add>, %374, %cst_171 [1] : vector<18x18xf32> to vector<18xf32>
    %376 = vector.shape_cast %375 : vector<18xf32> to vector<18x1xf32>
    %377 = tpu.reciprocal %376 : vector<18x1xf32> -> vector<18x1xf32>
    %378 = vector.broadcast %377 : vector<18x1xf32> to vector<18x18xf32>
    %379 = arith.mulf %374, %378 : vector<18x18xf32>
    %380 = vector.extract_strided_slice %358 {offsets = [0, 0], sizes = [18, 8], strides = [1, 1]} : vector<18x32xf32> to vector<18x8xf32>
    %cst_172 = arith.constant dense<0.000000e+00> : vector<18x8xf32>
    %381 = tpu.matmul %379, %380, %cst_172 {dimension_numbers = #tpu.dot_dimension_numbers<[1], [0], [0], [1], [0, 0, 1, 1], [], []>} : vector<18x18xf32>, vector<18x8xf32>, vector<18x8xf32> -> vector<18x8xf32>
    %382 = vector.extract_strided_slice %362 {offsets = [0, 0], sizes = [8, 32], strides = [1, 1]} : vector<32x32xf32> to vector<8x32xf32>
    %cst_173 = arith.constant dense<0.000000e+00> : vector<18x32xf32>
    %383 = tpu.matmul %381, %382, %cst_173 {dimension_numbers = #tpu.dot_dimension_numbers<[1], [0], [0], [1], [0, 0, 1, 1], [], []>} : vector<18x8xf32>, vector<8x32xf32>, vector<18x32xf32> -> vector<18x32xf32>
    %384 = arith.addf %365, %383 : vector<18x32xf32>
    %385 = vector.extract_strided_slice %359 {offsets = [0, 8], sizes = [18, 8], strides = [1, 1]} : vector<18x32xf32> to vector<18x8xf32>
    %386 = vector.extract_strided_slice %360 {offsets = [0, 8], sizes = [18, 8], strides = [1, 1]} : vector<18x32xf32> to vector<18x8xf32>
    %cst_174 = arith.constant dense<0.000000e+00> : vector<18x18xf32>
    %387 = tpu.matmul %385, %386, %cst_174 {dimension_numbers = #tpu.dot_dimension_numbers<[1], [1], [0], [0], [0, 0, 1, 0], [], []>} : vector<18x8xf32>, vector<18x8xf32>, vector<18x18xf32> -> vector<18x18xf32>
    %388 = arith.addf %387, %56 : vector<18x18xf32>
    %cst_175 = arith.constant dense<0xFF800000> : vector<18xf32>
    %389 = vector.multi_reduction <maximumf>, %388, %cst_175 [1] : vector<18x18xf32> to vector<18xf32>
    %390 = vector.shape_cast %389 : vector<18xf32> to vector<18x1xf32>
    %391 = vector.broadcast %390 : vector<18x1xf32> to vector<18x18xf32>
    %392 = arith.subf %388, %391 : vector<18x18xf32>
    %393 = math.exp %392 : vector<18x18xf32>
    %cst_176 = arith.constant dense<0.000000e+00> : vector<18xf32>
    %394 = vector.multi_reduction <add>, %393, %cst_176 [1] : vector<18x18xf32> to vector<18xf32>
    %395 = vector.shape_cast %394 : vector<18xf32> to vector<18x1xf32>
    %396 = tpu.reciprocal %395 : vector<18x1xf32> -> vector<18x1xf32>
    %397 = vector.broadcast %396 : vector<18x1xf32> to vector<18x18xf32>
    %398 = arith.mulf %393, %397 : vector<18x18xf32>
    %399 = vector.extract_strided_slice %358 {offsets = [0, 8], sizes = [18, 8], strides = [1, 1]} : vector<18x32xf32> to vector<18x8xf32>
    %cst_177 = arith.constant dense<0.000000e+00> : vector<18x8xf32>
    %400 = tpu.matmul %398, %399, %cst_177 {dimension_numbers = #tpu.dot_dimension_numbers<[1], [0], [0], [1], [0, 0, 1, 1], [], []>} : vector<18x18xf32>, vector<18x8xf32>, vector<18x8xf32> -> vector<18x8xf32>
    %401 = vector.extract_strided_slice %362 {offsets = [8, 0], sizes = [8, 32], strides = [1, 1]} : vector<32x32xf32> to vector<8x32xf32>
    %cst_178 = arith.constant dense<0.000000e+00> : vector<18x32xf32>
    %402 = tpu.matmul %400, %401, %cst_178 {dimension_numbers = #tpu.dot_dimension_numbers<[1], [0], [0], [1], [0, 0, 1, 1], [], []>} : vector<18x8xf32>, vector<8x32xf32>, vector<18x32xf32> -> vector<18x32xf32>
    %403 = arith.addf %384, %402 : vector<18x32xf32>
    %404 = vector.extract_strided_slice %359 {offsets = [0, 16], sizes = [18, 8], strides = [1, 1]} : vector<18x32xf32> to vector<18x8xf32>
    %405 = vector.extract_strided_slice %360 {offsets = [0, 16], sizes = [18, 8], strides = [1, 1]} : vector<18x32xf32> to vector<18x8xf32>
    %cst_179 = arith.constant dense<0.000000e+00> : vector<18x18xf32>
    %406 = tpu.matmul %404, %405, %cst_179 {dimension_numbers = #tpu.dot_dimension_numbers<[1], [1], [0], [0], [0, 0, 1, 0], [], []>} : vector<18x8xf32>, vector<18x8xf32>, vector<18x18xf32> -> vector<18x18xf32>
    %407 = arith.addf %406, %56 : vector<18x18xf32>
    %cst_180 = arith.constant dense<0xFF800000> : vector<18xf32>
    %408 = vector.multi_reduction <maximumf>, %407, %cst_180 [1] : vector<18x18xf32> to vector<18xf32>
    %409 = vector.shape_cast %408 : vector<18xf32> to vector<18x1xf32>
    %410 = vector.broadcast %409 : vector<18x1xf32> to vector<18x18xf32>
    %411 = arith.subf %407, %410 : vector<18x18xf32>
    %412 = math.exp %411 : vector<18x18xf32>
    %cst_181 = arith.constant dense<0.000000e+00> : vector<18xf32>
    %413 = vector.multi_reduction <add>, %412, %cst_181 [1] : vector<18x18xf32> to vector<18xf32>
    %414 = vector.shape_cast %413 : vector<18xf32> to vector<18x1xf32>
    %415 = tpu.reciprocal %414 : vector<18x1xf32> -> vector<18x1xf32>
    %416 = vector.broadcast %415 : vector<18x1xf32> to vector<18x18xf32>
    %417 = arith.mulf %412, %416 : vector<18x18xf32>
    %418 = vector.extract_strided_slice %358 {offsets = [0, 16], sizes = [18, 8], strides = [1, 1]} : vector<18x32xf32> to vector<18x8xf32>
    %cst_182 = arith.constant dense<0.000000e+00> : vector<18x8xf32>
    %419 = tpu.matmul %417, %418, %cst_182 {dimension_numbers = #tpu.dot_dimension_numbers<[1], [0], [0], [1], [0, 0, 1, 1], [], []>} : vector<18x18xf32>, vector<18x8xf32>, vector<18x8xf32> -> vector<18x8xf32>
    %420 = vector.extract_strided_slice %362 {offsets = [16, 0], sizes = [8, 32], strides = [1, 1]} : vector<32x32xf32> to vector<8x32xf32>
    %cst_183 = arith.constant dense<0.000000e+00> : vector<18x32xf32>
    %421 = tpu.matmul %419, %420, %cst_183 {dimension_numbers = #tpu.dot_dimension_numbers<[1], [0], [0], [1], [0, 0, 1, 1], [], []>} : vector<18x8xf32>, vector<8x32xf32>, vector<18x32xf32> -> vector<18x32xf32>
    %422 = arith.addf %403, %421 : vector<18x32xf32>
    %423 = vector.extract_strided_slice %359 {offsets = [0, 24], sizes = [18, 8], strides = [1, 1]} : vector<18x32xf32> to vector<18x8xf32>
    %424 = vector.extract_strided_slice %360 {offsets = [0, 24], sizes = [18, 8], strides = [1, 1]} : vector<18x32xf32> to vector<18x8xf32>
    %cst_184 = arith.constant dense<0.000000e+00> : vector<18x18xf32>
    %425 = tpu.matmul %423, %424, %cst_184 {dimension_numbers = #tpu.dot_dimension_numbers<[1], [1], [0], [0], [0, 0, 1, 0], [], []>} : vector<18x8xf32>, vector<18x8xf32>, vector<18x18xf32> -> vector<18x18xf32>
    %426 = arith.addf %425, %56 : vector<18x18xf32>
    %cst_185 = arith.constant dense<0xFF800000> : vector<18xf32>
    %427 = vector.multi_reduction <maximumf>, %426, %cst_185 [1] : vector<18x18xf32> to vector<18xf32>
    %428 = vector.shape_cast %427 : vector<18xf32> to vector<18x1xf32>
    %429 = vector.broadcast %428 : vector<18x1xf32> to vector<18x18xf32>
    %430 = arith.subf %426, %429 : vector<18x18xf32>
    %431 = math.exp %430 : vector<18x18xf32>
    %cst_186 = arith.constant dense<0.000000e+00> : vector<18xf32>
    %432 = vector.multi_reduction <add>, %431, %cst_186 [1] : vector<18x18xf32> to vector<18xf32>
    %433 = vector.shape_cast %432 : vector<18xf32> to vector<18x1xf32>
    %434 = tpu.reciprocal %433 : vector<18x1xf32> -> vector<18x1xf32>
    %435 = vector.broadcast %434 : vector<18x1xf32> to vector<18x18xf32>
    %436 = arith.mulf %431, %435 : vector<18x18xf32>
    %437 = vector.extract_strided_slice %358 {offsets = [0, 24], sizes = [18, 8], strides = [1, 1]} : vector<18x32xf32> to vector<18x8xf32>
    %cst_187 = arith.constant dense<0.000000e+00> : vector<18x8xf32>
    %438 = tpu.matmul %436, %437, %cst_187 {dimension_numbers = #tpu.dot_dimension_numbers<[1], [0], [0], [1], [0, 0, 1, 1], [], []>} : vector<18x18xf32>, vector<18x8xf32>, vector<18x8xf32> -> vector<18x8xf32>
    %439 = vector.extract_strided_slice %362 {offsets = [24, 0], sizes = [8, 32], strides = [1, 1]} : vector<32x32xf32> to vector<8x32xf32>
    %cst_188 = arith.constant dense<0.000000e+00> : vector<18x32xf32>
    %440 = tpu.matmul %438, %439, %cst_188 {dimension_numbers = #tpu.dot_dimension_numbers<[1], [0], [0], [1], [0, 0, 1, 1], [], []>} : vector<18x8xf32>, vector<8x32xf32>, vector<18x32xf32> -> vector<18x32xf32>
    %441 = arith.addf %422, %440 : vector<18x32xf32>
    %442 = vector.broadcast %364 : vector<1x32xf32> to vector<18x32xf32>
    %443 = arith.addf %441, %442 : vector<18x32xf32>
    %444 = arith.addf %317, %443 : vector<18x32xf32>
    %c13 = arith.constant 13 : index
    %c0_189 = arith.constant 0 : index
    %c0_190 = arith.constant 0 : index
    %445 = vector.load %arg6[%c13, %c0_189, %c0_190] : memref<42x1x32xf32, #tpu.memory_space<vmem>>, vector<1x1x32xf32>
    %446 = vector.shape_cast %445 : vector<1x1x32xf32> to vector<1x32xf32>
    %c14 = arith.constant 14 : index
    %c0_191 = arith.constant 0 : index
    %c0_192 = arith.constant 0 : index
    %447 = vector.load %arg6[%c14, %c0_191, %c0_192] : memref<42x1x32xf32, #tpu.memory_space<vmem>>, vector<1x1x32xf32>
    %448 = vector.shape_cast %447 : vector<1x1x32xf32> to vector<1x32xf32>
    %cst_193 = arith.constant dense<0.000000e+00> : vector<18xf32>
    %449 = vector.multi_reduction <add>, %444, %cst_193 [1] : vector<18x32xf32> to vector<18xf32>
    %450 = vector.shape_cast %449 : vector<18xf32> to vector<18x1xf32>
    %cst_194 = arith.constant 3.200000e+01 : f32
    %451 = vector.broadcast %cst_194 : f32 to vector<18x1xf32>
    %452 = arith.divf %450, %451 : vector<18x1xf32>
    %453 = vector.broadcast %452 : vector<18x1xf32> to vector<18x32xf32>
    %454 = arith.subf %444, %453 : vector<18x32xf32>
    %455 = arith.mulf %454, %454 : vector<18x32xf32>
    %cst_195 = arith.constant dense<0.000000e+00> : vector<18xf32>
    %456 = vector.multi_reduction <add>, %455, %cst_195 [1] : vector<18x32xf32> to vector<18xf32>
    %457 = vector.shape_cast %456 : vector<18xf32> to vector<18x1xf32>
    %cst_196 = arith.constant 3.200000e+01 : f32
    %458 = vector.broadcast %cst_196 : f32 to vector<18x1xf32>
    %459 = arith.divf %457, %458 : vector<18x1xf32>
    %460 = vector.broadcast %452 : vector<18x1xf32> to vector<18x32xf32>
    %461 = arith.subf %444, %460 : vector<18x32xf32>
    %cst_197 = arith.constant 9.99999974E-6 : f32
    %462 = vector.broadcast %cst_197 : f32 to vector<18x1xf32>
    %463 = arith.addf %459, %462 : vector<18x1xf32>
    %464 = math.rsqrt %463 : vector<18x1xf32>
    %465 = vector.broadcast %464 : vector<18x1xf32> to vector<18x32xf32>
    %466 = arith.mulf %461, %465 : vector<18x32xf32>
    %467 = vector.broadcast %446 : vector<1x32xf32> to vector<18x32xf32>
    %468 = arith.mulf %466, %467 : vector<18x32xf32>
    %469 = vector.broadcast %448 : vector<1x32xf32> to vector<18x32xf32>
    %470 = arith.addf %468, %469 : vector<18x32xf32>
    %c3_198 = arith.constant 3 : index
    %c0_199 = arith.constant 0 : index
    %c0_200 = arith.constant 0 : index
    %471 = vector.load %arg7[%c3_198, %c0_199, %c0_200] : memref<10x32x64xf32, #tpu.memory_space<vmem>>, vector<1x32x64xf32>
    %472 = vector.shape_cast %471 : vector<1x32x64xf32> to vector<32x64xf32>
    %cst_201 = arith.constant dense<0.000000e+00> : vector<18x64xf32>
    %473 = tpu.matmul %470, %472, %cst_201 {dimension_numbers = #tpu.dot_dimension_numbers<[1], [0], [0], [1], [0, 0, 1, 1], [], []>} : vector<18x32xf32>, vector<32x64xf32>, vector<18x64xf32> -> vector<18x64xf32>
    %c3_202 = arith.constant 3 : index
    %c0_203 = arith.constant 0 : index
    %c0_204 = arith.constant 0 : index
    %474 = vector.load %arg8[%c3_202, %c0_203, %c0_204] : memref<10x1x64xf32, #tpu.memory_space<vmem>>, vector<1x1x64xf32>
    %475 = vector.shape_cast %474 : vector<1x1x64xf32> to vector<1x64xf32>
    %476 = vector.broadcast %475 : vector<1x64xf32> to vector<18x64xf32>
    %477 = arith.addf %473, %476 : vector<18x64xf32>
    %cst_205 = arith.constant 0.000000e+00 : f32
    %478 = vector.broadcast %cst_205 : f32 to vector<18x64xf32>
    %479 = arith.maximumf %477, %478 : vector<18x64xf32>
    %c1_206 = arith.constant 1 : index
    %c0_207 = arith.constant 0 : index
    %c0_208 = arith.constant 0 : index
    %480 = vector.load %arg9[%c1_206, %c0_207, %c0_208] : memref<4x64x32xf32, #tpu.memory_space<vmem>>, vector<1x64x32xf32>
    %481 = vector.shape_cast %480 : vector<1x64x32xf32> to vector<64x32xf32>
    %cst_209 = arith.constant dense<0.000000e+00> : vector<18x32xf32>
    %482 = tpu.matmul %479, %481, %cst_209 {dimension_numbers = #tpu.dot_dimension_numbers<[1], [0], [0], [1], [0, 0, 1, 1], [], []>} : vector<18x64xf32>, vector<64x32xf32>, vector<18x32xf32> -> vector<18x32xf32>
    %483 = arith.addf %444, %482 : vector<18x32xf32>
    %c15 = arith.constant 15 : index
    %c0_210 = arith.constant 0 : index
    %c0_211 = arith.constant 0 : index
    %484 = vector.load %arg6[%c15, %c0_210, %c0_211] : memref<42x1x32xf32, #tpu.memory_space<vmem>>, vector<1x1x32xf32>
    %485 = vector.shape_cast %484 : vector<1x1x32xf32> to vector<1x32xf32>
    %486 = vector.broadcast %485 : vector<1x32xf32> to vector<18x32xf32>
    %487 = arith.addf %483, %486 : vector<18x32xf32>
    %c16 = arith.constant 16 : index
    %c0_212 = arith.constant 0 : index
    %c0_213 = arith.constant 0 : index
    %488 = vector.load %arg6[%c16, %c0_212, %c0_213] : memref<42x1x32xf32, #tpu.memory_space<vmem>>, vector<1x1x32xf32>
    %489 = vector.shape_cast %488 : vector<1x1x32xf32> to vector<1x32xf32>
    %c17 = arith.constant 17 : index
    %c0_214 = arith.constant 0 : index
    %c0_215 = arith.constant 0 : index
    %490 = vector.load %arg6[%c17, %c0_214, %c0_215] : memref<42x1x32xf32, #tpu.memory_space<vmem>>, vector<1x1x32xf32>
    %491 = vector.shape_cast %490 : vector<1x1x32xf32> to vector<1x32xf32>
    %cst_216 = arith.constant dense<0.000000e+00> : vector<18xf32>
    %492 = vector.multi_reduction <add>, %487, %cst_216 [1] : vector<18x32xf32> to vector<18xf32>
    %493 = vector.shape_cast %492 : vector<18xf32> to vector<18x1xf32>
    %cst_217 = arith.constant 3.200000e+01 : f32
    %494 = vector.broadcast %cst_217 : f32 to vector<18x1xf32>
    %495 = arith.divf %493, %494 : vector<18x1xf32>
    %496 = vector.broadcast %495 : vector<18x1xf32> to vector<18x32xf32>
    %497 = arith.subf %487, %496 : vector<18x32xf32>
    %498 = arith.mulf %497, %497 : vector<18x32xf32>
    %cst_218 = arith.constant dense<0.000000e+00> : vector<18xf32>
    %499 = vector.multi_reduction <add>, %498, %cst_218 [1] : vector<18x32xf32> to vector<18xf32>
    %500 = vector.shape_cast %499 : vector<18xf32> to vector<18x1xf32>
    %cst_219 = arith.constant 3.200000e+01 : f32
    %501 = vector.broadcast %cst_219 : f32 to vector<18x1xf32>
    %502 = arith.divf %500, %501 : vector<18x1xf32>
    %503 = vector.broadcast %495 : vector<18x1xf32> to vector<18x32xf32>
    %504 = arith.subf %487, %503 : vector<18x32xf32>
    %cst_220 = arith.constant 9.99999974E-6 : f32
    %505 = vector.broadcast %cst_220 : f32 to vector<18x1xf32>
    %506 = arith.addf %502, %505 : vector<18x1xf32>
    %507 = math.rsqrt %506 : vector<18x1xf32>
    %508 = vector.broadcast %507 : vector<18x1xf32> to vector<18x32xf32>
    %509 = arith.mulf %504, %508 : vector<18x32xf32>
    %510 = vector.broadcast %489 : vector<1x32xf32> to vector<18x32xf32>
    %511 = arith.mulf %509, %510 : vector<18x32xf32>
    %512 = vector.broadcast %491 : vector<1x32xf32> to vector<18x32xf32>
    %513 = arith.addf %511, %512 : vector<18x32xf32>
    %514 = arith.addf %513, %1 : vector<18x32xf32>
    %c8_221 = arith.constant 8 : index
    %c0_222 = arith.constant 0 : index
    %c0_223 = arith.constant 0 : index
    %515 = vector.load %arg7[%c8_221, %c0_222, %c0_223] : memref<10x32x64xf32, #tpu.memory_space<vmem>>, vector<1x32x64xf32>
    %516 = vector.shape_cast %515 : vector<1x32x64xf32> to vector<32x64xf32>
    %cst_224 = arith.constant dense<0.000000e+00> : vector<18x64xf32>
    %517 = tpu.matmul %514, %516, %cst_224 {dimension_numbers = #tpu.dot_dimension_numbers<[1], [0], [0], [1], [0, 0, 1, 1], [], []>} : vector<18x32xf32>, vector<32x64xf32>, vector<18x64xf32> -> vector<18x64xf32>
    %c8_225 = arith.constant 8 : index
    %c0_226 = arith.constant 0 : index
    %c0_227 = arith.constant 0 : index
    %518 = vector.load %arg8[%c8_225, %c0_226, %c0_227] : memref<10x1x64xf32, #tpu.memory_space<vmem>>, vector<1x1x64xf32>
    %519 = vector.shape_cast %518 : vector<1x1x64xf32> to vector<1x64xf32>
    %520 = vector.broadcast %519 : vector<1x64xf32> to vector<18x64xf32>
    %521 = arith.addf %517, %520 : vector<18x64xf32>
    %c9_228 = arith.constant 9 : index
    %c0_229 = arith.constant 0 : index
    %c0_230 = arith.constant 0 : index
    %522 = vector.load %arg7[%c9_228, %c0_229, %c0_230] : memref<10x32x64xf32, #tpu.memory_space<vmem>>, vector<1x32x64xf32>
    %523 = vector.shape_cast %522 : vector<1x32x64xf32> to vector<32x64xf32>
    %cst_231 = arith.constant dense<0.000000e+00> : vector<18x64xf32>
    %524 = tpu.matmul %513, %523, %cst_231 {dimension_numbers = #tpu.dot_dimension_numbers<[1], [0], [0], [1], [0, 0, 1, 1], [], []>} : vector<18x32xf32>, vector<32x64xf32>, vector<18x64xf32> -> vector<18x64xf32>
    %c9_232 = arith.constant 9 : index
    %c0_233 = arith.constant 0 : index
    %c0_234 = arith.constant 0 : index
    %525 = vector.load %arg8[%c9_232, %c0_233, %c0_234] : memref<10x1x64xf32, #tpu.memory_space<vmem>>, vector<1x1x64xf32>
    %526 = vector.shape_cast %525 : vector<1x1x64xf32> to vector<1x64xf32>
    %527 = vector.broadcast %526 : vector<1x64xf32> to vector<18x64xf32>
    %528 = arith.addf %524, %527 : vector<18x64xf32>
    %c22 = arith.constant 22 : index
    %c0_235 = arith.constant 0 : index
    %c0_236 = arith.constant 0 : index
    %529 = vector.load %arg6[%c22, %c0_235, %c0_236] : memref<42x1x32xf32, #tpu.memory_space<vmem>>, vector<1x1x32xf32>
    %530 = vector.shape_cast %529 : vector<1x1x32xf32> to vector<1x32xf32>
    %c23 = arith.constant 23 : index
    %c0_237 = arith.constant 0 : index
    %c0_238 = arith.constant 0 : index
    %531 = vector.load %arg6[%c23, %c0_237, %c0_238] : memref<42x1x32xf32, #tpu.memory_space<vmem>>, vector<1x1x32xf32>
    %532 = vector.shape_cast %531 : vector<1x1x32xf32> to vector<1x32xf32>
    %cst_239 = arith.constant dense<0.000000e+00> : vector<16xf32>
    %533 = vector.multi_reduction <add>, %146, %cst_239 [1] : vector<16x32xf32> to vector<16xf32>
    %534 = vector.shape_cast %533 : vector<16xf32> to vector<16x1xf32>
    %cst_240 = arith.constant 3.200000e+01 : f32
    %535 = vector.broadcast %cst_240 : f32 to vector<16x1xf32>
    %536 = arith.divf %534, %535 : vector<16x1xf32>
    %537 = vector.broadcast %536 : vector<16x1xf32> to vector<16x32xf32>
    %538 = arith.subf %146, %537 : vector<16x32xf32>
    %539 = arith.mulf %538, %538 : vector<16x32xf32>
    %cst_241 = arith.constant dense<0.000000e+00> : vector<16xf32>
    %540 = vector.multi_reduction <add>, %539, %cst_241 [1] : vector<16x32xf32> to vector<16xf32>
    %541 = vector.shape_cast %540 : vector<16xf32> to vector<16x1xf32>
    %cst_242 = arith.constant 3.200000e+01 : f32
    %542 = vector.broadcast %cst_242 : f32 to vector<16x1xf32>
    %543 = arith.divf %541, %542 : vector<16x1xf32>
    %544 = vector.broadcast %536 : vector<16x1xf32> to vector<16x32xf32>
    %545 = arith.subf %146, %544 : vector<16x32xf32>
    %cst_243 = arith.constant 9.99999974E-6 : f32
    %546 = vector.broadcast %cst_243 : f32 to vector<16x1xf32>
    %547 = arith.addf %543, %546 : vector<16x1xf32>
    %548 = math.rsqrt %547 : vector<16x1xf32>
    %549 = vector.broadcast %548 : vector<16x1xf32> to vector<16x32xf32>
    %550 = arith.mulf %545, %549 : vector<16x32xf32>
    %551 = vector.broadcast %530 : vector<1x32xf32> to vector<16x32xf32>
    %552 = arith.mulf %550, %551 : vector<16x32xf32>
    %553 = vector.broadcast %532 : vector<1x32xf32> to vector<16x32xf32>
    %554 = arith.addf %552, %553 : vector<16x32xf32>
    %555 = arith.addf %554, %4 : vector<16x32xf32>
    %c4_244 = arith.constant 4 : index
    %c0_245 = arith.constant 0 : index
    %c0_246 = arith.constant 0 : index
    %556 = vector.load %arg7[%c4_244, %c0_245, %c0_246] : memref<10x32x64xf32, #tpu.memory_space<vmem>>, vector<1x32x64xf32>
    %557 = vector.shape_cast %556 : vector<1x32x64xf32> to vector<32x64xf32>
    %cst_247 = arith.constant dense<0.000000e+00> : vector<16x64xf32>
    %558 = tpu.matmul %555, %557, %cst_247 {dimension_numbers = #tpu.dot_dimension_numbers<[1], [0], [0], [1], [0, 0, 1, 1], [], []>} : vector<16x32xf32>, vector<32x64xf32>, vector<16x64xf32> -> vector<16x64xf32>
    %c4_248 = arith.constant 4 : index
    %c0_249 = arith.constant 0 : index
    %c0_250 = arith.constant 0 : index
    %559 = vector.load %arg8[%c4_248, %c0_249, %c0_250] : memref<10x1x64xf32, #tpu.memory_space<vmem>>, vector<1x1x64xf32>
    %560 = vector.shape_cast %559 : vector<1x1x64xf32> to vector<1x64xf32>
    %561 = vector.broadcast %560 : vector<1x64xf32> to vector<16x64xf32>
    %562 = arith.addf %558, %561 : vector<16x64xf32>
    %c6_251 = arith.constant 6 : index
    %c0_252 = arith.constant 0 : index
    %c0_253 = arith.constant 0 : index
    %563 = vector.load %arg5[%c6_251, %c0_252, %c0_253] : memref<14x32x32xf32, #tpu.memory_space<vmem>>, vector<1x32x32xf32>
    %564 = vector.shape_cast %563 : vector<1x32x32xf32> to vector<32x32xf32>
    %cst_254 = arith.constant dense<0.000000e+00> : vector<16x32xf32>
    %565 = tpu.matmul %554, %564, %cst_254 {dimension_numbers = #tpu.dot_dimension_numbers<[1], [0], [0], [1], [0, 0, 1, 1], [], []>} : vector<16x32xf32>, vector<32x32xf32>, vector<16x32xf32> -> vector<16x32xf32>
    %c18 = arith.constant 18 : index
    %c0_255 = arith.constant 0 : index
    %c0_256 = arith.constant 0 : index
    %566 = vector.load %arg6[%c18, %c0_255, %c0_256] : memref<42x1x32xf32, #tpu.memory_space<vmem>>, vector<1x1x32xf32>
    %567 = vector.shape_cast %566 : vector<1x1x32xf32> to vector<1x32xf32>
    %568 = vector.broadcast %567 : vector<1x32xf32> to vector<16x32xf32>
    %569 = arith.addf %565, %568 : vector<16x32xf32>
    %570 = vector.extract_strided_slice %562 {offsets = [0, 0], sizes = [16, 32], strides = [1, 1]} : vector<16x64xf32> to vector<16x32xf32>
    %571 = vector.extract_strided_slice %562 {offsets = [0, 32], sizes = [16, 32], strides = [1, 1]} : vector<16x64xf32> to vector<16x32xf32>
    %c7_257 = arith.constant 7 : index
    %c0_258 = arith.constant 0 : index
    %c0_259 = arith.constant 0 : index
    %572 = vector.load %arg5[%c7_257, %c0_258, %c0_259] : memref<14x32x32xf32, #tpu.memory_space<vmem>>, vector<1x32x32xf32>
    %573 = vector.shape_cast %572 : vector<1x32x32xf32> to vector<32x32xf32>
    %c19 = arith.constant 19 : index
    %c0_260 = arith.constant 0 : index
    %c0_261 = arith.constant 0 : index
    %574 = vector.load %arg6[%c19, %c0_260, %c0_261] : memref<42x1x32xf32, #tpu.memory_space<vmem>>, vector<1x1x32xf32>
    %575 = vector.shape_cast %574 : vector<1x1x32xf32> to vector<1x32xf32>
    %cst_262 = arith.constant 0.000000e+00 : f32
    %576 = vector.broadcast %cst_262 : f32 to vector<16x32xf32>
    %577 = vector.extract_strided_slice %570 {offsets = [0, 0], sizes = [16, 8], strides = [1, 1]} : vector<16x32xf32> to vector<16x8xf32>
    %578 = vector.extract_strided_slice %571 {offsets = [0, 0], sizes = [16, 8], strides = [1, 1]} : vector<16x32xf32> to vector<16x8xf32>
    %cst_263 = arith.constant dense<0.000000e+00> : vector<16x16xf32>
    %579 = tpu.matmul %577, %578, %cst_263 {dimension_numbers = #tpu.dot_dimension_numbers<[1], [1], [0], [0], [0, 0, 1, 0], [], []>} : vector<16x8xf32>, vector<16x8xf32>, vector<16x16xf32> -> vector<16x16xf32>
    %580 = arith.addf %579, %92 : vector<16x16xf32>
    %cst_264 = arith.constant dense<0xFF800000> : vector<16xf32>
    %581 = vector.multi_reduction <maximumf>, %580, %cst_264 [1] : vector<16x16xf32> to vector<16xf32>
    %582 = vector.shape_cast %581 : vector<16xf32> to vector<16x1xf32>
    %583 = vector.broadcast %582 : vector<16x1xf32> to vector<16x16xf32>
    %584 = arith.subf %580, %583 : vector<16x16xf32>
    %585 = math.exp %584 : vector<16x16xf32>
    %cst_265 = arith.constant dense<0.000000e+00> : vector<16xf32>
    %586 = vector.multi_reduction <add>, %585, %cst_265 [1] : vector<16x16xf32> to vector<16xf32>
    %587 = vector.shape_cast %586 : vector<16xf32> to vector<16x1xf32>
    %588 = tpu.reciprocal %587 : vector<16x1xf32> -> vector<16x1xf32>
    %589 = vector.broadcast %588 : vector<16x1xf32> to vector<16x16xf32>
    %590 = arith.mulf %585, %589 : vector<16x16xf32>
    %591 = vector.extract_strided_slice %569 {offsets = [0, 0], sizes = [16, 8], strides = [1, 1]} : vector<16x32xf32> to vector<16x8xf32>
    %cst_266 = arith.constant dense<0.000000e+00> : vector<16x8xf32>
    %592 = tpu.matmul %590, %591, %cst_266 {dimension_numbers = #tpu.dot_dimension_numbers<[1], [0], [0], [1], [0, 0, 1, 1], [], []>} : vector<16x16xf32>, vector<16x8xf32>, vector<16x8xf32> -> vector<16x8xf32>
    %593 = vector.extract_strided_slice %573 {offsets = [0, 0], sizes = [8, 32], strides = [1, 1]} : vector<32x32xf32> to vector<8x32xf32>
    %cst_267 = arith.constant dense<0.000000e+00> : vector<16x32xf32>
    %594 = tpu.matmul %592, %593, %cst_267 {dimension_numbers = #tpu.dot_dimension_numbers<[1], [0], [0], [1], [0, 0, 1, 1], [], []>} : vector<16x8xf32>, vector<8x32xf32>, vector<16x32xf32> -> vector<16x32xf32>
    %595 = arith.addf %576, %594 : vector<16x32xf32>
    %596 = vector.extract_strided_slice %570 {offsets = [0, 8], sizes = [16, 8], strides = [1, 1]} : vector<16x32xf32> to vector<16x8xf32>
    %597 = vector.extract_strided_slice %571 {offsets = [0, 8], sizes = [16, 8], strides = [1, 1]} : vector<16x32xf32> to vector<16x8xf32>
    %cst_268 = arith.constant dense<0.000000e+00> : vector<16x16xf32>
    %598 = tpu.matmul %596, %597, %cst_268 {dimension_numbers = #tpu.dot_dimension_numbers<[1], [1], [0], [0], [0, 0, 1, 0], [], []>} : vector<16x8xf32>, vector<16x8xf32>, vector<16x16xf32> -> vector<16x16xf32>
    %599 = arith.addf %598, %92 : vector<16x16xf32>
    %cst_269 = arith.constant dense<0xFF800000> : vector<16xf32>
    %600 = vector.multi_reduction <maximumf>, %599, %cst_269 [1] : vector<16x16xf32> to vector<16xf32>
    %601 = vector.shape_cast %600 : vector<16xf32> to vector<16x1xf32>
    %602 = vector.broadcast %601 : vector<16x1xf32> to vector<16x16xf32>
    %603 = arith.subf %599, %602 : vector<16x16xf32>
    %604 = math.exp %603 : vector<16x16xf32>
    %cst_270 = arith.constant dense<0.000000e+00> : vector<16xf32>
    %605 = vector.multi_reduction <add>, %604, %cst_270 [1] : vector<16x16xf32> to vector<16xf32>
    %606 = vector.shape_cast %605 : vector<16xf32> to vector<16x1xf32>
    %607 = tpu.reciprocal %606 : vector<16x1xf32> -> vector<16x1xf32>
    %608 = vector.broadcast %607 : vector<16x1xf32> to vector<16x16xf32>
    %609 = arith.mulf %604, %608 : vector<16x16xf32>
    %610 = vector.extract_strided_slice %569 {offsets = [0, 8], sizes = [16, 8], strides = [1, 1]} : vector<16x32xf32> to vector<16x8xf32>
    %cst_271 = arith.constant dense<0.000000e+00> : vector<16x8xf32>
    %611 = tpu.matmul %609, %610, %cst_271 {dimension_numbers = #tpu.dot_dimension_numbers<[1], [0], [0], [1], [0, 0, 1, 1], [], []>} : vector<16x16xf32>, vector<16x8xf32>, vector<16x8xf32> -> vector<16x8xf32>
    %612 = vector.extract_strided_slice %573 {offsets = [8, 0], sizes = [8, 32], strides = [1, 1]} : vector<32x32xf32> to vector<8x32xf32>
    %cst_272 = arith.constant dense<0.000000e+00> : vector<16x32xf32>
    %613 = tpu.matmul %611, %612, %cst_272 {dimension_numbers = #tpu.dot_dimension_numbers<[1], [0], [0], [1], [0, 0, 1, 1], [], []>} : vector<16x8xf32>, vector<8x32xf32>, vector<16x32xf32> -> vector<16x32xf32>
    %614 = arith.addf %595, %613 : vector<16x32xf32>
    %615 = vector.extract_strided_slice %570 {offsets = [0, 16], sizes = [16, 8], strides = [1, 1]} : vector<16x32xf32> to vector<16x8xf32>
    %616 = vector.extract_strided_slice %571 {offsets = [0, 16], sizes = [16, 8], strides = [1, 1]} : vector<16x32xf32> to vector<16x8xf32>
    %cst_273 = arith.constant dense<0.000000e+00> : vector<16x16xf32>
    %617 = tpu.matmul %615, %616, %cst_273 {dimension_numbers = #tpu.dot_dimension_numbers<[1], [1], [0], [0], [0, 0, 1, 0], [], []>} : vector<16x8xf32>, vector<16x8xf32>, vector<16x16xf32> -> vector<16x16xf32>
    %618 = arith.addf %617, %92 : vector<16x16xf32>
    %cst_274 = arith.constant dense<0xFF800000> : vector<16xf32>
    %619 = vector.multi_reduction <maximumf>, %618, %cst_274 [1] : vector<16x16xf32> to vector<16xf32>
    %620 = vector.shape_cast %619 : vector<16xf32> to vector<16x1xf32>
    %621 = vector.broadcast %620 : vector<16x1xf32> to vector<16x16xf32>
    %622 = arith.subf %618, %621 : vector<16x16xf32>
    %623 = math.exp %622 : vector<16x16xf32>
    %cst_275 = arith.constant dense<0.000000e+00> : vector<16xf32>
    %624 = vector.multi_reduction <add>, %623, %cst_275 [1] : vector<16x16xf32> to vector<16xf32>
    %625 = vector.shape_cast %624 : vector<16xf32> to vector<16x1xf32>
    %626 = tpu.reciprocal %625 : vector<16x1xf32> -> vector<16x1xf32>
    %627 = vector.broadcast %626 : vector<16x1xf32> to vector<16x16xf32>
    %628 = arith.mulf %623, %627 : vector<16x16xf32>
    %629 = vector.extract_strided_slice %569 {offsets = [0, 16], sizes = [16, 8], strides = [1, 1]} : vector<16x32xf32> to vector<16x8xf32>
    %cst_276 = arith.constant dense<0.000000e+00> : vector<16x8xf32>
    %630 = tpu.matmul %628, %629, %cst_276 {dimension_numbers = #tpu.dot_dimension_numbers<[1], [0], [0], [1], [0, 0, 1, 1], [], []>} : vector<16x16xf32>, vector<16x8xf32>, vector<16x8xf32> -> vector<16x8xf32>
    %631 = vector.extract_strided_slice %573 {offsets = [16, 0], sizes = [8, 32], strides = [1, 1]} : vector<32x32xf32> to vector<8x32xf32>
    %cst_277 = arith.constant dense<0.000000e+00> : vector<16x32xf32>
    %632 = tpu.matmul %630, %631, %cst_277 {dimension_numbers = #tpu.dot_dimension_numbers<[1], [0], [0], [1], [0, 0, 1, 1], [], []>} : vector<16x8xf32>, vector<8x32xf32>, vector<16x32xf32> -> vector<16x32xf32>
    %633 = arith.addf %614, %632 : vector<16x32xf32>
    %634 = vector.extract_strided_slice %570 {offsets = [0, 24], sizes = [16, 8], strides = [1, 1]} : vector<16x32xf32> to vector<16x8xf32>
    %635 = vector.extract_strided_slice %571 {offsets = [0, 24], sizes = [16, 8], strides = [1, 1]} : vector<16x32xf32> to vector<16x8xf32>
    %cst_278 = arith.constant dense<0.000000e+00> : vector<16x16xf32>
    %636 = tpu.matmul %634, %635, %cst_278 {dimension_numbers = #tpu.dot_dimension_numbers<[1], [1], [0], [0], [0, 0, 1, 0], [], []>} : vector<16x8xf32>, vector<16x8xf32>, vector<16x16xf32> -> vector<16x16xf32>
    %637 = arith.addf %636, %92 : vector<16x16xf32>
    %cst_279 = arith.constant dense<0xFF800000> : vector<16xf32>
    %638 = vector.multi_reduction <maximumf>, %637, %cst_279 [1] : vector<16x16xf32> to vector<16xf32>
    %639 = vector.shape_cast %638 : vector<16xf32> to vector<16x1xf32>
    %640 = vector.broadcast %639 : vector<16x1xf32> to vector<16x16xf32>
    %641 = arith.subf %637, %640 : vector<16x16xf32>
    %642 = math.exp %641 : vector<16x16xf32>
    %cst_280 = arith.constant dense<0.000000e+00> : vector<16xf32>
    %643 = vector.multi_reduction <add>, %642, %cst_280 [1] : vector<16x16xf32> to vector<16xf32>
    %644 = vector.shape_cast %643 : vector<16xf32> to vector<16x1xf32>
    %645 = tpu.reciprocal %644 : vector<16x1xf32> -> vector<16x1xf32>
    %646 = vector.broadcast %645 : vector<16x1xf32> to vector<16x16xf32>
    %647 = arith.mulf %642, %646 : vector<16x16xf32>
    %648 = vector.extract_strided_slice %569 {offsets = [0, 24], sizes = [16, 8], strides = [1, 1]} : vector<16x32xf32> to vector<16x8xf32>
    %cst_281 = arith.constant dense<0.000000e+00> : vector<16x8xf32>
    %649 = tpu.matmul %647, %648, %cst_281 {dimension_numbers = #tpu.dot_dimension_numbers<[1], [0], [0], [1], [0, 0, 1, 1], [], []>} : vector<16x16xf32>, vector<16x8xf32>, vector<16x8xf32> -> vector<16x8xf32>
    %650 = vector.extract_strided_slice %573 {offsets = [24, 0], sizes = [8, 32], strides = [1, 1]} : vector<32x32xf32> to vector<8x32xf32>
    %cst_282 = arith.constant dense<0.000000e+00> : vector<16x32xf32>
    %651 = tpu.matmul %649, %650, %cst_282 {dimension_numbers = #tpu.dot_dimension_numbers<[1], [0], [0], [1], [0, 0, 1, 1], [], []>} : vector<16x8xf32>, vector<8x32xf32>, vector<16x32xf32> -> vector<16x32xf32>
    %652 = arith.addf %633, %651 : vector<16x32xf32>
    %653 = vector.broadcast %575 : vector<1x32xf32> to vector<16x32xf32>
    %654 = arith.addf %652, %653 : vector<16x32xf32>
    %655 = arith.addf %146, %654 : vector<16x32xf32>
    %c24 = arith.constant 24 : index
    %c0_283 = arith.constant 0 : index
    %c0_284 = arith.constant 0 : index
    %656 = vector.load %arg6[%c24, %c0_283, %c0_284] : memref<42x1x32xf32, #tpu.memory_space<vmem>>, vector<1x1x32xf32>
    %657 = vector.shape_cast %656 : vector<1x1x32xf32> to vector<1x32xf32>
    %c25 = arith.constant 25 : index
    %c0_285 = arith.constant 0 : index
    %c0_286 = arith.constant 0 : index
    %658 = vector.load %arg6[%c25, %c0_285, %c0_286] : memref<42x1x32xf32, #tpu.memory_space<vmem>>, vector<1x1x32xf32>
    %659 = vector.shape_cast %658 : vector<1x1x32xf32> to vector<1x32xf32>
    %cst_287 = arith.constant dense<0.000000e+00> : vector<16xf32>
    %660 = vector.multi_reduction <add>, %655, %cst_287 [1] : vector<16x32xf32> to vector<16xf32>
    %661 = vector.shape_cast %660 : vector<16xf32> to vector<16x1xf32>
    %cst_288 = arith.constant 3.200000e+01 : f32
    %662 = vector.broadcast %cst_288 : f32 to vector<16x1xf32>
    %663 = arith.divf %661, %662 : vector<16x1xf32>
    %664 = vector.broadcast %663 : vector<16x1xf32> to vector<16x32xf32>
    %665 = arith.subf %655, %664 : vector<16x32xf32>
    %666 = arith.mulf %665, %665 : vector<16x32xf32>
    %cst_289 = arith.constant dense<0.000000e+00> : vector<16xf32>
    %667 = vector.multi_reduction <add>, %666, %cst_289 [1] : vector<16x32xf32> to vector<16xf32>
    %668 = vector.shape_cast %667 : vector<16xf32> to vector<16x1xf32>
    %cst_290 = arith.constant 3.200000e+01 : f32
    %669 = vector.broadcast %cst_290 : f32 to vector<16x1xf32>
    %670 = arith.divf %668, %669 : vector<16x1xf32>
    %671 = vector.broadcast %663 : vector<16x1xf32> to vector<16x32xf32>
    %672 = arith.subf %655, %671 : vector<16x32xf32>
    %cst_291 = arith.constant 9.99999974E-6 : f32
    %673 = vector.broadcast %cst_291 : f32 to vector<16x1xf32>
    %674 = arith.addf %670, %673 : vector<16x1xf32>
    %675 = math.rsqrt %674 : vector<16x1xf32>
    %676 = vector.broadcast %675 : vector<16x1xf32> to vector<16x32xf32>
    %677 = arith.mulf %672, %676 : vector<16x32xf32>
    %678 = vector.broadcast %657 : vector<1x32xf32> to vector<16x32xf32>
    %679 = arith.mulf %677, %678 : vector<16x32xf32>
    %680 = vector.broadcast %659 : vector<1x32xf32> to vector<16x32xf32>
    %681 = arith.addf %679, %680 : vector<16x32xf32>
    %682 = arith.addf %681, %4 : vector<16x32xf32>
    %c8_292 = arith.constant 8 : index
    %c0_293 = arith.constant 0 : index
    %c0_294 = arith.constant 0 : index
    %683 = vector.load %arg5[%c8_292, %c0_293, %c0_294] : memref<14x32x32xf32, #tpu.memory_space<vmem>>, vector<1x32x32xf32>
    %684 = vector.shape_cast %683 : vector<1x32x32xf32> to vector<32x32xf32>
    %cst_295 = arith.constant dense<0.000000e+00> : vector<16x32xf32>
    %685 = tpu.matmul %682, %684, %cst_295 {dimension_numbers = #tpu.dot_dimension_numbers<[1], [0], [0], [1], [0, 0, 1, 1], [], []>} : vector<16x32xf32>, vector<32x32xf32>, vector<16x32xf32> -> vector<16x32xf32>
    %c20 = arith.constant 20 : index
    %c0_296 = arith.constant 0 : index
    %c0_297 = arith.constant 0 : index
    %686 = vector.load %arg6[%c20, %c0_296, %c0_297] : memref<42x1x32xf32, #tpu.memory_space<vmem>>, vector<1x1x32xf32>
    %687 = vector.shape_cast %686 : vector<1x1x32xf32> to vector<1x32xf32>
    %688 = vector.broadcast %687 : vector<1x32xf32> to vector<16x32xf32>
    %689 = arith.addf %685, %688 : vector<16x32xf32>
    %690 = vector.extract_strided_slice %521 {offsets = [0, 0], sizes = [18, 32], strides = [1, 1]} : vector<18x64xf32> to vector<18x32xf32>
    %691 = vector.extract_strided_slice %528 {offsets = [0, 0], sizes = [18, 32], strides = [1, 1]} : vector<18x64xf32> to vector<18x32xf32>
    %c9_298 = arith.constant 9 : index
    %c0_299 = arith.constant 0 : index
    %c0_300 = arith.constant 0 : index
    %692 = vector.load %arg5[%c9_298, %c0_299, %c0_300] : memref<14x32x32xf32, #tpu.memory_space<vmem>>, vector<1x32x32xf32>
    %693 = vector.shape_cast %692 : vector<1x32x32xf32> to vector<32x32xf32>
    %c21 = arith.constant 21 : index
    %c0_301 = arith.constant 0 : index
    %c0_302 = arith.constant 0 : index
    %694 = vector.load %arg6[%c21, %c0_301, %c0_302] : memref<42x1x32xf32, #tpu.memory_space<vmem>>, vector<1x1x32xf32>
    %695 = vector.shape_cast %694 : vector<1x1x32xf32> to vector<1x32xf32>
    %cst_303 = arith.constant 0.000000e+00 : f32
    %696 = vector.broadcast %cst_303 : f32 to vector<16x32xf32>
    %697 = vector.extract_strided_slice %689 {offsets = [0, 0], sizes = [16, 8], strides = [1, 1]} : vector<16x32xf32> to vector<16x8xf32>
    %698 = vector.extract_strided_slice %690 {offsets = [0, 0], sizes = [18, 8], strides = [1, 1]} : vector<18x32xf32> to vector<18x8xf32>
    %cst_304 = arith.constant dense<0.000000e+00> : vector<16x18xf32>
    %699 = tpu.matmul %697, %698, %cst_304 {dimension_numbers = #tpu.dot_dimension_numbers<[1], [1], [0], [0], [0, 0, 1, 0], [], []>} : vector<16x8xf32>, vector<18x8xf32>, vector<16x18xf32> -> vector<16x18xf32>
    %700 = arith.addf %699, %136 : vector<16x18xf32>
    %cst_305 = arith.constant dense<0xFF800000> : vector<16xf32>
    %701 = vector.multi_reduction <maximumf>, %700, %cst_305 [1] : vector<16x18xf32> to vector<16xf32>
    %702 = vector.shape_cast %701 : vector<16xf32> to vector<16x1xf32>
    %703 = vector.broadcast %702 : vector<16x1xf32> to vector<16x18xf32>
    %704 = arith.subf %700, %703 : vector<16x18xf32>
    %705 = math.exp %704 : vector<16x18xf32>
    %cst_306 = arith.constant dense<0.000000e+00> : vector<16xf32>
    %706 = vector.multi_reduction <add>, %705, %cst_306 [1] : vector<16x18xf32> to vector<16xf32>
    %707 = vector.shape_cast %706 : vector<16xf32> to vector<16x1xf32>
    %708 = tpu.reciprocal %707 : vector<16x1xf32> -> vector<16x1xf32>
    %709 = vector.broadcast %708 : vector<16x1xf32> to vector<16x18xf32>
    %710 = arith.mulf %705, %709 : vector<16x18xf32>
    %711 = vector.extract_strided_slice %691 {offsets = [0, 0], sizes = [18, 8], strides = [1, 1]} : vector<18x32xf32> to vector<18x8xf32>
    %cst_307 = arith.constant dense<0.000000e+00> : vector<16x8xf32>
    %712 = tpu.matmul %710, %711, %cst_307 {dimension_numbers = #tpu.dot_dimension_numbers<[1], [0], [0], [1], [0, 0, 1, 1], [], []>} : vector<16x18xf32>, vector<18x8xf32>, vector<16x8xf32> -> vector<16x8xf32>
    %713 = vector.extract_strided_slice %693 {offsets = [0, 0], sizes = [8, 32], strides = [1, 1]} : vector<32x32xf32> to vector<8x32xf32>
    %cst_308 = arith.constant dense<0.000000e+00> : vector<16x32xf32>
    %714 = tpu.matmul %712, %713, %cst_308 {dimension_numbers = #tpu.dot_dimension_numbers<[1], [0], [0], [1], [0, 0, 1, 1], [], []>} : vector<16x8xf32>, vector<8x32xf32>, vector<16x32xf32> -> vector<16x32xf32>
    %715 = arith.addf %696, %714 : vector<16x32xf32>
    %716 = vector.extract_strided_slice %689 {offsets = [0, 8], sizes = [16, 8], strides = [1, 1]} : vector<16x32xf32> to vector<16x8xf32>
    %717 = vector.extract_strided_slice %690 {offsets = [0, 8], sizes = [18, 8], strides = [1, 1]} : vector<18x32xf32> to vector<18x8xf32>
    %cst_309 = arith.constant dense<0.000000e+00> : vector<16x18xf32>
    %718 = tpu.matmul %716, %717, %cst_309 {dimension_numbers = #tpu.dot_dimension_numbers<[1], [1], [0], [0], [0, 0, 1, 0], [], []>} : vector<16x8xf32>, vector<18x8xf32>, vector<16x18xf32> -> vector<16x18xf32>
    %719 = arith.addf %718, %136 : vector<16x18xf32>
    %cst_310 = arith.constant dense<0xFF800000> : vector<16xf32>
    %720 = vector.multi_reduction <maximumf>, %719, %cst_310 [1] : vector<16x18xf32> to vector<16xf32>
    %721 = vector.shape_cast %720 : vector<16xf32> to vector<16x1xf32>
    %722 = vector.broadcast %721 : vector<16x1xf32> to vector<16x18xf32>
    %723 = arith.subf %719, %722 : vector<16x18xf32>
    %724 = math.exp %723 : vector<16x18xf32>
    %cst_311 = arith.constant dense<0.000000e+00> : vector<16xf32>
    %725 = vector.multi_reduction <add>, %724, %cst_311 [1] : vector<16x18xf32> to vector<16xf32>
    %726 = vector.shape_cast %725 : vector<16xf32> to vector<16x1xf32>
    %727 = tpu.reciprocal %726 : vector<16x1xf32> -> vector<16x1xf32>
    %728 = vector.broadcast %727 : vector<16x1xf32> to vector<16x18xf32>
    %729 = arith.mulf %724, %728 : vector<16x18xf32>
    %730 = vector.extract_strided_slice %691 {offsets = [0, 8], sizes = [18, 8], strides = [1, 1]} : vector<18x32xf32> to vector<18x8xf32>
    %cst_312 = arith.constant dense<0.000000e+00> : vector<16x8xf32>
    %731 = tpu.matmul %729, %730, %cst_312 {dimension_numbers = #tpu.dot_dimension_numbers<[1], [0], [0], [1], [0, 0, 1, 1], [], []>} : vector<16x18xf32>, vector<18x8xf32>, vector<16x8xf32> -> vector<16x8xf32>
    %732 = vector.extract_strided_slice %693 {offsets = [8, 0], sizes = [8, 32], strides = [1, 1]} : vector<32x32xf32> to vector<8x32xf32>
    %cst_313 = arith.constant dense<0.000000e+00> : vector<16x32xf32>
    %733 = tpu.matmul %731, %732, %cst_313 {dimension_numbers = #tpu.dot_dimension_numbers<[1], [0], [0], [1], [0, 0, 1, 1], [], []>} : vector<16x8xf32>, vector<8x32xf32>, vector<16x32xf32> -> vector<16x32xf32>
    %734 = arith.addf %715, %733 : vector<16x32xf32>
    %735 = vector.extract_strided_slice %689 {offsets = [0, 16], sizes = [16, 8], strides = [1, 1]} : vector<16x32xf32> to vector<16x8xf32>
    %736 = vector.extract_strided_slice %690 {offsets = [0, 16], sizes = [18, 8], strides = [1, 1]} : vector<18x32xf32> to vector<18x8xf32>
    %cst_314 = arith.constant dense<0.000000e+00> : vector<16x18xf32>
    %737 = tpu.matmul %735, %736, %cst_314 {dimension_numbers = #tpu.dot_dimension_numbers<[1], [1], [0], [0], [0, 0, 1, 0], [], []>} : vector<16x8xf32>, vector<18x8xf32>, vector<16x18xf32> -> vector<16x18xf32>
    %738 = arith.addf %737, %136 : vector<16x18xf32>
    %cst_315 = arith.constant dense<0xFF800000> : vector<16xf32>
    %739 = vector.multi_reduction <maximumf>, %738, %cst_315 [1] : vector<16x18xf32> to vector<16xf32>
    %740 = vector.shape_cast %739 : vector<16xf32> to vector<16x1xf32>
    %741 = vector.broadcast %740 : vector<16x1xf32> to vector<16x18xf32>
    %742 = arith.subf %738, %741 : vector<16x18xf32>
    %743 = math.exp %742 : vector<16x18xf32>
    %cst_316 = arith.constant dense<0.000000e+00> : vector<16xf32>
    %744 = vector.multi_reduction <add>, %743, %cst_316 [1] : vector<16x18xf32> to vector<16xf32>
    %745 = vector.shape_cast %744 : vector<16xf32> to vector<16x1xf32>
    %746 = tpu.reciprocal %745 : vector<16x1xf32> -> vector<16x1xf32>
    %747 = vector.broadcast %746 : vector<16x1xf32> to vector<16x18xf32>
    %748 = arith.mulf %743, %747 : vector<16x18xf32>
    %749 = vector.extract_strided_slice %691 {offsets = [0, 16], sizes = [18, 8], strides = [1, 1]} : vector<18x32xf32> to vector<18x8xf32>
    %cst_317 = arith.constant dense<0.000000e+00> : vector<16x8xf32>
    %750 = tpu.matmul %748, %749, %cst_317 {dimension_numbers = #tpu.dot_dimension_numbers<[1], [0], [0], [1], [0, 0, 1, 1], [], []>} : vector<16x18xf32>, vector<18x8xf32>, vector<16x8xf32> -> vector<16x8xf32>
    %751 = vector.extract_strided_slice %693 {offsets = [16, 0], sizes = [8, 32], strides = [1, 1]} : vector<32x32xf32> to vector<8x32xf32>
    %cst_318 = arith.constant dense<0.000000e+00> : vector<16x32xf32>
    %752 = tpu.matmul %750, %751, %cst_318 {dimension_numbers = #tpu.dot_dimension_numbers<[1], [0], [0], [1], [0, 0, 1, 1], [], []>} : vector<16x8xf32>, vector<8x32xf32>, vector<16x32xf32> -> vector<16x32xf32>
    %753 = arith.addf %734, %752 : vector<16x32xf32>
    %754 = vector.extract_strided_slice %689 {offsets = [0, 24], sizes = [16, 8], strides = [1, 1]} : vector<16x32xf32> to vector<16x8xf32>
    %755 = vector.extract_strided_slice %690 {offsets = [0, 24], sizes = [18, 8], strides = [1, 1]} : vector<18x32xf32> to vector<18x8xf32>
    %cst_319 = arith.constant dense<0.000000e+00> : vector<16x18xf32>
    %756 = tpu.matmul %754, %755, %cst_319 {dimension_numbers = #tpu.dot_dimension_numbers<[1], [1], [0], [0], [0, 0, 1, 0], [], []>} : vector<16x8xf32>, vector<18x8xf32>, vector<16x18xf32> -> vector<16x18xf32>
    %757 = arith.addf %756, %136 : vector<16x18xf32>
    %cst_320 = arith.constant dense<0xFF800000> : vector<16xf32>
    %758 = vector.multi_reduction <maximumf>, %757, %cst_320 [1] : vector<16x18xf32> to vector<16xf32>
    %759 = vector.shape_cast %758 : vector<16xf32> to vector<16x1xf32>
    %760 = vector.broadcast %759 : vector<16x1xf32> to vector<16x18xf32>
    %761 = arith.subf %757, %760 : vector<16x18xf32>
    %762 = math.exp %761 : vector<16x18xf32>
    %cst_321 = arith.constant dense<0.000000e+00> : vector<16xf32>
    %763 = vector.multi_reduction <add>, %762, %cst_321 [1] : vector<16x18xf32> to vector<16xf32>
    %764 = vector.shape_cast %763 : vector<16xf32> to vector<16x1xf32>
    %765 = tpu.reciprocal %764 : vector<16x1xf32> -> vector<16x1xf32>
    %766 = vector.broadcast %765 : vector<16x1xf32> to vector<16x18xf32>
    %767 = arith.mulf %762, %766 : vector<16x18xf32>
    %768 = vector.extract_strided_slice %691 {offsets = [0, 24], sizes = [18, 8], strides = [1, 1]} : vector<18x32xf32> to vector<18x8xf32>
    %cst_322 = arith.constant dense<0.000000e+00> : vector<16x8xf32>
    %769 = tpu.matmul %767, %768, %cst_322 {dimension_numbers = #tpu.dot_dimension_numbers<[1], [0], [0], [1], [0, 0, 1, 1], [], []>} : vector<16x18xf32>, vector<18x8xf32>, vector<16x8xf32> -> vector<16x8xf32>
    %770 = vector.extract_strided_slice %693 {offsets = [24, 0], sizes = [8, 32], strides = [1, 1]} : vector<32x32xf32> to vector<8x32xf32>
    %cst_323 = arith.constant dense<0.000000e+00> : vector<16x32xf32>
    %771 = tpu.matmul %769, %770, %cst_323 {dimension_numbers = #tpu.dot_dimension_numbers<[1], [0], [0], [1], [0, 0, 1, 1], [], []>} : vector<16x8xf32>, vector<8x32xf32>, vector<16x32xf32> -> vector<16x32xf32>
    %772 = arith.addf %753, %771 : vector<16x32xf32>
    %773 = vector.broadcast %695 : vector<1x32xf32> to vector<16x32xf32>
    %774 = arith.addf %772, %773 : vector<16x32xf32>
    %775 = arith.addf %655, %774 : vector<16x32xf32>
    %c26 = arith.constant 26 : index
    %c0_324 = arith.constant 0 : index
    %c0_325 = arith.constant 0 : index
    %776 = vector.load %arg6[%c26, %c0_324, %c0_325] : memref<42x1x32xf32, #tpu.memory_space<vmem>>, vector<1x1x32xf32>
    %777 = vector.shape_cast %776 : vector<1x1x32xf32> to vector<1x32xf32>
    %c27 = arith.constant 27 : index
    %c0_326 = arith.constant 0 : index
    %c0_327 = arith.constant 0 : index
    %778 = vector.load %arg6[%c27, %c0_326, %c0_327] : memref<42x1x32xf32, #tpu.memory_space<vmem>>, vector<1x1x32xf32>
    %779 = vector.shape_cast %778 : vector<1x1x32xf32> to vector<1x32xf32>
    %cst_328 = arith.constant dense<0.000000e+00> : vector<16xf32>
    %780 = vector.multi_reduction <add>, %775, %cst_328 [1] : vector<16x32xf32> to vector<16xf32>
    %781 = vector.shape_cast %780 : vector<16xf32> to vector<16x1xf32>
    %cst_329 = arith.constant 3.200000e+01 : f32
    %782 = vector.broadcast %cst_329 : f32 to vector<16x1xf32>
    %783 = arith.divf %781, %782 : vector<16x1xf32>
    %784 = vector.broadcast %783 : vector<16x1xf32> to vector<16x32xf32>
    %785 = arith.subf %775, %784 : vector<16x32xf32>
    %786 = arith.mulf %785, %785 : vector<16x32xf32>
    %cst_330 = arith.constant dense<0.000000e+00> : vector<16xf32>
    %787 = vector.multi_reduction <add>, %786, %cst_330 [1] : vector<16x32xf32> to vector<16xf32>
    %788 = vector.shape_cast %787 : vector<16xf32> to vector<16x1xf32>
    %cst_331 = arith.constant 3.200000e+01 : f32
    %789 = vector.broadcast %cst_331 : f32 to vector<16x1xf32>
    %790 = arith.divf %788, %789 : vector<16x1xf32>
    %791 = vector.broadcast %783 : vector<16x1xf32> to vector<16x32xf32>
    %792 = arith.subf %775, %791 : vector<16x32xf32>
    %cst_332 = arith.constant 9.99999974E-6 : f32
    %793 = vector.broadcast %cst_332 : f32 to vector<16x1xf32>
    %794 = arith.addf %790, %793 : vector<16x1xf32>
    %795 = math.rsqrt %794 : vector<16x1xf32>
    %796 = vector.broadcast %795 : vector<16x1xf32> to vector<16x32xf32>
    %797 = arith.mulf %792, %796 : vector<16x32xf32>
    %798 = vector.broadcast %777 : vector<1x32xf32> to vector<16x32xf32>
    %799 = arith.mulf %797, %798 : vector<16x32xf32>
    %800 = vector.broadcast %779 : vector<1x32xf32> to vector<16x32xf32>
    %801 = arith.addf %799, %800 : vector<16x32xf32>
    %c5_333 = arith.constant 5 : index
    %c0_334 = arith.constant 0 : index
    %c0_335 = arith.constant 0 : index
    %802 = vector.load %arg7[%c5_333, %c0_334, %c0_335] : memref<10x32x64xf32, #tpu.memory_space<vmem>>, vector<1x32x64xf32>
    %803 = vector.shape_cast %802 : vector<1x32x64xf32> to vector<32x64xf32>
    %cst_336 = arith.constant dense<0.000000e+00> : vector<16x64xf32>
    %804 = tpu.matmul %801, %803, %cst_336 {dimension_numbers = #tpu.dot_dimension_numbers<[1], [0], [0], [1], [0, 0, 1, 1], [], []>} : vector<16x32xf32>, vector<32x64xf32>, vector<16x64xf32> -> vector<16x64xf32>
    %c5_337 = arith.constant 5 : index
    %c0_338 = arith.constant 0 : index
    %c0_339 = arith.constant 0 : index
    %805 = vector.load %arg8[%c5_337, %c0_338, %c0_339] : memref<10x1x64xf32, #tpu.memory_space<vmem>>, vector<1x1x64xf32>
    %806 = vector.shape_cast %805 : vector<1x1x64xf32> to vector<1x64xf32>
    %807 = vector.broadcast %806 : vector<1x64xf32> to vector<16x64xf32>
    %808 = arith.addf %804, %807 : vector<16x64xf32>
    %cst_340 = arith.constant 0.000000e+00 : f32
    %809 = vector.broadcast %cst_340 : f32 to vector<16x64xf32>
    %810 = arith.maximumf %808, %809 : vector<16x64xf32>
    %c2_341 = arith.constant 2 : index
    %c0_342 = arith.constant 0 : index
    %c0_343 = arith.constant 0 : index
    %811 = vector.load %arg9[%c2_341, %c0_342, %c0_343] : memref<4x64x32xf32, #tpu.memory_space<vmem>>, vector<1x64x32xf32>
    %812 = vector.shape_cast %811 : vector<1x64x32xf32> to vector<64x32xf32>
    %cst_344 = arith.constant dense<0.000000e+00> : vector<16x32xf32>
    %813 = tpu.matmul %810, %812, %cst_344 {dimension_numbers = #tpu.dot_dimension_numbers<[1], [0], [0], [1], [0, 0, 1, 1], [], []>} : vector<16x64xf32>, vector<64x32xf32>, vector<16x32xf32> -> vector<16x32xf32>
    %814 = arith.addf %775, %813 : vector<16x32xf32>
    %c28 = arith.constant 28 : index
    %c0_345 = arith.constant 0 : index
    %c0_346 = arith.constant 0 : index
    %815 = vector.load %arg6[%c28, %c0_345, %c0_346] : memref<42x1x32xf32, #tpu.memory_space<vmem>>, vector<1x1x32xf32>
    %816 = vector.shape_cast %815 : vector<1x1x32xf32> to vector<1x32xf32>
    %817 = vector.broadcast %816 : vector<1x32xf32> to vector<16x32xf32>
    %818 = arith.addf %814, %817 : vector<16x32xf32>
    %c33 = arith.constant 33 : index
    %c0_347 = arith.constant 0 : index
    %c0_348 = arith.constant 0 : index
    %819 = vector.load %arg6[%c33, %c0_347, %c0_348] : memref<42x1x32xf32, #tpu.memory_space<vmem>>, vector<1x1x32xf32>
    %820 = vector.shape_cast %819 : vector<1x1x32xf32> to vector<1x32xf32>
    %c34 = arith.constant 34 : index
    %c0_349 = arith.constant 0 : index
    %c0_350 = arith.constant 0 : index
    %821 = vector.load %arg6[%c34, %c0_349, %c0_350] : memref<42x1x32xf32, #tpu.memory_space<vmem>>, vector<1x1x32xf32>
    %822 = vector.shape_cast %821 : vector<1x1x32xf32> to vector<1x32xf32>
    %cst_351 = arith.constant dense<0.000000e+00> : vector<16xf32>
    %823 = vector.multi_reduction <add>, %818, %cst_351 [1] : vector<16x32xf32> to vector<16xf32>
    %824 = vector.shape_cast %823 : vector<16xf32> to vector<16x1xf32>
    %cst_352 = arith.constant 3.200000e+01 : f32
    %825 = vector.broadcast %cst_352 : f32 to vector<16x1xf32>
    %826 = arith.divf %824, %825 : vector<16x1xf32>
    %827 = vector.broadcast %826 : vector<16x1xf32> to vector<16x32xf32>
    %828 = arith.subf %818, %827 : vector<16x32xf32>
    %829 = arith.mulf %828, %828 : vector<16x32xf32>
    %cst_353 = arith.constant dense<0.000000e+00> : vector<16xf32>
    %830 = vector.multi_reduction <add>, %829, %cst_353 [1] : vector<16x32xf32> to vector<16xf32>
    %831 = vector.shape_cast %830 : vector<16xf32> to vector<16x1xf32>
    %cst_354 = arith.constant 3.200000e+01 : f32
    %832 = vector.broadcast %cst_354 : f32 to vector<16x1xf32>
    %833 = arith.divf %831, %832 : vector<16x1xf32>
    %834 = vector.broadcast %826 : vector<16x1xf32> to vector<16x32xf32>
    %835 = arith.subf %818, %834 : vector<16x32xf32>
    %cst_355 = arith.constant 9.99999974E-6 : f32
    %836 = vector.broadcast %cst_355 : f32 to vector<16x1xf32>
    %837 = arith.addf %833, %836 : vector<16x1xf32>
    %838 = math.rsqrt %837 : vector<16x1xf32>
    %839 = vector.broadcast %838 : vector<16x1xf32> to vector<16x32xf32>
    %840 = arith.mulf %835, %839 : vector<16x32xf32>
    %841 = vector.broadcast %820 : vector<1x32xf32> to vector<16x32xf32>
    %842 = arith.mulf %840, %841 : vector<16x32xf32>
    %843 = vector.broadcast %822 : vector<1x32xf32> to vector<16x32xf32>
    %844 = arith.addf %842, %843 : vector<16x32xf32>
    %845 = arith.addf %844, %4 : vector<16x32xf32>
    %c6_356 = arith.constant 6 : index
    %c0_357 = arith.constant 0 : index
    %c0_358 = arith.constant 0 : index
    %846 = vector.load %arg7[%c6_356, %c0_357, %c0_358] : memref<10x32x64xf32, #tpu.memory_space<vmem>>, vector<1x32x64xf32>
    %847 = vector.shape_cast %846 : vector<1x32x64xf32> to vector<32x64xf32>
    %cst_359 = arith.constant dense<0.000000e+00> : vector<16x64xf32>
    %848 = tpu.matmul %845, %847, %cst_359 {dimension_numbers = #tpu.dot_dimension_numbers<[1], [0], [0], [1], [0, 0, 1, 1], [], []>} : vector<16x32xf32>, vector<32x64xf32>, vector<16x64xf32> -> vector<16x64xf32>
    %c6_360 = arith.constant 6 : index
    %c0_361 = arith.constant 0 : index
    %c0_362 = arith.constant 0 : index
    %849 = vector.load %arg8[%c6_360, %c0_361, %c0_362] : memref<10x1x64xf32, #tpu.memory_space<vmem>>, vector<1x1x64xf32>
    %850 = vector.shape_cast %849 : vector<1x1x64xf32> to vector<1x64xf32>
    %851 = vector.broadcast %850 : vector<1x64xf32> to vector<16x64xf32>
    %852 = arith.addf %848, %851 : vector<16x64xf32>
    %c10_363 = arith.constant 10 : index
    %c0_364 = arith.constant 0 : index
    %c0_365 = arith.constant 0 : index
    %853 = vector.load %arg5[%c10_363, %c0_364, %c0_365] : memref<14x32x32xf32, #tpu.memory_space<vmem>>, vector<1x32x32xf32>
    %854 = vector.shape_cast %853 : vector<1x32x32xf32> to vector<32x32xf32>
    %cst_366 = arith.constant dense<0.000000e+00> : vector<16x32xf32>
    %855 = tpu.matmul %844, %854, %cst_366 {dimension_numbers = #tpu.dot_dimension_numbers<[1], [0], [0], [1], [0, 0, 1, 1], [], []>} : vector<16x32xf32>, vector<32x32xf32>, vector<16x32xf32> -> vector<16x32xf32>
    %c29 = arith.constant 29 : index
    %c0_367 = arith.constant 0 : index
    %c0_368 = arith.constant 0 : index
    %856 = vector.load %arg6[%c29, %c0_367, %c0_368] : memref<42x1x32xf32, #tpu.memory_space<vmem>>, vector<1x1x32xf32>
    %857 = vector.shape_cast %856 : vector<1x1x32xf32> to vector<1x32xf32>
    %858 = vector.broadcast %857 : vector<1x32xf32> to vector<16x32xf32>
    %859 = arith.addf %855, %858 : vector<16x32xf32>
    %860 = vector.extract_strided_slice %852 {offsets = [0, 0], sizes = [16, 32], strides = [1, 1]} : vector<16x64xf32> to vector<16x32xf32>
    %861 = vector.extract_strided_slice %852 {offsets = [0, 32], sizes = [16, 32], strides = [1, 1]} : vector<16x64xf32> to vector<16x32xf32>
    %c11_369 = arith.constant 11 : index
    %c0_370 = arith.constant 0 : index
    %c0_371 = arith.constant 0 : index
    %862 = vector.load %arg5[%c11_369, %c0_370, %c0_371] : memref<14x32x32xf32, #tpu.memory_space<vmem>>, vector<1x32x32xf32>
    %863 = vector.shape_cast %862 : vector<1x32x32xf32> to vector<32x32xf32>
    %c30 = arith.constant 30 : index
    %c0_372 = arith.constant 0 : index
    %c0_373 = arith.constant 0 : index
    %864 = vector.load %arg6[%c30, %c0_372, %c0_373] : memref<42x1x32xf32, #tpu.memory_space<vmem>>, vector<1x1x32xf32>
    %865 = vector.shape_cast %864 : vector<1x1x32xf32> to vector<1x32xf32>
    %cst_374 = arith.constant 0.000000e+00 : f32
    %866 = vector.broadcast %cst_374 : f32 to vector<16x32xf32>
    %867 = vector.extract_strided_slice %860 {offsets = [0, 0], sizes = [16, 8], strides = [1, 1]} : vector<16x32xf32> to vector<16x8xf32>
    %868 = vector.extract_strided_slice %861 {offsets = [0, 0], sizes = [16, 8], strides = [1, 1]} : vector<16x32xf32> to vector<16x8xf32>
    %cst_375 = arith.constant dense<0.000000e+00> : vector<16x16xf32>
    %869 = tpu.matmul %867, %868, %cst_375 {dimension_numbers = #tpu.dot_dimension_numbers<[1], [1], [0], [0], [0, 0, 1, 0], [], []>} : vector<16x8xf32>, vector<16x8xf32>, vector<16x16xf32> -> vector<16x16xf32>
    %870 = arith.addf %869, %92 : vector<16x16xf32>
    %cst_376 = arith.constant dense<0xFF800000> : vector<16xf32>
    %871 = vector.multi_reduction <maximumf>, %870, %cst_376 [1] : vector<16x16xf32> to vector<16xf32>
    %872 = vector.shape_cast %871 : vector<16xf32> to vector<16x1xf32>
    %873 = vector.broadcast %872 : vector<16x1xf32> to vector<16x16xf32>
    %874 = arith.subf %870, %873 : vector<16x16xf32>
    %875 = math.exp %874 : vector<16x16xf32>
    %cst_377 = arith.constant dense<0.000000e+00> : vector<16xf32>
    %876 = vector.multi_reduction <add>, %875, %cst_377 [1] : vector<16x16xf32> to vector<16xf32>
    %877 = vector.shape_cast %876 : vector<16xf32> to vector<16x1xf32>
    %878 = tpu.reciprocal %877 : vector<16x1xf32> -> vector<16x1xf32>
    %879 = vector.broadcast %878 : vector<16x1xf32> to vector<16x16xf32>
    %880 = arith.mulf %875, %879 : vector<16x16xf32>
    %881 = vector.extract_strided_slice %859 {offsets = [0, 0], sizes = [16, 8], strides = [1, 1]} : vector<16x32xf32> to vector<16x8xf32>
    %cst_378 = arith.constant dense<0.000000e+00> : vector<16x8xf32>
    %882 = tpu.matmul %880, %881, %cst_378 {dimension_numbers = #tpu.dot_dimension_numbers<[1], [0], [0], [1], [0, 0, 1, 1], [], []>} : vector<16x16xf32>, vector<16x8xf32>, vector<16x8xf32> -> vector<16x8xf32>
    %883 = vector.extract_strided_slice %863 {offsets = [0, 0], sizes = [8, 32], strides = [1, 1]} : vector<32x32xf32> to vector<8x32xf32>
    %cst_379 = arith.constant dense<0.000000e+00> : vector<16x32xf32>
    %884 = tpu.matmul %882, %883, %cst_379 {dimension_numbers = #tpu.dot_dimension_numbers<[1], [0], [0], [1], [0, 0, 1, 1], [], []>} : vector<16x8xf32>, vector<8x32xf32>, vector<16x32xf32> -> vector<16x32xf32>
    %885 = arith.addf %866, %884 : vector<16x32xf32>
    %886 = vector.extract_strided_slice %860 {offsets = [0, 8], sizes = [16, 8], strides = [1, 1]} : vector<16x32xf32> to vector<16x8xf32>
    %887 = vector.extract_strided_slice %861 {offsets = [0, 8], sizes = [16, 8], strides = [1, 1]} : vector<16x32xf32> to vector<16x8xf32>
    %cst_380 = arith.constant dense<0.000000e+00> : vector<16x16xf32>
    %888 = tpu.matmul %886, %887, %cst_380 {dimension_numbers = #tpu.dot_dimension_numbers<[1], [1], [0], [0], [0, 0, 1, 0], [], []>} : vector<16x8xf32>, vector<16x8xf32>, vector<16x16xf32> -> vector<16x16xf32>
    %889 = arith.addf %888, %92 : vector<16x16xf32>
    %cst_381 = arith.constant dense<0xFF800000> : vector<16xf32>
    %890 = vector.multi_reduction <maximumf>, %889, %cst_381 [1] : vector<16x16xf32> to vector<16xf32>
    %891 = vector.shape_cast %890 : vector<16xf32> to vector<16x1xf32>
    %892 = vector.broadcast %891 : vector<16x1xf32> to vector<16x16xf32>
    %893 = arith.subf %889, %892 : vector<16x16xf32>
    %894 = math.exp %893 : vector<16x16xf32>
    %cst_382 = arith.constant dense<0.000000e+00> : vector<16xf32>
    %895 = vector.multi_reduction <add>, %894, %cst_382 [1] : vector<16x16xf32> to vector<16xf32>
    %896 = vector.shape_cast %895 : vector<16xf32> to vector<16x1xf32>
    %897 = tpu.reciprocal %896 : vector<16x1xf32> -> vector<16x1xf32>
    %898 = vector.broadcast %897 : vector<16x1xf32> to vector<16x16xf32>
    %899 = arith.mulf %894, %898 : vector<16x16xf32>
    %900 = vector.extract_strided_slice %859 {offsets = [0, 8], sizes = [16, 8], strides = [1, 1]} : vector<16x32xf32> to vector<16x8xf32>
    %cst_383 = arith.constant dense<0.000000e+00> : vector<16x8xf32>
    %901 = tpu.matmul %899, %900, %cst_383 {dimension_numbers = #tpu.dot_dimension_numbers<[1], [0], [0], [1], [0, 0, 1, 1], [], []>} : vector<16x16xf32>, vector<16x8xf32>, vector<16x8xf32> -> vector<16x8xf32>
    %902 = vector.extract_strided_slice %863 {offsets = [8, 0], sizes = [8, 32], strides = [1, 1]} : vector<32x32xf32> to vector<8x32xf32>
    %cst_384 = arith.constant dense<0.000000e+00> : vector<16x32xf32>
    %903 = tpu.matmul %901, %902, %cst_384 {dimension_numbers = #tpu.dot_dimension_numbers<[1], [0], [0], [1], [0, 0, 1, 1], [], []>} : vector<16x8xf32>, vector<8x32xf32>, vector<16x32xf32> -> vector<16x32xf32>
    %904 = arith.addf %885, %903 : vector<16x32xf32>
    %905 = vector.extract_strided_slice %860 {offsets = [0, 16], sizes = [16, 8], strides = [1, 1]} : vector<16x32xf32> to vector<16x8xf32>
    %906 = vector.extract_strided_slice %861 {offsets = [0, 16], sizes = [16, 8], strides = [1, 1]} : vector<16x32xf32> to vector<16x8xf32>
    %cst_385 = arith.constant dense<0.000000e+00> : vector<16x16xf32>
    %907 = tpu.matmul %905, %906, %cst_385 {dimension_numbers = #tpu.dot_dimension_numbers<[1], [1], [0], [0], [0, 0, 1, 0], [], []>} : vector<16x8xf32>, vector<16x8xf32>, vector<16x16xf32> -> vector<16x16xf32>
    %908 = arith.addf %907, %92 : vector<16x16xf32>
    %cst_386 = arith.constant dense<0xFF800000> : vector<16xf32>
    %909 = vector.multi_reduction <maximumf>, %908, %cst_386 [1] : vector<16x16xf32> to vector<16xf32>
    %910 = vector.shape_cast %909 : vector<16xf32> to vector<16x1xf32>
    %911 = vector.broadcast %910 : vector<16x1xf32> to vector<16x16xf32>
    %912 = arith.subf %908, %911 : vector<16x16xf32>
    %913 = math.exp %912 : vector<16x16xf32>
    %cst_387 = arith.constant dense<0.000000e+00> : vector<16xf32>
    %914 = vector.multi_reduction <add>, %913, %cst_387 [1] : vector<16x16xf32> to vector<16xf32>
    %915 = vector.shape_cast %914 : vector<16xf32> to vector<16x1xf32>
    %916 = tpu.reciprocal %915 : vector<16x1xf32> -> vector<16x1xf32>
    %917 = vector.broadcast %916 : vector<16x1xf32> to vector<16x16xf32>
    %918 = arith.mulf %913, %917 : vector<16x16xf32>
    %919 = vector.extract_strided_slice %859 {offsets = [0, 16], sizes = [16, 8], strides = [1, 1]} : vector<16x32xf32> to vector<16x8xf32>
    %cst_388 = arith.constant dense<0.000000e+00> : vector<16x8xf32>
    %920 = tpu.matmul %918, %919, %cst_388 {dimension_numbers = #tpu.dot_dimension_numbers<[1], [0], [0], [1], [0, 0, 1, 1], [], []>} : vector<16x16xf32>, vector<16x8xf32>, vector<16x8xf32> -> vector<16x8xf32>
    %921 = vector.extract_strided_slice %863 {offsets = [16, 0], sizes = [8, 32], strides = [1, 1]} : vector<32x32xf32> to vector<8x32xf32>
    %cst_389 = arith.constant dense<0.000000e+00> : vector<16x32xf32>
    %922 = tpu.matmul %920, %921, %cst_389 {dimension_numbers = #tpu.dot_dimension_numbers<[1], [0], [0], [1], [0, 0, 1, 1], [], []>} : vector<16x8xf32>, vector<8x32xf32>, vector<16x32xf32> -> vector<16x32xf32>
    %923 = arith.addf %904, %922 : vector<16x32xf32>
    %924 = vector.extract_strided_slice %860 {offsets = [0, 24], sizes = [16, 8], strides = [1, 1]} : vector<16x32xf32> to vector<16x8xf32>
    %925 = vector.extract_strided_slice %861 {offsets = [0, 24], sizes = [16, 8], strides = [1, 1]} : vector<16x32xf32> to vector<16x8xf32>
    %cst_390 = arith.constant dense<0.000000e+00> : vector<16x16xf32>
    %926 = tpu.matmul %924, %925, %cst_390 {dimension_numbers = #tpu.dot_dimension_numbers<[1], [1], [0], [0], [0, 0, 1, 0], [], []>} : vector<16x8xf32>, vector<16x8xf32>, vector<16x16xf32> -> vector<16x16xf32>
    %927 = arith.addf %926, %92 : vector<16x16xf32>
    %cst_391 = arith.constant dense<0xFF800000> : vector<16xf32>
    %928 = vector.multi_reduction <maximumf>, %927, %cst_391 [1] : vector<16x16xf32> to vector<16xf32>
    %929 = vector.shape_cast %928 : vector<16xf32> to vector<16x1xf32>
    %930 = vector.broadcast %929 : vector<16x1xf32> to vector<16x16xf32>
    %931 = arith.subf %927, %930 : vector<16x16xf32>
    %932 = math.exp %931 : vector<16x16xf32>
    %cst_392 = arith.constant dense<0.000000e+00> : vector<16xf32>
    %933 = vector.multi_reduction <add>, %932, %cst_392 [1] : vector<16x16xf32> to vector<16xf32>
    %934 = vector.shape_cast %933 : vector<16xf32> to vector<16x1xf32>
    %935 = tpu.reciprocal %934 : vector<16x1xf32> -> vector<16x1xf32>
    %936 = vector.broadcast %935 : vector<16x1xf32> to vector<16x16xf32>
    %937 = arith.mulf %932, %936 : vector<16x16xf32>
    %938 = vector.extract_strided_slice %859 {offsets = [0, 24], sizes = [16, 8], strides = [1, 1]} : vector<16x32xf32> to vector<16x8xf32>
    %cst_393 = arith.constant dense<0.000000e+00> : vector<16x8xf32>
    %939 = tpu.matmul %937, %938, %cst_393 {dimension_numbers = #tpu.dot_dimension_numbers<[1], [0], [0], [1], [0, 0, 1, 1], [], []>} : vector<16x16xf32>, vector<16x8xf32>, vector<16x8xf32> -> vector<16x8xf32>
    %940 = vector.extract_strided_slice %863 {offsets = [24, 0], sizes = [8, 32], strides = [1, 1]} : vector<32x32xf32> to vector<8x32xf32>
    %cst_394 = arith.constant dense<0.000000e+00> : vector<16x32xf32>
    %941 = tpu.matmul %939, %940, %cst_394 {dimension_numbers = #tpu.dot_dimension_numbers<[1], [0], [0], [1], [0, 0, 1, 1], [], []>} : vector<16x8xf32>, vector<8x32xf32>, vector<16x32xf32> -> vector<16x32xf32>
    %942 = arith.addf %923, %941 : vector<16x32xf32>
    %943 = vector.broadcast %865 : vector<1x32xf32> to vector<16x32xf32>
    %944 = arith.addf %942, %943 : vector<16x32xf32>
    %945 = arith.addf %818, %944 : vector<16x32xf32>
    %c35 = arith.constant 35 : index
    %c0_395 = arith.constant 0 : index
    %c0_396 = arith.constant 0 : index
    %946 = vector.load %arg6[%c35, %c0_395, %c0_396] : memref<42x1x32xf32, #tpu.memory_space<vmem>>, vector<1x1x32xf32>
    %947 = vector.shape_cast %946 : vector<1x1x32xf32> to vector<1x32xf32>
    %c36 = arith.constant 36 : index
    %c0_397 = arith.constant 0 : index
    %c0_398 = arith.constant 0 : index
    %948 = vector.load %arg6[%c36, %c0_397, %c0_398] : memref<42x1x32xf32, #tpu.memory_space<vmem>>, vector<1x1x32xf32>
    %949 = vector.shape_cast %948 : vector<1x1x32xf32> to vector<1x32xf32>
    %cst_399 = arith.constant dense<0.000000e+00> : vector<16xf32>
    %950 = vector.multi_reduction <add>, %945, %cst_399 [1] : vector<16x32xf32> to vector<16xf32>
    %951 = vector.shape_cast %950 : vector<16xf32> to vector<16x1xf32>
    %cst_400 = arith.constant 3.200000e+01 : f32
    %952 = vector.broadcast %cst_400 : f32 to vector<16x1xf32>
    %953 = arith.divf %951, %952 : vector<16x1xf32>
    %954 = vector.broadcast %953 : vector<16x1xf32> to vector<16x32xf32>
    %955 = arith.subf %945, %954 : vector<16x32xf32>
    %956 = arith.mulf %955, %955 : vector<16x32xf32>
    %cst_401 = arith.constant dense<0.000000e+00> : vector<16xf32>
    %957 = vector.multi_reduction <add>, %956, %cst_401 [1] : vector<16x32xf32> to vector<16xf32>
    %958 = vector.shape_cast %957 : vector<16xf32> to vector<16x1xf32>
    %cst_402 = arith.constant 3.200000e+01 : f32
    %959 = vector.broadcast %cst_402 : f32 to vector<16x1xf32>
    %960 = arith.divf %958, %959 : vector<16x1xf32>
    %961 = vector.broadcast %953 : vector<16x1xf32> to vector<16x32xf32>
    %962 = arith.subf %945, %961 : vector<16x32xf32>
    %cst_403 = arith.constant 9.99999974E-6 : f32
    %963 = vector.broadcast %cst_403 : f32 to vector<16x1xf32>
    %964 = arith.addf %960, %963 : vector<16x1xf32>
    %965 = math.rsqrt %964 : vector<16x1xf32>
    %966 = vector.broadcast %965 : vector<16x1xf32> to vector<16x32xf32>
    %967 = arith.mulf %962, %966 : vector<16x32xf32>
    %968 = vector.broadcast %947 : vector<1x32xf32> to vector<16x32xf32>
    %969 = arith.mulf %967, %968 : vector<16x32xf32>
    %970 = vector.broadcast %949 : vector<1x32xf32> to vector<16x32xf32>
    %971 = arith.addf %969, %970 : vector<16x32xf32>
    %972 = arith.addf %971, %4 : vector<16x32xf32>
    %c12_404 = arith.constant 12 : index
    %c0_405 = arith.constant 0 : index
    %c0_406 = arith.constant 0 : index
    %973 = vector.load %arg5[%c12_404, %c0_405, %c0_406] : memref<14x32x32xf32, #tpu.memory_space<vmem>>, vector<1x32x32xf32>
    %974 = vector.shape_cast %973 : vector<1x32x32xf32> to vector<32x32xf32>
    %cst_407 = arith.constant dense<0.000000e+00> : vector<16x32xf32>
    %975 = tpu.matmul %972, %974, %cst_407 {dimension_numbers = #tpu.dot_dimension_numbers<[1], [0], [0], [1], [0, 0, 1, 1], [], []>} : vector<16x32xf32>, vector<32x32xf32>, vector<16x32xf32> -> vector<16x32xf32>
    %c31 = arith.constant 31 : index
    %c0_408 = arith.constant 0 : index
    %c0_409 = arith.constant 0 : index
    %976 = vector.load %arg6[%c31, %c0_408, %c0_409] : memref<42x1x32xf32, #tpu.memory_space<vmem>>, vector<1x1x32xf32>
    %977 = vector.shape_cast %976 : vector<1x1x32xf32> to vector<1x32xf32>
    %978 = vector.broadcast %977 : vector<1x32xf32> to vector<16x32xf32>
    %979 = arith.addf %975, %978 : vector<16x32xf32>
    %980 = vector.extract_strided_slice %521 {offsets = [0, 32], sizes = [18, 32], strides = [1, 1]} : vector<18x64xf32> to vector<18x32xf32>
    %981 = vector.extract_strided_slice %528 {offsets = [0, 32], sizes = [18, 32], strides = [1, 1]} : vector<18x64xf32> to vector<18x32xf32>
    %c13_410 = arith.constant 13 : index
    %c0_411 = arith.constant 0 : index
    %c0_412 = arith.constant 0 : index
    %982 = vector.load %arg5[%c13_410, %c0_411, %c0_412] : memref<14x32x32xf32, #tpu.memory_space<vmem>>, vector<1x32x32xf32>
    %983 = vector.shape_cast %982 : vector<1x32x32xf32> to vector<32x32xf32>
    %c32 = arith.constant 32 : index
    %c0_413 = arith.constant 0 : index
    %c0_414 = arith.constant 0 : index
    %984 = vector.load %arg6[%c32, %c0_413, %c0_414] : memref<42x1x32xf32, #tpu.memory_space<vmem>>, vector<1x1x32xf32>
    %985 = vector.shape_cast %984 : vector<1x1x32xf32> to vector<1x32xf32>
    %cst_415 = arith.constant 0.000000e+00 : f32
    %986 = vector.broadcast %cst_415 : f32 to vector<16x32xf32>
    %987 = vector.extract_strided_slice %979 {offsets = [0, 0], sizes = [16, 8], strides = [1, 1]} : vector<16x32xf32> to vector<16x8xf32>
    %988 = vector.extract_strided_slice %980 {offsets = [0, 0], sizes = [18, 8], strides = [1, 1]} : vector<18x32xf32> to vector<18x8xf32>
    %cst_416 = arith.constant dense<0.000000e+00> : vector<16x18xf32>
    %989 = tpu.matmul %987, %988, %cst_416 {dimension_numbers = #tpu.dot_dimension_numbers<[1], [1], [0], [0], [0, 0, 1, 0], [], []>} : vector<16x8xf32>, vector<18x8xf32>, vector<16x18xf32> -> vector<16x18xf32>
    %990 = arith.addf %989, %136 : vector<16x18xf32>
    %cst_417 = arith.constant dense<0xFF800000> : vector<16xf32>
    %991 = vector.multi_reduction <maximumf>, %990, %cst_417 [1] : vector<16x18xf32> to vector<16xf32>
    %992 = vector.shape_cast %991 : vector<16xf32> to vector<16x1xf32>
    %993 = vector.broadcast %992 : vector<16x1xf32> to vector<16x18xf32>
    %994 = arith.subf %990, %993 : vector<16x18xf32>
    %995 = math.exp %994 : vector<16x18xf32>
    %cst_418 = arith.constant dense<0.000000e+00> : vector<16xf32>
    %996 = vector.multi_reduction <add>, %995, %cst_418 [1] : vector<16x18xf32> to vector<16xf32>
    %997 = vector.shape_cast %996 : vector<16xf32> to vector<16x1xf32>
    %998 = tpu.reciprocal %997 : vector<16x1xf32> -> vector<16x1xf32>
    %999 = vector.broadcast %998 : vector<16x1xf32> to vector<16x18xf32>
    %1000 = arith.mulf %995, %999 : vector<16x18xf32>
    %1001 = vector.extract_strided_slice %981 {offsets = [0, 0], sizes = [18, 8], strides = [1, 1]} : vector<18x32xf32> to vector<18x8xf32>
    %cst_419 = arith.constant dense<0.000000e+00> : vector<16x8xf32>
    %1002 = tpu.matmul %1000, %1001, %cst_419 {dimension_numbers = #tpu.dot_dimension_numbers<[1], [0], [0], [1], [0, 0, 1, 1], [], []>} : vector<16x18xf32>, vector<18x8xf32>, vector<16x8xf32> -> vector<16x8xf32>
    %1003 = vector.extract_strided_slice %983 {offsets = [0, 0], sizes = [8, 32], strides = [1, 1]} : vector<32x32xf32> to vector<8x32xf32>
    %cst_420 = arith.constant dense<0.000000e+00> : vector<16x32xf32>
    %1004 = tpu.matmul %1002, %1003, %cst_420 {dimension_numbers = #tpu.dot_dimension_numbers<[1], [0], [0], [1], [0, 0, 1, 1], [], []>} : vector<16x8xf32>, vector<8x32xf32>, vector<16x32xf32> -> vector<16x32xf32>
    %1005 = arith.addf %986, %1004 : vector<16x32xf32>
    %1006 = vector.extract_strided_slice %979 {offsets = [0, 8], sizes = [16, 8], strides = [1, 1]} : vector<16x32xf32> to vector<16x8xf32>
    %1007 = vector.extract_strided_slice %980 {offsets = [0, 8], sizes = [18, 8], strides = [1, 1]} : vector<18x32xf32> to vector<18x8xf32>
    %cst_421 = arith.constant dense<0.000000e+00> : vector<16x18xf32>
    %1008 = tpu.matmul %1006, %1007, %cst_421 {dimension_numbers = #tpu.dot_dimension_numbers<[1], [1], [0], [0], [0, 0, 1, 0], [], []>} : vector<16x8xf32>, vector<18x8xf32>, vector<16x18xf32> -> vector<16x18xf32>
    %1009 = arith.addf %1008, %136 : vector<16x18xf32>
    %cst_422 = arith.constant dense<0xFF800000> : vector<16xf32>
    %1010 = vector.multi_reduction <maximumf>, %1009, %cst_422 [1] : vector<16x18xf32> to vector<16xf32>
    %1011 = vector.shape_cast %1010 : vector<16xf32> to vector<16x1xf32>
    %1012 = vector.broadcast %1011 : vector<16x1xf32> to vector<16x18xf32>
    %1013 = arith.subf %1009, %1012 : vector<16x18xf32>
    %1014 = math.exp %1013 : vector<16x18xf32>
    %cst_423 = arith.constant dense<0.000000e+00> : vector<16xf32>
    %1015 = vector.multi_reduction <add>, %1014, %cst_423 [1] : vector<16x18xf32> to vector<16xf32>
    %1016 = vector.shape_cast %1015 : vector<16xf32> to vector<16x1xf32>
    %1017 = tpu.reciprocal %1016 : vector<16x1xf32> -> vector<16x1xf32>
    %1018 = vector.broadcast %1017 : vector<16x1xf32> to vector<16x18xf32>
    %1019 = arith.mulf %1014, %1018 : vector<16x18xf32>
    %1020 = vector.extract_strided_slice %981 {offsets = [0, 8], sizes = [18, 8], strides = [1, 1]} : vector<18x32xf32> to vector<18x8xf32>
    %cst_424 = arith.constant dense<0.000000e+00> : vector<16x8xf32>
    %1021 = tpu.matmul %1019, %1020, %cst_424 {dimension_numbers = #tpu.dot_dimension_numbers<[1], [0], [0], [1], [0, 0, 1, 1], [], []>} : vector<16x18xf32>, vector<18x8xf32>, vector<16x8xf32> -> vector<16x8xf32>
    %1022 = vector.extract_strided_slice %983 {offsets = [8, 0], sizes = [8, 32], strides = [1, 1]} : vector<32x32xf32> to vector<8x32xf32>
    %cst_425 = arith.constant dense<0.000000e+00> : vector<16x32xf32>
    %1023 = tpu.matmul %1021, %1022, %cst_425 {dimension_numbers = #tpu.dot_dimension_numbers<[1], [0], [0], [1], [0, 0, 1, 1], [], []>} : vector<16x8xf32>, vector<8x32xf32>, vector<16x32xf32> -> vector<16x32xf32>
    %1024 = arith.addf %1005, %1023 : vector<16x32xf32>
    %1025 = vector.extract_strided_slice %979 {offsets = [0, 16], sizes = [16, 8], strides = [1, 1]} : vector<16x32xf32> to vector<16x8xf32>
    %1026 = vector.extract_strided_slice %980 {offsets = [0, 16], sizes = [18, 8], strides = [1, 1]} : vector<18x32xf32> to vector<18x8xf32>
    %cst_426 = arith.constant dense<0.000000e+00> : vector<16x18xf32>
    %1027 = tpu.matmul %1025, %1026, %cst_426 {dimension_numbers = #tpu.dot_dimension_numbers<[1], [1], [0], [0], [0, 0, 1, 0], [], []>} : vector<16x8xf32>, vector<18x8xf32>, vector<16x18xf32> -> vector<16x18xf32>
    %1028 = arith.addf %1027, %136 : vector<16x18xf32>
    %cst_427 = arith.constant dense<0xFF800000> : vector<16xf32>
    %1029 = vector.multi_reduction <maximumf>, %1028, %cst_427 [1] : vector<16x18xf32> to vector<16xf32>
    %1030 = vector.shape_cast %1029 : vector<16xf32> to vector<16x1xf32>
    %1031 = vector.broadcast %1030 : vector<16x1xf32> to vector<16x18xf32>
    %1032 = arith.subf %1028, %1031 : vector<16x18xf32>
    %1033 = math.exp %1032 : vector<16x18xf32>
    %cst_428 = arith.constant dense<0.000000e+00> : vector<16xf32>
    %1034 = vector.multi_reduction <add>, %1033, %cst_428 [1] : vector<16x18xf32> to vector<16xf32>
    %1035 = vector.shape_cast %1034 : vector<16xf32> to vector<16x1xf32>
    %1036 = tpu.reciprocal %1035 : vector<16x1xf32> -> vector<16x1xf32>
    %1037 = vector.broadcast %1036 : vector<16x1xf32> to vector<16x18xf32>
    %1038 = arith.mulf %1033, %1037 : vector<16x18xf32>
    %1039 = vector.extract_strided_slice %981 {offsets = [0, 16], sizes = [18, 8], strides = [1, 1]} : vector<18x32xf32> to vector<18x8xf32>
    %cst_429 = arith.constant dense<0.000000e+00> : vector<16x8xf32>
    %1040 = tpu.matmul %1038, %1039, %cst_429 {dimension_numbers = #tpu.dot_dimension_numbers<[1], [0], [0], [1], [0, 0, 1, 1], [], []>} : vector<16x18xf32>, vector<18x8xf32>, vector<16x8xf32> -> vector<16x8xf32>
    %1041 = vector.extract_strided_slice %983 {offsets = [16, 0], sizes = [8, 32], strides = [1, 1]} : vector<32x32xf32> to vector<8x32xf32>
    %cst_430 = arith.constant dense<0.000000e+00> : vector<16x32xf32>
    %1042 = tpu.matmul %1040, %1041, %cst_430 {dimension_numbers = #tpu.dot_dimension_numbers<[1], [0], [0], [1], [0, 0, 1, 1], [], []>} : vector<16x8xf32>, vector<8x32xf32>, vector<16x32xf32> -> vector<16x32xf32>
    %1043 = arith.addf %1024, %1042 : vector<16x32xf32>
    %1044 = vector.extract_strided_slice %979 {offsets = [0, 24], sizes = [16, 8], strides = [1, 1]} : vector<16x32xf32> to vector<16x8xf32>
    %1045 = vector.extract_strided_slice %980 {offsets = [0, 24], sizes = [18, 8], strides = [1, 1]} : vector<18x32xf32> to vector<18x8xf32>
    %cst_431 = arith.constant dense<0.000000e+00> : vector<16x18xf32>
    %1046 = tpu.matmul %1044, %1045, %cst_431 {dimension_numbers = #tpu.dot_dimension_numbers<[1], [1], [0], [0], [0, 0, 1, 0], [], []>} : vector<16x8xf32>, vector<18x8xf32>, vector<16x18xf32> -> vector<16x18xf32>
    %1047 = arith.addf %1046, %136 : vector<16x18xf32>
    %cst_432 = arith.constant dense<0xFF800000> : vector<16xf32>
    %1048 = vector.multi_reduction <maximumf>, %1047, %cst_432 [1] : vector<16x18xf32> to vector<16xf32>
    %1049 = vector.shape_cast %1048 : vector<16xf32> to vector<16x1xf32>
    %1050 = vector.broadcast %1049 : vector<16x1xf32> to vector<16x18xf32>
    %1051 = arith.subf %1047, %1050 : vector<16x18xf32>
    %1052 = math.exp %1051 : vector<16x18xf32>
    %cst_433 = arith.constant dense<0.000000e+00> : vector<16xf32>
    %1053 = vector.multi_reduction <add>, %1052, %cst_433 [1] : vector<16x18xf32> to vector<16xf32>
    %1054 = vector.shape_cast %1053 : vector<16xf32> to vector<16x1xf32>
    %1055 = tpu.reciprocal %1054 : vector<16x1xf32> -> vector<16x1xf32>
    %1056 = vector.broadcast %1055 : vector<16x1xf32> to vector<16x18xf32>
    %1057 = arith.mulf %1052, %1056 : vector<16x18xf32>
    %1058 = vector.extract_strided_slice %981 {offsets = [0, 24], sizes = [18, 8], strides = [1, 1]} : vector<18x32xf32> to vector<18x8xf32>
    %cst_434 = arith.constant dense<0.000000e+00> : vector<16x8xf32>
    %1059 = tpu.matmul %1057, %1058, %cst_434 {dimension_numbers = #tpu.dot_dimension_numbers<[1], [0], [0], [1], [0, 0, 1, 1], [], []>} : vector<16x18xf32>, vector<18x8xf32>, vector<16x8xf32> -> vector<16x8xf32>
    %1060 = vector.extract_strided_slice %983 {offsets = [24, 0], sizes = [8, 32], strides = [1, 1]} : vector<32x32xf32> to vector<8x32xf32>
    %cst_435 = arith.constant dense<0.000000e+00> : vector<16x32xf32>
    %1061 = tpu.matmul %1059, %1060, %cst_435 {dimension_numbers = #tpu.dot_dimension_numbers<[1], [0], [0], [1], [0, 0, 1, 1], [], []>} : vector<16x8xf32>, vector<8x32xf32>, vector<16x32xf32> -> vector<16x32xf32>
    %1062 = arith.addf %1043, %1061 : vector<16x32xf32>
    %1063 = vector.broadcast %985 : vector<1x32xf32> to vector<16x32xf32>
    %1064 = arith.addf %1062, %1063 : vector<16x32xf32>
    %1065 = arith.addf %945, %1064 : vector<16x32xf32>
    %c37 = arith.constant 37 : index
    %c0_436 = arith.constant 0 : index
    %c0_437 = arith.constant 0 : index
    %1066 = vector.load %arg6[%c37, %c0_436, %c0_437] : memref<42x1x32xf32, #tpu.memory_space<vmem>>, vector<1x1x32xf32>
    %1067 = vector.shape_cast %1066 : vector<1x1x32xf32> to vector<1x32xf32>
    %c38 = arith.constant 38 : index
    %c0_438 = arith.constant 0 : index
    %c0_439 = arith.constant 0 : index
    %1068 = vector.load %arg6[%c38, %c0_438, %c0_439] : memref<42x1x32xf32, #tpu.memory_space<vmem>>, vector<1x1x32xf32>
    %1069 = vector.shape_cast %1068 : vector<1x1x32xf32> to vector<1x32xf32>
    %cst_440 = arith.constant dense<0.000000e+00> : vector<16xf32>
    %1070 = vector.multi_reduction <add>, %1065, %cst_440 [1] : vector<16x32xf32> to vector<16xf32>
    %1071 = vector.shape_cast %1070 : vector<16xf32> to vector<16x1xf32>
    %cst_441 = arith.constant 3.200000e+01 : f32
    %1072 = vector.broadcast %cst_441 : f32 to vector<16x1xf32>
    %1073 = arith.divf %1071, %1072 : vector<16x1xf32>
    %1074 = vector.broadcast %1073 : vector<16x1xf32> to vector<16x32xf32>
    %1075 = arith.subf %1065, %1074 : vector<16x32xf32>
    %1076 = arith.mulf %1075, %1075 : vector<16x32xf32>
    %cst_442 = arith.constant dense<0.000000e+00> : vector<16xf32>
    %1077 = vector.multi_reduction <add>, %1076, %cst_442 [1] : vector<16x32xf32> to vector<16xf32>
    %1078 = vector.shape_cast %1077 : vector<16xf32> to vector<16x1xf32>
    %cst_443 = arith.constant 3.200000e+01 : f32
    %1079 = vector.broadcast %cst_443 : f32 to vector<16x1xf32>
    %1080 = arith.divf %1078, %1079 : vector<16x1xf32>
    %1081 = vector.broadcast %1073 : vector<16x1xf32> to vector<16x32xf32>
    %1082 = arith.subf %1065, %1081 : vector<16x32xf32>
    %cst_444 = arith.constant 9.99999974E-6 : f32
    %1083 = vector.broadcast %cst_444 : f32 to vector<16x1xf32>
    %1084 = arith.addf %1080, %1083 : vector<16x1xf32>
    %1085 = math.rsqrt %1084 : vector<16x1xf32>
    %1086 = vector.broadcast %1085 : vector<16x1xf32> to vector<16x32xf32>
    %1087 = arith.mulf %1082, %1086 : vector<16x32xf32>
    %1088 = vector.broadcast %1067 : vector<1x32xf32> to vector<16x32xf32>
    %1089 = arith.mulf %1087, %1088 : vector<16x32xf32>
    %1090 = vector.broadcast %1069 : vector<1x32xf32> to vector<16x32xf32>
    %1091 = arith.addf %1089, %1090 : vector<16x32xf32>
    %c7_445 = arith.constant 7 : index
    %c0_446 = arith.constant 0 : index
    %c0_447 = arith.constant 0 : index
    %1092 = vector.load %arg7[%c7_445, %c0_446, %c0_447] : memref<10x32x64xf32, #tpu.memory_space<vmem>>, vector<1x32x64xf32>
    %1093 = vector.shape_cast %1092 : vector<1x32x64xf32> to vector<32x64xf32>
    %cst_448 = arith.constant dense<0.000000e+00> : vector<16x64xf32>
    %1094 = tpu.matmul %1091, %1093, %cst_448 {dimension_numbers = #tpu.dot_dimension_numbers<[1], [0], [0], [1], [0, 0, 1, 1], [], []>} : vector<16x32xf32>, vector<32x64xf32>, vector<16x64xf32> -> vector<16x64xf32>
    %c7_449 = arith.constant 7 : index
    %c0_450 = arith.constant 0 : index
    %c0_451 = arith.constant 0 : index
    %1095 = vector.load %arg8[%c7_449, %c0_450, %c0_451] : memref<10x1x64xf32, #tpu.memory_space<vmem>>, vector<1x1x64xf32>
    %1096 = vector.shape_cast %1095 : vector<1x1x64xf32> to vector<1x64xf32>
    %1097 = vector.broadcast %1096 : vector<1x64xf32> to vector<16x64xf32>
    %1098 = arith.addf %1094, %1097 : vector<16x64xf32>
    %cst_452 = arith.constant 0.000000e+00 : f32
    %1099 = vector.broadcast %cst_452 : f32 to vector<16x64xf32>
    %1100 = arith.maximumf %1098, %1099 : vector<16x64xf32>
    %c3_453 = arith.constant 3 : index
    %c0_454 = arith.constant 0 : index
    %c0_455 = arith.constant 0 : index
    %1101 = vector.load %arg9[%c3_453, %c0_454, %c0_455] : memref<4x64x32xf32, #tpu.memory_space<vmem>>, vector<1x64x32xf32>
    %1102 = vector.shape_cast %1101 : vector<1x64x32xf32> to vector<64x32xf32>
    %cst_456 = arith.constant dense<0.000000e+00> : vector<16x32xf32>
    %1103 = tpu.matmul %1100, %1102, %cst_456 {dimension_numbers = #tpu.dot_dimension_numbers<[1], [0], [0], [1], [0, 0, 1, 1], [], []>} : vector<16x64xf32>, vector<64x32xf32>, vector<16x32xf32> -> vector<16x32xf32>
    %1104 = arith.addf %1065, %1103 : vector<16x32xf32>
    %c39 = arith.constant 39 : index
    %c0_457 = arith.constant 0 : index
    %c0_458 = arith.constant 0 : index
    %1105 = vector.load %arg6[%c39, %c0_457, %c0_458] : memref<42x1x32xf32, #tpu.memory_space<vmem>>, vector<1x1x32xf32>
    %1106 = vector.shape_cast %1105 : vector<1x1x32xf32> to vector<1x32xf32>
    %1107 = vector.broadcast %1106 : vector<1x32xf32> to vector<16x32xf32>
    %1108 = arith.addf %1104, %1107 : vector<16x32xf32>
    %c40 = arith.constant 40 : index
    %c0_459 = arith.constant 0 : index
    %c0_460 = arith.constant 0 : index
    %1109 = vector.load %arg6[%c40, %c0_459, %c0_460] : memref<42x1x32xf32, #tpu.memory_space<vmem>>, vector<1x1x32xf32>
    %1110 = vector.shape_cast %1109 : vector<1x1x32xf32> to vector<1x32xf32>
    %c41 = arith.constant 41 : index
    %c0_461 = arith.constant 0 : index
    %c0_462 = arith.constant 0 : index
    %1111 = vector.load %arg6[%c41, %c0_461, %c0_462] : memref<42x1x32xf32, #tpu.memory_space<vmem>>, vector<1x1x32xf32>
    %1112 = vector.shape_cast %1111 : vector<1x1x32xf32> to vector<1x32xf32>
    %cst_463 = arith.constant dense<0.000000e+00> : vector<16xf32>
    %1113 = vector.multi_reduction <add>, %1108, %cst_463 [1] : vector<16x32xf32> to vector<16xf32>
    %1114 = vector.shape_cast %1113 : vector<16xf32> to vector<16x1xf32>
    %cst_464 = arith.constant 3.200000e+01 : f32
    %1115 = vector.broadcast %cst_464 : f32 to vector<16x1xf32>
    %1116 = arith.divf %1114, %1115 : vector<16x1xf32>
    %1117 = vector.broadcast %1116 : vector<16x1xf32> to vector<16x32xf32>
    %1118 = arith.subf %1108, %1117 : vector<16x32xf32>
    %1119 = arith.mulf %1118, %1118 : vector<16x32xf32>
    %cst_465 = arith.constant dense<0.000000e+00> : vector<16xf32>
    %1120 = vector.multi_reduction <add>, %1119, %cst_465 [1] : vector<16x32xf32> to vector<16xf32>
    %1121 = vector.shape_cast %1120 : vector<16xf32> to vector<16x1xf32>
    %cst_466 = arith.constant 3.200000e+01 : f32
    %1122 = vector.broadcast %cst_466 : f32 to vector<16x1xf32>
    %1123 = arith.divf %1121, %1122 : vector<16x1xf32>
    %1124 = vector.broadcast %1116 : vector<16x1xf32> to vector<16x32xf32>
    %1125 = arith.subf %1108, %1124 : vector<16x32xf32>
    %cst_467 = arith.constant 9.99999974E-6 : f32
    %1126 = vector.broadcast %cst_467 : f32 to vector<16x1xf32>
    %1127 = arith.addf %1123, %1126 : vector<16x1xf32>
    %1128 = math.rsqrt %1127 : vector<16x1xf32>
    %1129 = vector.broadcast %1128 : vector<16x1xf32> to vector<16x32xf32>
    %1130 = arith.mulf %1125, %1129 : vector<16x32xf32>
    %1131 = vector.broadcast %1110 : vector<1x32xf32> to vector<16x32xf32>
    %1132 = arith.mulf %1130, %1131 : vector<16x32xf32>
    %1133 = vector.broadcast %1112 : vector<1x32xf32> to vector<16x32xf32>
    %1134 = arith.addf %1132, %1133 : vector<16x32xf32>
    %c1_468 = arith.constant 1 : index
    %c0_469 = arith.constant 0 : index
    %c0_470 = arith.constant 0 : index
    %1135 = vector.load %arg5[%c1_468, %c0_469, %c0_470] : memref<14x32x32xf32, #tpu.memory_space<vmem>>, vector<1x32x32xf32>
    %1136 = vector.shape_cast %1135 : vector<1x32x32xf32> to vector<32x32xf32>
    %cst_471 = arith.constant dense<0.000000e+00> : vector<16x32xf32>
    %1137 = tpu.matmul %1134, %1136, %cst_471 {dimension_numbers = #tpu.dot_dimension_numbers<[1], [0], [0], [1], [0, 0, 1, 1], [], []>} : vector<16x32xf32>, vector<32x32xf32>, vector<16x32xf32> -> vector<16x32xf32>
    %c1_472 = arith.constant 1 : index
    %c0_473 = arith.constant 0 : index
    %c0_474 = arith.constant 0 : index
    %1138 = vector.load %arg6[%c1_472, %c0_473, %c0_474] : memref<42x1x32xf32, #tpu.memory_space<vmem>>, vector<1x1x32xf32>
    %1139 = vector.shape_cast %1138 : vector<1x1x32xf32> to vector<1x32xf32>
    %1140 = vector.broadcast %1139 : vector<1x32xf32> to vector<16x32xf32>
    %1141 = arith.addf %1137, %1140 : vector<16x32xf32>
    %c0_475 = arith.constant 0 : index
    %c0_476 = arith.constant 0 : index
    %c0_477 = arith.constant 0 : index
    %1142 = vector.load %arg10[%c0_475, %c0_476, %c0_477] : memref<3x16x32xf32, #tpu.memory_space<vmem>>, vector<1x16x32xf32>
    %1143 = vector.shape_cast %1142 : vector<1x16x32xf32> to vector<16x32xf32>
    %1144 = vector.shape_cast %1141 : vector<16x32xf32> to vector<1x16x32xf32>
    tpu.vector_store %arg10[%c0_475, %c0_476, %c0_477], %1144 {strides = array<i32>} : memref<3x16x32xf32, #tpu.memory_space<vmem>>, vector<1x16x32xf32>,
    %c1_478 = arith.constant 1 : index
    %c0_479 = arith.constant 0 : index
    %c0_480 = arith.constant 0 : index
    %1145 = vector.load %arg10[%c1_478, %c0_479, %c0_480] : memref<3x16x32xf32, #tpu.memory_space<vmem>>, vector<1x16x32xf32>
    %1146 = vector.shape_cast %1145 : vector<1x16x32xf32> to vector<16x32xf32>
    %1147 = vector.shape_cast %1134 : vector<16x32xf32> to vector<1x16x32xf32>
    tpu.vector_store %arg10[%c1_478, %c0_479, %c0_480], %1147 {strides = array<i32>} : memref<3x16x32xf32, #tpu.memory_space<vmem>>, vector<1x16x32xf32>,
    %c2_481 = arith.constant 2 : index
    %c0_482 = arith.constant 0 : index
    %c0_483 = arith.constant 0 : index
    %1148 = vector.load %arg10[%c2_481, %c0_482, %c0_483] : memref<3x16x32xf32, #tpu.memory_space<vmem>>, vector<1x16x32xf32>
    %1149 = vector.shape_cast %1148 : vector<1x16x32xf32> to vector<16x32xf32>
    %1150 = vector.shape_cast %146 : vector<16x32xf32> to vector<1x16x32xf32>
    tpu.vector_store %arg10[%c2_481, %c0_482, %c0_483], %1150 {strides = array<i32>} : memref<3x16x32xf32, #tpu.memory_space<vmem>>, vector<1x16x32xf32>,
    return
  }
}

</mosaic_0001>

<llo_original>
// kernel: actor_forward.1
$region0: #{actor_forward.1}
  #allocation0 [shape = 'u32[]', space=smem, size = 0x4, offset = 0x4, fixed_abs, tag = 'smem constant byte address 0x4 - core index']
  #allocation1 [shape = 'u32[144,128]{1,0:T(1,128)}', space=vmem, size = 0x12000, scoped, tag = 'internal scratch']
  %s0 = inlined_call_operand.vmem [shape: f32[16,32], index: 0, kind: input, shape index: {}]
  %s1 = inlined_call_operand.vmem [shape: f32[18,32], index: 1, kind: input, shape index: {}]
  %s2 = inlined_call_operand.vmem [shape: f32[2,32], index: 2, kind: input, shape index: {}]
  %s3 = inlined_call_operand.vmem [shape: f32[16,32], index: 3, kind: input, shape index: {}]
  %s4 = inlined_call_operand.vmem [shape: f32[16,32], index: 4, kind: input, shape index: {}]
  %s5 = inlined_call_operand.vmem [shape: f32[14,32,32], index: 5, kind: input, shape index: {}]
  %s6 = inlined_call_operand.vmem [shape: f32[42,1,32], index: 6, kind: input, shape index: {}]
  %s7 = inlined_call_operand.vmem [shape: f32[10,32,64], index: 7, kind: input, shape index: {}]
  %s8 = inlined_call_operand.vmem [shape: f32[10,1,64], index: 8, kind: input, shape index: {}]
  %s9 = inlined_call_operand.vmem [shape: f32[4,64,32], index: 9, kind: input, shape index: {}]
  %s10 = inlined_call_operand.vmem [shape: f32[3,16,32], index: 10, kind: output, shape index: {}]
  %s11 = sld [smem:[#allocation0]]
  $region50: #{actor_forward.1} parent=0
    _
  %s13 = ssub.s32 1, %s11
  %s14 = scalar_select 0, %s13, %s11
  // Predicated region
  $region2: #{actor_forward.1} parent=0 // pred_check
    _
  $region3: #{actor_forward.1} parent=0 // pred_check_branch
    %16 = sbr.rel (0) target = $region5
  $region4: #{actor_forward.1} parent=0 // pred_region
    _
  $region5: #{actor_forward.1} parent=0 // pred_fallthru
    _
  // Predicated region
  $region6: #{actor_forward.1} parent=0 // pred_check
    _
  $region7: #{actor_forward.1} parent=0 // pred_check_branch
    %18 = sbr.rel (0) target = $region9
  $region8: #{actor_forward.1} parent=0 // pred_region
    _
  $region9: #{actor_forward.1} parent=0 // pred_fallthru
    _
  // Predicated region
  $region10: #{actor_forward.1} parent=0 // pred_check
    _
  $region11: #{actor_forward.1} parent=0 // pred_check_branch
    %20 = sbr.rel (0) target = $region13
  $region12: #{actor_forward.1} parent=0 // pred_region
    _
  $region13: #{actor_forward.1} parent=0 // pred_fallthru
    _
  // Predicated region
  $region14: #{actor_forward.1} parent=0 // pred_check
    _
  $region15: #{actor_forward.1} parent=0 // pred_check_branch
    %22 = sbr.rel (0) target = $region17
  $region16: #{actor_forward.1} parent=0 // pred_region
    _
  $region17: #{actor_forward.1} parent=0 // pred_fallthru
    _
  // Predicated region
  $region18: #{actor_forward.1} parent=0 // pred_check
    _
  $region19: #{actor_forward.1} parent=0 // pred_check_branch
    %24 = sbr.rel (0) target = $region21
  $region20: #{actor_forward.1} parent=0 // pred_region
    _
  $region21: #{actor_forward.1} parent=0 // pred_fallthru
    _
  // Predicated region
  $region22: #{actor_forward.1} parent=0 // pred_check
    _
  $region23: #{actor_forward.1} parent=0 // pred_check_branch
    %26 = sbr.rel (0) target = $region25
  $region24: #{actor_forward.1} parent=0 // pred_region
    _
  $region25: #{actor_forward.1} parent=0 // pred_fallthru
    _
  // Predicated region
  $region26: #{actor_forward.1} parent=0 // pred_check
    _
  $region27: #{actor_forward.1} parent=0 // pred_check_branch
    %28 = sbr.rel (0) target = $region29
  $region28: #{actor_forward.1} parent=0 // pred_region
    _
  $region29: #{actor_forward.1} parent=0 // pred_fallthru
    _
  // Predicated region
  $region30: #{actor_forward.1} parent=0 // pred_check
    _
  $region31: #{actor_forward.1} parent=0 // pred_check_branch
    %30 = sbr.rel (0) target = $region33
  $region32: #{actor_forward.1} parent=0 // pred_region
    _
  $region33: #{actor_forward.1} parent=0 // pred_fallthru
    _
  // Predicated region
  $region34: #{actor_forward.1} parent=0 // pred_check
    _
  $region35: #{actor_forward.1} parent=0 // pred_check_branch
    %32 = sbr.rel (0) target = $region37
  $region36: #{actor_forward.1} parent=0 // pred_region
    _
  $region37: #{actor_forward.1} parent=0 // pred_fallthru
    _
  // Predicated region
  $region38: #{actor_forward.1} parent=0 // pred_check
    _
  $region39: #{actor_forward.1} parent=0 // pred_check_branch
    %34 = sbr.rel (0) target = $region41
  $region40: #{actor_forward.1} parent=0 // pred_region
    _
  $region41: #{actor_forward.1} parent=0 // pred_fallthru
    _
  %v35 = vld [vmem:[%s0] sm:$0xff]
  %v36 = vld [vmem:[%s0 + $0x8] sm:$0xff]
  %v37 = vld [vmem:[%s1] sm:$0xff]
  %v38 = vld [vmem:[%s1 + $0x8] sm:$0xff]
  %v39 = vld [vmem:[%s1 + $0x10] sm:$0x3]
  %v40 = vld [vmem:[%s2] sm:$0x3]
  %v41 = vld [vmem:[%s3] sm:$0xff]
  %v42 = vld [vmem:[%s3 + $0x8] sm:$0xff]
  %v43 = vld [vmem:[%s4] sm:$0xff]
  %v44 = vld [vmem:[%s4 + $0x8] sm:$0xff]
  %v45 = vlaneseq
  %v46 = vshrl.u32 %v45, 7
  %v47 = vadd.s32 %v46, 8
  %v48 = vadd.s32 %v46, 16
  %v49 = vlaneseq
  %v50 = vand.u32 %v49, 127
  %vm51 = vcmp.ge.s32.totalorder %v46, 8
  %vm52 = vcmp.ge.s32.totalorder %v47, 8
  %vm53 = vcmp.ge.s32.totalorder %v48, 8
  %vm54 = vcmp.lt.s32.totalorder %v46, 16
  %vm55 = vcmp.lt.s32.totalorder %v47, 16
  %vm56 = vcmp.lt.s32.totalorder %v48, 16
  %vm57 = vmand %vm51, %vm54
  %vm58 = vmand %vm52, %vm55
  %vm59 = vmand %vm53, %vm56
  %v60 = vsel %vm57, 1, 0
  %v61 = vsel %vm58, 1, 0
  %v62 = vsel %vm59, 1, 0
  %vm63 = vcmp.eq.s32.totalorder %v46, 17
  %vm64 = vcmp.eq.s32.totalorder %v47, 17
  %vm65 = vcmp.eq.s32.totalorder %v48, 17
  %v66 = vsel %vm63, 1, %v60
  %v67 = vsel %vm64, 1, %v61
  %v68 = vsel %vm65, 1, %v62
  %vm69 = vcmp.ge.s32.totalorder %v50, 8
  %vm70 = vcmp.lt.s32.totalorder %v50, 16
  %vm71 = vmand %vm69, %vm70
  %v72 = vsel %vm71, 1, 0
  %vm73 = vcmp.eq.s32.totalorder %v50, 17
  %v74 = vsel %vm73, 1, %v72
  %vm75 = vcmp.eq.s32.totalorder %v66, %v74
  %vm76 = vcmp.eq.s32.totalorder %v67, %v74
  %vm77 = vcmp.eq.s32.totalorder %v68, %v74
  %v78 = vsel %vm75, 0.0, -1e+30
  %v79 = vsel %vm76, 0.0, -1e+30
  %v80 = vsel %vm77, 0.0, -1e+30
  %vm81 = vcmp.eq.s32.totalorder %v60, %v72
  %vm82 = vcmp.eq.s32.totalorder %v61, %v72
  %v83 = vsel %vm81, 0.0, -1e+30
  %v84 = vsel %vm82, 0.0, -1e+30
  %vm85 = vcmp.eq.s32.totalorder %v60, %v74
  %vm86 = vcmp.eq.s32.totalorder %v61, %v74
  %v87 = vsel %vm85, 0.0, -1e+30
  %v88 = vsel %vm86, 0.0, -1e+30
  %v89 = vld [vmem:[%s5] sm:$0xff]
  %v90 = vld [vmem:[%s5 + $0x8] sm:$0xff]
  %v91 = vld [vmem:[%s5 + $0x10] sm:$0xff]
  %v92 = vld [vmem:[%s5 + $0x18] sm:$0xff]
  %v93 = vld [vmem:[%s6] sm:$0x1]
  %v95 = vlaneseq
  %v96 = vshrl.u32 %v95, 7
  %v97 = vsub.s32 0, %v96
  %v98 = vrot.slane %v93, %v97
  %vm100 = vcmask 261120
  %v102 = vsel %vm100, %v40, 0
  %104 = vmatprep.subr.mxu0 0.0
  %105 = vmatpush1.msra.mxu0 0.0
  %106 = vmatprep.subr.mxu0 0.0
  %107 = vmatpush1.msra.mxu0 0.0
  %108 = vmatprep.subr.mxu0 0.0
  %109 = vmatpush1.msra.mxu0 0.0
  %110 = vmatprep.subr.mxu0 0.0
  %111 = vmatpush1.msra.mxu0 0.0
  %112 = vmatprep.subr.mxu0 0.0
  %113 = vmatpush1.msra.mxu0 0.0
  %114 = vmatprep.subr.mxu0 0.0
  %115 = vmatpush1.msra.mxu0 0.0
  %116 = vmatprep.subr.mxu0 0.0
  %117 = vmatpush1.msra.mxu0 0.0
  %118 = vmatprep.subr.mxu0 0.0
  %119 = vmatpush1.msra.mxu0 0.0
  %120 = vmatprep.subr.mxu0 0.0
  %121 = vmatpush1.msra.mxu0 0.0
  %122 = vmatprep.subr.mxu0 0.0
  %123 = vmatpush1.msra.mxu0 0.0
  %124 = vmatprep.subr.mxu0 0.0
  %125 = vmatpush1.msra.mxu0 0.0
  %126 = vmatprep.subr.mxu0 0.0
  %127 = vmatpush1.msra.mxu0 0.0
  %128 = vmatprep.subr.mxu0 0.0
  %129 = vmatpush1.msra.mxu0 %v92
  %130 = vmatprep.subr.mxu0 0.0
  %131 = vmatpush1.msra.mxu0 %v91
  %132 = vmatprep.subr.mxu0 0.0
  %133 = vmatpush1.msra.mxu0 %v90
  %134 = vmatprep.subr.mxu0 0.0
  %135 = vmatpush1.msra.mxu0 %v89
  %136 = vmatprep.subr.mxu0 0.0
  %137 = vmatpush2.msra.mxu0 0.0
  %138 = vmatprep.subr.mxu0 0.0
  %139 = vmatpush2.msra.mxu0 0.0
  %140 = vmatprep.subr.mxu0 0.0
  %141 = vmatpush2.msra.mxu0 0.0
  %142 = vmatprep.subr.mxu0 0.0
  %143 = vmatpush2.msra.mxu0 0.0
  %144 = vmatprep.subr.mxu0 0.0
  %145 = vmatpush2.msra.mxu0 0.0
  %146 = vmatprep.subr.mxu0 0.0
  %147 = vmatpush2.msra.mxu0 0.0
  %148 = vmatprep.subr.mxu0 0.0
  %149 = vmatpush2.msra.mxu0 0.0
  %150 = vmatprep.subr.mxu0 0.0
  %151 = vmatpush2.msra.mxu0 0.0
  %152 = vmatprep.subr.mxu0 0.0
  %153 = vmatpush2.msra.mxu0 0.0
  %154 = vmatprep.subr.mxu0 0.0
  %155 = vmatpush2.msra.mxu0 0.0
  %156 = vmatprep.subr.mxu0 0.0
  %157 = vmatpush2.msra.mxu0 0.0
  %158 = vmatprep.subr.mxu0 0.0
  %159 = vmatpush2.msra.mxu0 0.0
  %160 = vmatprep.subr.mxu0 0.0
  %161 = vmatpush2.msra.mxu0 0.0
  %162 = vmatprep.subr.mxu0 0.0
  %163 = vmatpush2.msra.mxu0 0.0
  %164 = vmatprep.subr.mxu0 0.0
  %165 = vmatpush2.msra.mxu0 0.0
  %166 = vmatprep.subr.mxu0 0.0
  %167 = vmatpush2.msra.mxu0 0.0
  %168 = vmatprep.mubr.f32.mxu0 0.0
  %169 = vmatmul.mubr.f32.gmra.mxu0 %v102
  %v170 = vpop.f32.mrf.mxu0
  %v171 = vadd.f32 %v98, %v170
  %v172 = vpop.f32.mrf.mxu0
  %173 = vdwg.mxu0
  %v175 = vsel %vm100, %v41, 0
  %v178 = vsel %vm100, %v42, 0
  %180 = vmatprep.subr.mxu0 0.0
  %181 = vmatpush1.msra.mxu0 0.0
  %182 = vmatprep.subr.mxu0 0.0
  %183 = vmatpush1.msra.mxu0 0.0
  %184 = vmatprep.subr.mxu0 0.0
  %185 = vmatpush1.msra.mxu0 0.0
  %186 = vmatprep.subr.mxu0 0.0
  %187 = vmatpush1.msra.mxu0 0.0
  %188 = vmatprep.subr.mxu0 0.0
  %189 = vmatpush1.msra.mxu0 0.0
  %190 = vmatprep.subr.mxu0 0.0
  %191 = vmatpush1.msra.mxu0 0.0
  %192 = vmatprep.subr.mxu0 0.0
  %193 = vmatpush1.msra.mxu0 0.0
  %194 = vmatprep.subr.mxu0 0.0
  %195 = vmatpush1.msra.mxu0 0.0
  %196 = vmatprep.subr.mxu0 0.0
  %197 = vmatpush1.msra.mxu0 0.0
  %198 = vmatprep.subr.mxu0 0.0
  %199 = vmatpush1.msra.mxu0 0.0
  %200 = vmatprep.subr.mxu0 0.0
  %201 = vmatpush1.msra.mxu0 0.0
  %202 = vmatprep.subr.mxu0 0.0
  %203 = vmatpush1.msra.mxu0 0.0
  %204 = vmatprep.subr.mxu0 0.0
  %205 = vmatpush1.msra.mxu0 %v92
  %206 = vmatprep.subr.mxu0 0.0
  %207 = vmatpush1.msra.mxu0 %v91
  %208 = vmatprep.subr.mxu0 0.0
  %209 = vmatpush1.msra.mxu0 %v90
  %210 = vmatprep.subr.mxu0 0.0
  %211 = vmatpush1.msra.mxu0 %v89
  %212 = vmatprep.subr.mxu0 0.0
  %213 = vmatpush2.msra.mxu0 0.0
  %214 = vmatprep.subr.mxu0 0.0
  %215 = vmatpush2.msra.mxu0 0.0
  %216 = vmatprep.subr.mxu0 0.0
  %217 = vmatpush2.msra.mxu0 0.0
  %218 = vmatprep.subr.mxu0 0.0
  %219 = vmatpush2.msra.mxu0 0.0
  %220 = vmatprep.subr.mxu0 0.0
  %221 = vmatpush2.msra.mxu0 0.0
  %222 = vmatprep.subr.mxu0 0.0
  %223 = vmatpush2.msra.mxu0 0.0
  %224 = vmatprep.subr.mxu0 0.0
  %225 = vmatpush2.msra.mxu0 0.0
  %226 = vmatprep.subr.mxu0 0.0
  %227 = vmatpush2.msra.mxu0 0.0
  %228 = vmatprep.subr.mxu0 0.0
  %229 = vmatpush2.msra.mxu0 0.0
  %230 = vmatprep.subr.mxu0 0.0
  %231 = vmatpush2.msra.mxu0 0.0
  %232 = vmatprep.subr.mxu0 0.0
  %233 = vmatpush2.msra.mxu0 0.0
  %234 = vmatprep.subr.mxu0 0.0
  %235 = vmatpush2.msra.mxu0 0.0
  %236 = vmatprep.subr.mxu0 0.0
  %237 = vmatpush2.msra.mxu0 0.0
  %238 = vmatprep.subr.mxu0 0.0
  %239 = vmatpush2.msra.mxu0 0.0
  %240 = vmatprep.subr.mxu0 0.0
  %241 = vmatpush2.msra.mxu0 0.0
  %242 = vmatprep.subr.mxu0 0.0
  %243 = vmatpush2.msra.mxu0 0.0
  %244 = vmatprep.mubr.f32.mxu0 0.0
  %245 = vmatmul.mubr.f32.gmra.mxu0 %v175
  %v246 = vpop.f32.mrf.mxu0
  %v247 = vadd.f32 %v98, %v246
  %v248 = vpop.f32.mrf.mxu0
  %249 = vmatprep.mubr.f32.mxu0 0.0
  %250 = vmatmul.mubr.f32.gmra.mxu0 %v178
  %v251 = vpop.f32.mrf.mxu0
  %v252 = vadd.f32 %v98, %v251
  %v253 = vpop.f32.mrf.mxu0
  %254 = vdwg.mxu0
  %s255 = scalar_lea.vmem %s6, 4
  %v256 = vld [vmem:[%s255] sm:$0x1]
  %s257 = scalar_lea.vmem %s6, 5
  %v258 = vld [vmem:[%s257] sm:$0x1]
  %v259 = vsel %vm100, %v35, 0.0
  %260 = vadd.xlane.f32.xlu0 %v259
  %v261 = vpop.xlane.xlu0 %260
  %v262 = vsel %vm100, %v36, 0.0
  %263 = vadd.xlane.f32.xlu0 %v262
  %v264 = vpop.xlane.xlu0 %263
  %vm265 = vcmask 254976
  %v266 = vsel %vm265, %v171, 0.0
  %267 = vadd.xlane.f32.xlu0 %v266
  %v268 = vpop.xlane.xlu0 %267
  %v269 = vrcp.pop 32.0
  %v270 = vmul.f32 %v261, %v269
  %v271 = vmul.f32 %v264, %v269
  %v272 = vmul.f32 %v268, %v269
  %v273 = vsub.f32 %v35, %v270
  %v274 = vsub.f32 %v36, %v271
  %v275 = vsub.f32 %v171, %v272
  %v276 = vmul.f32 %v273, %v273
  %v277 = vmul.f32 %v274, %v274
  %v278 = vmul.f32 %v275, %v275
  %v279 = vsel %vm100, %v276, 0.0
  %280 = vadd.xlane.f32.xlu0 %v279
  %v281 = vpop.xlane.xlu0 %280
  %v282 = vsel %vm100, %v277, 0.0
  %283 = vadd.xlane.f32.xlu0 %v282
  %v284 = vpop.xlane.xlu0 %283
  %v285 = vsel %vm265, %v278, 0.0
  %286 = vadd.xlane.f32.xlu0 %v285
  %v287 = vpop.xlane.xlu0 %286
  %v288 = vmul.f32 %v281, %v269
  %v289 = vmul.f32 %v284, %v269
  %v290 = vmul.f32 %v287, %v269
  %v291 = vadd.f32 %v288, 1e-05
  %v292 = vadd.f32 %v289, 1e-05
  %v293 = vadd.f32 %v290, 1e-05
  %v294 = vrsqrt.pop %v291
  %v295 = vrsqrt.pop %v292
  %v296 = vrsqrt.pop %v293
  %v297 = vmul.f32 %v273, %v294
  %v298 = vmul.f32 %v274, %v295
  %v299 = vmul.f32 %v275, %v296
  %v301 = vlaneseq
  %v302 = vshrl.u32 %v301, 7
  %v303 = vsub.s32 0, %v302
  %v304 = vrot.slane %v256, %v303
  %v306 = vmul.f32 %v297, %v304
  %v307 = vmul.f32 %v298, %v304
  %v308 = vmul.f32 %v299, %v304
  %v310 = vlaneseq
  %v311 = vshrl.u32 %v310, 7
  %v312 = vsub.s32 0, %v311
  %v313 = vrot.slane %v258, %v312
  %v315 = vadd.f32 %v306, %v313
  %v316 = vadd.f32 %v307, %v313
  %v317 = vadd.f32 %v308, %v313
  %v318 = vadd.f32 %v315, %v37
  %v319 = vadd.f32 %v316, %v38
  %v320 = vadd.f32 %v317, %v39
  %v321 = vld [vmem:[%s7] sm:$0xff]
  %v322 = vld [vmem:[%s7 + $0x8] sm:$0xff]
  %v323 = vld [vmem:[%s7 + $0x10] sm:$0xff]
  %v324 = vld [vmem:[%s7 + $0x18] sm:$0xff]
  %v325 = vld [vmem:[%s8] sm:$0x1]
  %v327 = vlaneseq
  %v328 = vshrl.u32 %v327, 7
  %v329 = vsub.s32 0, %v328
  %v330 = vrot.slane %v325, %v329
  %v333 = vsel %vm100, %v318, 0
  %v336 = vsel %vm100, %v319, 0
  %v339 = vsel %vm100, %v320, 0
  %341 = vmatprep.subr.mxu0 0.0
  %342 = vmatpush1.msra.mxu0 0.0
  %343 = vmatprep.subr.mxu0 0.0
  %344 = vmatpush1.msra.mxu0 0.0
  %345 = vmatprep.subr.mxu0 0.0
  %346 = vmatpush1.msra.mxu0 0.0
  %347 = vmatprep.subr.mxu0 0.0
  %348 = vmatpush1.msra.mxu0 0.0
  %349 = vmatprep.subr.mxu0 0.0
  %350 = vmatpush1.msra.mxu0 0.0
  %351 = vmatprep.subr.mxu0 0.0
  %352 = vmatpush1.msra.mxu0 0.0
  %353 = vmatprep.subr.mxu0 0.0
  %354 = vmatpush1.msra.mxu0 0.0
  %355 = vmatprep.subr.mxu0 0.0
  %356 = vmatpush1.msra.mxu0 0.0
  %357 = vmatprep.subr.mxu0 0.0
  %358 = vmatpush1.msra.mxu0 0.0
  %359 = vmatprep.subr.mxu0 0.0
  %360 = vmatpush1.msra.mxu0 0.0
  %361 = vmatprep.subr.mxu0 0.0
  %362 = vmatpush1.msra.mxu0 0.0
  %363 = vmatprep.subr.mxu0 0.0
  %364 = vmatpush1.msra.mxu0 0.0
  %365 = vmatprep.subr.mxu0 0.0
  %366 = vmatpush1.msra.mxu0 %v324
  %367 = vmatprep.subr.mxu0 0.0
  %368 = vmatpush1.msra.mxu0 %v323
  %369 = vmatprep.subr.mxu0 0.0
  %370 = vmatpush1.msra.mxu0 %v322
  %371 = vmatprep.subr.mxu0 0.0
  %372 = vmatpush1.msra.mxu0 %v321
  %373 = vmatprep.subr.mxu0 0.0
  %374 = vmatpush2.msra.mxu0 0.0
  %375 = vmatprep.subr.mxu0 0.0
  %376 = vmatpush2.msra.mxu0 0.0
  %377 = vmatprep.subr.mxu0 0.0
  %378 = vmatpush2.msra.mxu0 0.0
  %379 = vmatprep.subr.mxu0 0.0
  %380 = vmatpush2.msra.mxu0 0.0
  %381 = vmatprep.subr.mxu0 0.0
  %382 = vmatpush2.msra.mxu0 0.0
  %383 = vmatprep.subr.mxu0 0.0
  %384 = vmatpush2.msra.mxu0 0.0
  %385 = vmatprep.subr.mxu0 0.0
  %386 = vmatpush2.msra.mxu0 0.0
  %387 = vmatprep.subr.mxu0 0.0
  %388 = vmatpush2.msra.mxu0 0.0
  %389 = vmatprep.subr.mxu0 0.0
  %390 = vmatpush2.msra.mxu0 0.0
  %391 = vmatprep.subr.mxu0 0.0
  %392 = vmatpush2.msra.mxu0 0.0
  %393 = vmatprep.subr.mxu0 0.0
  %394 = vmatpush2.msra.mxu0 0.0
  %395 = vmatprep.subr.mxu0 0.0
  %396 = vmatpush2.msra.mxu0 0.0
  %397 = vmatprep.subr.mxu0 0.0
  %398 = vmatpush2.msra.mxu0 0.0
  %399 = vmatprep.subr.mxu0 0.0
  %400 = vmatpush2.msra.mxu0 0.0
  %401 = vmatprep.subr.mxu0 0.0
  %402 = vmatpush2.msra.mxu0 0.0
  %403 = vmatprep.subr.mxu0 0.0
  %404 = vmatpush2.msra.mxu0 0.0
  %405 = vmatprep.mubr.f32.mxu0 0.0
  %406 = vmatmul.mubr.f32.gmra.mxu0 %v333
  %v407 = vpop.f32.mrf.mxu0
  %v408 = vadd.f32 %v330, %v407
  %v409 = vpop.f32.mrf.mxu0
  %410 = vmatprep.mubr.f32.mxu0 0.0
  %411 = vmatmul.mubr.f32.gmra.mxu0 %v336
  %v412 = vpop.f32.mrf.mxu0
  %v413 = vadd.f32 %v330, %v412
  %v414 = vpop.f32.mrf.mxu0
  %415 = vmatprep.mubr.f32.mxu0 0.0
  %416 = vmatmul.mubr.f32.gmra.mxu0 %v339
  %v417 = vpop.f32.mrf.mxu0
  %v418 = vadd.f32 %v330, %v417
  %v419 = vpop.f32.mrf.mxu0
  %420 = vdwg.mxu0
  %s421 = scalar_lea.vmem %s5, 64
  %v422 = vld [vmem:[%s421] sm:$0xff]
  %v423 = vld [vmem:[%s421 + $0x8] sm:$0xff]
  %v424 = vld [vmem:[%s421 + $0x10] sm:$0xff]
  %v425 = vld [vmem:[%s421 + $0x18] sm:$0xff]
  %s426 = scalar_lea.vmem %s6, 2
  %v427 = vld [vmem:[%s426] sm:$0x1]
  %v429 = vlaneseq
  %v430 = vshrl.u32 %v429, 7
  %v431 = vsub.s32 0, %v430
  %v432 = vrot.slane %v427, %v431
  %v435 = vsel %vm100, %v315, 0
  %v438 = vsel %vm100, %v316, 0
  %v441 = vsel %vm100, %v317, 0
  %443 = vmatprep.subr.mxu0 0.0
  %444 = vmatpush1.msra.mxu0 0.0
  %445 = vmatprep.subr.mxu0 0.0
  %446 = vmatpush1.msra.mxu0 0.0
  %447 = vmatprep.subr.mxu0 0.0
  %448 = vmatpush1.msra.mxu0 0.0
  %449 = vmatprep.subr.mxu0 0.0
  %450 = vmatpush1.msra.mxu0 0.0
  %451 = vmatprep.subr.mxu0 0.0
  %452 = vmatpush1.msra.mxu0 0.0
  %453 = vmatprep.subr.mxu0 0.0
  %454 = vmatpush1.msra.mxu0 0.0
  %455 = vmatprep.subr.mxu0 0.0
  %456 = vmatpush1.msra.mxu0 0.0
  %457 = vmatprep.subr.mxu0 0.0
  %458 = vmatpush1.msra.mxu0 0.0
  %459 = vmatprep.subr.mxu0 0.0
  %460 = vmatpush1.msra.mxu0 0.0
  %461 = vmatprep.subr.mxu0 0.0
  %462 = vmatpush1.msra.mxu0 0.0
  %463 = vmatprep.subr.mxu0 0.0
  %464 = vmatpush1.msra.mxu0 0.0
  %465 = vmatprep.subr.mxu0 0.0
  %466 = vmatpush1.msra.mxu0 0.0
  %467 = vmatprep.subr.mxu0 0.0
  %468 = vmatpush1.msra.mxu0 %v425
  %469 = vmatprep.subr.mxu0 0.0
  %470 = vmatpush1.msra.mxu0 %v424
  %471 = vmatprep.subr.mxu0 0.0
  %472 = vmatpush1.msra.mxu0 %v423
  %473 = vmatprep.subr.mxu0 0.0
  %474 = vmatpush1.msra.mxu0 %v422
  %475 = vmatprep.subr.mxu0 0.0
  %476 = vmatpush2.msra.mxu0 0.0
  %477 = vmatprep.subr.mxu0 0.0
  %478 = vmatpush2.msra.mxu0 0.0
  %479 = vmatprep.subr.mxu0 0.0
  %480 = vmatpush2.msra.mxu0 0.0
  %481 = vmatprep.subr.mxu0 0.0
  %482 = vmatpush2.msra.mxu0 0.0
  %483 = vmatprep.subr.mxu0 0.0
  %484 = vmatpush2.msra.mxu0 0.0
  %485 = vmatprep.subr.mxu0 0.0
  %486 = vmatpush2.msra.mxu0 0.0
  %487 = vmatprep.subr.mxu0 0.0
  %488 = vmatpush2.msra.mxu0 0.0
  %489 = vmatprep.subr.mxu0 0.0
  %490 = vmatpush2.msra.mxu0 0.0
  %491 = vmatprep.subr.mxu0 0.0
  %492 = vmatpush2.msra.mxu0 0.0
  %493 = vmatprep.subr.mxu0 0.0
  %494 = vmatpush2.msra.mxu0 0.0
  %495 = vmatprep.subr.mxu0 0.0
  %496 = vmatpush2.msra.mxu0 0.0
  %497 = vmatprep.subr.mxu0 0.0
  %498 = vmatpush2.msra.mxu0 0.0
  %499 = vmatprep.subr.mxu0 0.0
  %500 = vmatpush2.msra.mxu0 0.0
  %501 = vmatprep.subr.mxu0 0.0
  %502 = vmatpush2.msra.mxu0 0.0
  %503 = vmatprep.subr.mxu0 0.0
  %504 = vmatpush2.msra.mxu0 0.0
  %505 = vmatprep.subr.mxu0 0.0
  %506 = vmatpush2.msra.mxu0 0.0
  %507 = vmatprep.mubr.f32.mxu0 0.0
  %508 = vmatmul.mubr.f32.gmra.mxu0 %v435
  %v509 = vpop.f32.mrf.mxu0
  %v510 = vadd.f32 %v432, %v509
  %v511 = vpop.f32.mrf.mxu0
  %512 = vmatprep.mubr.f32.mxu0 0.0
  %513 = vmatmul.mubr.f32.gmra.mxu0 %v438
  %v514 = vpop.f32.mrf.mxu0
  %v515 = vadd.f32 %v432, %v514
  %v516 = vpop.f32.mrf.mxu0
  %517 = vmatprep.mubr.f32.mxu0 0.0
  %518 = vmatmul.mubr.f32.gmra.mxu0 %v441
  %v519 = vpop.f32.mrf.mxu0
  %v520 = vadd.f32 %v432, %v519
  %v521 = vpop.f32.mrf.mxu0
  %522 = vdwg.mxu0
  %s523 = scalar_lea.vmem %s5, 96
  %v524 = vld [vmem:[%s523] sm:$0xff]
  %v525 = vld [vmem:[%s523 + $0x8] sm:$0xff]
  %v526 = vld [vmem:[%s523 + $0x10] sm:$0xff]
  %v527 = vld [vmem:[%s523 + $0x18] sm:$0xff]
  %s528 = scalar_lea.vmem %s6, 3
  %v529 = vld [vmem:[%s528] sm:$0x1]
  %533 = vrot.lane.b32.xlu0 %v408, 96
  %v534 = vpop.permute.xlu0 %533
  %535 = vrot.lane.b32.xlu0 %v413, 96
  %v536 = vpop.permute.xlu0 %535
  %537 = vrot.lane.b32.xlu0 %v418, 96
  %v538 = vpop.permute.xlu0 %537
  %vm539 = vcmask 64512
  %v540 = vsel %vm539, %v408, 0
  %v542 = vsel %vm539, %v413, 0
  %v544 = vsel %vm539, %v418, 0
  %v546 = vsel %vm539, %v534, 0
  %v548 = vsel %vm539, %v536, 0
  %v550 = vsel %vm539, %v538, 0
  %552 = vmatprep.subr.mxu0 0.0
  %553 = vmatpush1.xpose.msra.mxu0 0.0
  %554 = vmatprep.subr.mxu0 0.0
  %555 = vmatpush1.xpose.msra.mxu0 0.0
  %556 = vmatprep.subr.mxu0 0.0
  %557 = vmatpush1.xpose.msra.mxu0 0.0
  %558 = vmatprep.subr.mxu0 0.0
  %559 = vmatpush1.xpose.msra.mxu0 0.0
  %560 = vmatprep.subr.mxu0 0.0
  %561 = vmatpush1.xpose.msra.mxu0 0.0
  %562 = vmatprep.subr.mxu0 0.0
  %563 = vmatpush1.xpose.msra.mxu0 0.0
  %564 = vmatprep.subr.mxu0 0.0
  %565 = vmatpush1.xpose.msra.mxu0 0.0
  %566 = vmatprep.subr.mxu0 0.0
  %567 = vmatpush1.xpose.msra.mxu0 0.0
  %568 = vmatprep.subr.mxu0 0.0
  %569 = vmatpush1.xpose.msra.mxu0 0.0
  %570 = vmatprep.subr.mxu0 0.0
  %571 = vmatpush1.xpose.msra.mxu0 0.0
  %572 = vmatprep.subr.mxu0 0.0
  %573 = vmatpush1.xpose.msra.mxu0 0.0
  %574 = vmatprep.subr.mxu0 0.0
  %575 = vmatpush1.xpose.msra.mxu0 0.0
  %576 = vmatprep.subr.mxu0 0.0
  %577 = vmatpush1.xpose.msra.mxu0 0.0
  %578 = vmatprep.subr.mxu0 0.0
  %579 = vmatpush1.xpose.msra.mxu0 %v550
  %580 = vmatprep.subr.mxu0 0.0
  %581 = vmatpush1.xpose.msra.mxu0 %v548
  %582 = vmatprep.subr.mxu0 0.0
  %583 = vmatpush1.xpose.msra.mxu0 %v546
  %584 = vmatprep.subr.mxu0 0.0
  %585 = vmatpush2.xpose.msra.mxu0 0.0
  %586 = vmatprep.subr.mxu0 0.0
  %587 = vmatpush2.xpose.msra.mxu0 0.0
  %588 = vmatprep.subr.mxu0 0.0
  %589 = vmatpush2.xpose.msra.mxu0 0.0
  %590 = vmatprep.subr.mxu0 0.0
  %591 = vmatpush2.xpose.msra.mxu0 0.0
  %592 = vmatprep.subr.mxu0 0.0
  %593 = vmatpush2.xpose.msra.mxu0 0.0
  %594 = vmatprep.subr.mxu0 0.0
  %595 = vmatpush2.xpose.msra.mxu0 0.0
  %596 = vmatprep.subr.mxu0 0.0
  %597 = vmatpush2.xpose.msra.mxu0 0.0
  %598 = vmatprep.subr.mxu0 0.0
  %599 = vmatpush2.xpose.msra.mxu0 0.0
  %600 = vmatprep.subr.mxu0 0.0
  %601 = vmatpush2.xpose.msra.mxu0 0.0
  %602 = vmatprep.subr.mxu0 0.0
  %603 = vmatpush2.xpose.msra.mxu0 0.0
  %604 = vmatprep.subr.mxu0 0.0
  %605 = vmatpush2.xpose.msra.mxu0 0.0
  %606 = vmatprep.subr.mxu0 0.0
  %607 = vmatpush2.xpose.msra.mxu0 0.0
  %608 = vmatprep.subr.mxu0 0.0
  %609 = vmatpush2.xpose.msra.mxu0 0.0
  %610 = vmatprep.subr.mxu0 0.0
  %611 = vmatpush2.xpose.msra.mxu0 0.0
  %612 = vmatprep.subr.mxu0 0.0
  %613 = vmatpush2.xpose.msra.mxu0 0.0
  %614 = vmatprep.subr.mxu0 0.0
  %615 = vmatpush2.xpose.msra.mxu0 0.0
  %616 = vmatprep.mubr.f32.mxu0 0.0
  %617 = vmatmul.mubr.f32.gmra.mxu0 %v540
  %v618 = vpop.f32.mrf.mxu0
  %v619 = vadd.f32 %v78, %v618
  %v620 = vpop.f32.mrf.mxu0
  %621 = vmatprep.mubr.f32.mxu0 0.0
  %622 = vmatmul.mubr.f32.gmra.mxu0 %v542
  %v623 = vpop.f32.mrf.mxu0
  %v624 = vadd.f32 %v79, %v623
  %v625 = vpop.f32.mrf.mxu0
  %626 = vmatprep.mubr.f32.mxu0 0.0
  %627 = vmatmul.mubr.f32.gmra.mxu0 %v544
  %v628 = vpop.f32.mrf.mxu0
  %v629 = vadd.f32 %v80, %v628
  %v630 = vpop.f32.mrf.mxu0
  %631 = vdwg.mxu0
  %vm632 = vcmask 146432
  %v633 = vsel %vm632, %v619, -inf
  %634 = vmax.xlane.f32.xlu0 %v633
  %v635 = vpop.xlane.xlu0 %634
  %v636 = vsel %vm632, %v624, -inf
  %637 = vmax.xlane.f32.xlu0 %v636
  %v638 = vpop.xlane.xlu0 %637
  %vm639 = vcmask 140288
  %v640 = vsel %vm639, %v629, -inf
  %641 = vmax.xlane.f32.xlu0 %v640
  %v642 = vpop.xlane.xlu0 %641
  %v643 = vsub.f32 %v619, %v635
  %v644 = vsub.f32 %v624, %v638
  %v645 = vsub.f32 %v629, %v642
  %v646 = vmul.f32 %v643, 1.442695
  %v647 = vpow.pop %v646
  %v648 = vmul.f32 %v644, 1.442695
  %v649 = vpow.pop %v648
  %v650 = vmul.f32 %v645, 1.442695
  %v651 = vpow.pop %v650
  %v652 = vsel %vm632, %v647, 0.0
  %653 = vadd.xlane.f32.xlu0 %v652
  %v654 = vpop.xlane.xlu0 %653
  %v655 = vsel %vm632, %v649, 0.0
  %656 = vadd.xlane.f32.xlu0 %v655
  %v657 = vpop.xlane.xlu0 %656
  %v658 = vsel %vm639, %v651, 0.0
  %659 = vadd.xlane.f32.xlu0 %v658
  %v660 = vpop.xlane.xlu0 %659
  %v661 = vrcp.pop %v654
  %v662 = vrcp.pop %v657
  %v663 = vrcp.pop %v660
  %v664 = vmul.f32 %v647, %v661
  %v665 = vmul.f32 %v649, %v662
  %v666 = vmul.f32 %v651, %v663
  %v668 = vsel %vm632, %v664, 0
  %v671 = vsel %vm632, %v665, 0
  %v674 = vsel %vm632, %v666, 0
  %vm676 = vcmask 1041408
  %v678 = vsel %vm676, %v520, 0
  %680 = vmatprep.subr.mxu0 0.0
  %681 = vmatpush1.msra.mxu0 0.0
  %682 = vmatprep.subr.mxu0 0.0
  %683 = vmatpush1.msra.mxu0 0.0
  %684 = vmatprep.subr.mxu0 0.0
  %685 = vmatpush1.msra.mxu0 0.0
  %686 = vmatprep.subr.mxu0 0.0
  %687 = vmatpush1.msra.mxu0 0.0
  %688 = vmatprep.subr.mxu0 0.0
  %689 = vmatpush1.msra.mxu0 0.0
  %690 = vmatprep.subr.mxu0 0.0
  %691 = vmatpush1.msra.mxu0 0.0
  %692 = vmatprep.subr.mxu0 0.0
  %693 = vmatpush1.msra.mxu0 0.0
  %694 = vmatprep.subr.mxu0 0.0
  %695 = vmatpush1.msra.mxu0 0.0
  %696 = vmatprep.subr.mxu0 0.0
  %697 = vmatpush1.msra.mxu0 0.0
  %698 = vmatprep.subr.mxu0 0.0
  %699 = vmatpush1.msra.mxu0 0.0
  %700 = vmatprep.subr.mxu0 0.0
  %701 = vmatpush1.msra.mxu0 0.0
  %702 = vmatprep.subr.mxu0 0.0
  %703 = vmatpush1.msra.mxu0 0.0
  %704 = vmatprep.subr.mxu0 0.0
  %705 = vmatpush1.msra.mxu0 0.0
  %706 = vmatprep.subr.mxu0 0.0
  %707 = vmatpush1.msra.mxu0 %v678
  %708 = vmatprep.subr.mxu0 0.0
  %709 = vmatpush1.msra.mxu0 %v515
  %710 = vmatprep.subr.mxu0 0.0
  %711 = vmatpush1.msra.mxu0 %v510
  %712 = vmatprep.subr.mxu0 0.0
  %713 = vmatpush2.msra.mxu0 0.0
  %714 = vmatprep.subr.mxu0 0.0
  %715 = vmatpush2.msra.mxu0 0.0
  %716 = vmatprep.subr.mxu0 0.0
  %717 = vmatpush2.msra.mxu0 0.0
  %718 = vmatprep.subr.mxu0 0.0
  %719 = vmatpush2.msra.mxu0 0.0
  %720 = vmatprep.subr.mxu0 0.0
  %721 = vmatpush2.msra.mxu0 0.0
  %722 = vmatprep.subr.mxu0 0.0
  %723 = vmatpush2.msra.mxu0 0.0
  %724 = vmatprep.subr.mxu0 0.0
  %725 = vmatpush2.msra.mxu0 0.0
  %726 = vmatprep.subr.mxu0 0.0
  %727 = vmatpush2.msra.mxu0 0.0
  %728 = vmatprep.subr.mxu0 0.0
  %729 = vmatpush2.msra.mxu0 0.0
  %730 = vmatprep.subr.mxu0 0.0
  %731 = vmatpush2.msra.mxu0 0.0
  %732 = vmatprep.subr.mxu0 0.0
  %733 = vmatpush2.msra.mxu0 0.0
  %734 = vmatprep.subr.mxu0 0.0
  %735 = vmatpush2.msra.mxu0 0.0
  %736 = vmatprep.subr.mxu0 0.0
  %737 = vmatpush2.msra.mxu0 0.0
  %738 = vmatprep.subr.mxu0 0.0
  %739 = vmatpush2.msra.mxu0 0.0
  %740 = vmatprep.subr.mxu0 0.0
  %741 = vmatpush2.msra.mxu0 0.0
  %742 = vmatprep.subr.mxu0 0.0
  %743 = vmatpush2.msra.mxu0 0.0
  %744 = vmatprep.mubr.f32.mxu0 0.0
  %745 = vmatmul.mubr.f32.gmra.mxu0 %v668
  %v746 = vpop.f32.mrf.mxu0
  %v747 = vadd.f32 0.0, %v746
  %v748 = vpop.f32.mrf.mxu0
  %749 = vmatprep.mubr.f32.mxu0 0.0
  %750 = vmatmul.mubr.f32.gmra.mxu0 %v671
  %v751 = vpop.f32.mrf.mxu0
  %v752 = vadd.f32 0.0, %v751
  %v753 = vpop.f32.mrf.mxu0
  %754 = vmatprep.mubr.f32.mxu0 0.0
  %755 = vmatmul.mubr.f32.gmra.mxu0 %v674
  %v756 = vpop.f32.mrf.mxu0
  %v757 = vadd.f32 0.0, %v756
  %v758 = vpop.f32.mrf.mxu0
  %759 = vdwg.mxu0
  %760 = vrot.lane.b32.xlu0 %v408, 120
  %v761 = vpop.permute.xlu0 %760
  %762 = vrot.lane.b32.xlu0 %v413, 120
  %v763 = vpop.permute.xlu0 %762
  %764 = vrot.lane.b32.xlu0 %v418, 120
  %v765 = vpop.permute.xlu0 %764
  %766 = vrot.lane.b32.xlu0 %v408, 88
  %v767 = vpop.permute.xlu0 %766
  %768 = vrot.lane.b32.xlu0 %v413, 88
  %v769 = vpop.permute.xlu0 %768
  %770 = vrot.lane.b32.xlu0 %v418, 88
  %v771 = vpop.permute.xlu0 %770
  %v772 = vsel %vm539, %v761, 0
  %v774 = vsel %vm539, %v763, 0
  %v776 = vsel %vm539, %v765, 0
  %v778 = vsel %vm539, %v767, 0
  %v780 = vsel %vm539, %v769, 0
  %v782 = vsel %vm539, %v771, 0
  %784 = vmatprep.subr.mxu0 0.0
  %785 = vmatpush1.xpose.msra.mxu0 0.0
  %786 = vmatprep.subr.mxu0 0.0
  %787 = vmatpush1.xpose.msra.mxu0 0.0
  %788 = vmatprep.subr.mxu0 0.0
  %789 = vmatpush1.xpose.msra.mxu0 0.0
  %790 = vmatprep.subr.mxu0 0.0
  %791 = vmatpush1.xpose.msra.mxu0 0.0
  %792 = vmatprep.subr.mxu0 0.0
  %793 = vmatpush1.xpose.msra.mxu0 0.0
  %794 = vmatprep.subr.mxu0 0.0
  %795 = vmatpush1.xpose.msra.mxu0 0.0
  %796 = vmatprep.subr.mxu0 0.0
  %797 = vmatpush1.xpose.msra.mxu0 0.0
  %798 = vmatprep.subr.mxu0 0.0
  %799 = vmatpush1.xpose.msra.mxu0 0.0
  %800 = vmatprep.subr.mxu0 0.0
  %801 = vmatpush1.xpose.msra.mxu0 0.0
  %802 = vmatprep.subr.mxu0 0.0
  %803 = vmatpush1.xpose.msra.mxu0 0.0
  %804 = vmatprep.subr.mxu0 0.0
  %805 = vmatpush1.xpose.msra.mxu0 0.0
  %806 = vmatprep.subr.mxu0 0.0
  %807 = vmatpush1.xpose.msra.mxu0 0.0
  %808 = vmatprep.subr.mxu0 0.0
  %809 = vmatpush1.xpose.msra.mxu0 0.0
  %810 = vmatprep.subr.mxu0 0.0
  %811 = vmatpush1.xpose.msra.mxu0 %v782
  %812 = vmatprep.subr.mxu0 0.0
  %813 = vmatpush1.xpose.msra.mxu0 %v780
  %814 = vmatprep.subr.mxu0 0.0
  %815 = vmatpush1.xpose.msra.mxu0 %v778
  %816 = vmatprep.subr.mxu0 0.0
  %817 = vmatpush2.xpose.msra.mxu0 0.0
  %818 = vmatprep.subr.mxu0 0.0
  %819 = vmatpush2.xpose.msra.mxu0 0.0
  %820 = vmatprep.subr.mxu0 0.0
  %821 = vmatpush2.xpose.msra.mxu0 0.0
  %822 = vmatprep.subr.mxu0 0.0
  %823 = vmatpush2.xpose.msra.mxu0 0.0
  %824 = vmatprep.subr.mxu0 0.0
  %825 = vmatpush2.xpose.msra.mxu0 0.0
  %826 = vmatprep.subr.mxu0 0.0
  %827 = vmatpush2.xpose.msra.mxu0 0.0
  %828 = vmatprep.subr.mxu0 0.0
  %829 = vmatpush2.xpose.msra.mxu0 0.0
  %830 = vmatprep.subr.mxu0 0.0
  %831 = vmatpush2.xpose.msra.mxu0 0.0
  %832 = vmatprep.subr.mxu0 0.0
  %833 = vmatpush2.xpose.msra.mxu0 0.0
  %834 = vmatprep.subr.mxu0 0.0
  %835 = vmatpush2.xpose.msra.mxu0 0.0
  %836 = vmatprep.subr.mxu0 0.0
  %837 = vmatpush2.xpose.msra.mxu0 0.0
  %838 = vmatprep.subr.mxu0 0.0
  %839 = vmatpush2.xpose.msra.mxu0 0.0
  %840 = vmatprep.subr.mxu0 0.0
  %841 = vmatpush2.xpose.msra.mxu0 0.0
  %842 = vmatprep.subr.mxu0 0.0
  %843 = vmatpush2.xpose.msra.mxu0 0.0
  %844 = vmatprep.subr.mxu0 0.0
  %845 = vmatpush2.xpose.msra.mxu0 0.0
  %846 = vmatprep.subr.mxu0 0.0
  %847 = vmatpush2.xpose.msra.mxu0 0.0
  %848 = vmatprep.mubr.f32.mxu0 0.0
  %849 = vmatmul.mubr.f32.gmra.mxu0 %v772
  %v850 = vpop.f32.mrf.mxu0
  %v851 = vadd.f32 %v78, %v850
  %v852 = vpop.f32.mrf.mxu0
  %853 = vmatprep.mubr.f32.mxu0 0.0
  %854 = vmatmul.mubr.f32.gmra.mxu0 %v774
  %v855 = vpop.f32.mrf.mxu0
  %v856 = vadd.f32 %v79, %v855
  %v857 = vpop.f32.mrf.mxu0
  %858 = vmatprep.mubr.f32.mxu0 0.0
  %859 = vmatmul.mubr.f32.gmra.mxu0 %v776
  %v860 = vpop.f32.mrf.mxu0
  %v861 = vadd.f32 %v80, %v860
  %v862 = vpop.f32.mrf.mxu0
  %863 = vdwg.mxu0
  %v864 = vsel %vm632, %v851, -inf
  %865 = vmax.xlane.f32.xlu0 %v864
  %v866 = vpop.xlane.xlu0 %865
  %v867 = vsel %vm632, %v856, -inf
  %868 = vmax.xlane.f32.xlu0 %v867
  %v869 = vpop.xlane.xlu0 %868
  %v870 = vsel %vm639, %v861, -inf
  %871 = vmax.xlane.f32.xlu0 %v870
  %v872 = vpop.xlane.xlu0 %871
  %v873 = vsub.f32 %v851, %v866
  %v874 = vsub.f32 %v856, %v869
  %v875 = vsub.f32 %v861, %v872
  %v876 = vmul.f32 %v873, 1.442695
  %v877 = vpow.pop %v876
  %v878 = vmul.f32 %v874, 1.442695
  %v879 = vpow.pop %v878
  %v880 = vmul.f32 %v875, 1.442695
  %v881 = vpow.pop %v880
  %v882 = vsel %vm632, %v877, 0.0
  %883 = vadd.xlane.f32.xlu0 %v882
  %v884 = vpop.xlane.xlu0 %883
  %v885 = vsel %vm632, %v879, 0.0
  %886 = vadd.xlane.f32.xlu0 %v885
  %v887 = vpop.xlane.xlu0 %886
  %v888 = vsel %vm639, %v881, 0.0
  %889 = vadd.xlane.f32.xlu0 %v888
  %v890 = vpop.xlane.xlu0 %889
  %v891 = vrcp.pop %v884
  %v892 = vrcp.pop %v887
  %v893 = vrcp.pop %v890
  %v894 = vmul.f32 %v877, %v891
  %v895 = vmul.f32 %v879, %v892
  %v896 = vmul.f32 %v881, %v893
  %899 = vrot.lane.b32.xlu0 %v510, 120
  %v900 = vpop.permute.xlu0 %899
  %901 = vrot.lane.b32.xlu0 %v515, 120
  %v902 = vpop.permute.xlu0 %901
  %903 = vrot.lane.b32.xlu0 %v520, 120
  %v904 = vpop.permute.xlu0 %903
  %v908 = vsel %vm632, %v894, 0
  %v911 = vsel %vm632, %v895, 0
  %v914 = vsel %vm632, %v896, 0
  %v916 = vsel %vm676, %v904, 0
  %918 = vmatprep.subr.mxu0 0.0
  %919 = vmatpush1.msra.mxu0 0.0
  %920 = vmatprep.subr.mxu0 0.0
  %921 = vmatpush1.msra.mxu0 0.0
  %922 = vmatprep.subr.mxu0 0.0
  %923 = vmatpush1.msra.mxu0 0.0
  %924 = vmatprep.subr.mxu0 0.0
  %925 = vmatpush1.msra.mxu0 0.0
  %926 = vmatprep.subr.mxu0 0.0
  %927 = vmatpush1.msra.mxu0 0.0
  %928 = vmatprep.subr.mxu0 0.0
  %929 = vmatpush1.msra.mxu0 0.0
  %930 = vmatprep.subr.mxu0 0.0
  %931 = vmatpush1.msra.mxu0 0.0
  %932 = vmatprep.subr.mxu0 0.0
  %933 = vmatpush1.msra.mxu0 0.0
  %934 = vmatprep.subr.mxu0 0.0
  %935 = vmatpush1.msra.mxu0 0.0
  %936 = vmatprep.subr.mxu0 0.0
  %937 = vmatpush1.msra.mxu0 0.0
  %938 = vmatprep.subr.mxu0 0.0
  %939 = vmatpush1.msra.mxu0 0.0
  %940 = vmatprep.subr.mxu0 0.0
  %941 = vmatpush1.msra.mxu0 0.0
  %942 = vmatprep.subr.mxu0 0.0
  %943 = vmatpush1.msra.mxu0 0.0
  %944 = vmatprep.subr.mxu0 0.0
  %945 = vmatpush1.msra.mxu0 %v916
  %946 = vmatprep.subr.mxu0 0.0
  %947 = vmatpush1.msra.mxu0 %v902
  %948 = vmatprep.subr.mxu0 0.0
  %949 = vmatpush1.msra.mxu0 %v900
  %950 = vmatprep.subr.mxu0 0.0
  %951 = vmatpush2.msra.mxu0 0.0
  %952 = vmatprep.subr.mxu0 0.0
  %953 = vmatpush2.msra.mxu0 0.0
  %954 = vmatprep.subr.mxu0 0.0
  %955 = vmatpush2.msra.mxu0 0.0
  %956 = vmatprep.subr.mxu0 0.0
  %957 = vmatpush2.msra.mxu0 0.0
  %958 = vmatprep.subr.mxu0 0.0
  %959 = vmatpush2.msra.mxu0 0.0
  %960 = vmatprep.subr.mxu0 0.0
  %961 = vmatpush2.msra.mxu0 0.0
  %962 = vmatprep.subr.mxu0 0.0
  %963 = vmatpush2.msra.mxu0 0.0
  %964 = vmatprep.subr.mxu0 0.0
  %965 = vmatpush2.msra.mxu0 0.0
  %966 = vmatprep.subr.mxu0 0.0
  %967 = vmatpush2.msra.mxu0 0.0
  %968 = vmatprep.subr.mxu0 0.0
  %969 = vmatpush2.msra.mxu0 0.0
  %970 = vmatprep.subr.mxu0 0.0
  %971 = vmatpush2.msra.mxu0 0.0
  %972 = vmatprep.subr.mxu0 0.0
  %973 = vmatpush2.msra.mxu0 0.0
  %974 = vmatprep.subr.mxu0 0.0
  %975 = vmatpush2.msra.mxu0 0.0
  %976 = vmatprep.subr.mxu0 0.0
  %977 = vmatpush2.msra.mxu0 0.0
  %978 = vmatprep.subr.mxu0 0.0
  %979 = vmatpush2.msra.mxu0 0.0
  %980 = vmatprep.subr.mxu0 0.0
  %981 = vmatpush2.msra.mxu0 0.0
  %982 = vmatprep.mubr.f32.mxu0 0.0
  %983 = vmatmul.mubr.f32.gmra.mxu0 %v908
  %v984 = vpop.f32.mrf.mxu0
  %v985 = vadd.f32 0.0, %v984
  %v986 = vpop.f32.mrf.mxu0
  %987 = vmatprep.mubr.f32.mxu0 0.0
  %988 = vmatmul.mubr.f32.gmra.mxu0 %v911
  %v989 = vpop.f32.mrf.mxu0
  %v990 = vadd.f32 0.0, %v989
  %v991 = vpop.f32.mrf.mxu0
  %992 = vmatprep.mubr.f32.mxu0 0.0
  %993 = vmatmul.mubr.f32.gmra.mxu0 %v914
  %v994 = vpop.f32.mrf.mxu0
  %v995 = vadd.f32 0.0, %v994
  %v996 = vpop.f32.mrf.mxu0
  %997 = vdwg.mxu0
  %v999 = vsel %vm539, %v985, 0
  %v1002 = vsel %vm539, %v990, 0
  %v1005 = vsel %vm539, %v995, 0
  %1007 = vmatprep.subr.mxu0 0.0
  %1008 = vmatpush1.msra.mxu0 0.0
  %1009 = vmatprep.subr.mxu0 0.0
  %1010 = vmatpush1.msra.mxu0 0.0
  %1011 = vmatprep.subr.mxu0 0.0
  %1012 = vmatpush1.msra.mxu0 0.0
  %1013 = vmatprep.subr.mxu0 0.0
  %1014 = vmatpush1.msra.mxu0 0.0
  %1015 = vmatprep.subr.mxu0 0.0
  %1016 = vmatpush1.msra.mxu0 0.0
  %1017 = vmatprep.subr.mxu0 0.0
  %1018 = vmatpush1.msra.mxu0 0.0
  %1019 = vmatprep.subr.mxu0 0.0
  %1020 = vmatpush1.msra.mxu0 0.0
  %1021 = vmatprep.subr.mxu0 0.0
  %1022 = vmatpush1.msra.mxu0 0.0
  %1023 = vmatprep.subr.mxu0 0.0
  %1024 = vmatpush1.msra.mxu0 0.0
  %1025 = vmatprep.subr.mxu0 0.0
  %1026 = vmatpush1.msra.mxu0 0.0
  %1027 = vmatprep.subr.mxu0 0.0
  %1028 = vmatpush1.msra.mxu0 0.0
  %1029 = vmatprep.subr.mxu0 0.0
  %1030 = vmatpush1.msra.mxu0 0.0
  %1031 = vmatprep.subr.mxu0 0.0
  %1032 = vmatpush1.msra.mxu0 0.0
  %1033 = vmatprep.subr.mxu0 0.0
  %1034 = vmatpush1.msra.mxu0 0.0
  %1035 = vmatprep.subr.mxu0 0.0
  %1036 = vmatpush1.msra.mxu0 0.0
  %1037 = vmatprep.subr.mxu0 0.0
  %1038 = vmatpush1.msra.mxu0 %v525
  %1039 = vmatprep.subr.mxu0 0.0
  %1040 = vmatpush2.msra.mxu0 0.0
  %1041 = vmatprep.subr.mxu0 0.0
  %1042 = vmatpush2.msra.mxu0 0.0
  %1043 = vmatprep.subr.mxu0 0.0
  %1044 = vmatpush2.msra.mxu0 0.0
  %1045 = vmatprep.subr.mxu0 0.0
  %1046 = vmatpush2.msra.mxu0 0.0
  %1047 = vmatprep.subr.mxu0 0.0
  %1048 = vmatpush2.msra.mxu0 0.0
  %1049 = vmatprep.subr.mxu0 0.0
  %1050 = vmatpush2.msra.mxu0 0.0
  %1051 = vmatprep.subr.mxu0 0.0
  %1052 = vmatpush2.msra.mxu0 0.0
  %1053 = vmatprep.subr.mxu0 0.0
  %1054 = vmatpush2.msra.mxu0 0.0
  %1055 = vmatprep.subr.mxu0 0.0
  %1056 = vmatpush2.msra.mxu0 0.0
  %1057 = vmatprep.subr.mxu0 0.0
  %1058 = vmatpush2.msra.mxu0 0.0
  %1059 = vmatprep.subr.mxu0 0.0
  %1060 = vmatpush2.msra.mxu0 0.0
  %1061 = vmatprep.subr.mxu0 0.0
  %1062 = vmatpush2.msra.mxu0 0.0
  %1063 = vmatprep.subr.mxu0 0.0
  %1064 = vmatpush2.msra.mxu0 0.0
  %1065 = vmatprep.subr.mxu0 0.0
  %1066 = vmatpush2.msra.mxu0 0.0
  %1067 = vmatprep.subr.mxu0 0.0
  %1068 = vmatpush2.msra.mxu0 0.0
  %1069 = vmatprep.subr.mxu0 0.0
  %1070 = vmatpush2.msra.mxu0 0.0
  %1071 = vmatprep.mubr.f32.mxu0 0.0
  %1072 = vmatmul.mubr.f32.gmra.mxu0 %v999
  %v1073 = vpop.f32.mrf.mxu0
  %v1074 = vadd.f32 0.0, %v1073
  %v1075 = vpop.f32.mrf.mxu0
  %1076 = vmatprep.mubr.f32.mxu0 0.0
  %1077 = vmatmul.mubr.f32.gmra.mxu0 %v1002
  %v1078 = vpop.f32.mrf.mxu0
  %v1079 = vadd.f32 0.0, %v1078
  %v1080 = vpop.f32.mrf.mxu0
  %1081 = vmatprep.mubr.f32.mxu0 0.0
  %1082 = vmatmul.mubr.f32.gmra.mxu0 %v1005
  %v1083 = vpop.f32.mrf.mxu0
  %v1084 = vadd.f32 0.0, %v1083
  %v1085 = vpop.f32.mrf.mxu0
  %1086 = vdwg.mxu0
  %v1088 = vsel %vm539, %v747, 0
  %v1091 = vsel %vm539, %v752, 0
  %v1094 = vsel %vm539, %v757, 0
  %1096 = vmatprep.subr.mxu0 0.0
  %1097 = vmatpush1.msra.mxu0 0.0
  %1098 = vmatprep.subr.mxu0 0.0
  %1099 = vmatpush1.msra.mxu0 0.0
  %1100 = vmatprep.subr.mxu0 0.0
  %1101 = vmatpush1.msra.mxu0 0.0
  %1102 = vmatprep.subr.mxu0 0.0
  %1103 = vmatpush1.msra.mxu0 0.0
  %1104 = vmatprep.subr.mxu0 0.0
  %1105 = vmatpush1.msra.mxu0 0.0
  %1106 = vmatprep.subr.mxu0 0.0
  %1107 = vmatpush1.msra.mxu0 0.0
  %1108 = vmatprep.subr.mxu0 0.0
  %1109 = vmatpush1.msra.mxu0 0.0
  %1110 = vmatprep.subr.mxu0 0.0
  %1111 = vmatpush1.msra.mxu0 0.0
  %1112 = vmatprep.subr.mxu0 0.0
  %1113 = vmatpush1.msra.mxu0 0.0
  %1114 = vmatprep.subr.mxu0 0.0
  %1115 = vmatpush1.msra.mxu0 0.0
  %1116 = vmatprep.subr.mxu0 0.0
  %1117 = vmatpush1.msra.mxu0 0.0
  %1118 = vmatprep.subr.mxu0 0.0
  %1119 = vmatpush1.msra.mxu0 0.0
  %1120 = vmatprep.subr.mxu0 0.0
  %1121 = vmatpush1.msra.mxu0 0.0
  %1122 = vmatprep.subr.mxu0 0.0
  %1123 = vmatpush1.msra.mxu0 0.0
  %1124 = vmatprep.subr.mxu0 0.0
  %1125 = vmatpush1.msra.mxu0 0.0
  %1126 = vmatprep.subr.mxu0 0.0
  %1127 = vmatpush1.msra.mxu0 %v524
  %1128 = vmatprep.subr.mxu0 0.0
  %1129 = vmatpush2.msra.mxu0 0.0
  %1130 = vmatprep.subr.mxu0 0.0
  %1131 = vmatpush2.msra.mxu0 0.0
  %1132 = vmatprep.subr.mxu0 0.0
  %1133 = vmatpush2.msra.mxu0 0.0
  %1134 = vmatprep.subr.mxu0 0.0
  %1135 = vmatpush2.msra.mxu0 0.0
  %1136 = vmatprep.subr.mxu0 0.0
  %1137 = vmatpush2.msra.mxu0 0.0
  %1138 = vmatprep.subr.mxu0 0.0
  %1139 = vmatpush2.msra.mxu0 0.0
  %1140 = vmatprep.subr.mxu0 0.0
  %1141 = vmatpush2.msra.mxu0 0.0
  %1142 = vmatprep.subr.mxu0 0.0
  %1143 = vmatpush2.msra.mxu0 0.0
  %1144 = vmatprep.subr.mxu0 0.0
  %1145 = vmatpush2.msra.mxu0 0.0
  %1146 = vmatprep.subr.mxu0 0.0
  %1147 = vmatpush2.msra.mxu0 0.0
  %1148 = vmatprep.subr.mxu0 0.0
  %1149 = vmatpush2.msra.mxu0 0.0
  %1150 = vmatprep.subr.mxu0 0.0
  %1151 = vmatpush2.msra.mxu0 0.0
  %1152 = vmatprep.subr.mxu0 0.0
  %1153 = vmatpush2.msra.mxu0 0.0
  %1154 = vmatprep.subr.mxu0 0.0
  %1155 = vmatpush2.msra.mxu0 0.0
  %1156 = vmatprep.subr.mxu0 0.0
  %1157 = vmatpush2.msra.mxu0 0.0
  %1158 = vmatprep.subr.mxu0 0.0
  %1159 = vmatpush2.msra.mxu0 0.0
  %1160 = vmatprep.mubr.f32.mxu0 0.0
  %1161 = vmatmul.mubr.f32.gmra.mxu0 %v1088
  %v1162 = vpop.f32.mrf.mxu0
  %v1163 = vadd.f32 %v1074, %v1162
  %v1164 = vpop.f32.mrf.mxu0
  %1165 = vmatprep.mubr.f32.mxu0 0.0
  %1166 = vmatmul.mubr.f32.gmra.mxu0 %v1091
  %v1167 = vpop.f32.mrf.mxu0
  %v1168 = vadd.f32 %v1079, %v1167
  %v1169 = vpop.f32.mrf.mxu0
  %1170 = vmatprep.mubr.f32.mxu0 0.0
  %1171 = vmatmul.mubr.f32.gmra.mxu0 %v1094
  %v1172 = vpop.f32.mrf.mxu0
  %v1173 = vadd.f32 %v1084, %v1172
  %v1174 = vpop.f32.mrf.mxu0
  %1175 = vdwg.mxu0
  %1176 = vrot.lane.b32.xlu0 %v408, 112
  %v1177 = vpop.permute.xlu0 %1176
  %1178 = vrot.lane.b32.xlu0 %v413, 112
  %v1179 = vpop.permute.xlu0 %1178
  %1180 = vrot.lane.b32.xlu0 %v418, 112
  %v1181 = vpop.permute.xlu0 %1180
  %1182 = vrot.lane.b32.xlu0 %v408, 80
  %v1183 = vpop.permute.xlu0 %1182
  %1184 = vrot.lane.b32.xlu0 %v413, 80
  %v1185 = vpop.permute.xlu0 %1184
  %1186 = vrot.lane.b32.xlu0 %v418, 80
  %v1187 = vpop.permute.xlu0 %1186
  %v1188 = vsel %vm539, %v1177, 0
  %v1190 = vsel %vm539, %v1179, 0
  %v1192 = vsel %vm539, %v1181, 0
  %v1194 = vsel %vm539, %v1183, 0
  %v1196 = vsel %vm539, %v1185, 0
  %v1198 = vsel %vm539, %v1187, 0
  %1200 = vmatprep.subr.mxu0 0.0
  %1201 = vmatpush1.xpose.msra.mxu0 0.0
  %1202 = vmatprep.subr.mxu0 0.0
  %1203 = vmatpush1.xpose.msra.mxu0 0.0
  %1204 = vmatprep.subr.mxu0 0.0
  %1205 = vmatpush1.xpose.msra.mxu0 0.0
  %1206 = vmatprep.subr.mxu0 0.0
  %1207 = vmatpush1.xpose.msra.mxu0 0.0
  %1208 = vmatprep.subr.mxu0 0.0
  %1209 = vmatpush1.xpose.msra.mxu0 0.0
  %1210 = vmatprep.subr.mxu0 0.0
  %1211 = vmatpush1.xpose.msra.mxu0 0.0
  %1212 = vmatprep.subr.mxu0 0.0
  %1213 = vmatpush1.xpose.msra.mxu0 0.0
  %1214 = vmatprep.subr.mxu0 0.0
  %1215 = vmatpush1.xpose.msra.mxu0 0.0
  %1216 = vmatprep.subr.mxu0 0.0
  %1217 = vmatpush1.xpose.msra.mxu0 0.0
  %1218 = vmatprep.subr.mxu0 0.0
  %1219 = vmatpush1.xpose.msra.mxu0 0.0
  %1220 = vmatprep.subr.mxu0 0.0
  %1221 = vmatpush1.xpose.msra.mxu0 0.0
  %1222 = vmatprep.subr.mxu0 0.0
  %1223 = vmatpush1.xpose.msra.mxu0 0.0
  %1224 = vmatprep.subr.mxu0 0.0
  %1225 = vmatpush1.xpose.msra.mxu0 0.0
  %1226 = vmatprep.subr.mxu0 0.0
  %1227 = vmatpush1.xpose.msra.mxu0 %v1198
  %1228 = vmatprep.subr.mxu0 0.0
  %1229 = vmatpush1.xpose.msra.mxu0 %v1196
  %1230 = vmatprep.subr.mxu0 0.0
  %1231 = vmatpush1.xpose.msra.mxu0 %v1194
  %1232 = vmatprep.subr.mxu0 0.0
  %1233 = vmatpush2.xpose.msra.mxu0 0.0
  %1234 = vmatprep.subr.mxu0 0.0
  %1235 = vmatpush2.xpose.msra.mxu0 0.0
  %1236 = vmatprep.subr.mxu0 0.0
  %1237 = vmatpush2.xpose.msra.mxu0 0.0
  %1238 = vmatprep.subr.mxu0 0.0
  %1239 = vmatpush2.xpose.msra.mxu0 0.0
  %1240 = vmatprep.subr.mxu0 0.0
  %1241 = vmatpush2.xpose.msra.mxu0 0.0
  %1242 = vmatprep.subr.mxu0 0.0
  %1243 = vmatpush2.xpose.msra.mxu0 0.0
  %1244 = vmatprep.subr.mxu0 0.0
  %1245 = vmatpush2.xpose.msra.mxu0 0.0
  %1246 = vmatprep.subr.mxu0 0.0
  %1247 = vmatpush2.xpose.msra.mxu0 0.0
  %1248 = vmatprep.subr.mxu0 0.0
  %1249 = vmatpush2.xpose.msra.mxu0 0.0
  %1250 = vmatprep.subr.mxu0 0.0
  %1251 = vmatpush2.xpose.msra.mxu0 0.0
  %1252 = vmatprep.subr.mxu0 0.0
  %1253 = vmatpush2.xpose.msra.mxu0 0.0
  %1254 = vmatprep.subr.mxu0 0.0
  %1255 = vmatpush2.xpose.msra.mxu0 0.0
  %1256 = vmatprep.subr.mxu0 0.0
  %1257 = vmatpush2.xpose.msra.mxu0 0.0
  %1258 = vmatprep.subr.mxu0 0.0
  %1259 = vmatpush2.xpose.msra.mxu0 0.0
  %1260 = vmatprep.subr.mxu0 0.0
  %1261 = vmatpush2.xpose.msra.mxu0 0.0
  %1262 = vmatprep.subr.mxu0 0.0
  %1263 = vmatpush2.xpose.msra.mxu0 0.0
  %1264 = vmatprep.mubr.f32.mxu0 0.0
  %1265 = vmatmul.mubr.f32.gmra.mxu0 %v1188
  %v1266 = vpop.f32.mrf.mxu0
  %v1267 = vadd.f32 %v78, %v1266
  %v1268 = vpop.f32.mrf.mxu0
  %1269 = vmatprep.mubr.f32.mxu0 0.0
  %1270 = vmatmul.mubr.f32.gmra.mxu0 %v1190
  %v1271 = vpop.f32.mrf.mxu0
  %v1272 = vadd.f32 %v79, %v1271
  %v1273 = vpop.f32.mrf.mxu0
  %1274 = vmatprep.mubr.f32.mxu0 0.0
  %1275 = vmatmul.mubr.f32.gmra.mxu0 %v1192
  %v1276 = vpop.f32.mrf.mxu0
  %v1277 = vadd.f32 %v80, %v1276
  %v1278 = vpop.f32.mrf.mxu0
  %1279 = vdwg.mxu0
  %v1280 = vsel %vm632, %v1267, -inf
  %1281 = vmax.xlane.f32.xlu0 %v1280
  %v1282 = vpop.xlane.xlu0 %1281
  %v1283 = vsel %vm632, %v1272, -inf
  %1284 = vmax.xlane.f32.xlu0 %v1283
  %v1285 = vpop.xlane.xlu0 %1284
  %v1286 = vsel %vm639, %v1277, -inf
  %1287 = vmax.xlane.f32.xlu0 %v1286
  %v1288 = vpop.xlane.xlu0 %1287
  %v1289 = vsub.f32 %v1267, %v1282
  %v1290 = vsub.f32 %v1272, %v1285
  %v1291 = vsub.f32 %v1277, %v1288
  %v1292 = vmul.f32 %v1289, 1.442695
  %v1293 = vpow.pop %v1292
  %v1294 = vmul.f32 %v1290, 1.442695
  %v1295 = vpow.pop %v1294
  %v1296 = vmul.f32 %v1291, 1.442695
  %v1297 = vpow.pop %v1296
  %v1298 = vsel %vm632, %v1293, 0.0
  %1299 = vadd.xlane.f32.xlu0 %v1298
  %v1300 = vpop.xlane.xlu0 %1299
  %v1301 = vsel %vm632, %v1295, 0.0
  %1302 = vadd.xlane.f32.xlu0 %v1301
  %v1303 = vpop.xlane.xlu0 %1302
  %v1304 = vsel %vm639, %v1297, 0.0
  %1305 = vadd.xlane.f32.xlu0 %v1304
  %v1306 = vpop.xlane.xlu0 %1305
  %v1307 = vrcp.pop %v1300
  %v1308 = vrcp.pop %v1303
  %v1309 = vrcp.pop %v1306
  %v1310 = vmul.f32 %v1293, %v1307
  %v1311 = vmul.f32 %v1295, %v1308
  %v1312 = vmul.f32 %v1297, %v1309
  %1313 = vrot.lane.b32.xlu0 %v510, 112
  %v1314 = vpop.permute.xlu0 %1313
  %1315 = vrot.lane.b32.xlu0 %v515, 112
  %v1316 = vpop.permute.xlu0 %1315
  %1317 = vrot.lane.b32.xlu0 %v520, 112
  %v1318 = vpop.permute.xlu0 %1317
  %v1322 = vsel %vm632, %v1310, 0
  %v1325 = vsel %vm632, %v1311, 0
  %v1328 = vsel %vm632, %v1312, 0
  %v1330 = vsel %vm676, %v1318, 0
  %1332 = vmatprep.subr.mxu0 0.0
  %1333 = vmatpush1.msra.mxu0 0.0
  %1334 = vmatprep.subr.mxu0 0.0
  %1335 = vmatpush1.msra.mxu0 0.0
  %1336 = vmatprep.subr.mxu0 0.0
  %1337 = vmatpush1.msra.mxu0 0.0
  %1338 = vmatprep.subr.mxu0 0.0
  %1339 = vmatpush1.msra.mxu0 0.0
  %1340 = vmatprep.subr.mxu0 0.0
  %1341 = vmatpush1.msra.mxu0 0.0
  %1342 = vmatprep.subr.mxu0 0.0
  %1343 = vmatpush1.msra.mxu0 0.0
  %1344 = vmatprep.subr.mxu0 0.0
  %1345 = vmatpush1.msra.mxu0 0.0
  %1346 = vmatprep.subr.mxu0 0.0
  %1347 = vmatpush1.msra.mxu0 0.0
  %1348 = vmatprep.subr.mxu0 0.0
  %1349 = vmatpush1.msra.mxu0 0.0
  %1350 = vmatprep.subr.mxu0 0.0
  %1351 = vmatpush1.msra.mxu0 0.0
  %1352 = vmatprep.subr.mxu0 0.0
  %1353 = vmatpush1.msra.mxu0 0.0
  %1354 = vmatprep.subr.mxu0 0.0
  %1355 = vmatpush1.msra.mxu0 0.0
  %1356 = vmatprep.subr.mxu0 0.0
  %1357 = vmatpush1.msra.mxu0 0.0
  %1358 = vmatprep.subr.mxu0 0.0
  %1359 = vmatpush1.msra.mxu0 %v1330
  %1360 = vmatprep.subr.mxu0 0.0
  %1361 = vmatpush1.msra.mxu0 %v1316
  %1362 = vmatprep.subr.mxu0 0.0
  %1363 = vmatpush1.msra.mxu0 %v1314
  %1364 = vmatprep.subr.mxu0 0.0
  %1365 = vmatpush2.msra.mxu0 0.0
  %1366 = vmatprep.subr.mxu0 0.0
  %1367 = vmatpush2.msra.mxu0 0.0
  %1368 = vmatprep.subr.mxu0 0.0
  %1369 = vmatpush2.msra.mxu0 0.0
  %1370 = vmatprep.subr.mxu0 0.0
  %1371 = vmatpush2.msra.mxu0 0.0
  %1372 = vmatprep.subr.mxu0 0.0
  %1373 = vmatpush2.msra.mxu0 0.0
  %1374 = vmatprep.subr.mxu0 0.0
  %1375 = vmatpush2.msra.mxu0 0.0
  %1376 = vmatprep.subr.mxu0 0.0
  %1377 = vmatpush2.msra.mxu0 0.0
  %1378 = vmatprep.subr.mxu0 0.0
  %1379 = vmatpush2.msra.mxu0 0.0
  %1380 = vmatprep.subr.mxu0 0.0
  %1381 = vmatpush2.msra.mxu0 0.0
  %1382 = vmatprep.subr.mxu0 0.0
  %1383 = vmatpush2.msra.mxu0 0.0
  %1384 = vmatprep.subr.mxu0 0.0
  %1385 = vmatpush2.msra.mxu0 0.0
  %1386 = vmatprep.subr.mxu0 0.0
  %1387 = vmatpush2.msra.mxu0 0.0
  %1388 = vmatprep.subr.mxu0 0.0
  %1389 = vmatpush2.msra.mxu0 0.0
  %1390 = vmatprep.subr.mxu0 0.0
  %1391 = vmatpush2.msra.mxu0 0.0
  %1392 = vmatprep.subr.mxu0 0.0
  %1393 = vmatpush2.msra.mxu0 0.0
  %1394 = vmatprep.subr.mxu0 0.0
  %1395 = vmatpush2.msra.mxu0 0.0
  %1396 = vmatprep.mubr.f32.mxu0 0.0
  %1397 = vmatmul.mubr.f32.gmra.mxu0 %v1322
  %v1398 = vpop.f32.mrf.mxu0
  %v1399 = vadd.f32 0.0, %v1398
  %v1400 = vpop.f32.mrf.mxu0
  %1401 = vmatprep.mubr.f32.mxu0 0.0
  %1402 = vmatmul.mubr.f32.gmra.mxu0 %v1325
  %v1403 = vpop.f32.mrf.mxu0
  %v1404 = vadd.f32 0.0, %v1403
  %v1405 = vpop.f32.mrf.mxu0
  %1406 = vmatprep.mubr.f32.mxu0 0.0
  %1407 = vmatmul.mubr.f32.gmra.mxu0 %v1328
  %v1408 = vpop.f32.mrf.mxu0
  %v1409 = vadd.f32 0.0, %v1408
  %v1410 = vpop.f32.mrf.mxu0
  %1411 = vdwg.mxu0
  %v1413 = vsel %vm539, %v1399, 0
  %v1416 = vsel %vm539, %v1404, 0
  %v1419 = vsel %vm539, %v1409, 0
  %1421 = vmatprep.subr.mxu0 0.0
  %1422 = vmatpush1.msra.mxu0 0.0
  %1423 = vmatprep.subr.mxu0 0.0
  %1424 = vmatpush1.msra.mxu0 0.0
  %1425 = vmatprep.subr.mxu0 0.0
  %1426 = vmatpush1.msra.mxu0 0.0
  %1427 = vmatprep.subr.mxu0 0.0
  %1428 = vmatpush1.msra.mxu0 0.0
  %1429 = vmatprep.subr.mxu0 0.0
  %1430 = vmatpush1.msra.mxu0 0.0
  %1431 = vmatprep.subr.mxu0 0.0
  %1432 = vmatpush1.msra.mxu0 0.0
  %1433 = vmatprep.subr.mxu0 0.0
  %1434 = vmatpush1.msra.mxu0 0.0
  %1435 = vmatprep.subr.mxu0 0.0
  %1436 = vmatpush1.msra.mxu0 0.0
  %1437 = vmatprep.subr.mxu0 0.0
  %1438 = vmatpush1.msra.mxu0 0.0
  %1439 = vmatprep.subr.mxu0 0.0
  %1440 = vmatpush1.msra.mxu0 0.0
  %1441 = vmatprep.subr.mxu0 0.0
  %1442 = vmatpush1.msra.mxu0 0.0
  %1443 = vmatprep.subr.mxu0 0.0
  %1444 = vmatpush1.msra.mxu0 0.0
  %1445 = vmatprep.subr.mxu0 0.0
  %1446 = vmatpush1.msra.mxu0 0.0
  %1447 = vmatprep.subr.mxu0 0.0
  %1448 = vmatpush1.msra.mxu0 0.0
  %1449 = vmatprep.subr.mxu0 0.0
  %1450 = vmatpush1.msra.mxu0 0.0
  %1451 = vmatprep.subr.mxu0 0.0
  %1452 = vmatpush1.msra.mxu0 %v526
  %1453 = vmatprep.subr.mxu0 0.0
  %1454 = vmatpush2.msra.mxu0 0.0
  %1455 = vmatprep.subr.mxu0 0.0
  %1456 = vmatpush2.msra.mxu0 0.0
  %1457 = vmatprep.subr.mxu0 0.0
  %1458 = vmatpush2.msra.mxu0 0.0
  %1459 = vmatprep.subr.mxu0 0.0
  %1460 = vmatpush2.msra.mxu0 0.0
  %1461 = vmatprep.subr.mxu0 0.0
  %1462 = vmatpush2.msra.mxu0 0.0
  %1463 = vmatprep.subr.mxu0 0.0
  %1464 = vmatpush2.msra.mxu0 0.0
  %1465 = vmatprep.subr.mxu0 0.0
  %1466 = vmatpush2.msra.mxu0 0.0
  %1467 = vmatprep.subr.mxu0 0.0
  %1468 = vmatpush2.msra.mxu0 0.0
  %1469 = vmatprep.subr.mxu0 0.0
  %1470 = vmatpush2.msra.mxu0 0.0
  %1471 = vmatprep.subr.mxu0 0.0
  %1472 = vmatpush2.msra.mxu0 0.0
  %1473 = vmatprep.subr.mxu0 0.0
  %1474 = vmatpush2.msra.mxu0 0.0
  %1475 = vmatprep.subr.mxu0 0.0
  %1476 = vmatpush2.msra.mxu0 0.0
  %1477 = vmatprep.subr.mxu0 0.0
  %1478 = vmatpush2.msra.mxu0 0.0
  %1479 = vmatprep.subr.mxu0 0.0
  %1480 = vmatpush2.msra.mxu0 0.0
  %1481 = vmatprep.subr.mxu0 0.0
  %1482 = vmatpush2.msra.mxu0 0.0
  %1483 = vmatprep.subr.mxu0 0.0
  %1484 = vmatpush2.msra.mxu0 0.0
  %1485 = vmatprep.mubr.f32.mxu0 0.0
  %1486 = vmatmul.mubr.f32.gmra.mxu0 %v1413
  %v1487 = vpop.f32.mrf.mxu0
  %v1488 = vadd.f32 0.0, %v1487
  %v1489 = vpop.f32.mrf.mxu0
  %1490 = vmatprep.mubr.f32.mxu0 0.0
  %1491 = vmatmul.mubr.f32.gmra.mxu0 %v1416
  %v1492 = vpop.f32.mrf.mxu0
  %v1493 = vadd.f32 0.0, %v1492
  %v1494 = vpop.f32.mrf.mxu0
  %1495 = vmatprep.mubr.f32.mxu0 0.0
  %1496 = vmatmul.mubr.f32.gmra.mxu0 %v1419
  %v1497 = vpop.f32.mrf.mxu0
  %v1498 = vadd.f32 0.0, %v1497
  %v1499 = vpop.f32.mrf.mxu0
  %1500 = vdwg.mxu0
  %v1501 = vadd.f32 %v1163, %v1488
  %v1502 = vadd.f32 %v1168, %v1493
  %v1503 = vadd.f32 %v1173, %v1498
  %1504 = vrot.lane.b32.xlu0 %v408, 104
  %v1505 = vpop.permute.xlu0 %1504
  %1506 = vrot.lane.b32.xlu0 %v413, 104
  %v1507 = vpop.permute.xlu0 %1506
  %1508 = vrot.lane.b32.xlu0 %v418, 104
  %v1509 = vpop.permute.xlu0 %1508
  %1510 = vrot.lane.b32.xlu0 %v408, 72
  %v1511 = vpop.permute.xlu0 %1510
  %1512 = vrot.lane.b32.xlu0 %v413, 72
  %v1513 = vpop.permute.xlu0 %1512
  %1514 = vrot.lane.b32.xlu0 %v418, 72
  %v1515 = vpop.permute.xlu0 %1514
  %v1516 = vsel %vm539, %v1505, 0
  %v1518 = vsel %vm539, %v1507, 0
  %v1520 = vsel %vm539, %v1509, 0
  %v1522 = vsel %vm539, %v1511, 0
  %v1524 = vsel %vm539, %v1513, 0
  %v1526 = vsel %vm539, %v1515, 0
  %1528 = vmatprep.subr.mxu0 0.0
  %1529 = vmatpush1.xpose.msra.mxu0 0.0
  %1530 = vmatprep.subr.mxu0 0.0
  %1531 = vmatpush1.xpose.msra.mxu0 0.0
  %1532 = vmatprep.subr.mxu0 0.0
  %1533 = vmatpush1.xpose.msra.mxu0 0.0
  %1534 = vmatprep.subr.mxu0 0.0
  %1535 = vmatpush1.xpose.msra.mxu0 0.0
  %1536 = vmatprep.subr.mxu0 0.0
  %1537 = vmatpush1.xpose.msra.mxu0 0.0
  %1538 = vmatprep.subr.mxu0 0.0
  %1539 = vmatpush1.xpose.msra.mxu0 0.0
  %1540 = vmatprep.subr.mxu0 0.0
  %1541 = vmatpush1.xpose.msra.mxu0 0.0
  %1542 = vmatprep.subr.mxu0 0.0
  %1543 = vmatpush1.xpose.msra.mxu0 0.0
  %1544 = vmatprep.subr.mxu0 0.0
  %1545 = vmatpush1.xpose.msra.mxu0 0.0
  %1546 = vmatprep.subr.mxu0 0.0
  %1547 = vmatpush1.xpose.msra.mxu0 0.0
  %1548 = vmatprep.subr.mxu0 0.0
  %1549 = vmatpush1.xpose.msra.mxu0 0.0
  %1550 = vmatprep.subr.mxu0 0.0
  %1551 = vmatpush1.xpose.msra.mxu0 0.0
  %1552 = vmatprep.subr.mxu0 0.0
  %1553 = vmatpush1.xpose.msra.mxu0 0.0
  %1554 = vmatprep.subr.mxu0 0.0
  %1555 = vmatpush1.xpose.msra.mxu0 %v1526
  %1556 = vmatprep.subr.mxu0 0.0
  %1557 = vmatpush1.xpose.msra.mxu0 %v1524
  %1558 = vmatprep.subr.mxu0 0.0
  %1559 = vmatpush1.xpose.msra.mxu0 %v1522
  %1560 = vmatprep.subr.mxu0 0.0
  %1561 = vmatpush2.xpose.msra.mxu0 0.0
  %1562 = vmatprep.subr.mxu0 0.0
  %1563 = vmatpush2.xpose.msra.mxu0 0.0
  %1564 = vmatprep.subr.mxu0 0.0
  %1565 = vmatpush2.xpose.msra.mxu0 0.0
  %1566 = vmatprep.subr.mxu0 0.0
  %1567 = vmatpush2.xpose.msra.mxu0 0.0
  %1568 = vmatprep.subr.mxu0 0.0
  %1569 = vmatpush2.xpose.msra.mxu0 0.0
  %1570 = vmatprep.subr.mxu0 0.0
  %1571 = vmatpush2.xpose.msra.mxu0 0.0
  %1572 = vmatprep.subr.mxu0 0.0
  %1573 = vmatpush2.xpose.msra.mxu0 0.0
  %1574 = vmatprep.subr.mxu0 0.0
  %1575 = vmatpush2.xpose.msra.mxu0 0.0
  %1576 = vmatprep.subr.mxu0 0.0
  %1577 = vmatpush2.xpose.msra.mxu0 0.0
  %1578 = vmatprep.subr.mxu0 0.0
  %1579 = vmatpush2.xpose.msra.mxu0 0.0
  %1580 = vmatprep.subr.mxu0 0.0
  %1581 = vmatpush2.xpose.msra.mxu0 0.0
  %1582 = vmatprep.subr.mxu0 0.0
  %1583 = vmatpush2.xpose.msra.mxu0 0.0
  %1584 = vmatprep.subr.mxu0 0.0
  %1585 = vmatpush2.xpose.msra.mxu0 0.0
  %1586 = vmatprep.subr.mxu0 0.0
  %1587 = vmatpush2.xpose.msra.mxu0 0.0
  %1588 = vmatprep.subr.mxu0 0.0
  %1589 = vmatpush2.xpose.msra.mxu0 0.0
  %1590 = vmatprep.subr.mxu0 0.0
  %1591 = vmatpush2.xpose.msra.mxu0 0.0
  %1592 = vmatprep.mubr.f32.mxu0 0.0
  %1593 = vmatmul.mubr.f32.gmra.mxu0 %v1516
  %v1594 = vpop.f32.mrf.mxu0
  %v1595 = vadd.f32 %v78, %v1594
  %v1596 = vpop.f32.mrf.mxu0
  %1597 = vmatprep.mubr.f32.mxu0 0.0
  %1598 = vmatmul.mubr.f32.gmra.mxu0 %v1518
  %v1599 = vpop.f32.mrf.mxu0
  %v1600 = vadd.f32 %v79, %v1599
  %v1601 = vpop.f32.mrf.mxu0
  %1602 = vmatprep.mubr.f32.mxu0 0.0
  %1603 = vmatmul.mubr.f32.gmra.mxu0 %v1520
  %v1604 = vpop.f32.mrf.mxu0
  %v1605 = vadd.f32 %v80, %v1604
  %v1606 = vpop.f32.mrf.mxu0
  %1607 = vdwg.mxu0
  %v1608 = vsel %vm632, %v1595, -inf
  %1609 = vmax.xlane.f32.xlu0 %v1608
  %v1610 = vpop.xlane.xlu0 %1609
  %v1611 = vsel %vm632, %v1600, -inf
  %1612 = vmax.xlane.f32.xlu0 %v1611
  %v1613 = vpop.xlane.xlu0 %1612
  %v1614 = vsel %vm639, %v1605, -inf
  %1615 = vmax.xlane.f32.xlu0 %v1614
  %v1616 = vpop.xlane.xlu0 %1615
  %v1617 = vsub.f32 %v1595, %v1610
  %v1618 = vsub.f32 %v1600, %v1613
  %v1619 = vsub.f32 %v1605, %v1616
  %v1620 = vmul.f32 %v1617, 1.442695
  %v1621 = vpow.pop %v1620
  %v1622 = vmul.f32 %v1618, 1.442695
  %v1623 = vpow.pop %v1622
  %v1624 = vmul.f32 %v1619, 1.442695
  %v1625 = vpow.pop %v1624
  %v1626 = vsel %vm632, %v1621, 0.0
  %1627 = vadd.xlane.f32.xlu0 %v1626
  %v1628 = vpop.xlane.xlu0 %1627
  %v1629 = vsel %vm632, %v1623, 0.0
  %1630 = vadd.xlane.f32.xlu0 %v1629
  %v1631 = vpop.xlane.xlu0 %1630
  %v1632 = vsel %vm639, %v1625, 0.0
  %1633 = vadd.xlane.f32.xlu0 %v1632
  %v1634 = vpop.xlane.xlu0 %1633
  %v1635 = vrcp.pop %v1628
  %v1636 = vrcp.pop %v1631
  %v1637 = vrcp.pop %v1634
  %v1638 = vmul.f32 %v1621, %v1635
  %v1639 = vmul.f32 %v1623, %v1636
  %v1640 = vmul.f32 %v1625, %v1637
  %1641 = vrot.lane.b32.xlu0 %v510, 104
  %v1642 = vpop.permute.xlu0 %1641
  %1643 = vrot.lane.b32.xlu0 %v515, 104
  %v1644 = vpop.permute.xlu0 %1643
  %1645 = vrot.lane.b32.xlu0 %v520, 104
  %v1646 = vpop.permute.xlu0 %1645
  %v1650 = vsel %vm632, %v1638, 0
  %v1653 = vsel %vm632, %v1639, 0
  %v1656 = vsel %vm632, %v1640, 0
  %v1658 = vsel %vm676, %v1646, 0
  %1660 = vmatprep.subr.mxu0 0.0
  %1661 = vmatpush1.msra.mxu0 0.0
  %1662 = vmatprep.subr.mxu0 0.0
  %1663 = vmatpush1.msra.mxu0 0.0
  %1664 = vmatprep.subr.mxu0 0.0
  %1665 = vmatpush1.msra.mxu0 0.0
  %1666 = vmatprep.subr.mxu0 0.0
  %1667 = vmatpush1.msra.mxu0 0.0
  %1668 = vmatprep.subr.mxu0 0.0
  %1669 = vmatpush1.msra.mxu0 0.0
  %1670 = vmatprep.subr.mxu0 0.0
  %1671 = vmatpush1.msra.mxu0 0.0
  %1672 = vmatprep.subr.mxu0 0.0
  %1673 = vmatpush1.msra.mxu0 0.0
  %1674 = vmatprep.subr.mxu0 0.0
  %1675 = vmatpush1.msra.mxu0 0.0
  %1676 = vmatprep.subr.mxu0 0.0
  %1677 = vmatpush1.msra.mxu0 0.0
  %1678 = vmatprep.subr.mxu0 0.0
  %1679 = vmatpush1.msra.mxu0 0.0
  %1680 = vmatprep.subr.mxu0 0.0
  %1681 = vmatpush1.msra.mxu0 0.0
  %1682 = vmatprep.subr.mxu0 0.0
  %1683 = vmatpush1.msra.mxu0 0.0
  %1684 = vmatprep.subr.mxu0 0.0
  %1685 = vmatpush1.msra.mxu0 0.0
  %1686 = vmatprep.subr.mxu0 0.0
  %1687 = vmatpush1.msra.mxu0 %v1658
  %1688 = vmatprep.subr.mxu0 0.0
  %1689 = vmatpush1.msra.mxu0 %v1644
  %1690 = vmatprep.subr.mxu0 0.0
  %1691 = vmatpush1.msra.mxu0 %v1642
  %1692 = vmatprep.subr.mxu0 0.0
  %1693 = vmatpush2.msra.mxu0 0.0
  %1694 = vmatprep.subr.mxu0 0.0
  %1695 = vmatpush2.msra.mxu0 0.0
  %1696 = vmatprep.subr.mxu0 0.0
  %1697 = vmatpush2.msra.mxu0 0.0
  %1698 = vmatprep.subr.mxu0 0.0
  %1699 = vmatpush2.msra.mxu0 0.0
  %1700 = vmatprep.subr.mxu0 0.0
  %1701 = vmatpush2.msra.mxu0 0.0
  %1702 = vmatprep.subr.mxu0 0.0
  %1703 = vmatpush2.msra.mxu0 0.0
  %1704 = vmatprep.subr.mxu0 0.0
  %1705 = vmatpush2.msra.mxu0 0.0
  %1706 = vmatprep.subr.mxu0 0.0
  %1707 = vmatpush2.msra.mxu0 0.0
  %1708 = vmatprep.subr.mxu0 0.0
  %1709 = vmatpush2.msra.mxu0 0.0
  %1710 = vmatprep.subr.mxu0 0.0
  %1711 = vmatpush2.msra.mxu0 0.0
  %1712 = vmatprep.subr.mxu0 0.0
  %1713 = vmatpush2.msra.mxu0 0.0
  %1714 = vmatprep.subr.mxu0 0.0
  %1715 = vmatpush2.msra.mxu0 0.0
  %1716 = vmatprep.subr.mxu0 0.0
  %1717 = vmatpush2.msra.mxu0 0.0
  %1718 = vmatprep.subr.mxu0 0.0
  %1719 = vmatpush2.msra.mxu0 0.0
  %1720 = vmatprep.subr.mxu0 0.0
  %1721 = vmatpush2.msra.mxu0 0.0
  %1722 = vmatprep.subr.mxu0 0.0
  %1723 = vmatpush2.msra.mxu0 0.0
  %1724 = vmatprep.mubr.f32.mxu0 0.0
  %1725 = vmatmul.mubr.f32.gmra.mxu0 %v1650
  %v1726 = vpop.f32.mrf.mxu0
  %v1727 = vadd.f32 0.0, %v1726
  %v1728 = vpop.f32.mrf.mxu0
  %1729 = vmatprep.mubr.f32.mxu0 0.0
  %1730 = vmatmul.mubr.f32.gmra.mxu0 %v1653
  %v1731 = vpop.f32.mrf.mxu0
  %v1732 = vadd.f32 0.0, %v1731
  %v1733 = vpop.f32.mrf.mxu0
  %1734 = vmatprep.mubr.f32.mxu0 0.0
  %1735 = vmatmul.mubr.f32.gmra.mxu0 %v1656
  %v1736 = vpop.f32.mrf.mxu0
  %v1737 = vadd.f32 0.0, %v1736
  %v1738 = vpop.f32.mrf.mxu0
  %1739 = vdwg.mxu0
  %v1741 = vsel %vm539, %v1727, 0
  %v1744 = vsel %vm539, %v1732, 0
  %v1747 = vsel %vm539, %v1737, 0
  %1749 = vmatprep.subr.mxu0 0.0
  %1750 = vmatpush1.msra.mxu0 0.0
  %1751 = vmatprep.subr.mxu0 0.0
  %1752 = vmatpush1.msra.mxu0 0.0
  %1753 = vmatprep.subr.mxu0 0.0
  %1754 = vmatpush1.msra.mxu0 0.0
  %1755 = vmatprep.subr.mxu0 0.0
  %1756 = vmatpush1.msra.mxu0 0.0
  %1757 = vmatprep.subr.mxu0 0.0
  %1758 = vmatpush1.msra.mxu0 0.0
  %1759 = vmatprep.subr.mxu0 0.0
  %1760 = vmatpush1.msra.mxu0 0.0
  %1761 = vmatprep.subr.mxu0 0.0
  %1762 = vmatpush1.msra.mxu0 0.0
  %1763 = vmatprep.subr.mxu0 0.0
  %1764 = vmatpush1.msra.mxu0 0.0
  %1765 = vmatprep.subr.mxu0 0.0
  %1766 = vmatpush1.msra.mxu0 0.0
  %1767 = vmatprep.subr.mxu0 0.0
  %1768 = vmatpush1.msra.mxu0 0.0
  %1769 = vmatprep.subr.mxu0 0.0
  %1770 = vmatpush1.msra.mxu0 0.0
  %1771 = vmatprep.subr.mxu0 0.0
  %1772 = vmatpush1.msra.mxu0 0.0
  %1773 = vmatprep.subr.mxu0 0.0
  %1774 = vmatpush1.msra.mxu0 0.0
  %1775 = vmatprep.subr.mxu0 0.0
  %1776 = vmatpush1.msra.mxu0 0.0
  %1777 = vmatprep.subr.mxu0 0.0
  %1778 = vmatpush1.msra.mxu0 0.0
  %1779 = vmatprep.subr.mxu0 0.0
  %1780 = vmatpush1.msra.mxu0 %v527
  %1781 = vmatprep.subr.mxu0 0.0
  %1782 = vmatpush2.msra.mxu0 0.0
  %1783 = vmatprep.subr.mxu0 0.0
  %1784 = vmatpush2.msra.mxu0 0.0
  %1785 = vmatprep.subr.mxu0 0.0
  %1786 = vmatpush2.msra.mxu0 0.0
  %1787 = vmatprep.subr.mxu0 0.0
  %1788 = vmatpush2.msra.mxu0 0.0
  %1789 = vmatprep.subr.mxu0 0.0
  %1790 = vmatpush2.msra.mxu0 0.0
  %1791 = vmatprep.subr.mxu0 0.0
  %1792 = vmatpush2.msra.mxu0 0.0
  %1793 = vmatprep.subr.mxu0 0.0
  %1794 = vmatpush2.msra.mxu0 0.0
  %1795 = vmatprep.subr.mxu0 0.0
  %1796 = vmatpush2.msra.mxu0 0.0
  %1797 = vmatprep.subr.mxu0 0.0
  %1798 = vmatpush2.msra.mxu0 0.0
  %1799 = vmatprep.subr.mxu0 0.0
  %1800 = vmatpush2.msra.mxu0 0.0
  %1801 = vmatprep.subr.mxu0 0.0
  %1802 = vmatpush2.msra.mxu0 0.0
  %1803 = vmatprep.subr.mxu0 0.0
  %1804 = vmatpush2.msra.mxu0 0.0
  %1805 = vmatprep.subr.mxu0 0.0
  %1806 = vmatpush2.msra.mxu0 0.0
  %1807 = vmatprep.subr.mxu0 0.0
  %1808 = vmatpush2.msra.mxu0 0.0
  %1809 = vmatprep.subr.mxu0 0.0
  %1810 = vmatpush2.msra.mxu0 0.0
  %1811 = vmatprep.subr.mxu0 0.0
  %1812 = vmatpush2.msra.mxu0 0.0
  %1813 = vmatprep.mubr.f32.mxu0 0.0
  %1814 = vmatmul.mubr.f32.gmra.mxu0 %v1741
  %v1815 = vpop.f32.mrf.mxu0
  %v1816 = vadd.f32 0.0, %v1815
  %v1817 = vpop.f32.mrf.mxu0
  %1818 = vmatprep.mubr.f32.mxu0 0.0
  %1819 = vmatmul.mubr.f32.gmra.mxu0 %v1744
  %v1820 = vpop.f32.mrf.mxu0
  %v1821 = vadd.f32 0.0, %v1820
  %v1822 = vpop.f32.mrf.mxu0
  %1823 = vmatprep.mubr.f32.mxu0 0.0
  %1824 = vmatmul.mubr.f32.gmra.mxu0 %v1747
  %v1825 = vpop.f32.mrf.mxu0
  %v1826 = vadd.f32 0.0, %v1825
  %v1827 = vpop.f32.mrf.mxu0
  %1828 = vdwg.mxu0
  %v1829 = vadd.f32 %v1501, %v1816
  %v1830 = vadd.f32 %v1502, %v1821
  %v1831 = vadd.f32 %v1503, %v1826
  %v1833 = vlaneseq
  %v1834 = vshrl.u32 %v1833, 7
  %v1835 = vsub.s32 0, %v1834
  %v1836 = vrot.slane %v529, %v1835
  %v1838 = vadd.f32 %v1829, %v1836
  %v1839 = vadd.f32 %v1830, %v1836
  %v1840 = vadd.f32 %v1831, %v1836
  %v1841 = vadd.f32 %v35, %v1838
  %v1842 = vadd.f32 %v36, %v1839
  %v1843 = vadd.f32 %v171, %v1840
  %s1844 = scalar_lea.vmem %s6, 6
  %v1845 = vld [vmem:[%s1844] sm:$0x1]
  %s1846 = scalar_lea.vmem %s6, 7
  %v1847 = vld [vmem:[%s1846] sm:$0x1]
  %v1848 = vsel %vm100, %v1841, 0.0
  %1849 = vadd.xlane.f32.xlu0 %v1848
  %v1850 = vpop.xlane.xlu0 %1849
  %v1851 = vsel %vm100, %v1842, 0.0
  %1852 = vadd.xlane.f32.xlu0 %v1851
  %v1853 = vpop.xlane.xlu0 %1852
  %v1854 = vsel %vm265, %v1843, 0.0
  %1855 = vadd.xlane.f32.xlu0 %v1854
  %v1856 = vpop.xlane.xlu0 %1855
  %v1857 = vmul.f32 %v1850, %v269
  %v1858 = vmul.f32 %v1853, %v269
  %v1859 = vmul.f32 %v1856, %v269
  %v1860 = vsub.f32 %v1841, %v1857
  %v1861 = vsub.f32 %v1842, %v1858
  %v1862 = vsub.f32 %v1843, %v1859
  %v1863 = vmul.f32 %v1860, %v1860
  %v1864 = vmul.f32 %v1861, %v1861
  %v1865 = vmul.f32 %v1862, %v1862
  %v1866 = vsel %vm100, %v1863, 0.0
  %1867 = vadd.xlane.f32.xlu0 %v1866
  %v1868 = vpop.xlane.xlu0 %1867
  %v1869 = vsel %vm100, %v1864, 0.0
  %1870 = vadd.xlane.f32.xlu0 %v1869
  %v1871 = vpop.xlane.xlu0 %1870
  %v1872 = vsel %vm265, %v1865, 0.0
  %1873 = vadd.xlane.f32.xlu0 %v1872
  %v1874 = vpop.xlane.xlu0 %1873
  %v1875 = vmul.f32 %v1868, %v269
  %v1876 = vmul.f32 %v1871, %v269
  %v1877 = vmul.f32 %v1874, %v269
  %v1878 = vadd.f32 %v1875, 1e-05
  %v1879 = vadd.f32 %v1876, 1e-05
  %v1880 = vadd.f32 %v1877, 1e-05
  %v1881 = vrsqrt.pop %v1878
  %v1882 = vrsqrt.pop %v1879
  %v1883 = vrsqrt.pop %v1880
  %v1884 = vmul.f32 %v1860, %v1881
  %v1885 = vmul.f32 %v1861, %v1882
  %v1886 = vmul.f32 %v1862, %v1883
  %v1888 = vlaneseq
  %v1889 = vshrl.u32 %v1888, 7
  %v1890 = vsub.s32 0, %v1889
  %v1891 = vrot.slane %v1845, %v1890
  %v1893 = vmul.f32 %v1884, %v1891
  %v1894 = vmul.f32 %v1885, %v1891
  %v1895 = vmul.f32 %v1886, %v1891
  %v1897 = vlaneseq
  %v1898 = vshrl.u32 %v1897, 7
  %v1899 = vsub.s32 0, %v1898
  %v1900 = vrot.slane %v1847, %v1899
  %v1902 = vadd.f32 %v1893, %v1900
  %v1903 = vadd.f32 %v1894, %v1900
  %v1904 = vadd.f32 %v1895, %v1900
  %s1905 = scalar_lea.vmem %s7, 32
  %v1906 = vld [vmem:[%s1905] sm:$0xff]
  %v1907 = vld [vmem:[%s1905 + $0x8] sm:$0xff]
  %v1908 = vld [vmem:[%s1905 + $0x10] sm:$0xff]
  %v1909 = vld [vmem:[%s1905 + $0x18] sm:$0xff]
  %s1910 = scalar_lea.vmem %s8, 1
  %v1911 = vld [vmem:[%s1910] sm:$0x1]
  %v1913 = vlaneseq
  %v1914 = vshrl.u32 %v1913, 7
  %v1915 = vsub.s32 0, %v1914
  %v1916 = vrot.slane %v1911, %v1915
  %v1919 = vsel %vm100, %v1902, 0
  %v1922 = vsel %vm100, %v1903, 0
  %v1925 = vsel %vm100, %v1904, 0
  %1927 = vmatprep.subr.mxu0 0.0
  %1928 = vmatpush1.msra.mxu0 0.0
  %1929 = vmatprep.subr.mxu0 0.0
  %1930 = vmatpush1.msra.mxu0 0.0
  %1931 = vmatprep.subr.mxu0 0.0
  %1932 = vmatpush1.msra.mxu0 0.0
  %1933 = vmatprep.subr.mxu0 0.0
  %1934 = vmatpush1.msra.mxu0 0.0
  %1935 = vmatprep.subr.mxu0 0.0
  %1936 = vmatpush1.msra.mxu0 0.0
  %1937 = vmatprep.subr.mxu0 0.0
  %1938 = vmatpush1.msra.mxu0 0.0
  %1939 = vmatprep.subr.mxu0 0.0
  %1940 = vmatpush1.msra.mxu0 0.0
  %1941 = vmatprep.subr.mxu0 0.0
  %1942 = vmatpush1.msra.mxu0 0.0
  %1943 = vmatprep.subr.mxu0 0.0
  %1944 = vmatpush1.msra.mxu0 0.0
  %1945 = vmatprep.subr.mxu0 0.0
  %1946 = vmatpush1.msra.mxu0 0.0
  %1947 = vmatprep.subr.mxu0 0.0
  %1948 = vmatpush1.msra.mxu0 0.0
  %1949 = vmatprep.subr.mxu0 0.0
  %1950 = vmatpush1.msra.mxu0 0.0
  %1951 = vmatprep.subr.mxu0 0.0
  %1952 = vmatpush1.msra.mxu0 %v1909
  %1953 = vmatprep.subr.mxu0 0.0
  %1954 = vmatpush1.msra.mxu0 %v1908
  %1955 = vmatprep.subr.mxu0 0.0
  %1956 = vmatpush1.msra.mxu0 %v1907
  %1957 = vmatprep.subr.mxu0 0.0
  %1958 = vmatpush1.msra.mxu0 %v1906
  %1959 = vmatprep.subr.mxu0 0.0
  %1960 = vmatpush2.msra.mxu0 0.0
  %1961 = vmatprep.subr.mxu0 0.0
  %1962 = vmatpush2.msra.mxu0 0.0
  %1963 = vmatprep.subr.mxu0 0.0
  %1964 = vmatpush2.msra.mxu0 0.0
  %1965 = vmatprep.subr.mxu0 0.0
  %1966 = vmatpush2.msra.mxu0 0.0
  %1967 = vmatprep.subr.mxu0 0.0
  %1968 = vmatpush2.msra.mxu0 0.0
  %1969 = vmatprep.subr.mxu0 0.0
  %1970 = vmatpush2.msra.mxu0 0.0
  %1971 = vmatprep.subr.mxu0 0.0
  %1972 = vmatpush2.msra.mxu0 0.0
  %1973 = vmatprep.subr.mxu0 0.0
  %1974 = vmatpush2.msra.mxu0 0.0
  %1975 = vmatprep.subr.mxu0 0.0
  %1976 = vmatpush2.msra.mxu0 0.0
  %1977 = vmatprep.subr.mxu0 0.0
  %1978 = vmatpush2.msra.mxu0 0.0
  %1979 = vmatprep.subr.mxu0 0.0
  %1980 = vmatpush2.msra.mxu0 0.0
  %1981 = vmatprep.subr.mxu0 0.0
  %1982 = vmatpush2.msra.mxu0 0.0
  %1983 = vmatprep.subr.mxu0 0.0
  %1984 = vmatpush2.msra.mxu0 0.0
  %1985 = vmatprep.subr.mxu0 0.0
  %1986 = vmatpush2.msra.mxu0 0.0
  %1987 = vmatprep.subr.mxu0 0.0
  %1988 = vmatpush2.msra.mxu0 0.0
  %1989 = vmatprep.subr.mxu0 0.0
  %1990 = vmatpush2.msra.mxu0 0.0
  %1991 = vmatprep.mubr.f32.mxu0 0.0
  %1992 = vmatmul.mubr.f32.gmra.mxu0 %v1919
  %v1993 = vpop.f32.mrf.mxu0
  %v1994 = vadd.f32 %v1916, %v1993
  %v1995 = vpop.f32.mrf.mxu0
  %1996 = vmatprep.mubr.f32.mxu0 0.0
  %1997 = vmatmul.mubr.f32.gmra.mxu0 %v1922
  %v1998 = vpop.f32.mrf.mxu0
  %v1999 = vadd.f32 %v1916, %v1998
  %v2000 = vpop.f32.mrf.mxu0
  %2001 = vmatprep.mubr.f32.mxu0 0.0
  %2002 = vmatmul.mubr.f32.gmra.mxu0 %v1925
  %v2003 = vpop.f32.mrf.mxu0
  %v2004 = vadd.f32 %v1916, %v2003
  %v2005 = vpop.f32.mrf.mxu0
  %2006 = vdwg.mxu0
  %v2007 = vmax.f32 %v1994, 0.0
  %v2008 = vmax.f32 %v1999, 0.0
  %v2009 = vmax.f32 %v2004, 0.0
  %v2010 = vld [vmem:[%s9] sm:$0xff]
  %v2011 = vld [vmem:[%s9 + $0x8] sm:$0xff]
  %v2012 = vld [vmem:[%s9 + $0x10] sm:$0xff]
  %v2013 = vld [vmem:[%s9 + $0x18] sm:$0xff]
  %v2014 = vld [vmem:[%s9 + $0x20] sm:$0xff]
  %v2015 = vld [vmem:[%s9 + $0x28] sm:$0xff]
  %v2016 = vld [vmem:[%s9 + $0x30] sm:$0xff]
  %v2017 = vld [vmem:[%s9 + $0x38] sm:$0xff]
  %vm2018 = vcmask 523264
  %v2020 = vsel %vm2018, %v2007, 0
  %v2023 = vsel %vm2018, %v2008, 0
  %v2026 = vsel %vm2018, %v2009, 0
  %2028 = vmatprep.subr.mxu0 0.0
  %2029 = vmatpush1.msra.mxu0 0.0
  %2030 = vmatprep.subr.mxu0 0.0
  %2031 = vmatpush1.msra.mxu0 0.0
  %2032 = vmatprep.subr.mxu0 0.0
  %2033 = vmatpush1.msra.mxu0 0.0
  %2034 = vmatprep.subr.mxu0 0.0
  %2035 = vmatpush1.msra.mxu0 0.0
  %2036 = vmatprep.subr.mxu0 0.0
  %2037 = vmatpush1.msra.mxu0 0.0
  %2038 = vmatprep.subr.mxu0 0.0
  %2039 = vmatpush1.msra.mxu0 0.0
  %2040 = vmatprep.subr.mxu0 0.0
  %2041 = vmatpush1.msra.mxu0 0.0
  %2042 = vmatprep.subr.mxu0 0.0
  %2043 = vmatpush1.msra.mxu0 0.0
  %2044 = vmatprep.subr.mxu0 0.0
  %2045 = vmatpush1.msra.mxu0 %v2017
  %2046 = vmatprep.subr.mxu0 0.0
  %2047 = vmatpush1.msra.mxu0 %v2016
  %2048 = vmatprep.subr.mxu0 0.0
  %2049 = vmatpush1.msra.mxu0 %v2015
  %2050 = vmatprep.subr.mxu0 0.0
  %2051 = vmatpush1.msra.mxu0 %v2014
  %2052 = vmatprep.subr.mxu0 0.0
  %2053 = vmatpush1.msra.mxu0 %v2013
  %2054 = vmatprep.subr.mxu0 0.0
  %2055 = vmatpush1.msra.mxu0 %v2012
  %2056 = vmatprep.subr.mxu0 0.0
  %2057 = vmatpush1.msra.mxu0 %v2011
  %2058 = vmatprep.subr.mxu0 0.0
  %2059 = vmatpush1.msra.mxu0 %v2010
  %2060 = vmatprep.subr.mxu0 0.0
  %2061 = vmatpush2.msra.mxu0 0.0
  %2062 = vmatprep.subr.mxu0 0.0
  %2063 = vmatpush2.msra.mxu0 0.0
  %2064 = vmatprep.subr.mxu0 0.0
  %2065 = vmatpush2.msra.mxu0 0.0
  %2066 = vmatprep.subr.mxu0 0.0
  %2067 = vmatpush2.msra.mxu0 0.0
  %2068 = vmatprep.subr.mxu0 0.0
  %2069 = vmatpush2.msra.mxu0 0.0
  %2070 = vmatprep.subr.mxu0 0.0
  %2071 = vmatpush2.msra.mxu0 0.0
  %2072 = vmatprep.subr.mxu0 0.0
  %2073 = vmatpush2.msra.mxu0 0.0
  %2074 = vmatprep.subr.mxu0 0.0
  %2075 = vmatpush2.msra.mxu0 0.0
  %2076 = vmatprep.subr.mxu0 0.0
  %2077 = vmatpush2.msra.mxu0 0.0
  %2078 = vmatprep.subr.mxu0 0.0
  %2079 = vmatpush2.msra.mxu0 0.0
  %2080 = vmatprep.subr.mxu0 0.0
  %2081 = vmatpush2.msra.mxu0 0.0
  %2082 = vmatprep.subr.mxu0 0.0
  %2083 = vmatpush2.msra.mxu0 0.0
  %2084 = vmatprep.subr.mxu0 0.0
  %2085 = vmatpush2.msra.mxu0 0.0
  %2086 = vmatprep.subr.mxu0 0.0
  %2087 = vmatpush2.msra.mxu0 0.0
  %2088 = vmatprep.subr.mxu0 0.0
  %2089 = vmatpush2.msra.mxu0 0.0
  %2090 = vmatprep.subr.mxu0 0.0
  %2091 = vmatpush2.msra.mxu0 0.0
  %2092 = vmatprep.mubr.f32.mxu0 0.0
  %2093 = vmatmul.mubr.f32.gmra.mxu0 %v2020
  %v2094 = vpop.f32.mrf.mxu0
  %v2095 = vadd.f32 0.0, %v2094
  %v2096 = vpop.f32.mrf.mxu0
  %2097 = vmatprep.mubr.f32.mxu0 0.0
  %2098 = vmatmul.mubr.f32.gmra.mxu0 %v2023
  %v2099 = vpop.f32.mrf.mxu0
  %v2100 = vadd.f32 0.0, %v2099
  %v2101 = vpop.f32.mrf.mxu0
  %2102 = vmatprep.mubr.f32.mxu0 0.0
  %2103 = vmatmul.mubr.f32.gmra.mxu0 %v2026
  %v2104 = vpop.f32.mrf.mxu0
  %v2105 = vadd.f32 0.0, %v2104
  %v2106 = vpop.f32.mrf.mxu0
  %2107 = vdwg.mxu0
  %v2108 = vadd.f32 %v1841, %v2095
  %v2109 = vadd.f32 %v1842, %v2100
  %v2110 = vadd.f32 %v1843, %v2105
  %s2111 = scalar_lea.vmem %s6, 8
  %v2112 = vld [vmem:[%s2111] sm:$0x1]
  %v2114 = vlaneseq
  %v2115 = vshrl.u32 %v2114, 7
  %v2116 = vsub.s32 0, %v2115
  %v2117 = vrot.slane %v2112, %v2116
  %v2119 = vadd.f32 %v2108, %v2117
  %v2120 = vadd.f32 %v2109, %v2117
  %v2121 = vadd.f32 %v2110, %v2117
  %s2122 = scalar_lea.vmem %s6, 11
  %v2123 = vld [vmem:[%s2122] sm:$0x1]
  %s2124 = scalar_lea.vmem %s6, 12
  %v2125 = vld [vmem:[%s2124] sm:$0x1]
  %v2126 = vsel %vm100, %v2119, 0.0
  %2127 = vadd.xlane.f32.xlu0 %v2126
  %v2128 = vpop.xlane.xlu0 %2127
  %v2129 = vsel %vm100, %v2120, 0.0
  %2130 = vadd.xlane.f32.xlu0 %v2129
  %v2131 = vpop.xlane.xlu0 %2130
  %v2132 = vsel %vm265, %v2121, 0.0
  %2133 = vadd.xlane.f32.xlu0 %v2132
  %v2134 = vpop.xlane.xlu0 %2133
  %v2135 = vmul.f32 %v2128, %v269
  %v2136 = vmul.f32 %v2131, %v269
  %v2137 = vmul.f32 %v2134, %v269
  %v2138 = vsub.f32 %v2119, %v2135
  %v2139 = vsub.f32 %v2120, %v2136
  %v2140 = vsub.f32 %v2121, %v2137
  %v2141 = vmul.f32 %v2138, %v2138
  %v2142 = vmul.f32 %v2139, %v2139
  %v2143 = vmul.f32 %v2140, %v2140
  %v2144 = vsel %vm100, %v2141, 0.0
  %2145 = vadd.xlane.f32.xlu0 %v2144
  %v2146 = vpop.xlane.xlu0 %2145
  %v2147 = vsel %vm100, %v2142, 0.0
  %2148 = vadd.xlane.f32.xlu0 %v2147
  %v2149 = vpop.xlane.xlu0 %2148
  %v2150 = vsel %vm265, %v2143, 0.0
  %2151 = vadd.xlane.f32.xlu0 %v2150
  %v2152 = vpop.xlane.xlu0 %2151
  %v2153 = vmul.f32 %v2146, %v269
  %v2154 = vmul.f32 %v2149, %v269
  %v2155 = vmul.f32 %v2152, %v269
  %v2156 = vadd.f32 %v2153, 1e-05
  %v2157 = vadd.f32 %v2154, 1e-05
  %v2158 = vadd.f32 %v2155, 1e-05
  %v2159 = vrsqrt.pop %v2156
  %v2160 = vrsqrt.pop %v2157
  %v2161 = vrsqrt.pop %v2158
  %v2162 = vmul.f32 %v2138, %v2159
  %v2163 = vmul.f32 %v2139, %v2160
  %v2164 = vmul.f32 %v2140, %v2161
  %v2166 = vlaneseq
  %v2167 = vshrl.u32 %v2166, 7
  %v2168 = vsub.s32 0, %v2167
  %v2169 = vrot.slane %v2123, %v2168
  %v2171 = vmul.f32 %v2162, %v2169
  %v2172 = vmul.f32 %v2163, %v2169
  %v2173 = vmul.f32 %v2164, %v2169
  %v2175 = vlaneseq
  %v2176 = vshrl.u32 %v2175, 7
  %v2177 = vsub.s32 0, %v2176
  %v2178 = vrot.slane %v2125, %v2177
  %v2180 = vadd.f32 %v2171, %v2178
  %v2181 = vadd.f32 %v2172, %v2178
  %v2182 = vadd.f32 %v2173, %v2178
  %v2183 = vadd.f32 %v2180, %v37
  %v2184 = vadd.f32 %v2181, %v38
  %v2185 = vadd.f32 %v2182, %v39
  %s2186 = scalar_lea.vmem %s7, 64
  %v2187 = vld [vmem:[%s2186] sm:$0xff]
  %v2188 = vld [vmem:[%s2186 + $0x8] sm:$0xff]
  %v2189 = vld [vmem:[%s2186 + $0x10] sm:$0xff]
  %v2190 = vld [vmem:[%s2186 + $0x18] sm:$0xff]
  %s2191 = scalar_lea.vmem %s8, 2
  %v2192 = vld [vmem:[%s2191] sm:$0x1]
  %v2194 = vlaneseq
  %v2195 = vshrl.u32 %v2194, 7
  %v2196 = vsub.s32 0, %v2195
  %v2197 = vrot.slane %v2192, %v2196
  %v2200 = vsel %vm100, %v2183, 0
  %v2203 = vsel %vm100, %v2184, 0
  %v2206 = vsel %vm100, %v2185, 0
  %2208 = vmatprep.subr.mxu0 0.0
  %2209 = vmatpush1.msra.mxu0 0.0
  %2210 = vmatprep.subr.mxu0 0.0
  %2211 = vmatpush1.msra.mxu0 0.0
  %2212 = vmatprep.subr.mxu0 0.0
  %2213 = vmatpush1.msra.mxu0 0.0
  %2214 = vmatprep.subr.mxu0 0.0
  %2215 = vmatpush1.msra.mxu0 0.0
  %2216 = vmatprep.subr.mxu0 0.0
  %2217 = vmatpush1.msra.mxu0 0.0
  %2218 = vmatprep.subr.mxu0 0.0
  %2219 = vmatpush1.msra.mxu0 0.0
  %2220 = vmatprep.subr.mxu0 0.0
  %2221 = vmatpush1.msra.mxu0 0.0
  %2222 = vmatprep.subr.mxu0 0.0
  %2223 = vmatpush1.msra.mxu0 0.0
  %2224 = vmatprep.subr.mxu0 0.0
  %2225 = vmatpush1.msra.mxu0 0.0
  %2226 = vmatprep.subr.mxu0 0.0
  %2227 = vmatpush1.msra.mxu0 0.0
  %2228 = vmatprep.subr.mxu0 0.0
  %2229 = vmatpush1.msra.mxu0 0.0
  %2230 = vmatprep.subr.mxu0 0.0
  %2231 = vmatpush1.msra.mxu0 0.0
  %2232 = vmatprep.subr.mxu0 0.0
  %2233 = vmatpush1.msra.mxu0 %v2190
  %2234 = vmatprep.subr.mxu0 0.0
  %2235 = vmatpush1.msra.mxu0 %v2189
  %2236 = vmatprep.subr.mxu0 0.0
  %2237 = vmatpush1.msra.mxu0 %v2188
  %2238 = vmatprep.subr.mxu0 0.0
  %2239 = vmatpush1.msra.mxu0 %v2187
  %2240 = vmatprep.subr.mxu0 0.0
  %2241 = vmatpush2.msra.mxu0 0.0
  %2242 = vmatprep.subr.mxu0 0.0
  %2243 = vmatpush2.msra.mxu0 0.0
  %2244 = vmatprep.subr.mxu0 0.0
  %2245 = vmatpush2.msra.mxu0 0.0
  %2246 = vmatprep.subr.mxu0 0.0
  %2247 = vmatpush2.msra.mxu0 0.0
  %2248 = vmatprep.subr.mxu0 0.0
  %2249 = vmatpush2.msra.mxu0 0.0
  %2250 = vmatprep.subr.mxu0 0.0
  %2251 = vmatpush2.msra.mxu0 0.0
  %2252 = vmatprep.subr.mxu0 0.0
  %2253 = vmatpush2.msra.mxu0 0.0
  %2254 = vmatprep.subr.mxu0 0.0
  %2255 = vmatpush2.msra.mxu0 0.0
  %2256 = vmatprep.subr.mxu0 0.0
  %2257 = vmatpush2.msra.mxu0 0.0
  %2258 = vmatprep.subr.mxu0 0.0
  %2259 = vmatpush2.msra.mxu0 0.0
  %2260 = vmatprep.subr.mxu0 0.0
  %2261 = vmatpush2.msra.mxu0 0.0
  %2262 = vmatprep.subr.mxu0 0.0
  %2263 = vmatpush2.msra.mxu0 0.0
  %2264 = vmatprep.subr.mxu0 0.0
  %2265 = vmatpush2.msra.mxu0 0.0
  %2266 = vmatprep.subr.mxu0 0.0
  %2267 = vmatpush2.msra.mxu0 0.0
  %2268 = vmatprep.subr.mxu0 0.0
  %2269 = vmatpush2.msra.mxu0 0.0
  %2270 = vmatprep.subr.mxu0 0.0
  %2271 = vmatpush2.msra.mxu0 0.0
  %2272 = vmatprep.mubr.f32.mxu0 0.0
  %2273 = vmatmul.mubr.f32.gmra.mxu0 %v2200
  %v2274 = vpop.f32.mrf.mxu0
  %v2275 = vadd.f32 %v2197, %v2274
  %v2276 = vpop.f32.mrf.mxu0
  %2277 = vmatprep.mubr.f32.mxu0 0.0
  %2278 = vmatmul.mubr.f32.gmra.mxu0 %v2203
  %v2279 = vpop.f32.mrf.mxu0
  %v2280 = vadd.f32 %v2197, %v2279
  %v2281 = vpop.f32.mrf.mxu0
  %2282 = vmatprep.mubr.f32.mxu0 0.0
  %2283 = vmatmul.mubr.f32.gmra.mxu0 %v2206
  %v2284 = vpop.f32.mrf.mxu0
  %v2285 = vadd.f32 %v2197, %v2284
  %v2286 = vpop.f32.mrf.mxu0
  %2287 = vdwg.mxu0
  %s2288 = scalar_lea.vmem %s5, 128
  %v2289 = vld [vmem:[%s2288] sm:$0xff]
  %v2290 = vld [vmem:[%s2288 + $0x8] sm:$0xff]
  %v2291 = vld [vmem:[%s2288 + $0x10] sm:$0xff]
  %v2292 = vld [vmem:[%s2288 + $0x18] sm:$0xff]
  %s2293 = scalar_lea.vmem %s6, 9
  %v2294 = vld [vmem:[%s2293] sm:$0x1]
  %v2296 = vlaneseq
  %v2297 = vshrl.u32 %v2296, 7
  %v2298 = vsub.s32 0, %v2297
  %v2299 = vrot.slane %v2294, %v2298
  %v2302 = vsel %vm100, %v2180, 0
  %v2305 = vsel %vm100, %v2181, 0
  %v2308 = vsel %vm100, %v2182, 0
  %2310 = vmatprep.subr.mxu0 0.0
  %2311 = vmatpush1.msra.mxu0 0.0
  %2312 = vmatprep.subr.mxu0 0.0
  %2313 = vmatpush1.msra.mxu0 0.0
  %2314 = vmatprep.subr.mxu0 0.0
  %2315 = vmatpush1.msra.mxu0 0.0
  %2316 = vmatprep.subr.mxu0 0.0
  %2317 = vmatpush1.msra.mxu0 0.0
  %2318 = vmatprep.subr.mxu0 0.0
  %2319 = vmatpush1.msra.mxu0 0.0
  %2320 = vmatprep.subr.mxu0 0.0
  %2321 = vmatpush1.msra.mxu0 0.0
  %2322 = vmatprep.subr.mxu0 0.0
  %2323 = vmatpush1.msra.mxu0 0.0
  %2324 = vmatprep.subr.mxu0 0.0
  %2325 = vmatpush1.msra.mxu0 0.0
  %2326 = vmatprep.subr.mxu0 0.0
  %2327 = vmatpush1.msra.mxu0 0.0
  %2328 = vmatprep.subr.mxu0 0.0
  %2329 = vmatpush1.msra.mxu0 0.0
  %2330 = vmatprep.subr.mxu0 0.0
  %2331 = vmatpush1.msra.mxu0 0.0
  %2332 = vmatprep.subr.mxu0 0.0
  %2333 = vmatpush1.msra.mxu0 0.0
  %2334 = vmatprep.subr.mxu0 0.0
  %2335 = vmatpush1.msra.mxu0 %v2292
  %2336 = vmatprep.subr.mxu0 0.0
  %2337 = vmatpush1.msra.mxu0 %v2291
  %2338 = vmatprep.subr.mxu0 0.0
  %2339 = vmatpush1.msra.mxu0 %v2290
  %2340 = vmatprep.subr.mxu0 0.0
  %2341 = vmatpush1.msra.mxu0 %v2289
  %2342 = vmatprep.subr.mxu0 0.0
  %2343 = vmatpush2.msra.mxu0 0.0
  %2344 = vmatprep.subr.mxu0 0.0
  %2345 = vmatpush2.msra.mxu0 0.0
  %2346 = vmatprep.subr.mxu0 0.0
  %2347 = vmatpush2.msra.mxu0 0.0
  %2348 = vmatprep.subr.mxu0 0.0
  %2349 = vmatpush2.msra.mxu0 0.0
  %2350 = vmatprep.subr.mxu0 0.0
  %2351 = vmatpush2.msra.mxu0 0.0
  %2352 = vmatprep.subr.mxu0 0.0
  %2353 = vmatpush2.msra.mxu0 0.0
  %2354 = vmatprep.subr.mxu0 0.0
  %2355 = vmatpush2.msra.mxu0 0.0
  %2356 = vmatprep.subr.mxu0 0.0
  %2357 = vmatpush2.msra.mxu0 0.0
  %2358 = vmatprep.subr.mxu0 0.0
  %2359 = vmatpush2.msra.mxu0 0.0
  %2360 = vmatprep.subr.mxu0 0.0
  %2361 = vmatpush2.msra.mxu0 0.0
  %2362 = vmatprep.subr.mxu0 0.0
  %2363 = vmatpush2.msra.mxu0 0.0
  %2364 = vmatprep.subr.mxu0 0.0
  %2365 = vmatpush2.msra.mxu0 0.0
  %2366 = vmatprep.subr.mxu0 0.0
  %2367 = vmatpush2.msra.mxu0 0.0
  %2368 = vmatprep.subr.mxu0 0.0
  %2369 = vmatpush2.msra.mxu0 0.0
  %2370 = vmatprep.subr.mxu0 0.0
  %2371 = vmatpush2.msra.mxu0 0.0
  %2372 = vmatprep.subr.mxu0 0.0
  %2373 = vmatpush2.msra.mxu0 0.0
  %2374 = vmatprep.mubr.f32.mxu0 0.0
  %2375 = vmatmul.mubr.f32.gmra.mxu0 %v2302
  %v2376 = vpop.f32.mrf.mxu0
  %v2377 = vadd.f32 %v2299, %v2376
  %v2378 = vpop.f32.mrf.mxu0
  %2379 = vmatprep.mubr.f32.mxu0 0.0
  %2380 = vmatmul.mubr.f32.gmra.mxu0 %v2305
  %v2381 = vpop.f32.mrf.mxu0
  %v2382 = vadd.f32 %v2299, %v2381
  %v2383 = vpop.f32.mrf.mxu0
  %2384 = vmatprep.mubr.f32.mxu0 0.0
  %2385 = vmatmul.mubr.f32.gmra.mxu0 %v2308
  %v2386 = vpop.f32.mrf.mxu0
  %v2387 = vadd.f32 %v2299, %v2386
  %v2388 = vpop.f32.mrf.mxu0
  %2389 = vdwg.mxu0
  %s2390 = scalar_lea.vmem %s5, 160
  %v2391 = vld [vmem:[%s2390] sm:$0xff]
  %v2392 = vld [vmem:[%s2390 + $0x8] sm:$0xff]
  %v2393 = vld [vmem:[%s2390 + $0x10] sm:$0xff]
  %v2394 = vld [vmem:[%s2390 + $0x18] sm:$0xff]
  %s2395 = scalar_lea.vmem %s6, 10
  %v2396 = vld [vmem:[%s2395] sm:$0x1]
  %2400 = vrot.lane.b32.xlu0 %v2275, 96
  %v2401 = vpop.permute.xlu0 %2400
  %2402 = vrot.lane.b32.xlu0 %v2280, 96
  %v2403 = vpop.permute.xlu0 %2402
  %2404 = vrot.lane.b32.xlu0 %v2285, 96
  %v2405 = vpop.permute.xlu0 %2404
  %v2406 = vsel %vm539, %v2275, 0
  %v2408 = vsel %vm539, %v2280, 0
  %v2410 = vsel %vm539, %v2285, 0
  %v2412 = vsel %vm539, %v2401, 0
  %v2414 = vsel %vm539, %v2403, 0
  %v2416 = vsel %vm539, %v2405, 0
  %2418 = vmatprep.subr.mxu0 0.0
  %2419 = vmatpush1.xpose.msra.mxu0 0.0
  %2420 = vmatprep.subr.mxu0 0.0
  %2421 = vmatpush1.xpose.msra.mxu0 0.0
  %2422 = vmatprep.subr.mxu0 0.0
  %2423 = vmatpush1.xpose.msra.mxu0 0.0
  %2424 = vmatprep.subr.mxu0 0.0
  %2425 = vmatpush1.xpose.msra.mxu0 0.0
  %2426 = vmatprep.subr.mxu0 0.0
  %2427 = vmatpush1.xpose.msra.mxu0 0.0
  %2428 = vmatprep.subr.mxu0 0.0
  %2429 = vmatpush1.xpose.msra.mxu0 0.0
  %2430 = vmatprep.subr.mxu0 0.0
  %2431 = vmatpush1.xpose.msra.mxu0 0.0
  %2432 = vmatprep.subr.mxu0 0.0
  %2433 = vmatpush1.xpose.msra.mxu0 0.0
  %2434 = vmatprep.subr.mxu0 0.0
  %2435 = vmatpush1.xpose.msra.mxu0 0.0
  %2436 = vmatprep.subr.mxu0 0.0
  %2437 = vmatpush1.xpose.msra.mxu0 0.0
  %2438 = vmatprep.subr.mxu0 0.0
  %2439 = vmatpush1.xpose.msra.mxu0 0.0
  %2440 = vmatprep.subr.mxu0 0.0
  %2441 = vmatpush1.xpose.msra.mxu0 0.0
  %2442 = vmatprep.subr.mxu0 0.0
  %2443 = vmatpush1.xpose.msra.mxu0 0.0
  %2444 = vmatprep.subr.mxu0 0.0
  %2445 = vmatpush1.xpose.msra.mxu0 %v2416
  %2446 = vmatprep.subr.mxu0 0.0
  %2447 = vmatpush1.xpose.msra.mxu0 %v2414
  %2448 = vmatprep.subr.mxu0 0.0
  %2449 = vmatpush1.xpose.msra.mxu0 %v2412
  %2450 = vmatprep.subr.mxu0 0.0
  %2451 = vmatpush2.xpose.msra.mxu0 0.0
  %2452 = vmatprep.subr.mxu0 0.0
  %2453 = vmatpush2.xpose.msra.mxu0 0.0
  %2454 = vmatprep.subr.mxu0 0.0
  %2455 = vmatpush2.xpose.msra.mxu0 0.0
  %2456 = vmatprep.subr.mxu0 0.0
  %2457 = vmatpush2.xpose.msra.mxu0 0.0
  %2458 = vmatprep.subr.mxu0 0.0
  %2459 = vmatpush2.xpose.msra.mxu0 0.0
  %2460 = vmatprep.subr.mxu0 0.0
  %2461 = vmatpush2.xpose.msra.mxu0 0.0
  %2462 = vmatprep.subr.mxu0 0.0
  %2463 = vmatpush2.xpose.msra.mxu0 0.0
  %2464 = vmatprep.subr.mxu0 0.0
  %2465 = vmatpush2.xpose.msra.mxu0 0.0
  %2466 = vmatprep.subr.mxu0 0.0
  %2467 = vmatpush2.xpose.msra.mxu0 0.0
  %2468 = vmatprep.subr.mxu0 0.0
  %2469 = vmatpush2.xpose.msra.mxu0 0.0
  %2470 = vmatprep.subr.mxu0 0.0
  %2471 = vmatpush2.xpose.msra.mxu0 0.0
  %2472 = vmatprep.subr.mxu0 0.0
  %2473 = vmatpush2.xpose.msra.mxu0 0.0
  %2474 = vmatprep.subr.mxu0 0.0
  %2475 = vmatpush2.xpose.msra.mxu0 0.0
  %2476 = vmatprep.subr.mxu0 0.0
  %2477 = vmatpush2.xpose.msra.mxu0 0.0
  %2478 = vmatprep.subr.mxu0 0.0
  %2479 = vmatpush2.xpose.msra.mxu0 0.0
  %2480 = vmatprep.subr.mxu0 0.0
  %2481 = vmatpush2.xpose.msra.mxu0 0.0
  %2482 = vmatprep.mubr.f32.mxu0 0.0
  %2483 = vmatmul.mubr.f32.gmra.mxu0 %v2406
  %v2484 = vpop.f32.mrf.mxu0
  %v2485 = vadd.f32 %v78, %v2484
  %v2486 = vpop.f32.mrf.mxu0
  %2487 = vmatprep.mubr.f32.mxu0 0.0
  %2488 = vmatmul.mubr.f32.gmra.mxu0 %v2408
  %v2489 = vpop.f32.mrf.mxu0
  %v2490 = vadd.f32 %v79, %v2489
  %v2491 = vpop.f32.mrf.mxu0
  %2492 = vmatprep.mubr.f32.mxu0 0.0
  %2493 = vmatmul.mubr.f32.gmra.mxu0 %v2410
  %v2494 = vpop.f32.mrf.mxu0
  %v2495 = vadd.f32 %v80, %v2494
  %v2496 = vpop.f32.mrf.mxu0
  %2497 = vdwg.mxu0
  %v2498 = vsel %vm632, %v2485, -inf
  %2499 = vmax.xlane.f32.xlu0 %v2498
  %v2500 = vpop.xlane.xlu0 %2499
  %v2501 = vsel %vm632, %v2490, -inf
  %2502 = vmax.xlane.f32.xlu0 %v2501
  %v2503 = vpop.xlane.xlu0 %2502
  %v2504 = vsel %vm639, %v2495, -inf
  %2505 = vmax.xlane.f32.xlu0 %v2504
  %v2506 = vpop.xlane.xlu0 %2505
  %v2507 = vsub.f32 %v2485, %v2500
  %v2508 = vsub.f32 %v2490, %v2503
  %v2509 = vsub.f32 %v2495, %v2506
  %v2510 = vmul.f32 %v2507, 1.442695
  %v2511 = vpow.pop %v2510
  %v2512 = vmul.f32 %v2508, 1.442695
  %v2513 = vpow.pop %v2512
  %v2514 = vmul.f32 %v2509, 1.442695
  %v2515 = vpow.pop %v2514
  %v2516 = vsel %vm632, %v2511, 0.0
  %2517 = vadd.xlane.f32.xlu0 %v2516
  %v2518 = vpop.xlane.xlu0 %2517
  %v2519 = vsel %vm632, %v2513, 0.0
  %2520 = vadd.xlane.f32.xlu0 %v2519
  %v2521 = vpop.xlane.xlu0 %2520
  %v2522 = vsel %vm639, %v2515, 0.0
  %2523 = vadd.xlane.f32.xlu0 %v2522
  %v2524 = vpop.xlane.xlu0 %2523
  %v2525 = vrcp.pop %v2518
  %v2526 = vrcp.pop %v2521
  %v2527 = vrcp.pop %v2524
  %v2528 = vmul.f32 %v2511, %v2525
  %v2529 = vmul.f32 %v2513, %v2526
  %v2530 = vmul.f32 %v2515, %v2527
  %v2532 = vsel %vm632, %v2528, 0
  %v2535 = vsel %vm632, %v2529, 0
  %v2538 = vsel %vm632, %v2530, 0
  %v2541 = vsel %vm676, %v2387, 0
  %2543 = vmatprep.subr.mxu0 0.0
  %2544 = vmatpush1.msra.mxu0 0.0
  %2545 = vmatprep.subr.mxu0 0.0
  %2546 = vmatpush1.msra.mxu0 0.0
  %2547 = vmatprep.subr.mxu0 0.0
  %2548 = vmatpush1.msra.mxu0 0.0
  %2549 = vmatprep.subr.mxu0 0.0
  %2550 = vmatpush1.msra.mxu0 0.0
  %2551 = vmatprep.subr.mxu0 0.0
  %2552 = vmatpush1.msra.mxu0 0.0
  %2553 = vmatprep.subr.mxu0 0.0
  %2554 = vmatpush1.msra.mxu0 0.0
  %2555 = vmatprep.subr.mxu0 0.0
  %2556 = vmatpush1.msra.mxu0 0.0
  %2557 = vmatprep.subr.mxu0 0.0
  %2558 = vmatpush1.msra.mxu0 0.0
  %2559 = vmatprep.subr.mxu0 0.0
  %2560 = vmatpush1.msra.mxu0 0.0
  %2561 = vmatprep.subr.mxu0 0.0
  %2562 = vmatpush1.msra.mxu0 0.0
  %2563 = vmatprep.subr.mxu0 0.0
  %2564 = vmatpush1.msra.mxu0 0.0
  %2565 = vmatprep.subr.mxu0 0.0
  %2566 = vmatpush1.msra.mxu0 0.0
  %2567 = vmatprep.subr.mxu0 0.0
  %2568 = vmatpush1.msra.mxu0 0.0
  %2569 = vmatprep.subr.mxu0 0.0
  %2570 = vmatpush1.msra.mxu0 %v2541
  %2571 = vmatprep.subr.mxu0 0.0
  %2572 = vmatpush1.msra.mxu0 %v2382
  %2573 = vmatprep.subr.mxu0 0.0
  %2574 = vmatpush1.msra.mxu0 %v2377
  %2575 = vmatprep.subr.mxu0 0.0
  %2576 = vmatpush2.msra.mxu0 0.0
  %2577 = vmatprep.subr.mxu0 0.0
  %2578 = vmatpush2.msra.mxu0 0.0
  %2579 = vmatprep.subr.mxu0 0.0
  %2580 = vmatpush2.msra.mxu0 0.0
  %2581 = vmatprep.subr.mxu0 0.0
  %2582 = vmatpush2.msra.mxu0 0.0
  %2583 = vmatprep.subr.mxu0 0.0
  %2584 = vmatpush2.msra.mxu0 0.0
  %2585 = vmatprep.subr.mxu0 0.0
  %2586 = vmatpush2.msra.mxu0 0.0
  %2587 = vmatprep.subr.mxu0 0.0
  %2588 = vmatpush2.msra.mxu0 0.0
  %2589 = vmatprep.subr.mxu0 0.0
  %2590 = vmatpush2.msra.mxu0 0.0
  %2591 = vmatprep.subr.mxu0 0.0
  %2592 = vmatpush2.msra.mxu0 0.0
  %2593 = vmatprep.subr.mxu0 0.0
  %2594 = vmatpush2.msra.mxu0 0.0
  %2595 = vmatprep.subr.mxu0 0.0
  %2596 = vmatpush2.msra.mxu0 0.0
  %2597 = vmatprep.subr.mxu0 0.0
  %2598 = vmatpush2.msra.mxu0 0.0
  %2599 = vmatprep.subr.mxu0 0.0
  %2600 = vmatpush2.msra.mxu0 0.0
  %2601 = vmatprep.subr.mxu0 0.0
  %2602 = vmatpush2.msra.mxu0 0.0
  %2603 = vmatprep.subr.mxu0 0.0
  %2604 = vmatpush2.msra.mxu0 0.0
  %2605 = vmatprep.subr.mxu0 0.0
  %2606 = vmatpush2.msra.mxu0 0.0
  %2607 = vmatprep.mubr.f32.mxu0 0.0
  %2608 = vmatmul.mubr.f32.gmra.mxu0 %v2532
  %v2609 = vpop.f32.mrf.mxu0
  %v2610 = vadd.f32 0.0, %v2609
  %v2611 = vpop.f32.mrf.mxu0
  %2612 = vmatprep.mubr.f32.mxu0 0.0
  %2613 = vmatmul.mubr.f32.gmra.mxu0 %v2535
  %v2614 = vpop.f32.mrf.mxu0
  %v2615 = vadd.f32 0.0, %v2614
  %v2616 = vpop.f32.mrf.mxu0
  %2617 = vmatprep.mubr.f32.mxu0 0.0
  %2618 = vmatmul.mubr.f32.gmra.mxu0 %v2538
  %v2619 = vpop.f32.mrf.mxu0
  %v2620 = vadd.f32 0.0, %v2619
  %v2621 = vpop.f32.mrf.mxu0
  %2622 = vdwg.mxu0
  %2623 = vrot.lane.b32.xlu0 %v2275, 120
  %v2624 = vpop.permute.xlu0 %2623
  %2625 = vrot.lane.b32.xlu0 %v2280, 120
  %v2626 = vpop.permute.xlu0 %2625
  %2627 = vrot.lane.b32.xlu0 %v2285, 120
  %v2628 = vpop.permute.xlu0 %2627
  %2629 = vrot.lane.b32.xlu0 %v2275, 88
  %v2630 = vpop.permute.xlu0 %2629
  %2631 = vrot.lane.b32.xlu0 %v2280, 88
  %v2632 = vpop.permute.xlu0 %2631
  %2633 = vrot.lane.b32.xlu0 %v2285, 88
  %v2634 = vpop.permute.xlu0 %2633
  %v2635 = vsel %vm539, %v2624, 0
  %v2637 = vsel %vm539, %v2626, 0
  %v2639 = vsel %vm539, %v2628, 0
  %v2641 = vsel %vm539, %v2630, 0
  %v2643 = vsel %vm539, %v2632, 0
  %v2645 = vsel %vm539, %v2634, 0
  %2647 = vmatprep.subr.mxu0 0.0
  %2648 = vmatpush1.xpose.msra.mxu0 0.0
  %2649 = vmatprep.subr.mxu0 0.0
  %2650 = vmatpush1.xpose.msra.mxu0 0.0
  %2651 = vmatprep.subr.mxu0 0.0
  %2652 = vmatpush1.xpose.msra.mxu0 0.0
  %2653 = vmatprep.subr.mxu0 0.0
  %2654 = vmatpush1.xpose.msra.mxu0 0.0
  %2655 = vmatprep.subr.mxu0 0.0
  %2656 = vmatpush1.xpose.msra.mxu0 0.0
  %2657 = vmatprep.subr.mxu0 0.0
  %2658 = vmatpush1.xpose.msra.mxu0 0.0
  %2659 = vmatprep.subr.mxu0 0.0
  %2660 = vmatpush1.xpose.msra.mxu0 0.0
  %2661 = vmatprep.subr.mxu0 0.0
  %2662 = vmatpush1.xpose.msra.mxu0 0.0
  %2663 = vmatprep.subr.mxu0 0.0
  %2664 = vmatpush1.xpose.msra.mxu0 0.0
  %2665 = vmatprep.subr.mxu0 0.0
  %2666 = vmatpush1.xpose.msra.mxu0 0.0
  %2667 = vmatprep.subr.mxu0 0.0
  %2668 = vmatpush1.xpose.msra.mxu0 0.0
  %2669 = vmatprep.subr.mxu0 0.0
  %2670 = vmatpush1.xpose.msra.mxu0 0.0
  %2671 = vmatprep.subr.mxu0 0.0
  %2672 = vmatpush1.xpose.msra.mxu0 0.0
  %2673 = vmatprep.subr.mxu0 0.0
  %2674 = vmatpush1.xpose.msra.mxu0 %v2645
  %2675 = vmatprep.subr.mxu0 0.0
  %2676 = vmatpush1.xpose.msra.mxu0 %v2643
  %2677 = vmatprep.subr.mxu0 0.0
  %2678 = vmatpush1.xpose.msra.mxu0 %v2641
  %2679 = vmatprep.subr.mxu0 0.0
  %2680 = vmatpush2.xpose.msra.mxu0 0.0
  %2681 = vmatprep.subr.mxu0 0.0
  %2682 = vmatpush2.xpose.msra.mxu0 0.0
  %2683 = vmatprep.subr.mxu0 0.0
  %2684 = vmatpush2.xpose.msra.mxu0 0.0
  %2685 = vmatprep.subr.mxu0 0.0
  %2686 = vmatpush2.xpose.msra.mxu0 0.0
  %2687 = vmatprep.subr.mxu0 0.0
  %2688 = vmatpush2.xpose.msra.mxu0 0.0
  %2689 = vmatprep.subr.mxu0 0.0
  %2690 = vmatpush2.xpose.msra.mxu0 0.0
  %2691 = vmatprep.subr.mxu0 0.0
  %2692 = vmatpush2.xpose.msra.mxu0 0.0
  %2693 = vmatprep.subr.mxu0 0.0
  %2694 = vmatpush2.xpose.msra.mxu0 0.0
  %2695 = vmatprep.subr.mxu0 0.0
  %2696 = vmatpush2.xpose.msra.mxu0 0.0
  %2697 = vmatprep.subr.mxu0 0.0
  %2698 = vmatpush2.xpose.msra.mxu0 0.0
  %2699 = vmatprep.subr.mxu0 0.0
  %2700 = vmatpush2.xpose.msra.mxu0 0.0
  %2701 = vmatprep.subr.mxu0 0.0
  %2702 = vmatpush2.xpose.msra.mxu0 0.0
  %2703 = vmatprep.subr.mxu0 0.0
  %2704 = vmatpush2.xpose.msra.mxu0 0.0
  %2705 = vmatprep.subr.mxu0 0.0
  %2706 = vmatpush2.xpose.msra.mxu0 0.0
  %2707 = vmatprep.subr.mxu0 0.0
  %2708 = vmatpush2.xpose.msra.mxu0 0.0
  %2709 = vmatprep.subr.mxu0 0.0
  %2710 = vmatpush2.xpose.msra.mxu0 0.0
  %2711 = vmatprep.mubr.f32.mxu0 0.0
  %2712 = vmatmul.mubr.f32.gmra.mxu0 %v2635
  %v2713 = vpop.f32.mrf.mxu0
  %v2714 = vadd.f32 %v78, %v2713
  %v2715 = vpop.f32.mrf.mxu0
  %2716 = vmatprep.mubr.f32.mxu0 0.0
  %2717 = vmatmul.mubr.f32.gmra.mxu0 %v2637
  %v2718 = vpop.f32.mrf.mxu0
  %v2719 = vadd.f32 %v79, %v2718
  %v2720 = vpop.f32.mrf.mxu0
  %2721 = vmatprep.mubr.f32.mxu0 0.0
  %2722 = vmatmul.mubr.f32.gmra.mxu0 %v2639
  %v2723 = vpop.f32.mrf.mxu0
  %v2724 = vadd.f32 %v80, %v2723
  %v2725 = vpop.f32.mrf.mxu0
  %2726 = vdwg.mxu0
  %v2727 = vsel %vm632, %v2714, -inf
  %2728 = vmax.xlane.f32.xlu0 %v2727
  %v2729 = vpop.xlane.xlu0 %2728
  %v2730 = vsel %vm632, %v2719, -inf
  %2731 = vmax.xlane.f32.xlu0 %v2730
  %v2732 = vpop.xlane.xlu0 %2731
  %v2733 = vsel %vm639, %v2724, -inf
  %2734 = vmax.xlane.f32.xlu0 %v2733
  %v2735 = vpop.xlane.xlu0 %2734
  %v2736 = vsub.f32 %v2714, %v2729
  %v2737 = vsub.f32 %v2719, %v2732
  %v2738 = vsub.f32 %v2724, %v2735
  %v2739 = vmul.f32 %v2736, 1.442695
  %v2740 = vpow.pop %v2739
  %v2741 = vmul.f32 %v2737, 1.442695
  %v2742 = vpow.pop %v2741
  %v2743 = vmul.f32 %v2738, 1.442695
  %v2744 = vpow.pop %v2743
  %v2745 = vsel %vm632, %v2740, 0.0
  %2746 = vadd.xlane.f32.xlu0 %v2745
  %v2747 = vpop.xlane.xlu0 %2746
  %v2748 = vsel %vm632, %v2742, 0.0
  %2749 = vadd.xlane.f32.xlu0 %v2748
  %v2750 = vpop.xlane.xlu0 %2749
  %v2751 = vsel %vm639, %v2744, 0.0
  %2752 = vadd.xlane.f32.xlu0 %v2751
  %v2753 = vpop.xlane.xlu0 %2752
  %v2754 = vrcp.pop %v2747
  %v2755 = vrcp.pop %v2750
  %v2756 = vrcp.pop %v2753
  %v2757 = vmul.f32 %v2740, %v2754
  %v2758 = vmul.f32 %v2742, %v2755
  %v2759 = vmul.f32 %v2744, %v2756
  %2762 = vrot.lane.b32.xlu0 %v2377, 120
  %v2763 = vpop.permute.xlu0 %2762
  %2764 = vrot.lane.b32.xlu0 %v2382, 120
  %v2765 = vpop.permute.xlu0 %2764
  %2766 = vrot.lane.b32.xlu0 %v2387, 120
  %v2767 = vpop.permute.xlu0 %2766
  %v2771 = vsel %vm632, %v2757, 0
  %v2774 = vsel %vm632, %v2758, 0
  %v2777 = vsel %vm632, %v2759, 0
  %v2779 = vsel %vm676, %v2767, 0
  %2781 = vmatprep.subr.mxu0 0.0
  %2782 = vmatpush1.msra.mxu0 0.0
  %2783 = vmatprep.subr.mxu0 0.0
  %2784 = vmatpush1.msra.mxu0 0.0
  %2785 = vmatprep.subr.mxu0 0.0
  %2786 = vmatpush1.msra.mxu0 0.0
  %2787 = vmatprep.subr.mxu0 0.0
  %2788 = vmatpush1.msra.mxu0 0.0
  %2789 = vmatprep.subr.mxu0 0.0
  %2790 = vmatpush1.msra.mxu0 0.0
  %2791 = vmatprep.subr.mxu0 0.0
  %2792 = vmatpush1.msra.mxu0 0.0
  %2793 = vmatprep.subr.mxu0 0.0
  %2794 = vmatpush1.msra.mxu0 0.0
  %2795 = vmatprep.subr.mxu0 0.0
  %2796 = vmatpush1.msra.mxu0 0.0
  %2797 = vmatprep.subr.mxu0 0.0
  %2798 = vmatpush1.msra.mxu0 0.0
  %2799 = vmatprep.subr.mxu0 0.0
  %2800 = vmatpush1.msra.mxu0 0.0
  %2801 = vmatprep.subr.mxu0 0.0
  %2802 = vmatpush1.msra.mxu0 0.0
  %2803 = vmatprep.subr.mxu0 0.0
  %2804 = vmatpush1.msra.mxu0 0.0
  %2805 = vmatprep.subr.mxu0 0.0
  %2806 = vmatpush1.msra.mxu0 0.0
  %2807 = vmatprep.subr.mxu0 0.0
  %2808 = vmatpush1.msra.mxu0 %v2779
  %2809 = vmatprep.subr.mxu0 0.0
  %2810 = vmatpush1.msra.mxu0 %v2765
  %2811 = vmatprep.subr.mxu0 0.0
  %2812 = vmatpush1.msra.mxu0 %v2763
  %2813 = vmatprep.subr.mxu0 0.0
  %2814 = vmatpush2.msra.mxu0 0.0
  %2815 = vmatprep.subr.mxu0 0.0
  %2816 = vmatpush2.msra.mxu0 0.0
  %2817 = vmatprep.subr.mxu0 0.0
  %2818 = vmatpush2.msra.mxu0 0.0
  %2819 = vmatprep.subr.mxu0 0.0
  %2820 = vmatpush2.msra.mxu0 0.0
  %2821 = vmatprep.subr.mxu0 0.0
  %2822 = vmatpush2.msra.mxu0 0.0
  %2823 = vmatprep.subr.mxu0 0.0
  %2824 = vmatpush2.msra.mxu0 0.0
  %2825 = vmatprep.subr.mxu0 0.0
  %2826 = vmatpush2.msra.mxu0 0.0
  %2827 = vmatprep.subr.mxu0 0.0
  %2828 = vmatpush2.msra.mxu0 0.0
  %2829 = vmatprep.subr.mxu0 0.0
  %2830 = vmatpush2.msra.mxu0 0.0
  %2831 = vmatprep.subr.mxu0 0.0
  %2832 = vmatpush2.msra.mxu0 0.0
  %2833 = vmatprep.subr.mxu0 0.0
  %2834 = vmatpush2.msra.mxu0 0.0
  %2835 = vmatprep.subr.mxu0 0.0
  %2836 = vmatpush2.msra.mxu0 0.0
  %2837 = vmatprep.subr.mxu0 0.0
  %2838 = vmatpush2.msra.mxu0 0.0
  %2839 = vmatprep.subr.mxu0 0.0
  %2840 = vmatpush2.msra.mxu0 0.0
  %2841 = vmatprep.subr.mxu0 0.0
  %2842 = vmatpush2.msra.mxu0 0.0
  %2843 = vmatprep.subr.mxu0 0.0
  %2844 = vmatpush2.msra.mxu0 0.0
  %2845 = vmatprep.mubr.f32.mxu0 0.0
  %2846 = vmatmul.mubr.f32.gmra.mxu0 %v2771
  %v2847 = vpop.f32.mrf.mxu0
  %v2848 = vadd.f32 0.0, %v2847
  %v2849 = vpop.f32.mrf.mxu0
  %2850 = vmatprep.mubr.f32.mxu0 0.0
  %2851 = vmatmul.mubr.f32.gmra.mxu0 %v2774
  %v2852 = vpop.f32.mrf.mxu0
  %v2853 = vadd.f32 0.0, %v2852
  %v2854 = vpop.f32.mrf.mxu0
  %2855 = vmatprep.mubr.f32.mxu0 0.0
  %2856 = vmatmul.mubr.f32.gmra.mxu0 %v2777
  %v2857 = vpop.f32.mrf.mxu0
  %v2858 = vadd.f32 0.0, %v2857
  %v2859 = vpop.f32.mrf.mxu0
  %2860 = vdwg.mxu0
  %v2862 = vsel %vm539, %v2848, 0
  %v2865 = vsel %vm539, %v2853, 0
  %v2868 = vsel %vm539, %v2858, 0
  %2870 = vmatprep.subr.mxu0 0.0
  %2871 = vmatpush1.msra.mxu0 0.0
  %2872 = vmatprep.subr.mxu0 0.0
  %2873 = vmatpush1.msra.mxu0 0.0
  %2874 = vmatprep.subr.mxu0 0.0
  %2875 = vmatpush1.msra.mxu0 0.0
  %2876 = vmatprep.subr.mxu0 0.0
  %2877 = vmatpush1.msra.mxu0 0.0
  %2878 = vmatprep.subr.mxu0 0.0
  %2879 = vmatpush1.msra.mxu0 0.0
  %2880 = vmatprep.subr.mxu0 0.0
  %2881 = vmatpush1.msra.mxu0 0.0
  %2882 = vmatprep.subr.mxu0 0.0
  %2883 = vmatpush1.msra.mxu0 0.0
  %2884 = vmatprep.subr.mxu0 0.0
  %2885 = vmatpush1.msra.mxu0 0.0
  %2886 = vmatprep.subr.mxu0 0.0
  %2887 = vmatpush1.msra.mxu0 0.0
  %2888 = vmatprep.subr.mxu0 0.0
  %2889 = vmatpush1.msra.mxu0 0.0
  %2890 = vmatprep.subr.mxu0 0.0
  %2891 = vmatpush1.msra.mxu0 0.0
  %2892 = vmatprep.subr.mxu0 0.0
  %2893 = vmatpush1.msra.mxu0 0.0
  %2894 = vmatprep.subr.mxu0 0.0
  %2895 = vmatpush1.msra.mxu0 0.0
  %2896 = vmatprep.subr.mxu0 0.0
  %2897 = vmatpush1.msra.mxu0 0.0
  %2898 = vmatprep.subr.mxu0 0.0
  %2899 = vmatpush1.msra.mxu0 0.0
  %2900 = vmatprep.subr.mxu0 0.0
  %2901 = vmatpush1.msra.mxu0 %v2392
  %2902 = vmatprep.subr.mxu0 0.0
  %2903 = vmatpush2.msra.mxu0 0.0
  %2904 = vmatprep.subr.mxu0 0.0
  %2905 = vmatpush2.msra.mxu0 0.0
  %2906 = vmatprep.subr.mxu0 0.0
  %2907 = vmatpush2.msra.mxu0 0.0
  %2908 = vmatprep.subr.mxu0 0.0
  %2909 = vmatpush2.msra.mxu0 0.0
  %2910 = vmatprep.subr.mxu0 0.0
  %2911 = vmatpush2.msra.mxu0 0.0
  %2912 = vmatprep.subr.mxu0 0.0
  %2913 = vmatpush2.msra.mxu0 0.0
  %2914 = vmatprep.subr.mxu0 0.0
  %2915 = vmatpush2.msra.mxu0 0.0
  %2916 = vmatprep.subr.mxu0 0.0
  %2917 = vmatpush2.msra.mxu0 0.0
  %2918 = vmatprep.subr.mxu0 0.0
  %2919 = vmatpush2.msra.mxu0 0.0
  %2920 = vmatprep.subr.mxu0 0.0
  %2921 = vmatpush2.msra.mxu0 0.0
  %2922 = vmatprep.subr.mxu0 0.0
  %2923 = vmatpush2.msra.mxu0 0.0
  %2924 = vmatprep.subr.mxu0 0.0
  %2925 = vmatpush2.msra.mxu0 0.0
  %2926 = vmatprep.subr.mxu0 0.0
  %2927 = vmatpush2.msra.mxu0 0.0
  %2928 = vmatprep.subr.mxu0 0.0
  %2929 = vmatpush2.msra.mxu0 0.0
  %2930 = vmatprep.subr.mxu0 0.0
  %2931 = vmatpush2.msra.mxu0 0.0
  %2932 = vmatprep.subr.mxu0 0.0
  %2933 = vmatpush2.msra.mxu0 0.0
  %2934 = vmatprep.mubr.f32.mxu0 0.0
  %2935 = vmatmul.mubr.f32.gmra.mxu0 %v2862
  %v2936 = vpop.f32.mrf.mxu0
  %v2937 = vadd.f32 0.0, %v2936
  %v2938 = vpop.f32.mrf.mxu0
  %2939 = vmatprep.mubr.f32.mxu0 0.0
  %2940 = vmatmul.mubr.f32.gmra.mxu0 %v2865
  %v2941 = vpop.f32.mrf.mxu0
  %v2942 = vadd.f32 0.0, %v2941
  %v2943 = vpop.f32.mrf.mxu0
  %2944 = vmatprep.mubr.f32.mxu0 0.0
  %2945 = vmatmul.mubr.f32.gmra.mxu0 %v2868
  %v2946 = vpop.f32.mrf.mxu0
  %v2947 = vadd.f32 0.0, %v2946
  %v2948 = vpop.f32.mrf.mxu0
  %2949 = vdwg.mxu0
  %v2951 = vsel %vm539, %v2610, 0
  %v2954 = vsel %vm539, %v2615, 0
  %v2957 = vsel %vm539, %v2620, 0
  %2959 = vmatprep.subr.mxu0 0.0
  %2960 = vmatpush1.msra.mxu0 0.0
  %2961 = vmatprep.subr.mxu0 0.0
  %2962 = vmatpush1.msra.mxu0 0.0
  %2963 = vmatprep.subr.mxu0 0.0
  %2964 = vmatpush1.msra.mxu0 0.0
  %2965 = vmatprep.subr.mxu0 0.0
  %2966 = vmatpush1.msra.mxu0 0.0
  %2967 = vmatprep.subr.mxu0 0.0
  %2968 = vmatpush1.msra.mxu0 0.0
  %2969 = vmatprep.subr.mxu0 0.0
  %2970 = vmatpush1.msra.mxu0 0.0
  %2971 = vmatprep.subr.mxu0 0.0
  %2972 = vmatpush1.msra.mxu0 0.0
  %2973 = vmatprep.subr.mxu0 0.0
  %2974 = vmatpush1.msra.mxu0 0.0
  %2975 = vmatprep.subr.mxu0 0.0
  %2976 = vmatpush1.msra.mxu0 0.0
  %2977 = vmatprep.subr.mxu0 0.0
  %2978 = vmatpush1.msra.mxu0 0.0
  %2979 = vmatprep.subr.mxu0 0.0
  %2980 = vmatpush1.msra.mxu0 0.0
  %2981 = vmatprep.subr.mxu0 0.0
  %2982 = vmatpush1.msra.mxu0 0.0
  %2983 = vmatprep.subr.mxu0 0.0
  %2984 = vmatpush1.msra.mxu0 0.0
  %2985 = vmatprep.subr.mxu0 0.0
  %2986 = vmatpush1.msra.mxu0 0.0
  %2987 = vmatprep.subr.mxu0 0.0
  %2988 = vmatpush1.msra.mxu0 0.0
  %2989 = vmatprep.subr.mxu0 0.0
  %2990 = vmatpush1.msra.mxu0 %v2391
  %2991 = vmatprep.subr.mxu0 0.0
  %2992 = vmatpush2.msra.mxu0 0.0
  %2993 = vmatprep.subr.mxu0 0.0
  %2994 = vmatpush2.msra.mxu0 0.0
  %2995 = vmatprep.subr.mxu0 0.0
  %2996 = vmatpush2.msra.mxu0 0.0
  %2997 = vmatprep.subr.mxu0 0.0
  %2998 = vmatpush2.msra.mxu0 0.0
  %2999 = vmatprep.subr.mxu0 0.0
  %3000 = vmatpush2.msra.mxu0 0.0
  %3001 = vmatprep.subr.mxu0 0.0
  %3002 = vmatpush2.msra.mxu0 0.0
  %3003 = vmatprep.subr.mxu0 0.0
  %3004 = vmatpush2.msra.mxu0 0.0
  %3005 = vmatprep.subr.mxu0 0.0
  %3006 = vmatpush2.msra.mxu0 0.0
  %3007 = vmatprep.subr.mxu0 0.0
  %3008 = vmatpush2.msra.mxu0 0.0
  %3009 = vmatprep.subr.mxu0 0.0
  %3010 = vmatpush2.msra.mxu0 0.0
  %3011 = vmatprep.subr.mxu0 0.0
  %3012 = vmatpush2.msra.mxu0 0.0
  %3013 = vmatprep.subr.mxu0 0.0
  %3014 = vmatpush2.msra.mxu0 0.0
  %3015 = vmatprep.subr.mxu0 0.0
  %3016 = vmatpush2.msra.mxu0 0.0
  %3017 = vmatprep.subr.mxu0 0.0
  %3018 = vmatpush2.msra.mxu0 0.0
  %3019 = vmatprep.subr.mxu0 0.0
  %3020 = vmatpush2.msra.mxu0 0.0
  %3021 = vmatprep.subr.mxu0 0.0
  %3022 = vmatpush2.msra.mxu0 0.0
  %3023 = vmatprep.mubr.f32.mxu0 0.0
  %3024 = vmatmul.mubr.f32.gmra.mxu0 %v2951
  %v3025 = vpop.f32.mrf.mxu0
  %v3026 = vadd.f32 %v2937, %v3025
  %v3027 = vpop.f32.mrf.mxu0
  %3028 = vmatprep.mubr.f32.mxu0 0.0
  %3029 = vmatmul.mubr.f32.gmra.mxu0 %v2954
  %v3030 = vpop.f32.mrf.mxu0
  %v3031 = vadd.f32 %v2942, %v3030
  %v3032 = vpop.f32.mrf.mxu0
  %3033 = vmatprep.mubr.f32.mxu0 0.0
  %3034 = vmatmul.mubr.f32.gmra.mxu0 %v2957
  %v3035 = vpop.f32.mrf.mxu0
  %v3036 = vadd.f32 %v2947, %v3035
  %v3037 = vpop.f32.mrf.mxu0
  %3038 = vdwg.mxu0
  %3039 = vrot.lane.b32.xlu0 %v2275, 112
  %v3040 = vpop.permute.xlu0 %3039
  %3041 = vrot.lane.b32.xlu0 %v2280, 112
  %v3042 = vpop.permute.xlu0 %3041
  %3043 = vrot.lane.b32.xlu0 %v2285, 112
  %v3044 = vpop.permute.xlu0 %3043
  %3045 = vrot.lane.b32.xlu0 %v2275, 80
  %v3046 = vpop.permute.xlu0 %3045
  %3047 = vrot.lane.b32.xlu0 %v2280, 80
  %v3048 = vpop.permute.xlu0 %3047
  %3049 = vrot.lane.b32.xlu0 %v2285, 80
  %v3050 = vpop.permute.xlu0 %3049
  %v3051 = vsel %vm539, %v3040, 0
  %v3053 = vsel %vm539, %v3042, 0
  %v3055 = vsel %vm539, %v3044, 0
  %v3057 = vsel %vm539, %v3046, 0
  %v3059 = vsel %vm539, %v3048, 0
  %v3061 = vsel %vm539, %v3050, 0
  %3063 = vmatprep.subr.mxu0 0.0
  %3064 = vmatpush1.xpose.msra.mxu0 0.0
  %3065 = vmatprep.subr.mxu0 0.0
  %3066 = vmatpush1.xpose.msra.mxu0 0.0
  %3067 = vmatprep.subr.mxu0 0.0
  %3068 = vmatpush1.xpose.msra.mxu0 0.0
  %3069 = vmatprep.subr.mxu0 0.0
  %3070 = vmatpush1.xpose.msra.mxu0 0.0
  %3071 = vmatprep.subr.mxu0 0.0
  %3072 = vmatpush1.xpose.msra.mxu0 0.0
  %3073 = vmatprep.subr.mxu0 0.0
  %3074 = vmatpush1.xpose.msra.mxu0 0.0
  %3075 = vmatprep.subr.mxu0 0.0
  %3076 = vmatpush1.xpose.msra.mxu0 0.0
  %3077 = vmatprep.subr.mxu0 0.0
  %3078 = vmatpush1.xpose.msra.mxu0 0.0
  %3079 = vmatprep.subr.mxu0 0.0
  %3080 = vmatpush1.xpose.msra.mxu0 0.0
  %3081 = vmatprep.subr.mxu0 0.0
  %3082 = vmatpush1.xpose.msra.mxu0 0.0
  %3083 = vmatprep.subr.mxu0 0.0
  %3084 = vmatpush1.xpose.msra.mxu0 0.0
  %3085 = vmatprep.subr.mxu0 0.0
  %3086 = vmatpush1.xpose.msra.mxu0 0.0
  %3087 = vmatprep.subr.mxu0 0.0
  %3088 = vmatpush1.xpose.msra.mxu0 0.0
  %3089 = vmatprep.subr.mxu0 0.0
  %3090 = vmatpush1.xpose.msra.mxu0 %v3061
  %3091 = vmatprep.subr.mxu0 0.0
  %3092 = vmatpush1.xpose.msra.mxu0 %v3059
  %3093 = vmatprep.subr.mxu0 0.0
  %3094 = vmatpush1.xpose.msra.mxu0 %v3057
  %3095 = vmatprep.subr.mxu0 0.0
  %3096 = vmatpush2.xpose.msra.mxu0 0.0
  %3097 = vmatprep.subr.mxu0 0.0
  %3098 = vmatpush2.xpose.msra.mxu0 0.0
  %3099 = vmatprep.subr.mxu0 0.0
  %3100 = vmatpush2.xpose.msra.mxu0 0.0
  %3101 = vmatprep.subr.mxu0 0.0
  %3102 = vmatpush2.xpose.msra.mxu0 0.0
  %3103 = vmatprep.subr.mxu0 0.0
  %3104 = vmatpush2.xpose.msra.mxu0 0.0
  %3105 = vmatprep.subr.mxu0 0.0
  %3106 = vmatpush2.xpose.msra.mxu0 0.0
  %3107 = vmatprep.subr.mxu0 0.0
  %3108 = vmatpush2.xpose.msra.mxu0 0.0
  %3109 = vmatprep.subr.mxu0 0.0
  %3110 = vmatpush2.xpose.msra.mxu0 0.0
  %3111 = vmatprep.subr.mxu0 0.0
  %3112 = vmatpush2.xpose.msra.mxu0 0.0
  %3113 = vmatprep.subr.mxu0 0.0
  %3114 = vmatpush2.xpose.msra.mxu0 0.0
  %3115 = vmatprep.subr.mxu0 0.0
  %3116 = vmatpush2.xpose.msra.mxu0 0.0
  %3117 = vmatprep.subr.mxu0 0.0
  %3118 = vmatpush2.xpose.msra.mxu0 0.0
  %3119 = vmatprep.subr.mxu0 0.0
  %3120 = vmatpush2.xpose.msra.mxu0 0.0
  %3121 = vmatprep.subr.mxu0 0.0
  %3122 = vmatpush2.xpose.msra.mxu0 0.0
  %3123 = vmatprep.subr.mxu0 0.0
  %3124 = vmatpush2.xpose.msra.mxu0 0.0
  %3125 = vmatprep.subr.mxu0 0.0
  %3126 = vmatpush2.xpose.msra.mxu0 0.0
  %3127 = vmatprep.mubr.f32.mxu0 0.0
  %3128 = vmatmul.mubr.f32.gmra.mxu0 %v3051
  %v3129 = vpop.f32.mrf.mxu0
  %v3130 = vadd.f32 %v78, %v3129
  %v3131 = vpop.f32.mrf.mxu0
  %3132 = vmatprep.mubr.f32.mxu0 0.0
  %3133 = vmatmul.mubr.f32.gmra.mxu0 %v3053
  %v3134 = vpop.f32.mrf.mxu0
  %v3135 = vadd.f32 %v79, %v3134
  %v3136 = vpop.f32.mrf.mxu0
  %3137 = vmatprep.mubr.f32.mxu0 0.0
  %3138 = vmatmul.mubr.f32.gmra.mxu0 %v3055
  %v3139 = vpop.f32.mrf.mxu0
  %v3140 = vadd.f32 %v80, %v3139
  %v3141 = vpop.f32.mrf.mxu0
  %3142 = vdwg.mxu0
  %v3143 = vsel %vm632, %v3130, -inf
  %3144 = vmax.xlane.f32.xlu0 %v3143
  %v3145 = vpop.xlane.xlu0 %3144
  %v3146 = vsel %vm632, %v3135, -inf
  %3147 = vmax.xlane.f32.xlu0 %v3146
  %v3148 = vpop.xlane.xlu0 %3147
  %v3149 = vsel %vm639, %v3140, -inf
  %3150 = vmax.xlane.f32.xlu0 %v3149
  %v3151 = vpop.xlane.xlu0 %3150
  %v3152 = vsub.f32 %v3130, %v3145
  %v3153 = vsub.f32 %v3135, %v3148
  %v3154 = vsub.f32 %v3140, %v3151
  %v3155 = vmul.f32 %v3152, 1.442695
  %v3156 = vpow.pop %v3155
  %v3157 = vmul.f32 %v3153, 1.442695
  %v3158 = vpow.pop %v3157
  %v3159 = vmul.f32 %v3154, 1.442695
  %v3160 = vpow.pop %v3159
  %v3161 = vsel %vm632, %v3156, 0.0
  %3162 = vadd.xlane.f32.xlu0 %v3161
  %v3163 = vpop.xlane.xlu0 %3162
  %v3164 = vsel %vm632, %v3158, 0.0
  %3165 = vadd.xlane.f32.xlu0 %v3164
  %v3166 = vpop.xlane.xlu0 %3165
  %v3167 = vsel %vm639, %v3160, 0.0
  %3168 = vadd.xlane.f32.xlu0 %v3167
  %v3169 = vpop.xlane.xlu0 %3168
  %v3170 = vrcp.pop %v3163
  %v3171 = vrcp.pop %v3166
  %v3172 = vrcp.pop %v3169
  %v3173 = vmul.f32 %v3156, %v3170
  %v3174 = vmul.f32 %v3158, %v3171
  %v3175 = vmul.f32 %v3160, %v3172
  %3176 = vrot.lane.b32.xlu0 %v2377, 112
  %v3177 = vpop.permute.xlu0 %3176
  %3178 = vrot.lane.b32.xlu0 %v2382, 112
  %v3179 = vpop.permute.xlu0 %3178
  %3180 = vrot.lane.b32.xlu0 %v2387, 112
  %v3181 = vpop.permute.xlu0 %3180
  %v3185 = vsel %vm632, %v3173, 0
  %v3188 = vsel %vm632, %v3174, 0
  %v3191 = vsel %vm632, %v3175, 0
  %v3193 = vsel %vm676, %v3181, 0
  %3195 = vmatprep.subr.mxu0 0.0
  %3196 = vmatpush1.msra.mxu0 0.0
  %3197 = vmatprep.subr.mxu0 0.0
  %3198 = vmatpush1.msra.mxu0 0.0
  %3199 = vmatprep.subr.mxu0 0.0
  %3200 = vmatpush1.msra.mxu0 0.0
  %3201 = vmatprep.subr.mxu0 0.0
  %3202 = vmatpush1.msra.mxu0 0.0
  %3203 = vmatprep.subr.mxu0 0.0
  %3204 = vmatpush1.msra.mxu0 0.0
  %3205 = vmatprep.subr.mxu0 0.0
  %3206 = vmatpush1.msra.mxu0 0.0
  %3207 = vmatprep.subr.mxu0 0.0
  %3208 = vmatpush1.msra.mxu0 0.0
  %3209 = vmatprep.subr.mxu0 0.0
  %3210 = vmatpush1.msra.mxu0 0.0
  %3211 = vmatprep.subr.mxu0 0.0
  %3212 = vmatpush1.msra.mxu0 0.0
  %3213 = vmatprep.subr.mxu0 0.0
  %3214 = vmatpush1.msra.mxu0 0.0
  %3215 = vmatprep.subr.mxu0 0.0
  %3216 = vmatpush1.msra.mxu0 0.0
  %3217 = vmatprep.subr.mxu0 0.0
  %3218 = vmatpush1.msra.mxu0 0.0
  %3219 = vmatprep.subr.mxu0 0.0
  %3220 = vmatpush1.msra.mxu0 0.0
  %3221 = vmatprep.subr.mxu0 0.0
  %3222 = vmatpush1.msra.mxu0 %v3193
  %3223 = vmatprep.subr.mxu0 0.0
  %3224 = vmatpush1.msra.mxu0 %v3179
  %3225 = vmatprep.subr.mxu0 0.0
  %3226 = vmatpush1.msra.mxu0 %v3177
  %3227 = vmatprep.subr.mxu0 0.0
  %3228 = vmatpush2.msra.mxu0 0.0
  %3229 = vmatprep.subr.mxu0 0.0
  %3230 = vmatpush2.msra.mxu0 0.0
  %3231 = vmatprep.subr.mxu0 0.0
  %3232 = vmatpush2.msra.mxu0 0.0
  %3233 = vmatprep.subr.mxu0 0.0
  %3234 = vmatpush2.msra.mxu0 0.0
  %3235 = vmatprep.subr.mxu0 0.0
  %3236 = vmatpush2.msra.mxu0 0.0
  %3237 = vmatprep.subr.mxu0 0.0
  %3238 = vmatpush2.msra.mxu0 0.0
  %3239 = vmatprep.subr.mxu0 0.0
  %3240 = vmatpush2.msra.mxu0 0.0
  %3241 = vmatprep.subr.mxu0 0.0
  %3242 = vmatpush2.msra.mxu0 0.0
  %3243 = vmatprep.subr.mxu0 0.0
  %3244 = vmatpush2.msra.mxu0 0.0
  %3245 = vmatprep.subr.mxu0 0.0
  %3246 = vmatpush2.msra.mxu0 0.0
  %3247 = vmatprep.subr.mxu0 0.0
  %3248 = vmatpush2.msra.mxu0 0.0
  %3249 = vmatprep.subr.mxu0 0.0
  %3250 = vmatpush2.msra.mxu0 0.0
  %3251 = vmatprep.subr.mxu0 0.0
  %3252 = vmatpush2.msra.mxu0 0.0
  %3253 = vmatprep.subr.mxu0 0.0
  %3254 = vmatpush2.msra.mxu0 0.0
  %3255 = vmatprep.subr.mxu0 0.0
  %3256 = vmatpush2.msra.mxu0 0.0
  %3257 = vmatprep.subr.mxu0 0.0
  %3258 = vmatpush2.msra.mxu0 0.0
  %3259 = vmatprep.mubr.f32.mxu0 0.0
  %3260 = vmatmul.mubr.f32.gmra.mxu0 %v3185
  %v3261 = vpop.f32.mrf.mxu0
  %v3262 = vadd.f32 0.0, %v3261
  %v3263 = vpop.f32.mrf.mxu0
  %3264 = vmatprep.mubr.f32.mxu0 0.0
  %3265 = vmatmul.mubr.f32.gmra.mxu0 %v3188
  %v3266 = vpop.f32.mrf.mxu0
  %v3267 = vadd.f32 0.0, %v3266
  %v3268 = vpop.f32.mrf.mxu0
  %3269 = vmatprep.mubr.f32.mxu0 0.0
  %3270 = vmatmul.mubr.f32.gmra.mxu0 %v3191
  %v3271 = vpop.f32.mrf.mxu0
  %v3272 = vadd.f32 0.0, %v3271
  %v3273 = vpop.f32.mrf.mxu0
  %3274 = vdwg.mxu0
  %v3276 = vsel %vm539, %v3262, 0
  %v3279 = vsel %vm539, %v3267, 0
  %v3282 = vsel %vm539, %v3272, 0
  %3284 = vmatprep.subr.mxu0 0.0
  %3285 = vmatpush1.msra.mxu0 0.0
  %3286 = vmatprep.subr.mxu0 0.0
  %3287 = vmatpush1.msra.mxu0 0.0
  %3288 = vmatprep.subr.mxu0 0.0
  %3289 = vmatpush1.msra.mxu0 0.0
  %3290 = vmatprep.subr.mxu0 0.0
  %3291 = vmatpush1.msra.mxu0 0.0
  %3292 = vmatprep.subr.mxu0 0.0
  %3293 = vmatpush1.msra.mxu0 0.0
  %3294 = vmatprep.subr.mxu0 0.0
  %3295 = vmatpush1.msra.mxu0 0.0
  %3296 = vmatprep.subr.mxu0 0.0
  %3297 = vmatpush1.msra.mxu0 0.0
  %3298 = vmatprep.subr.mxu0 0.0
  %3299 = vmatpush1.msra.mxu0 0.0
  %3300 = vmatprep.subr.mxu0 0.0
  %3301 = vmatpush1.msra.mxu0 0.0
  %3302 = vmatprep.subr.mxu0 0.0
  %3303 = vmatpush1.msra.mxu0 0.0
  %3304 = vmatprep.subr.mxu0 0.0
  %3305 = vmatpush1.msra.mxu0 0.0
  %3306 = vmatprep.subr.mxu0 0.0
  %3307 = vmatpush1.msra.mxu0 0.0
  %3308 = vmatprep.subr.mxu0 0.0
  %3309 = vmatpush1.msra.mxu0 0.0
  %3310 = vmatprep.subr.mxu0 0.0
  %3311 = vmatpush1.msra.mxu0 0.0
  %3312 = vmatprep.subr.mxu0 0.0
  %3313 = vmatpush1.msra.mxu0 0.0
  %3314 = vmatprep.subr.mxu0 0.0
  %3315 = vmatpush1.msra.mxu0 %v2393
  %3316 = vmatprep.subr.mxu0 0.0
  %3317 = vmatpush2.msra.mxu0 0.0
  %3318 = vmatprep.subr.mxu0 0.0
  %3319 = vmatpush2.msra.mxu0 0.0
  %3320 = vmatprep.subr.mxu0 0.0
  %3321 = vmatpush2.msra.mxu0 0.0
  %3322 = vmatprep.subr.mxu0 0.0
  %3323 = vmatpush2.msra.mxu0 0.0
  %3324 = vmatprep.subr.mxu0 0.0
  %3325 = vmatpush2.msra.mxu0 0.0
  %3326 = vmatprep.subr.mxu0 0.0
  %3327 = vmatpush2.msra.mxu0 0.0
  %3328 = vmatprep.subr.mxu0 0.0
  %3329 = vmatpush2.msra.mxu0 0.0
  %3330 = vmatprep.subr.mxu0 0.0
  %3331 = vmatpush2.msra.mxu0 0.0
  %3332 = vmatprep.subr.mxu0 0.0
  %3333 = vmatpush2.msra.mxu0 0.0
  %3334 = vmatprep.subr.mxu0 0.0
  %3335 = vmatpush2.msra.mxu0 0.0
  %3336 = vmatprep.subr.mxu0 0.0
  %3337 = vmatpush2.msra.mxu0 0.0
  %3338 = vmatprep.subr.mxu0 0.0
  %3339 = vmatpush2.msra.mxu0 0.0
  %3340 = vmatprep.subr.mxu0 0.0
  %3341 = vmatpush2.msra.mxu0 0.0
  %3342 = vmatprep.subr.mxu0 0.0
  %3343 = vmatpush2.msra.mxu0 0.0
  %3344 = vmatprep.subr.mxu0 0.0
  %3345 = vmatpush2.msra.mxu0 0.0
  %3346 = vmatprep.subr.mxu0 0.0
  %3347 = vmatpush2.msra.mxu0 0.0
  %3348 = vmatprep.mubr.f32.mxu0 0.0
  %3349 = vmatmul.mubr.f32.gmra.mxu0 %v3276
  %v3350 = vpop.f32.mrf.mxu0
  %v3351 = vadd.f32 0.0, %v3350
  %v3352 = vpop.f32.mrf.mxu0
  %3353 = vmatprep.mubr.f32.mxu0 0.0
  %3354 = vmatmul.mubr.f32.gmra.mxu0 %v3279
  %v3355 = vpop.f32.mrf.mxu0
  %v3356 = vadd.f32 0.0, %v3355
  %v3357 = vpop.f32.mrf.mxu0
  %3358 = vmatprep.mubr.f32.mxu0 0.0
  %3359 = vmatmul.mubr.f32.gmra.mxu0 %v3282
  %v3360 = vpop.f32.mrf.mxu0
  %v3361 = vadd.f32 0.0, %v3360
  %v3362 = vpop.f32.mrf.mxu0
  %3363 = vdwg.mxu0
  %v3364 = vadd.f32 %v3026, %v3351
  %v3365 = vadd.f32 %v3031, %v3356
  %v3366 = vadd.f32 %v3036, %v3361
  %3367 = vrot.lane.b32.xlu0 %v2275, 104
  %v3368 = vpop.permute.xlu0 %3367
  %3369 = vrot.lane.b32.xlu0 %v2280, 104
  %v3370 = vpop.permute.xlu0 %3369
  %3371 = vrot.lane.b32.xlu0 %v2285, 104
  %v3372 = vpop.permute.xlu0 %3371
  %3373 = vrot.lane.b32.xlu0 %v2275, 72
  %v3374 = vpop.permute.xlu0 %3373
  %3375 = vrot.lane.b32.xlu0 %v2280, 72
  %v3376 = vpop.permute.xlu0 %3375
  %3377 = vrot.lane.b32.xlu0 %v2285, 72
  %v3378 = vpop.permute.xlu0 %3377
  %v3379 = vsel %vm539, %v3368, 0
  %v3381 = vsel %vm539, %v3370, 0
  %v3383 = vsel %vm539, %v3372, 0
  %v3385 = vsel %vm539, %v3374, 0
  %v3387 = vsel %vm539, %v3376, 0
  %v3389 = vsel %vm539, %v3378, 0
  %3391 = vmatprep.subr.mxu0 0.0
  %3392 = vmatpush1.xpose.msra.mxu0 0.0
  %3393 = vmatprep.subr.mxu0 0.0
  %3394 = vmatpush1.xpose.msra.mxu0 0.0
  %3395 = vmatprep.subr.mxu0 0.0
  %3396 = vmatpush1.xpose.msra.mxu0 0.0
  %3397 = vmatprep.subr.mxu0 0.0
  %3398 = vmatpush1.xpose.msra.mxu0 0.0
  %3399 = vmatprep.subr.mxu0 0.0
  %3400 = vmatpush1.xpose.msra.mxu0 0.0
  %3401 = vmatprep.subr.mxu0 0.0
  %3402 = vmatpush1.xpose.msra.mxu0 0.0
  %3403 = vmatprep.subr.mxu0 0.0
  %3404 = vmatpush1.xpose.msra.mxu0 0.0
  %3405 = vmatprep.subr.mxu0 0.0
  %3406 = vmatpush1.xpose.msra.mxu0 0.0
  %3407 = vmatprep.subr.mxu0 0.0
  %3408 = vmatpush1.xpose.msra.mxu0 0.0
  %3409 = vmatprep.subr.mxu0 0.0
  %3410 = vmatpush1.xpose.msra.mxu0 0.0
  %3411 = vmatprep.subr.mxu0 0.0
  %3412 = vmatpush1.xpose.msra.mxu0 0.0
  %3413 = vmatprep.subr.mxu0 0.0
  %3414 = vmatpush1.xpose.msra.mxu0 0.0
  %3415 = vmatprep.subr.mxu0 0.0
  %3416 = vmatpush1.xpose.msra.mxu0 0.0
  %3417 = vmatprep.subr.mxu0 0.0
  %3418 = vmatpush1.xpose.msra.mxu0 %v3389
  %3419 = vmatprep.subr.mxu0 0.0
  %3420 = vmatpush1.xpose.msra.mxu0 %v3387
  %3421 = vmatprep.subr.mxu0 0.0
  %3422 = vmatpush1.xpose.msra.mxu0 %v3385
  %3423 = vmatprep.subr.mxu0 0.0
  %3424 = vmatpush2.xpose.msra.mxu0 0.0
  %3425 = vmatprep.subr.mxu0 0.0
  %3426 = vmatpush2.xpose.msra.mxu0 0.0
  %3427 = vmatprep.subr.mxu0 0.0
  %3428 = vmatpush2.xpose.msra.mxu0 0.0
  %3429 = vmatprep.subr.mxu0 0.0
  %3430 = vmatpush2.xpose.msra.mxu0 0.0
  %3431 = vmatprep.subr.mxu0 0.0
  %3432 = vmatpush2.xpose.msra.mxu0 0.0
  %3433 = vmatprep.subr.mxu0 0.0
  %3434 = vmatpush2.xpose.msra.mxu0 0.0
  %3435 = vmatprep.subr.mxu0 0.0
  %3436 = vmatpush2.xpose.msra.mxu0 0.0
  %3437 = vmatprep.subr.mxu0 0.0
  %3438 = vmatpush2.xpose.msra.mxu0 0.0
  %3439 = vmatprep.subr.mxu0 0.0
  %3440 = vmatpush2.xpose.msra.mxu0 0.0
  %3441 = vmatprep.subr.mxu0 0.0
  %3442 = vmatpush2.xpose.msra.mxu0 0.0
  %3443 = vmatprep.subr.mxu0 0.0
  %3444 = vmatpush2.xpose.msra.mxu0 0.0
  %3445 = vmatprep.subr.mxu0 0.0
  %3446 = vmatpush2.xpose.msra.mxu0 0.0
  %3447 = vmatprep.subr.mxu0 0.0
  %3448 = vmatpush2.xpose.msra.mxu0 0.0
  %3449 = vmatprep.subr.mxu0 0.0
  %3450 = vmatpush2.xpose.msra.mxu0 0.0
  %3451 = vmatprep.subr.mxu0 0.0
  %3452 = vmatpush2.xpose.msra.mxu0 0.0
  %3453 = vmatprep.subr.mxu0 0.0
  %3454 = vmatpush2.xpose.msra.mxu0 0.0
  %3455 = vmatprep.mubr.f32.mxu0 0.0
  %3456 = vmatmul.mubr.f32.gmra.mxu0 %v3379
  %v3457 = vpop.f32.mrf.mxu0
  %v3458 = vadd.f32 %v78, %v3457
  %v3459 = vpop.f32.mrf.mxu0
  %3460 = vmatprep.mubr.f32.mxu0 0.0
  %3461 = vmatmul.mubr.f32.gmra.mxu0 %v3381
  %v3462 = vpop.f32.mrf.mxu0
  %v3463 = vadd.f32 %v79, %v3462
  %v3464 = vpop.f32.mrf.mxu0
  %3465 = vmatprep.mubr.f32.mxu0 0.0
  %3466 = vmatmul.mubr.f32.gmra.mxu0 %v3383
  %v3467 = vpop.f32.mrf.mxu0
  %v3468 = vadd.f32 %v80, %v3467
  %v3469 = vpop.f32.mrf.mxu0
  %3470 = vdwg.mxu0
  %v3471 = vsel %vm632, %v3458, -inf
  %3472 = vmax.xlane.f32.xlu0 %v3471
  %v3473 = vpop.xlane.xlu0 %3472
  %v3474 = vsel %vm632, %v3463, -inf
  %3475 = vmax.xlane.f32.xlu0 %v3474
  %v3476 = vpop.xlane.xlu0 %3475
  %v3477 = vsel %vm639, %v3468, -inf
  %3478 = vmax.xlane.f32.xlu0 %v3477
  %v3479 = vpop.xlane.xlu0 %3478
  %v3480 = vsub.f32 %v3458, %v3473
  %v3481 = vsub.f32 %v3463, %v3476
  %v3482 = vsub.f32 %v3468, %v3479
  %v3483 = vmul.f32 %v3480, 1.442695
  %v3484 = vpow.pop %v3483
  %v3485 = vmul.f32 %v3481, 1.442695
  %v3486 = vpow.pop %v3485
  %v3487 = vmul.f32 %v3482, 1.442695
  %v3488 = vpow.pop %v3487
  %v3489 = vsel %vm632, %v3484, 0.0
  %3490 = vadd.xlane.f32.xlu0 %v3489
  %v3491 = vpop.xlane.xlu0 %3490
  %v3492 = vsel %vm632, %v3486, 0.0
  %3493 = vadd.xlane.f32.xlu0 %v3492
  %v3494 = vpop.xlane.xlu0 %3493
  %v3495 = vsel %vm639, %v3488, 0.0
  %3496 = vadd.xlane.f32.xlu0 %v3495
  %v3497 = vpop.xlane.xlu0 %3496
  %v3498 = vrcp.pop %v3491
  %v3499 = vrcp.pop %v3494
  %v3500 = vrcp.pop %v3497
  %v3501 = vmul.f32 %v3484, %v3498
  %v3502 = vmul.f32 %v3486, %v3499
  %v3503 = vmul.f32 %v3488, %v3500
  %3504 = vrot.lane.b32.xlu0 %v2377, 104
  %v3505 = vpop.permute.xlu0 %3504
  %3506 = vrot.lane.b32.xlu0 %v2382, 104
  %v3507 = vpop.permute.xlu0 %3506
  %3508 = vrot.lane.b32.xlu0 %v2387, 104
  %v3509 = vpop.permute.xlu0 %3508
  %v3513 = vsel %vm632, %v3501, 0
  %v3516 = vsel %vm632, %v3502, 0
  %v3519 = vsel %vm632, %v3503, 0
  %v3521 = vsel %vm676, %v3509, 0
  %3523 = vmatprep.subr.mxu0 0.0
  %3524 = vmatpush1.msra.mxu0 0.0
  %3525 = vmatprep.subr.mxu0 0.0
  %3526 = vmatpush1.msra.mxu0 0.0
  %3527 = vmatprep.subr.mxu0 0.0
  %3528 = vmatpush1.msra.mxu0 0.0
  %3529 = vmatprep.subr.mxu0 0.0
  %3530 = vmatpush1.msra.mxu0 0.0
  %3531 = vmatprep.subr.mxu0 0.0
  %3532 = vmatpush1.msra.mxu0 0.0
  %3533 = vmatprep.subr.mxu0 0.0
  %3534 = vmatpush1.msra.mxu0 0.0
  %3535 = vmatprep.subr.mxu0 0.0
  %3536 = vmatpush1.msra.mxu0 0.0
  %3537 = vmatprep.subr.mxu0 0.0
  %3538 = vmatpush1.msra.mxu0 0.0
  %3539 = vmatprep.subr.mxu0 0.0
  %3540 = vmatpush1.msra.mxu0 0.0
  %3541 = vmatprep.subr.mxu0 0.0
  %3542 = vmatpush1.msra.mxu0 0.0
  %3543 = vmatprep.subr.mxu0 0.0
  %3544 = vmatpush1.msra.mxu0 0.0
  %3545 = vmatprep.subr.mxu0 0.0
  %3546 = vmatpush1.msra.mxu0 0.0
  %3547 = vmatprep.subr.mxu0 0.0
  %3548 = vmatpush1.msra.mxu0 0.0
  %3549 = vmatprep.subr.mxu0 0.0
  %3550 = vmatpush1.msra.mxu0 %v3521
  %3551 = vmatprep.subr.mxu0 0.0
  %3552 = vmatpush1.msra.mxu0 %v3507
  %3553 = vmatprep.subr.mxu0 0.0
  %3554 = vmatpush1.msra.mxu0 %v3505
  %3555 = vmatprep.subr.mxu0 0.0
  %3556 = vmatpush2.msra.mxu0 0.0
  %3557 = vmatprep.subr.mxu0 0.0
  %3558 = vmatpush2.msra.mxu0 0.0
  %3559 = vmatprep.subr.mxu0 0.0
  %3560 = vmatpush2.msra.mxu0 0.0
  %3561 = vmatprep.subr.mxu0 0.0
  %3562 = vmatpush2.msra.mxu0 0.0
  %3563 = vmatprep.subr.mxu0 0.0
  %3564 = vmatpush2.msra.mxu0 0.0
  %3565 = vmatprep.subr.mxu0 0.0
  %3566 = vmatpush2.msra.mxu0 0.0
  %3567 = vmatprep.subr.mxu0 0.0
  %3568 = vmatpush2.msra.mxu0 0.0
  %3569 = vmatprep.subr.mxu0 0.0
  %3570 = vmatpush2.msra.mxu0 0.0
  %3571 = vmatprep.subr.mxu0 0.0
  %3572 = vmatpush2.msra.mxu0 0.0
  %3573 = vmatprep.subr.mxu0 0.0
  %3574 = vmatpush2.msra.mxu0 0.0
  %3575 = vmatprep.subr.mxu0 0.0
  %3576 = vmatpush2.msra.mxu0 0.0
  %3577 = vmatprep.subr.mxu0 0.0
  %3578 = vmatpush2.msra.mxu0 0.0
  %3579 = vmatprep.subr.mxu0 0.0
  %3580 = vmatpush2.msra.mxu0 0.0
  %3581 = vmatprep.subr.mxu0 0.0
  %3582 = vmatpush2.msra.mxu0 0.0
  %3583 = vmatprep.subr.mxu0 0.0
  %3584 = vmatpush2.msra.mxu0 0.0
  %3585 = vmatprep.subr.mxu0 0.0
  %3586 = vmatpush2.msra.mxu0 0.0
  %3587 = vmatprep.mubr.f32.mxu0 0.0
  %3588 = vmatmul.mubr.f32.gmra.mxu0 %v3513
  %v3589 = vpop.f32.mrf.mxu0
  %v3590 = vadd.f32 0.0, %v3589
  %v3591 = vpop.f32.mrf.mxu0
  %3592 = vmatprep.mubr.f32.mxu0 0.0
  %3593 = vmatmul.mubr.f32.gmra.mxu0 %v3516
  %v3594 = vpop.f32.mrf.mxu0
  %v3595 = vadd.f32 0.0, %v3594
  %v3596 = vpop.f32.mrf.mxu0
  %3597 = vmatprep.mubr.f32.mxu0 0.0
  %3598 = vmatmul.mubr.f32.gmra.mxu0 %v3519
  %v3599 = vpop.f32.mrf.mxu0
  %v3600 = vadd.f32 0.0, %v3599
  %v3601 = vpop.f32.mrf.mxu0
  %3602 = vdwg.mxu0
  %v3604 = vsel %vm539, %v3590, 0
  %v3607 = vsel %vm539, %v3595, 0
  %v3610 = vsel %vm539, %v3600, 0
  %3612 = vmatprep.subr.mxu0 0.0
  %3613 = vmatpush1.msra.mxu0 0.0
  %3614 = vmatprep.subr.mxu0 0.0
  %3615 = vmatpush1.msra.mxu0 0.0
  %3616 = vmatprep.subr.mxu0 0.0
  %3617 = vmatpush1.msra.mxu0 0.0
  %3618 = vmatprep.subr.mxu0 0.0
  %3619 = vmatpush1.msra.mxu0 0.0
  %3620 = vmatprep.subr.mxu0 0.0
  %3621 = vmatpush1.msra.mxu0 0.0
  %3622 = vmatprep.subr.mxu0 0.0
  %3623 = vmatpush1.msra.mxu0 0.0
  %3624 = vmatprep.subr.mxu0 0.0
  %3625 = vmatpush1.msra.mxu0 0.0
  %3626 = vmatprep.subr.mxu0 0.0
  %3627 = vmatpush1.msra.mxu0 0.0
  %3628 = vmatprep.subr.mxu0 0.0
  %3629 = vmatpush1.msra.mxu0 0.0
  %3630 = vmatprep.subr.mxu0 0.0
  %3631 = vmatpush1.msra.mxu0 0.0
  %3632 = vmatprep.subr.mxu0 0.0
  %3633 = vmatpush1.msra.mxu0 0.0
  %3634 = vmatprep.subr.mxu0 0.0
  %3635 = vmatpush1.msra.mxu0 0.0
  %3636 = vmatprep.subr.mxu0 0.0
  %3637 = vmatpush1.msra.mxu0 0.0
  %3638 = vmatprep.subr.mxu0 0.0
  %3639 = vmatpush1.msra.mxu0 0.0
  %3640 = vmatprep.subr.mxu0 0.0
  %3641 = vmatpush1.msra.mxu0 0.0
  %3642 = vmatprep.subr.mxu0 0.0
  %3643 = vmatpush1.msra.mxu0 %v2394
  %3644 = vmatprep.subr.mxu0 0.0
  %3645 = vmatpush2.msra.mxu0 0.0
  %3646 = vmatprep.subr.mxu0 0.0
  %3647 = vmatpush2.msra.mxu0 0.0
  %3648 = vmatprep.subr.mxu0 0.0
  %3649 = vmatpush2.msra.mxu0 0.0
  %3650 = vmatprep.subr.mxu0 0.0
  %3651 = vmatpush2.msra.mxu0 0.0
  %3652 = vmatprep.subr.mxu0 0.0
  %3653 = vmatpush2.msra.mxu0 0.0
  %3654 = vmatprep.subr.mxu0 0.0
  %3655 = vmatpush2.msra.mxu0 0.0
  %3656 = vmatprep.subr.mxu0 0.0
  %3657 = vmatpush2.msra.mxu0 0.0
  %3658 = vmatprep.subr.mxu0 0.0
  %3659 = vmatpush2.msra.mxu0 0.0
  %3660 = vmatprep.subr.mxu0 0.0
  %3661 = vmatpush2.msra.mxu0 0.0
  %3662 = vmatprep.subr.mxu0 0.0
  %3663 = vmatpush2.msra.mxu0 0.0
  %3664 = vmatprep.subr.mxu0 0.0
  %3665 = vmatpush2.msra.mxu0 0.0
  %3666 = vmatprep.subr.mxu0 0.0
  %3667 = vmatpush2.msra.mxu0 0.0
  %3668 = vmatprep.subr.mxu0 0.0
  %3669 = vmatpush2.msra.mxu0 0.0
  %3670 = vmatprep.subr.mxu0 0.0
  %3671 = vmatpush2.msra.mxu0 0.0
  %3672 = vmatprep.subr.mxu0 0.0
  %3673 = vmatpush2.msra.mxu0 0.0
  %3674 = vmatprep.subr.mxu0 0.0
  %3675 = vmatpush2.msra.mxu0 0.0
  %3676 = vmatprep.mubr.f32.mxu0 0.0
  %3677 = vmatmul.mubr.f32.gmra.mxu0 %v3604
  %v3678 = vpop.f32.mrf.mxu0
  %v3679 = vadd.f32 0.0, %v3678
  %v3680 = vpop.f32.mrf.mxu0
  %3681 = vmatprep.mubr.f32.mxu0 0.0
  %3682 = vmatmul.mubr.f32.gmra.mxu0 %v3607
  %v3683 = vpop.f32.mrf.mxu0
  %v3684 = vadd.f32 0.0, %v3683
  %v3685 = vpop.f32.mrf.mxu0
  %3686 = vmatprep.mubr.f32.mxu0 0.0
  %3687 = vmatmul.mubr.f32.gmra.mxu0 %v3610
  %v3688 = vpop.f32.mrf.mxu0
  %v3689 = vadd.f32 0.0, %v3688
  %v3690 = vpop.f32.mrf.mxu0
  %3691 = vdwg.mxu0
  %v3692 = vadd.f32 %v3364, %v3679
  %v3693 = vadd.f32 %v3365, %v3684
  %v3694 = vadd.f32 %v3366, %v3689
  %v3696 = vlaneseq
  %v3697 = vshrl.u32 %v3696, 7
  %v3698 = vsub.s32 0, %v3697
  %v3699 = vrot.slane %v2396, %v3698
  %v3701 = vadd.f32 %v3692, %v3699
  %v3702 = vadd.f32 %v3693, %v3699
  %v3703 = vadd.f32 %v3694, %v3699
  %v3704 = vadd.f32 %v2119, %v3701
  %v3705 = vadd.f32 %v2120, %v3702
  %v3706 = vadd.f32 %v2121, %v3703
  %s3707 = scalar_lea.vmem %s6, 13
  %v3708 = vld [vmem:[%s3707] sm:$0x1]
  %s3709 = scalar_lea.vmem %s6, 14
  %v3710 = vld [vmem:[%s3709] sm:$0x1]
  %v3711 = vsel %vm100, %v3704, 0.0
  %3712 = vadd.xlane.f32.xlu0 %v3711
  %v3713 = vpop.xlane.xlu0 %3712
  %v3714 = vsel %vm100, %v3705, 0.0
  %3715 = vadd.xlane.f32.xlu0 %v3714
  %v3716 = vpop.xlane.xlu0 %3715
  %v3717 = vsel %vm265, %v3706, 0.0
  %3718 = vadd.xlane.f32.xlu0 %v3717
  %v3719 = vpop.xlane.xlu0 %3718
  %v3720 = vmul.f32 %v3713, %v269
  %v3721 = vmul.f32 %v3716, %v269
  %v3722 = vmul.f32 %v3719, %v269
  %v3723 = vsub.f32 %v3704, %v3720
  %v3724 = vsub.f32 %v3705, %v3721
  %v3725 = vsub.f32 %v3706, %v3722
  %v3726 = vmul.f32 %v3723, %v3723
  %v3727 = vmul.f32 %v3724, %v3724
  %v3728 = vmul.f32 %v3725, %v3725
  %v3729 = vsel %vm100, %v3726, 0.0
  %3730 = vadd.xlane.f32.xlu0 %v3729
  %v3731 = vpop.xlane.xlu0 %3730
  %v3732 = vsel %vm100, %v3727, 0.0
  %3733 = vadd.xlane.f32.xlu0 %v3732
  %v3734 = vpop.xlane.xlu0 %3733
  %v3735 = vsel %vm265, %v3728, 0.0
  %3736 = vadd.xlane.f32.xlu0 %v3735
  %v3737 = vpop.xlane.xlu0 %3736
  %v3738 = vmul.f32 %v3731, %v269
  %v3739 = vmul.f32 %v3734, %v269
  %v3740 = vmul.f32 %v3737, %v269
  %v3741 = vadd.f32 %v3738, 1e-05
  %v3742 = vadd.f32 %v3739, 1e-05
  %v3743 = vadd.f32 %v3740, 1e-05
  %v3744 = vrsqrt.pop %v3741
  %v3745 = vrsqrt.pop %v3742
  %v3746 = vrsqrt.pop %v3743
  %v3747 = vmul.f32 %v3723, %v3744
  %v3748 = vmul.f32 %v3724, %v3745
  %v3749 = vmul.f32 %v3725, %v3746
  %v3751 = vlaneseq
  %v3752 = vshrl.u32 %v3751, 7
  %v3753 = vsub.s32 0, %v3752
  %v3754 = vrot.slane %v3708, %v3753
  %v3756 = vmul.f32 %v3747, %v3754
  %v3757 = vmul.f32 %v3748, %v3754
  %v3758 = vmul.f32 %v3749, %v3754
  %v3760 = vlaneseq
  %v3761 = vshrl.u32 %v3760, 7
  %v3762 = vsub.s32 0, %v3761
  %v3763 = vrot.slane %v3710, %v3762
  %v3765 = vadd.f32 %v3756, %v3763
  %v3766 = vadd.f32 %v3757, %v3763
  %v3767 = vadd.f32 %v3758, %v3763
  %s3768 = scalar_lea.vmem %s7, 96
  %v3769 = vld [vmem:[%s3768] sm:$0xff]
  %v3770 = vld [vmem:[%s3768 + $0x8] sm:$0xff]
  %v3771 = vld [vmem:[%s3768 + $0x10] sm:$0xff]
  %v3772 = vld [vmem:[%s3768 + $0x18] sm:$0xff]
  %s3773 = scalar_lea.vmem %s8, 3
  %v3774 = vld [vmem:[%s3773] sm:$0x1]
  %v3776 = vlaneseq
  %v3777 = vshrl.u32 %v3776, 7
  %v3778 = vsub.s32 0, %v3777
  %v3779 = vrot.slane %v3774, %v3778
  %v3782 = vsel %vm100, %v3765, 0
  %v3785 = vsel %vm100, %v3766, 0
  %v3788 = vsel %vm100, %v3767, 0
  %3790 = vmatprep.subr.mxu0 0.0
  %3791 = vmatpush1.msra.mxu0 0.0
  %3792 = vmatprep.subr.mxu0 0.0
  %3793 = vmatpush1.msra.mxu0 0.0
  %3794 = vmatprep.subr.mxu0 0.0
  %3795 = vmatpush1.msra.mxu0 0.0
  %3796 = vmatprep.subr.mxu0 0.0
  %3797 = vmatpush1.msra.mxu0 0.0
  %3798 = vmatprep.subr.mxu0 0.0
  %3799 = vmatpush1.msra.mxu0 0.0
  %3800 = vmatprep.subr.mxu0 0.0
  %3801 = vmatpush1.msra.mxu0 0.0
  %3802 = vmatprep.subr.mxu0 0.0
  %3803 = vmatpush1.msra.mxu0 0.0
  %3804 = vmatprep.subr.mxu0 0.0
  %3805 = vmatpush1.msra.mxu0 0.0
  %3806 = vmatprep.subr.mxu0 0.0
  %3807 = vmatpush1.msra.mxu0 0.0
  %3808 = vmatprep.subr.mxu0 0.0
  %3809 = vmatpush1.msra.mxu0 0.0
  %3810 = vmatprep.subr.mxu0 0.0
  %3811 = vmatpush1.msra.mxu0 0.0
  %3812 = vmatprep.subr.mxu0 0.0
  %3813 = vmatpush1.msra.mxu0 0.0
  %3814 = vmatprep.subr.mxu0 0.0
  %3815 = vmatpush1.msra.mxu0 %v3772
  %3816 = vmatprep.subr.mxu0 0.0
  %3817 = vmatpush1.msra.mxu0 %v3771
  %3818 = vmatprep.subr.mxu0 0.0
  %3819 = vmatpush1.msra.mxu0 %v3770
  %3820 = vmatprep.subr.mxu0 0.0
  %3821 = vmatpush1.msra.mxu0 %v3769
  %3822 = vmatprep.subr.mxu0 0.0
  %3823 = vmatpush2.msra.mxu0 0.0
  %3824 = vmatprep.subr.mxu0 0.0
  %3825 = vmatpush2.msra.mxu0 0.0
  %3826 = vmatprep.subr.mxu0 0.0
  %3827 = vmatpush2.msra.mxu0 0.0
  %3828 = vmatprep.subr.mxu0 0.0
  %3829 = vmatpush2.msra.mxu0 0.0
  %3830 = vmatprep.subr.mxu0 0.0
  %3831 = vmatpush2.msra.mxu0 0.0
  %3832 = vmatprep.subr.mxu0 0.0
  %3833 = vmatpush2.msra.mxu0 0.0
  %3834 = vmatprep.subr.mxu0 0.0
  %3835 = vmatpush2.msra.mxu0 0.0
  %3836 = vmatprep.subr.mxu0 0.0
  %3837 = vmatpush2.msra.mxu0 0.0
  %3838 = vmatprep.subr.mxu0 0.0
  %3839 = vmatpush2.msra.mxu0 0.0
  %3840 = vmatprep.subr.mxu0 0.0
  %3841 = vmatpush2.msra.mxu0 0.0
  %3842 = vmatprep.subr.mxu0 0.0
  %3843 = vmatpush2.msra.mxu0 0.0
  %3844 = vmatprep.subr.mxu0 0.0
  %3845 = vmatpush2.msra.mxu0 0.0
  %3846 = vmatprep.subr.mxu0 0.0
  %3847 = vmatpush2.msra.mxu0 0.0
  %3848 = vmatprep.subr.mxu0 0.0
  %3849 = vmatpush2.msra.mxu0 0.0
  %3850 = vmatprep.subr.mxu0 0.0
  %3851 = vmatpush2.msra.mxu0 0.0
  %3852 = vmatprep.subr.mxu0 0.0
  %3853 = vmatpush2.msra.mxu0 0.0
  %3854 = vmatprep.mubr.f32.mxu0 0.0
  %3855 = vmatmul.mubr.f32.gmra.mxu0 %v3782
  %v3856 = vpop.f32.mrf.mxu0
  %v3857 = vadd.f32 %v3779, %v3856
  %v3858 = vpop.f32.mrf.mxu0
  %3859 = vmatprep.mubr.f32.mxu0 0.0
  %3860 = vmatmul.mubr.f32.gmra.mxu0 %v3785
  %v3861 = vpop.f32.mrf.mxu0
  %v3862 = vadd.f32 %v3779, %v3861
  %v3863 = vpop.f32.mrf.mxu0
  %3864 = vmatprep.mubr.f32.mxu0 0.0
  %3865 = vmatmul.mubr.f32.gmra.mxu0 %v3788
  %v3866 = vpop.f32.mrf.mxu0
  %v3867 = vadd.f32 %v3779, %v3866
  %v3868 = vpop.f32.mrf.mxu0
  %3869 = vdwg.mxu0
  %v3870 = vmax.f32 %v3857, 0.0
  %v3871 = vmax.f32 %v3862, 0.0
  %v3872 = vmax.f32 %v3867, 0.0
  %s3873 = scalar_lea.vmem %s9, 64
  %v3874 = vld [vmem:[%s3873] sm:$0xff]
  %v3875 = vld [vmem:[%s3873 + $0x8] sm:$0xff]
  %v3876 = vld [vmem:[%s3873 + $0x10] sm:$0xff]
  %v3877 = vld [vmem:[%s3873 + $0x18] sm:$0xff]
  %v3878 = vld [vmem:[%s3873 + $0x20] sm:$0xff]
  %v3879 = vld [vmem:[%s3873 + $0x28] sm:$0xff]
  %v3880 = vld [vmem:[%s3873 + $0x30] sm:$0xff]
  %v3881 = vld [vmem:[%s3873 + $0x38] sm:$0xff]
  %v3883 = vsel %vm2018, %v3870, 0
  %v3886 = vsel %vm2018, %v3871, 0
  %v3889 = vsel %vm2018, %v3872, 0
  %3891 = vmatprep.subr.mxu0 0.0
  %3892 = vmatpush1.msra.mxu0 0.0
  %3893 = vmatprep.subr.mxu0 0.0
  %3894 = vmatpush1.msra.mxu0 0.0
  %3895 = vmatprep.subr.mxu0 0.0
  %3896 = vmatpush1.msra.mxu0 0.0
  %3897 = vmatprep.subr.mxu0 0.0
  %3898 = vmatpush1.msra.mxu0 0.0
  %3899 = vmatprep.subr.mxu0 0.0
  %3900 = vmatpush1.msra.mxu0 0.0
  %3901 = vmatprep.subr.mxu0 0.0
  %3902 = vmatpush1.msra.mxu0 0.0
  %3903 = vmatprep.subr.mxu0 0.0
  %3904 = vmatpush1.msra.mxu0 0.0
  %3905 = vmatprep.subr.mxu0 0.0
  %3906 = vmatpush1.msra.mxu0 0.0
  %3907 = vmatprep.subr.mxu0 0.0
  %3908 = vmatpush1.msra.mxu0 %v3881
  %3909 = vmatprep.subr.mxu0 0.0
  %3910 = vmatpush1.msra.mxu0 %v3880
  %3911 = vmatprep.subr.mxu0 0.0
  %3912 = vmatpush1.msra.mxu0 %v3879
  %3913 = vmatprep.subr.mxu0 0.0
  %3914 = vmatpush1.msra.mxu0 %v3878
  %3915 = vmatprep.subr.mxu0 0.0
  %3916 = vmatpush1.msra.mxu0 %v3877
  %3917 = vmatprep.subr.mxu0 0.0
  %3918 = vmatpush1.msra.mxu0 %v3876
  %3919 = vmatprep.subr.mxu0 0.0
  %3920 = vmatpush1.msra.mxu0 %v3875
  %3921 = vmatprep.subr.mxu0 0.0
  %3922 = vmatpush1.msra.mxu0 %v3874
  %3923 = vmatprep.subr.mxu0 0.0
  %3924 = vmatpush2.msra.mxu0 0.0
  %3925 = vmatprep.subr.mxu0 0.0
  %3926 = vmatpush2.msra.mxu0 0.0
  %3927 = vmatprep.subr.mxu0 0.0
  %3928 = vmatpush2.msra.mxu0 0.0
  %3929 = vmatprep.subr.mxu0 0.0
  %3930 = vmatpush2.msra.mxu0 0.0
  %3931 = vmatprep.subr.mxu0 0.0
  %3932 = vmatpush2.msra.mxu0 0.0
  %3933 = vmatprep.subr.mxu0 0.0
  %3934 = vmatpush2.msra.mxu0 0.0
  %3935 = vmatprep.subr.mxu0 0.0
  %3936 = vmatpush2.msra.mxu0 0.0
  %3937 = vmatprep.subr.mxu0 0.0
  %3938 = vmatpush2.msra.mxu0 0.0
  %3939 = vmatprep.subr.mxu0 0.0
  %3940 = vmatpush2.msra.mxu0 0.0
  %3941 = vmatprep.subr.mxu0 0.0
  %3942 = vmatpush2.msra.mxu0 0.0
  %3943 = vmatprep.subr.mxu0 0.0
  %3944 = vmatpush2.msra.mxu0 0.0
  %3945 = vmatprep.subr.mxu0 0.0
  %3946 = vmatpush2.msra.mxu0 0.0
  %3947 = vmatprep.subr.mxu0 0.0
  %3948 = vmatpush2.msra.mxu0 0.0
  %3949 = vmatprep.subr.mxu0 0.0
  %3950 = vmatpush2.msra.mxu0 0.0
  %3951 = vmatprep.subr.mxu0 0.0
  %3952 = vmatpush2.msra.mxu0 0.0
  %3953 = vmatprep.subr.mxu0 0.0
  %3954 = vmatpush2.msra.mxu0 0.0
  %3955 = vmatprep.mubr.f32.mxu0 0.0
  %3956 = vmatmul.mubr.f32.gmra.mxu0 %v3883
  %v3957 = vpop.f32.mrf.mxu0
  %v3958 = vadd.f32 0.0, %v3957
  %v3959 = vpop.f32.mrf.mxu0
  %3960 = vmatprep.mubr.f32.mxu0 0.0
  %3961 = vmatmul.mubr.f32.gmra.mxu0 %v3886
  %v3962 = vpop.f32.mrf.mxu0
  %v3963 = vadd.f32 0.0, %v3962
  %v3964 = vpop.f32.mrf.mxu0
  %3965 = vmatprep.mubr.f32.mxu0 0.0
  %3966 = vmatmul.mubr.f32.gmra.mxu0 %v3889
  %v3967 = vpop.f32.mrf.mxu0
  %v3968 = vadd.f32 0.0, %v3967
  %v3969 = vpop.f32.mrf.mxu0
  %3970 = vdwg.mxu0
  %v3971 = vadd.f32 %v3704, %v3958
  %v3972 = vadd.f32 %v3705, %v3963
  %v3973 = vadd.f32 %v3706, %v3968
  %s3974 = scalar_lea.vmem %s6, 15
  %v3975 = vld [vmem:[%s3974] sm:$0x1]
  %v3977 = vlaneseq
  %v3978 = vshrl.u32 %v3977, 7
  %v3979 = vsub.s32 0, %v3978
  %v3980 = vrot.slane %v3975, %v3979
  %v3982 = vadd.f32 %v3971, %v3980
  %v3983 = vadd.f32 %v3972, %v3980
  %v3984 = vadd.f32 %v3973, %v3980
  %s3985 = scalar_lea.vmem %s6, 16
  %v3986 = vld [vmem:[%s3985] sm:$0x1]
  %s3987 = scalar_lea.vmem %s6, 17
  %v3988 = vld [vmem:[%s3987] sm:$0x1]
  %v3989 = vsel %vm100, %v3982, 0.0
  %3990 = vadd.xlane.f32.xlu0 %v3989
  %v3991 = vpop.xlane.xlu0 %3990
  %v3992 = vsel %vm100, %v3983, 0.0
  %3993 = vadd.xlane.f32.xlu0 %v3992
  %v3994 = vpop.xlane.xlu0 %3993
  %v3995 = vsel %vm265, %v3984, 0.0
  %3996 = vadd.xlane.f32.xlu0 %v3995
  %v3997 = vpop.xlane.xlu0 %3996
  %v3998 = vmul.f32 %v3991, %v269
  %v3999 = vmul.f32 %v3994, %v269
  %v4000 = vmul.f32 %v3997, %v269
  %v4001 = vsub.f32 %v3982, %v3998
  %v4002 = vsub.f32 %v3983, %v3999
  %v4003 = vsub.f32 %v3984, %v4000
  %v4004 = vmul.f32 %v4001, %v4001
  %v4005 = vmul.f32 %v4002, %v4002
  %v4006 = vmul.f32 %v4003, %v4003
  %v4007 = vsel %vm100, %v4004, 0.0
  %4008 = vadd.xlane.f32.xlu0 %v4007
  %v4009 = vpop.xlane.xlu0 %4008
  %v4010 = vsel %vm100, %v4005, 0.0
  %4011 = vadd.xlane.f32.xlu0 %v4010
  %v4012 = vpop.xlane.xlu0 %4011
  %v4013 = vsel %vm265, %v4006, 0.0
  %4014 = vadd.xlane.f32.xlu0 %v4013
  %v4015 = vpop.xlane.xlu0 %4014
  %v4016 = vmul.f32 %v4009, %v269
  %v4017 = vmul.f32 %v4012, %v269
  %v4018 = vmul.f32 %v4015, %v269
  %v4019 = vadd.f32 %v4016, 1e-05
  %v4020 = vadd.f32 %v4017, 1e-05
  %v4021 = vadd.f32 %v4018, 1e-05
  %v4022 = vrsqrt.pop %v4019
  %v4023 = vrsqrt.pop %v4020
  %v4024 = vrsqrt.pop %v4021
  %v4025 = vmul.f32 %v4001, %v4022
  %v4026 = vmul.f32 %v4002, %v4023
  %v4027 = vmul.f32 %v4003, %v4024
  %v4029 = vlaneseq
  %v4030 = vshrl.u32 %v4029, 7
  %v4031 = vsub.s32 0, %v4030
  %v4032 = vrot.slane %v3986, %v4031
  %v4034 = vmul.f32 %v4025, %v4032
  %v4035 = vmul.f32 %v4026, %v4032
  %v4036 = vmul.f32 %v4027, %v4032
  %v4038 = vlaneseq
  %v4039 = vshrl.u32 %v4038, 7
  %v4040 = vsub.s32 0, %v4039
  %v4041 = vrot.slane %v3988, %v4040
  %v4043 = vadd.f32 %v4034, %v4041
  %v4044 = vadd.f32 %v4035, %v4041
  %v4045 = vadd.f32 %v4036, %v4041
  %v4046 = vadd.f32 %v4043, %v37
  %v4047 = vadd.f32 %v4044, %v38
  %v4048 = vadd.f32 %v4045, %v39
  %s4049 = scalar_lea.vmem %s7, 256
  %v4050 = vld [vmem:[%s4049] sm:$0xff]
  %v4051 = vld [vmem:[%s4049 + $0x8] sm:$0xff]
  %v4052 = vld [vmem:[%s4049 + $0x10] sm:$0xff]
  %v4053 = vld [vmem:[%s4049 + $0x18] sm:$0xff]
  %s4054 = scalar_lea.vmem %s8, 8
  %v4055 = vld [vmem:[%s4054] sm:$0x1]
  %v4057 = vlaneseq
  %v4058 = vshrl.u32 %v4057, 7
  %v4059 = vsub.s32 0, %v4058
  %v4060 = vrot.slane %v4055, %v4059
  %v4063 = vsel %vm100, %v4046, 0
  %v4066 = vsel %vm100, %v4047, 0
  %v4069 = vsel %vm100, %v4048, 0
  %4071 = vmatprep.subr.mxu0 0.0
  %4072 = vmatpush1.msra.mxu0 0.0
  %4073 = vmatprep.subr.mxu0 0.0
  %4074 = vmatpush1.msra.mxu0 0.0
  %4075 = vmatprep.subr.mxu0 0.0
  %4076 = vmatpush1.msra.mxu0 0.0
  %4077 = vmatprep.subr.mxu0 0.0
  %4078 = vmatpush1.msra.mxu0 0.0
  %4079 = vmatprep.subr.mxu0 0.0
  %4080 = vmatpush1.msra.mxu0 0.0
  %4081 = vmatprep.subr.mxu0 0.0
  %4082 = vmatpush1.msra.mxu0 0.0
  %4083 = vmatprep.subr.mxu0 0.0
  %4084 = vmatpush1.msra.mxu0 0.0
  %4085 = vmatprep.subr.mxu0 0.0
  %4086 = vmatpush1.msra.mxu0 0.0
  %4087 = vmatprep.subr.mxu0 0.0
  %4088 = vmatpush1.msra.mxu0 0.0
  %4089 = vmatprep.subr.mxu0 0.0
  %4090 = vmatpush1.msra.mxu0 0.0
  %4091 = vmatprep.subr.mxu0 0.0
  %4092 = vmatpush1.msra.mxu0 0.0
  %4093 = vmatprep.subr.mxu0 0.0
  %4094 = vmatpush1.msra.mxu0 0.0
  %4095 = vmatprep.subr.mxu0 0.0
  %4096 = vmatpush1.msra.mxu0 %v4053
  %4097 = vmatprep.subr.mxu0 0.0
  %4098 = vmatpush1.msra.mxu0 %v4052
  %4099 = vmatprep.subr.mxu0 0.0
  %4100 = vmatpush1.msra.mxu0 %v4051
  %4101 = vmatprep.subr.mxu0 0.0
  %4102 = vmatpush1.msra.mxu0 %v4050
  %4103 = vmatprep.subr.mxu0 0.0
  %4104 = vmatpush2.msra.mxu0 0.0
  %4105 = vmatprep.subr.mxu0 0.0
  %4106 = vmatpush2.msra.mxu0 0.0
  %4107 = vmatprep.subr.mxu0 0.0
  %4108 = vmatpush2.msra.mxu0 0.0
  %4109 = vmatprep.subr.mxu0 0.0
  %4110 = vmatpush2.msra.mxu0 0.0
  %4111 = vmatprep.subr.mxu0 0.0
  %4112 = vmatpush2.msra.mxu0 0.0
  %4113 = vmatprep.subr.mxu0 0.0
  %4114 = vmatpush2.msra.mxu0 0.0
  %4115 = vmatprep.subr.mxu0 0.0
  %4116 = vmatpush2.msra.mxu0 0.0
  %4117 = vmatprep.subr.mxu0 0.0
  %4118 = vmatpush2.msra.mxu0 0.0
  %4119 = vmatprep.subr.mxu0 0.0
  %4120 = vmatpush2.msra.mxu0 0.0
  %4121 = vmatprep.subr.mxu0 0.0
  %4122 = vmatpush2.msra.mxu0 0.0
  %4123 = vmatprep.subr.mxu0 0.0
  %4124 = vmatpush2.msra.mxu0 0.0
  %4125 = vmatprep.subr.mxu0 0.0
  %4126 = vmatpush2.msra.mxu0 0.0
  %4127 = vmatprep.subr.mxu0 0.0
  %4128 = vmatpush2.msra.mxu0 0.0
  %4129 = vmatprep.subr.mxu0 0.0
  %4130 = vmatpush2.msra.mxu0 0.0
  %4131 = vmatprep.subr.mxu0 0.0
  %4132 = vmatpush2.msra.mxu0 0.0
  %4133 = vmatprep.subr.mxu0 0.0
  %4134 = vmatpush2.msra.mxu0 0.0
  %4135 = vmatprep.mubr.f32.mxu0 0.0
  %4136 = vmatmul.mubr.f32.gmra.mxu0 %v4063
  %v4137 = vpop.f32.mrf.mxu0
  %v4138 = vadd.f32 %v4060, %v4137
  %v4139 = vpop.f32.mrf.mxu0
  %4140 = vmatprep.mubr.f32.mxu0 0.0
  %4141 = vmatmul.mubr.f32.gmra.mxu0 %v4066
  %v4142 = vpop.f32.mrf.mxu0
  %v4143 = vadd.f32 %v4060, %v4142
  %v4144 = vpop.f32.mrf.mxu0
  %4145 = vmatprep.mubr.f32.mxu0 0.0
  %4146 = vmatmul.mubr.f32.gmra.mxu0 %v4069
  %v4147 = vpop.f32.mrf.mxu0
  %v4148 = vadd.f32 %v4060, %v4147
  %v4149 = vpop.f32.mrf.mxu0
  %4150 = vdwg.mxu0
  %s4151 = scalar_lea.vmem %s7, 288
  %v4152 = vld [vmem:[%s4151] sm:$0xff]
  %v4153 = vld [vmem:[%s4151 + $0x8] sm:$0xff]
  %v4154 = vld [vmem:[%s4151 + $0x10] sm:$0xff]
  %v4155 = vld [vmem:[%s4151 + $0x18] sm:$0xff]
  %s4156 = scalar_lea.vmem %s8, 9
  %v4157 = vld [vmem:[%s4156] sm:$0x1]
  %v4159 = vlaneseq
  %v4160 = vshrl.u32 %v4159, 7
  %v4161 = vsub.s32 0, %v4160
  %v4162 = vrot.slane %v4157, %v4161
  %v4165 = vsel %vm100, %v4043, 0
  %v4168 = vsel %vm100, %v4044, 0
  %v4171 = vsel %vm100, %v4045, 0
  %4173 = vmatprep.subr.mxu0 0.0
  %4174 = vmatpush1.msra.mxu0 0.0
  %4175 = vmatprep.subr.mxu0 0.0
  %4176 = vmatpush1.msra.mxu0 0.0
  %4177 = vmatprep.subr.mxu0 0.0
  %4178 = vmatpush1.msra.mxu0 0.0
  %4179 = vmatprep.subr.mxu0 0.0
  %4180 = vmatpush1.msra.mxu0 0.0
  %4181 = vmatprep.subr.mxu0 0.0
  %4182 = vmatpush1.msra.mxu0 0.0
  %4183 = vmatprep.subr.mxu0 0.0
  %4184 = vmatpush1.msra.mxu0 0.0
  %4185 = vmatprep.subr.mxu0 0.0
  %4186 = vmatpush1.msra.mxu0 0.0
  %4187 = vmatprep.subr.mxu0 0.0
  %4188 = vmatpush1.msra.mxu0 0.0
  %4189 = vmatprep.subr.mxu0 0.0
  %4190 = vmatpush1.msra.mxu0 0.0
  %4191 = vmatprep.subr.mxu0 0.0
  %4192 = vmatpush1.msra.mxu0 0.0
  %4193 = vmatprep.subr.mxu0 0.0
  %4194 = vmatpush1.msra.mxu0 0.0
  %4195 = vmatprep.subr.mxu0 0.0
  %4196 = vmatpush1.msra.mxu0 0.0
  %4197 = vmatprep.subr.mxu0 0.0
  %4198 = vmatpush1.msra.mxu0 %v4155
  %4199 = vmatprep.subr.mxu0 0.0
  %4200 = vmatpush1.msra.mxu0 %v4154
  %4201 = vmatprep.subr.mxu0 0.0
  %4202 = vmatpush1.msra.mxu0 %v4153
  %4203 = vmatprep.subr.mxu0 0.0
  %4204 = vmatpush1.msra.mxu0 %v4152
  %4205 = vmatprep.subr.mxu0 0.0
  %4206 = vmatpush2.msra.mxu0 0.0
  %4207 = vmatprep.subr.mxu0 0.0
  %4208 = vmatpush2.msra.mxu0 0.0
  %4209 = vmatprep.subr.mxu0 0.0
  %4210 = vmatpush2.msra.mxu0 0.0
  %4211 = vmatprep.subr.mxu0 0.0
  %4212 = vmatpush2.msra.mxu0 0.0
  %4213 = vmatprep.subr.mxu0 0.0
  %4214 = vmatpush2.msra.mxu0 0.0
  %4215 = vmatprep.subr.mxu0 0.0
  %4216 = vmatpush2.msra.mxu0 0.0
  %4217 = vmatprep.subr.mxu0 0.0
  %4218 = vmatpush2.msra.mxu0 0.0
  %4219 = vmatprep.subr.mxu0 0.0
  %4220 = vmatpush2.msra.mxu0 0.0
  %4221 = vmatprep.subr.mxu0 0.0
  %4222 = vmatpush2.msra.mxu0 0.0
  %4223 = vmatprep.subr.mxu0 0.0
  %4224 = vmatpush2.msra.mxu0 0.0
  %4225 = vmatprep.subr.mxu0 0.0
  %4226 = vmatpush2.msra.mxu0 0.0
  %4227 = vmatprep.subr.mxu0 0.0
  %4228 = vmatpush2.msra.mxu0 0.0
  %4229 = vmatprep.subr.mxu0 0.0
  %4230 = vmatpush2.msra.mxu0 0.0
  %4231 = vmatprep.subr.mxu0 0.0
  %4232 = vmatpush2.msra.mxu0 0.0
  %4233 = vmatprep.subr.mxu0 0.0
  %4234 = vmatpush2.msra.mxu0 0.0
  %4235 = vmatprep.subr.mxu0 0.0
  %4236 = vmatpush2.msra.mxu0 0.0
  %4237 = vmatprep.mubr.f32.mxu0 0.0
  %4238 = vmatmul.mubr.f32.gmra.mxu0 %v4165
  %v4239 = vpop.f32.mrf.mxu0
  %v4240 = vadd.f32 %v4162, %v4239
  %v4241 = vpop.f32.mrf.mxu0
  %4242 = vmatprep.mubr.f32.mxu0 0.0
  %4243 = vmatmul.mubr.f32.gmra.mxu0 %v4168
  %v4244 = vpop.f32.mrf.mxu0
  %v4245 = vadd.f32 %v4162, %v4244
  %v4246 = vpop.f32.mrf.mxu0
  %4247 = vmatprep.mubr.f32.mxu0 0.0
  %4248 = vmatmul.mubr.f32.gmra.mxu0 %v4171
  %v4249 = vpop.f32.mrf.mxu0
  %v4250 = vadd.f32 %v4162, %v4249
  %v4251 = vpop.f32.mrf.mxu0
  %4252 = vdwg.mxu0
  %s4253 = scalar_lea.vmem %s6, 22
  %v4254 = vld [vmem:[%s4253] sm:$0x1]
  %s4255 = scalar_lea.vmem %s6, 23
  %v4256 = vld [vmem:[%s4255] sm:$0x1]
  %v4257 = vsel %vm100, %v247, 0.0
  %4258 = vadd.xlane.f32.xlu0 %v4257
  %v4259 = vpop.xlane.xlu0 %4258
  %v4260 = vsel %vm100, %v252, 0.0
  %4261 = vadd.xlane.f32.xlu0 %v4260
  %v4262 = vpop.xlane.xlu0 %4261
  %v4263 = vmul.f32 %v4259, %v269
  %v4264 = vmul.f32 %v4262, %v269
  %v4265 = vsub.f32 %v247, %v4263
  %v4266 = vsub.f32 %v252, %v4264
  %v4267 = vmul.f32 %v4265, %v4265
  %v4268 = vmul.f32 %v4266, %v4266
  %v4269 = vsel %vm100, %v4267, 0.0
  %4270 = vadd.xlane.f32.xlu0 %v4269
  %v4271 = vpop.xlane.xlu0 %4270
  %v4272 = vsel %vm100, %v4268, 0.0
  %4273 = vadd.xlane.f32.xlu0 %v4272
  %v4274 = vpop.xlane.xlu0 %4273
  %v4275 = vmul.f32 %v4271, %v269
  %v4276 = vmul.f32 %v4274, %v269
  %v4277 = vadd.f32 %v4275, 1e-05
  %v4278 = vadd.f32 %v4276, 1e-05
  %v4279 = vrsqrt.pop %v4277
  %v4280 = vrsqrt.pop %v4278
  %v4281 = vmul.f32 %v4265, %v4279
  %v4282 = vmul.f32 %v4266, %v4280
  %v4284 = vlaneseq
  %v4285 = vshrl.u32 %v4284, 7
  %v4286 = vsub.s32 0, %v4285
  %v4287 = vrot.slane %v4254, %v4286
  %v4289 = vmul.f32 %v4281, %v4287
  %v4290 = vmul.f32 %v4282, %v4287
  %v4292 = vlaneseq
  %v4293 = vshrl.u32 %v4292, 7
  %v4294 = vsub.s32 0, %v4293
  %v4295 = vrot.slane %v4256, %v4294
  %v4297 = vadd.f32 %v4289, %v4295
  %v4298 = vadd.f32 %v4290, %v4295
  %v4299 = vadd.f32 %v4297, %v43
  %v4300 = vadd.f32 %v4298, %v44
  %s4301 = scalar_lea.vmem %s7, 128
  %v4302 = vld [vmem:[%s4301] sm:$0xff]
  %v4303 = vld [vmem:[%s4301 + $0x8] sm:$0xff]
  %v4304 = vld [vmem:[%s4301 + $0x10] sm:$0xff]
  %v4305 = vld [vmem:[%s4301 + $0x18] sm:$0xff]
  %s4306 = scalar_lea.vmem %s8, 4
  %v4307 = vld [vmem:[%s4306] sm:$0x1]
  %v4309 = vlaneseq
  %v4310 = vshrl.u32 %v4309, 7
  %v4311 = vsub.s32 0, %v4310
  %v4312 = vrot.slane %v4307, %v4311
  %v4315 = vsel %vm100, %v4299, 0
  %v4318 = vsel %vm100, %v4300, 0
  %4320 = vmatprep.subr.mxu0 0.0
  %4321 = vmatpush1.msra.mxu0 0.0
  %4322 = vmatprep.subr.mxu0 0.0
  %4323 = vmatpush1.msra.mxu0 0.0
  %4324 = vmatprep.subr.mxu0 0.0
  %4325 = vmatpush1.msra.mxu0 0.0
  %4326 = vmatprep.subr.mxu0 0.0
  %4327 = vmatpush1.msra.mxu0 0.0
  %4328 = vmatprep.subr.mxu0 0.0
  %4329 = vmatpush1.msra.mxu0 0.0
  %4330 = vmatprep.subr.mxu0 0.0
  %4331 = vmatpush1.msra.mxu0 0.0
  %4332 = vmatprep.subr.mxu0 0.0
  %4333 = vmatpush1.msra.mxu0 0.0
  %4334 = vmatprep.subr.mxu0 0.0
  %4335 = vmatpush1.msra.mxu0 0.0
  %4336 = vmatprep.subr.mxu0 0.0
  %4337 = vmatpush1.msra.mxu0 0.0
  %4338 = vmatprep.subr.mxu0 0.0
  %4339 = vmatpush1.msra.mxu0 0.0
  %4340 = vmatprep.subr.mxu0 0.0
  %4341 = vmatpush1.msra.mxu0 0.0
  %4342 = vmatprep.subr.mxu0 0.0
  %4343 = vmatpush1.msra.mxu0 0.0
  %4344 = vmatprep.subr.mxu0 0.0
  %4345 = vmatpush1.msra.mxu0 %v4305
  %4346 = vmatprep.subr.mxu0 0.0
  %4347 = vmatpush1.msra.mxu0 %v4304
  %4348 = vmatprep.subr.mxu0 0.0
  %4349 = vmatpush1.msra.mxu0 %v4303
  %4350 = vmatprep.subr.mxu0 0.0
  %4351 = vmatpush1.msra.mxu0 %v4302
  %4352 = vmatprep.subr.mxu0 0.0
  %4353 = vmatpush2.msra.mxu0 0.0
  %4354 = vmatprep.subr.mxu0 0.0
  %4355 = vmatpush2.msra.mxu0 0.0
  %4356 = vmatprep.subr.mxu0 0.0
  %4357 = vmatpush2.msra.mxu0 0.0
  %4358 = vmatprep.subr.mxu0 0.0
  %4359 = vmatpush2.msra.mxu0 0.0
  %4360 = vmatprep.subr.mxu0 0.0
  %4361 = vmatpush2.msra.mxu0 0.0
  %4362 = vmatprep.subr.mxu0 0.0
  %4363 = vmatpush2.msra.mxu0 0.0
  %4364 = vmatprep.subr.mxu0 0.0
  %4365 = vmatpush2.msra.mxu0 0.0
  %4366 = vmatprep.subr.mxu0 0.0
  %4367 = vmatpush2.msra.mxu0 0.0
  %4368 = vmatprep.subr.mxu0 0.0
  %4369 = vmatpush2.msra.mxu0 0.0
  %4370 = vmatprep.subr.mxu0 0.0
  %4371 = vmatpush2.msra.mxu0 0.0
  %4372 = vmatprep.subr.mxu0 0.0
  %4373 = vmatpush2.msra.mxu0 0.0
  %4374 = vmatprep.subr.mxu0 0.0
  %4375 = vmatpush2.msra.mxu0 0.0
  %4376 = vmatprep.subr.mxu0 0.0
  %4377 = vmatpush2.msra.mxu0 0.0
  %4378 = vmatprep.subr.mxu0 0.0
  %4379 = vmatpush2.msra.mxu0 0.0
  %4380 = vmatprep.subr.mxu0 0.0
  %4381 = vmatpush2.msra.mxu0 0.0
  %4382 = vmatprep.subr.mxu0 0.0
  %4383 = vmatpush2.msra.mxu0 0.0
  %4384 = vmatprep.mubr.f32.mxu0 0.0
  %4385 = vmatmul.mubr.f32.gmra.mxu0 %v4315
  %v4386 = vpop.f32.mrf.mxu0
  %v4387 = vadd.f32 %v4312, %v4386
  %v4388 = vpop.f32.mrf.mxu0
  %4389 = vmatprep.mubr.f32.mxu0 0.0
  %4390 = vmatmul.mubr.f32.gmra.mxu0 %v4318
  %v4391 = vpop.f32.mrf.mxu0
  %v4392 = vadd.f32 %v4312, %v4391
  %v4393 = vpop.f32.mrf.mxu0
  %4394 = vdwg.mxu0
  %s4395 = scalar_lea.vmem %s5, 192
  %v4396 = vld [vmem:[%s4395] sm:$0xff]
  %v4397 = vld [vmem:[%s4395 + $0x8] sm:$0xff]
  %v4398 = vld [vmem:[%s4395 + $0x10] sm:$0xff]
  %v4399 = vld [vmem:[%s4395 + $0x18] sm:$0xff]
  %s4400 = scalar_lea.vmem %s6, 18
  %v4401 = vld [vmem:[%s4400] sm:$0x1]
  %v4403 = vlaneseq
  %v4404 = vshrl.u32 %v4403, 7
  %v4405 = vsub.s32 0, %v4404
  %v4406 = vrot.slane %v4401, %v4405
  %v4409 = vsel %vm100, %v4297, 0
  %v4412 = vsel %vm100, %v4298, 0
  %4414 = vmatprep.subr.mxu0 0.0
  %4415 = vmatpush1.msra.mxu0 0.0
  %4416 = vmatprep.subr.mxu0 0.0
  %4417 = vmatpush1.msra.mxu0 0.0
  %4418 = vmatprep.subr.mxu0 0.0
  %4419 = vmatpush1.msra.mxu0 0.0
  %4420 = vmatprep.subr.mxu0 0.0
  %4421 = vmatpush1.msra.mxu0 0.0
  %4422 = vmatprep.subr.mxu0 0.0
  %4423 = vmatpush1.msra.mxu0 0.0
  %4424 = vmatprep.subr.mxu0 0.0
  %4425 = vmatpush1.msra.mxu0 0.0
  %4426 = vmatprep.subr.mxu0 0.0
  %4427 = vmatpush1.msra.mxu0 0.0
  %4428 = vmatprep.subr.mxu0 0.0
  %4429 = vmatpush1.msra.mxu0 0.0
  %4430 = vmatprep.subr.mxu0 0.0
  %4431 = vmatpush1.msra.mxu0 0.0
  %4432 = vmatprep.subr.mxu0 0.0
  %4433 = vmatpush1.msra.mxu0 0.0
  %4434 = vmatprep.subr.mxu0 0.0
  %4435 = vmatpush1.msra.mxu0 0.0
  %4436 = vmatprep.subr.mxu0 0.0
  %4437 = vmatpush1.msra.mxu0 0.0
  %4438 = vmatprep.subr.mxu0 0.0
  %4439 = vmatpush1.msra.mxu0 %v4399
  %4440 = vmatprep.subr.mxu0 0.0
  %4441 = vmatpush1.msra.mxu0 %v4398
  %4442 = vmatprep.subr.mxu0 0.0
  %4443 = vmatpush1.msra.mxu0 %v4397
  %4444 = vmatprep.subr.mxu0 0.0
  %4445 = vmatpush1.msra.mxu0 %v4396
  %4446 = vmatprep.subr.mxu0 0.0
  %4447 = vmatpush2.msra.mxu0 0.0
  %4448 = vmatprep.subr.mxu0 0.0
  %4449 = vmatpush2.msra.mxu0 0.0
  %4450 = vmatprep.subr.mxu0 0.0
  %4451 = vmatpush2.msra.mxu0 0.0
  %4452 = vmatprep.subr.mxu0 0.0
  %4453 = vmatpush2.msra.mxu0 0.0
  %4454 = vmatprep.subr.mxu0 0.0
  %4455 = vmatpush2.msra.mxu0 0.0
  %4456 = vmatprep.subr.mxu0 0.0
  %4457 = vmatpush2.msra.mxu0 0.0
  %4458 = vmatprep.subr.mxu0 0.0
  %4459 = vmatpush2.msra.mxu0 0.0
  %4460 = vmatprep.subr.mxu0 0.0
  %4461 = vmatpush2.msra.mxu0 0.0
  %4462 = vmatprep.subr.mxu0 0.0
  %4463 = vmatpush2.msra.mxu0 0.0
  %4464 = vmatprep.subr.mxu0 0.0
  %4465 = vmatpush2.msra.mxu0 0.0
  %4466 = vmatprep.subr.mxu0 0.0
  %4467 = vmatpush2.msra.mxu0 0.0
  %4468 = vmatprep.subr.mxu0 0.0
  %4469 = vmatpush2.msra.mxu0 0.0
  %4470 = vmatprep.subr.mxu0 0.0
  %4471 = vmatpush2.msra.mxu0 0.0
  %4472 = vmatprep.subr.mxu0 0.0
  %4473 = vmatpush2.msra.mxu0 0.0
  %4474 = vmatprep.subr.mxu0 0.0
  %4475 = vmatpush2.msra.mxu0 0.0
  %4476 = vmatprep.subr.mxu0 0.0
  %4477 = vmatpush2.msra.mxu0 0.0
  %4478 = vmatprep.mubr.f32.mxu0 0.0
  %4479 = vmatmul.mubr.f32.gmra.mxu0 %v4409
  %v4480 = vpop.f32.mrf.mxu0
  %v4481 = vadd.f32 %v4406, %v4480
  %v4482 = vpop.f32.mrf.mxu0
  %4483 = vmatprep.mubr.f32.mxu0 0.0
  %4484 = vmatmul.mubr.f32.gmra.mxu0 %v4412
  %v4485 = vpop.f32.mrf.mxu0
  %v4486 = vadd.f32 %v4406, %v4485
  %v4487 = vpop.f32.mrf.mxu0
  %4488 = vdwg.mxu0
  %s4489 = scalar_lea.vmem %s5, 224
  %v4490 = vld [vmem:[%s4489] sm:$0xff]
  %v4491 = vld [vmem:[%s4489 + $0x8] sm:$0xff]
  %v4492 = vld [vmem:[%s4489 + $0x10] sm:$0xff]
  %v4493 = vld [vmem:[%s4489 + $0x18] sm:$0xff]
  %s4494 = scalar_lea.vmem %s6, 19
  %v4495 = vld [vmem:[%s4494] sm:$0x1]
  %4498 = vrot.lane.b32.xlu0 %v4387, 96
  %v4499 = vpop.permute.xlu0 %4498
  %4500 = vrot.lane.b32.xlu0 %v4392, 96
  %v4501 = vpop.permute.xlu0 %4500
  %v4502 = vsel %vm539, %v4387, 0
  %v4504 = vsel %vm539, %v4392, 0
  %v4506 = vsel %vm539, %v4499, 0
  %v4508 = vsel %vm539, %v4501, 0
  %4510 = vmatprep.subr.mxu0 0.0
  %4511 = vmatpush1.xpose.msra.mxu0 0.0
  %4512 = vmatprep.subr.mxu0 0.0
  %4513 = vmatpush1.xpose.msra.mxu0 0.0
  %4514 = vmatprep.subr.mxu0 0.0
  %4515 = vmatpush1.xpose.msra.mxu0 0.0
  %4516 = vmatprep.subr.mxu0 0.0
  %4517 = vmatpush1.xpose.msra.mxu0 0.0
  %4518 = vmatprep.subr.mxu0 0.0
  %4519 = vmatpush1.xpose.msra.mxu0 0.0
  %4520 = vmatprep.subr.mxu0 0.0
  %4521 = vmatpush1.xpose.msra.mxu0 0.0
  %4522 = vmatprep.subr.mxu0 0.0
  %4523 = vmatpush1.xpose.msra.mxu0 0.0
  %4524 = vmatprep.subr.mxu0 0.0
  %4525 = vmatpush1.xpose.msra.mxu0 0.0
  %4526 = vmatprep.subr.mxu0 0.0
  %4527 = vmatpush1.xpose.msra.mxu0 0.0
  %4528 = vmatprep.subr.mxu0 0.0
  %4529 = vmatpush1.xpose.msra.mxu0 0.0
  %4530 = vmatprep.subr.mxu0 0.0
  %4531 = vmatpush1.xpose.msra.mxu0 0.0
  %4532 = vmatprep.subr.mxu0 0.0
  %4533 = vmatpush1.xpose.msra.mxu0 0.0
  %4534 = vmatprep.subr.mxu0 0.0
  %4535 = vmatpush1.xpose.msra.mxu0 0.0
  %4536 = vmatprep.subr.mxu0 0.0
  %4537 = vmatpush1.xpose.msra.mxu0 0.0
  %4538 = vmatprep.subr.mxu0 0.0
  %4539 = vmatpush1.xpose.msra.mxu0 %v4508
  %4540 = vmatprep.subr.mxu0 0.0
  %4541 = vmatpush1.xpose.msra.mxu0 %v4506
  %4542 = vmatprep.subr.mxu0 0.0
  %4543 = vmatpush2.xpose.msra.mxu0 0.0
  %4544 = vmatprep.subr.mxu0 0.0
  %4545 = vmatpush2.xpose.msra.mxu0 0.0
  %4546 = vmatprep.subr.mxu0 0.0
  %4547 = vmatpush2.xpose.msra.mxu0 0.0
  %4548 = vmatprep.subr.mxu0 0.0
  %4549 = vmatpush2.xpose.msra.mxu0 0.0
  %4550 = vmatprep.subr.mxu0 0.0
  %4551 = vmatpush2.xpose.msra.mxu0 0.0
  %4552 = vmatprep.subr.mxu0 0.0
  %4553 = vmatpush2.xpose.msra.mxu0 0.0
  %4554 = vmatprep.subr.mxu0 0.0
  %4555 = vmatpush2.xpose.msra.mxu0 0.0
  %4556 = vmatprep.subr.mxu0 0.0
  %4557 = vmatpush2.xpose.msra.mxu0 0.0
  %4558 = vmatprep.subr.mxu0 0.0
  %4559 = vmatpush2.xpose.msra.mxu0 0.0
  %4560 = vmatprep.subr.mxu0 0.0
  %4561 = vmatpush2.xpose.msra.mxu0 0.0
  %4562 = vmatprep.subr.mxu0 0.0
  %4563 = vmatpush2.xpose.msra.mxu0 0.0
  %4564 = vmatprep.subr.mxu0 0.0
  %4565 = vmatpush2.xpose.msra.mxu0 0.0
  %4566 = vmatprep.subr.mxu0 0.0
  %4567 = vmatpush2.xpose.msra.mxu0 0.0
  %4568 = vmatprep.subr.mxu0 0.0
  %4569 = vmatpush2.xpose.msra.mxu0 0.0
  %4570 = vmatprep.subr.mxu0 0.0
  %4571 = vmatpush2.xpose.msra.mxu0 0.0
  %4572 = vmatprep.subr.mxu0 0.0
  %4573 = vmatpush2.xpose.msra.mxu0 0.0
  %4574 = vmatprep.mubr.f32.mxu0 0.0
  %4575 = vmatmul.mubr.f32.gmra.mxu0 %v4502
  %v4576 = vpop.f32.mrf.mxu0
  %v4577 = vadd.f32 %v83, %v4576
  %v4578 = vpop.f32.mrf.mxu0
  %4579 = vmatprep.mubr.f32.mxu0 0.0
  %4580 = vmatmul.mubr.f32.gmra.mxu0 %v4504
  %v4581 = vpop.f32.mrf.mxu0
  %v4582 = vadd.f32 %v84, %v4581
  %v4583 = vpop.f32.mrf.mxu0
  %4584 = vdwg.mxu0
  %vm4585 = vcmask 130048
  %v4586 = vsel %vm4585, %v4577, -inf
  %4587 = vmax.xlane.f32.xlu0 %v4586
  %v4588 = vpop.xlane.xlu0 %4587
  %v4589 = vsel %vm4585, %v4582, -inf
  %4590 = vmax.xlane.f32.xlu0 %v4589
  %v4591 = vpop.xlane.xlu0 %4590
  %v4592 = vsub.f32 %v4577, %v4588
  %v4593 = vsub.f32 %v4582, %v4591
  %v4594 = vmul.f32 %v4592, 1.442695
  %v4595 = vpow.pop %v4594
  %v4596 = vmul.f32 %v4593, 1.442695
  %v4597 = vpow.pop %v4596
  %v4598 = vsel %vm4585, %v4595, 0.0
  %4599 = vadd.xlane.f32.xlu0 %v4598
  %v4600 = vpop.xlane.xlu0 %4599
  %v4601 = vsel %vm4585, %v4597, 0.0
  %4602 = vadd.xlane.f32.xlu0 %v4601
  %v4603 = vpop.xlane.xlu0 %4602
  %v4604 = vrcp.pop %v4600
  %v4605 = vrcp.pop %v4603
  %v4606 = vmul.f32 %v4595, %v4604
  %v4607 = vmul.f32 %v4597, %v4605
  %v4609 = vsel %vm4585, %v4606, 0
  %v4612 = vsel %vm4585, %v4607, 0
  %4614 = vmatprep.subr.mxu0 0.0
  %4615 = vmatpush1.msra.mxu0 0.0
  %4616 = vmatprep.subr.mxu0 0.0
  %4617 = vmatpush1.msra.mxu0 0.0
  %4618 = vmatprep.subr.mxu0 0.0
  %4619 = vmatpush1.msra.mxu0 0.0
  %4620 = vmatprep.subr.mxu0 0.0
  %4621 = vmatpush1.msra.mxu0 0.0
  %4622 = vmatprep.subr.mxu0 0.0
  %4623 = vmatpush1.msra.mxu0 0.0
  %4624 = vmatprep.subr.mxu0 0.0
  %4625 = vmatpush1.msra.mxu0 0.0
  %4626 = vmatprep.subr.mxu0 0.0
  %4627 = vmatpush1.msra.mxu0 0.0
  %4628 = vmatprep.subr.mxu0 0.0
  %4629 = vmatpush1.msra.mxu0 0.0
  %4630 = vmatprep.subr.mxu0 0.0
  %4631 = vmatpush1.msra.mxu0 0.0
  %4632 = vmatprep.subr.mxu0 0.0
  %4633 = vmatpush1.msra.mxu0 0.0
  %4634 = vmatprep.subr.mxu0 0.0
  %4635 = vmatpush1.msra.mxu0 0.0
  %4636 = vmatprep.subr.mxu0 0.0
  %4637 = vmatpush1.msra.mxu0 0.0
  %4638 = vmatprep.subr.mxu0 0.0
  %4639 = vmatpush1.msra.mxu0 0.0
  %4640 = vmatprep.subr.mxu0 0.0
  %4641 = vmatpush1.msra.mxu0 0.0
  %4642 = vmatprep.subr.mxu0 0.0
  %4643 = vmatpush1.msra.mxu0 %v4486
  %4644 = vmatprep.subr.mxu0 0.0
  %4645 = vmatpush1.msra.mxu0 %v4481
  %4646 = vmatprep.subr.mxu0 0.0
  %4647 = vmatpush2.msra.mxu0 0.0
  %4648 = vmatprep.subr.mxu0 0.0
  %4649 = vmatpush2.msra.mxu0 0.0
  %4650 = vmatprep.subr.mxu0 0.0
  %4651 = vmatpush2.msra.mxu0 0.0
  %4652 = vmatprep.subr.mxu0 0.0
  %4653 = vmatpush2.msra.mxu0 0.0
  %4654 = vmatprep.subr.mxu0 0.0
  %4655 = vmatpush2.msra.mxu0 0.0
  %4656 = vmatprep.subr.mxu0 0.0
  %4657 = vmatpush2.msra.mxu0 0.0
  %4658 = vmatprep.subr.mxu0 0.0
  %4659 = vmatpush2.msra.mxu0 0.0
  %4660 = vmatprep.subr.mxu0 0.0
  %4661 = vmatpush2.msra.mxu0 0.0
  %4662 = vmatprep.subr.mxu0 0.0
  %4663 = vmatpush2.msra.mxu0 0.0
  %4664 = vmatprep.subr.mxu0 0.0
  %4665 = vmatpush2.msra.mxu0 0.0
  %4666 = vmatprep.subr.mxu0 0.0
  %4667 = vmatpush2.msra.mxu0 0.0
  %4668 = vmatprep.subr.mxu0 0.0
  %4669 = vmatpush2.msra.mxu0 0.0
  %4670 = vmatprep.subr.mxu0 0.0
  %4671 = vmatpush2.msra.mxu0 0.0
  %4672 = vmatprep.subr.mxu0 0.0
  %4673 = vmatpush2.msra.mxu0 0.0
  %4674 = vmatprep.subr.mxu0 0.0
  %4675 = vmatpush2.msra.mxu0 0.0
  %4676 = vmatprep.subr.mxu0 0.0
  %4677 = vmatpush2.msra.mxu0 0.0
  %4678 = vmatprep.mubr.f32.mxu0 0.0
  %4679 = vmatmul.mubr.f32.gmra.mxu0 %v4609
  %v4680 = vpop.f32.mrf.mxu0
  %v4681 = vadd.f32 0.0, %v4680
  %v4682 = vpop.f32.mrf.mxu0
  %4683 = vmatprep.mubr.f32.mxu0 0.0
  %4684 = vmatmul.mubr.f32.gmra.mxu0 %v4612
  %v4685 = vpop.f32.mrf.mxu0
  %v4686 = vadd.f32 0.0, %v4685
  %v4687 = vpop.f32.mrf.mxu0
  %4688 = vdwg.mxu0
  %4689 = vrot.lane.b32.xlu0 %v4387, 120
  %v4690 = vpop.permute.xlu0 %4689
  %4691 = vrot.lane.b32.xlu0 %v4392, 120
  %v4692 = vpop.permute.xlu0 %4691
  %4693 = vrot.lane.b32.xlu0 %v4387, 88
  %v4694 = vpop.permute.xlu0 %4693
  %4695 = vrot.lane.b32.xlu0 %v4392, 88
  %v4696 = vpop.permute.xlu0 %4695
  %v4697 = vsel %vm539, %v4690, 0
  %v4699 = vsel %vm539, %v4692, 0
  %v4701 = vsel %vm539, %v4694, 0
  %v4703 = vsel %vm539, %v4696, 0
  %4705 = vmatprep.subr.mxu0 0.0
  %4706 = vmatpush1.xpose.msra.mxu0 0.0
  %4707 = vmatprep.subr.mxu0 0.0
  %4708 = vmatpush1.xpose.msra.mxu0 0.0
  %4709 = vmatprep.subr.mxu0 0.0
  %4710 = vmatpush1.xpose.msra.mxu0 0.0
  %4711 = vmatprep.subr.mxu0 0.0
  %4712 = vmatpush1.xpose.msra.mxu0 0.0
  %4713 = vmatprep.subr.mxu0 0.0
  %4714 = vmatpush1.xpose.msra.mxu0 0.0
  %4715 = vmatprep.subr.mxu0 0.0
  %4716 = vmatpush1.xpose.msra.mxu0 0.0
  %4717 = vmatprep.subr.mxu0 0.0
  %4718 = vmatpush1.xpose.msra.mxu0 0.0
  %4719 = vmatprep.subr.mxu0 0.0
  %4720 = vmatpush1.xpose.msra.mxu0 0.0
  %4721 = vmatprep.subr.mxu0 0.0
  %4722 = vmatpush1.xpose.msra.mxu0 0.0
  %4723 = vmatprep.subr.mxu0 0.0
  %4724 = vmatpush1.xpose.msra.mxu0 0.0
  %4725 = vmatprep.subr.mxu0 0.0
  %4726 = vmatpush1.xpose.msra.mxu0 0.0
  %4727 = vmatprep.subr.mxu0 0.0
  %4728 = vmatpush1.xpose.msra.mxu0 0.0
  %4729 = vmatprep.subr.mxu0 0.0
  %4730 = vmatpush1.xpose.msra.mxu0 0.0
  %4731 = vmatprep.subr.mxu0 0.0
  %4732 = vmatpush1.xpose.msra.mxu0 0.0
  %4733 = vmatprep.subr.mxu0 0.0
  %4734 = vmatpush1.xpose.msra.mxu0 %v4703
  %4735 = vmatprep.subr.mxu0 0.0
  %4736 = vmatpush1.xpose.msra.mxu0 %v4701
  %4737 = vmatprep.subr.mxu0 0.0
  %4738 = vmatpush2.xpose.msra.mxu0 0.0
  %4739 = vmatprep.subr.mxu0 0.0
  %4740 = vmatpush2.xpose.msra.mxu0 0.0
  %4741 = vmatprep.subr.mxu0 0.0
  %4742 = vmatpush2.xpose.msra.mxu0 0.0
  %4743 = vmatprep.subr.mxu0 0.0
  %4744 = vmatpush2.xpose.msra.mxu0 0.0
  %4745 = vmatprep.subr.mxu0 0.0
  %4746 = vmatpush2.xpose.msra.mxu0 0.0
  %4747 = vmatprep.subr.mxu0 0.0
  %4748 = vmatpush2.xpose.msra.mxu0 0.0
  %4749 = vmatprep.subr.mxu0 0.0
  %4750 = vmatpush2.xpose.msra.mxu0 0.0
  %4751 = vmatprep.subr.mxu0 0.0
  %4752 = vmatpush2.xpose.msra.mxu0 0.0
  %4753 = vmatprep.subr.mxu0 0.0
  %4754 = vmatpush2.xpose.msra.mxu0 0.0
  %4755 = vmatprep.subr.mxu0 0.0
  %4756 = vmatpush2.xpose.msra.mxu0 0.0
  %4757 = vmatprep.subr.mxu0 0.0
  %4758 = vmatpush2.xpose.msra.mxu0 0.0
  %4759 = vmatprep.subr.mxu0 0.0
  %4760 = vmatpush2.xpose.msra.mxu0 0.0
  %4761 = vmatprep.subr.mxu0 0.0
  %4762 = vmatpush2.xpose.msra.mxu0 0.0
  %4763 = vmatprep.subr.mxu0 0.0
  %4764 = vmatpush2.xpose.msra.mxu0 0.0
  %4765 = vmatprep.subr.mxu0 0.0
  %4766 = vmatpush2.xpose.msra.mxu0 0.0
  %4767 = vmatprep.subr.mxu0 0.0
  %4768 = vmatpush2.xpose.msra.mxu0 0.0
  %4769 = vmatprep.mubr.f32.mxu0 0.0
  %4770 = vmatmul.mubr.f32.gmra.mxu0 %v4697
  %v4771 = vpop.f32.mrf.mxu0
  %v4772 = vadd.f32 %v83, %v4771
  %v4773 = vpop.f32.mrf.mxu0
  %4774 = vmatprep.mubr.f32.mxu0 0.0
  %4775 = vmatmul.mubr.f32.gmra.mxu0 %v4699
  %v4776 = vpop.f32.mrf.mxu0
  %v4777 = vadd.f32 %v84, %v4776
  %v4778 = vpop.f32.mrf.mxu0
  %4779 = vdwg.mxu0
  %v4780 = vsel %vm4585, %v4772, -inf
  %4781 = vmax.xlane.f32.xlu0 %v4780
  %v4782 = vpop.xlane.xlu0 %4781
  %v4783 = vsel %vm4585, %v4777, -inf
  %4784 = vmax.xlane.f32.xlu0 %v4783
  %v4785 = vpop.xlane.xlu0 %4784
  %v4786 = vsub.f32 %v4772, %v4782
  %v4787 = vsub.f32 %v4777, %v4785
  %v4788 = vmul.f32 %v4786, 1.442695
  %v4789 = vpow.pop %v4788
  %v4790 = vmul.f32 %v4787, 1.442695
  %v4791 = vpow.pop %v4790
  %v4792 = vsel %vm4585, %v4789, 0.0
  %4793 = vadd.xlane.f32.xlu0 %v4792
  %v4794 = vpop.xlane.xlu0 %4793
  %v4795 = vsel %vm4585, %v4791, 0.0
  %4796 = vadd.xlane.f32.xlu0 %v4795
  %v4797 = vpop.xlane.xlu0 %4796
  %v4798 = vrcp.pop %v4794
  %v4799 = vrcp.pop %v4797
  %v4800 = vmul.f32 %v4789, %v4798
  %v4801 = vmul.f32 %v4791, %v4799
  %4804 = vrot.lane.b32.xlu0 %v4481, 120
  %v4805 = vpop.permute.xlu0 %4804
  %4806 = vrot.lane.b32.xlu0 %v4486, 120
  %v4807 = vpop.permute.xlu0 %4806
  %v4811 = vsel %vm4585, %v4800, 0
  %v4814 = vsel %vm4585, %v4801, 0
  %4816 = vmatprep.subr.mxu0 0.0
  %4817 = vmatpush1.msra.mxu0 0.0
  %4818 = vmatprep.subr.mxu0 0.0
  %4819 = vmatpush1.msra.mxu0 0.0
  %4820 = vmatprep.subr.mxu0 0.0
  %4821 = vmatpush1.msra.mxu0 0.0
  %4822 = vmatprep.subr.mxu0 0.0
  %4823 = vmatpush1.msra.mxu0 0.0
  %4824 = vmatprep.subr.mxu0 0.0
  %4825 = vmatpush1.msra.mxu0 0.0
  %4826 = vmatprep.subr.mxu0 0.0
  %4827 = vmatpush1.msra.mxu0 0.0
  %4828 = vmatprep.subr.mxu0 0.0
  %4829 = vmatpush1.msra.mxu0 0.0
  %4830 = vmatprep.subr.mxu0 0.0
  %4831 = vmatpush1.msra.mxu0 0.0
  %4832 = vmatprep.subr.mxu0 0.0
  %4833 = vmatpush1.msra.mxu0 0.0
  %4834 = vmatprep.subr.mxu0 0.0
  %4835 = vmatpush1.msra.mxu0 0.0
  %4836 = vmatprep.subr.mxu0 0.0
  %4837 = vmatpush1.msra.mxu0 0.0
  %4838 = vmatprep.subr.mxu0 0.0
  %4839 = vmatpush1.msra.mxu0 0.0
  %4840 = vmatprep.subr.mxu0 0.0
  %4841 = vmatpush1.msra.mxu0 0.0
  %4842 = vmatprep.subr.mxu0 0.0
  %4843 = vmatpush1.msra.mxu0 0.0
  %4844 = vmatprep.subr.mxu0 0.0
  %4845 = vmatpush1.msra.mxu0 %v4807
  %4846 = vmatprep.subr.mxu0 0.0
  %4847 = vmatpush1.msra.mxu0 %v4805
  %4848 = vmatprep.subr.mxu0 0.0
  %4849 = vmatpush2.msra.mxu0 0.0
  %4850 = vmatprep.subr.mxu0 0.0
  %4851 = vmatpush2.msra.mxu0 0.0
  %4852 = vmatprep.subr.mxu0 0.0
  %4853 = vmatpush2.msra.mxu0 0.0
  %4854 = vmatprep.subr.mxu0 0.0
  %4855 = vmatpush2.msra.mxu0 0.0
  %4856 = vmatprep.subr.mxu0 0.0
  %4857 = vmatpush2.msra.mxu0 0.0
  %4858 = vmatprep.subr.mxu0 0.0
  %4859 = vmatpush2.msra.mxu0 0.0
  %4860 = vmatprep.subr.mxu0 0.0
  %4861 = vmatpush2.msra.mxu0 0.0
  %4862 = vmatprep.subr.mxu0 0.0
  %4863 = vmatpush2.msra.mxu0 0.0
  %4864 = vmatprep.subr.mxu0 0.0
  %4865 = vmatpush2.msra.mxu0 0.0
  %4866 = vmatprep.subr.mxu0 0.0
  %4867 = vmatpush2.msra.mxu0 0.0
  %4868 = vmatprep.subr.mxu0 0.0
  %4869 = vmatpush2.msra.mxu0 0.0
  %4870 = vmatprep.subr.mxu0 0.0
  %4871 = vmatpush2.msra.mxu0 0.0
  %4872 = vmatprep.subr.mxu0 0.0
  %4873 = vmatpush2.msra.mxu0 0.0
  %4874 = vmatprep.subr.mxu0 0.0
  %4875 = vmatpush2.msra.mxu0 0.0
  %4876 = vmatprep.subr.mxu0 0.0
  %4877 = vmatpush2.msra.mxu0 0.0
  %4878 = vmatprep.subr.mxu0 0.0
  %4879 = vmatpush2.msra.mxu0 0.0
  %4880 = vmatprep.mubr.f32.mxu0 0.0
  %4881 = vmatmul.mubr.f32.gmra.mxu0 %v4811
  %v4882 = vpop.f32.mrf.mxu0
  %v4883 = vadd.f32 0.0, %v4882
  %v4884 = vpop.f32.mrf.mxu0
  %4885 = vmatprep.mubr.f32.mxu0 0.0
  %4886 = vmatmul.mubr.f32.gmra.mxu0 %v4814
  %v4887 = vpop.f32.mrf.mxu0
  %v4888 = vadd.f32 0.0, %v4887
  %v4889 = vpop.f32.mrf.mxu0
  %4890 = vdwg.mxu0
  %v4892 = vsel %vm539, %v4883, 0
  %v4895 = vsel %vm539, %v4888, 0
  %4897 = vmatprep.subr.mxu0 0.0
  %4898 = vmatpush1.msra.mxu0 0.0
  %4899 = vmatprep.subr.mxu0 0.0
  %4900 = vmatpush1.msra.mxu0 0.0
  %4901 = vmatprep.subr.mxu0 0.0
  %4902 = vmatpush1.msra.mxu0 0.0
  %4903 = vmatprep.subr.mxu0 0.0
  %4904 = vmatpush1.msra.mxu0 0.0
  %4905 = vmatprep.subr.mxu0 0.0
  %4906 = vmatpush1.msra.mxu0 0.0
  %4907 = vmatprep.subr.mxu0 0.0
  %4908 = vmatpush1.msra.mxu0 0.0
  %4909 = vmatprep.subr.mxu0 0.0
  %4910 = vmatpush1.msra.mxu0 0.0
  %4911 = vmatprep.subr.mxu0 0.0
  %4912 = vmatpush1.msra.mxu0 0.0
  %4913 = vmatprep.subr.mxu0 0.0
  %4914 = vmatpush1.msra.mxu0 0.0
  %4915 = vmatprep.subr.mxu0 0.0
  %4916 = vmatpush1.msra.mxu0 0.0
  %4917 = vmatprep.subr.mxu0 0.0
  %4918 = vmatpush1.msra.mxu0 0.0
  %4919 = vmatprep.subr.mxu0 0.0
  %4920 = vmatpush1.msra.mxu0 0.0
  %4921 = vmatprep.subr.mxu0 0.0
  %4922 = vmatpush1.msra.mxu0 0.0
  %4923 = vmatprep.subr.mxu0 0.0
  %4924 = vmatpush1.msra.mxu0 0.0
  %4925 = vmatprep.subr.mxu0 0.0
  %4926 = vmatpush1.msra.mxu0 0.0
  %4927 = vmatprep.subr.mxu0 0.0
  %4928 = vmatpush1.msra.mxu0 %v4491
  %4929 = vmatprep.subr.mxu0 0.0
  %4930 = vmatpush2.msra.mxu0 0.0
  %4931 = vmatprep.subr.mxu0 0.0
  %4932 = vmatpush2.msra.mxu0 0.0
  %4933 = vmatprep.subr.mxu0 0.0
  %4934 = vmatpush2.msra.mxu0 0.0
  %4935 = vmatprep.subr.mxu0 0.0
  %4936 = vmatpush2.msra.mxu0 0.0
  %4937 = vmatprep.subr.mxu0 0.0
  %4938 = vmatpush2.msra.mxu0 0.0
  %4939 = vmatprep.subr.mxu0 0.0
  %4940 = vmatpush2.msra.mxu0 0.0
  %4941 = vmatprep.subr.mxu0 0.0
  %4942 = vmatpush2.msra.mxu0 0.0
  %4943 = vmatprep.subr.mxu0 0.0
  %4944 = vmatpush2.msra.mxu0 0.0
  %4945 = vmatprep.subr.mxu0 0.0
  %4946 = vmatpush2.msra.mxu0 0.0
  %4947 = vmatprep.subr.mxu0 0.0
  %4948 = vmatpush2.msra.mxu0 0.0
  %4949 = vmatprep.subr.mxu0 0.0
  %4950 = vmatpush2.msra.mxu0 0.0
  %4951 = vmatprep.subr.mxu0 0.0
  %4952 = vmatpush2.msra.mxu0 0.0
  %4953 = vmatprep.subr.mxu0 0.0
  %4954 = vmatpush2.msra.mxu0 0.0
  %4955 = vmatprep.subr.mxu0 0.0
  %4956 = vmatpush2.msra.mxu0 0.0
  %4957 = vmatprep.subr.mxu0 0.0
  %4958 = vmatpush2.msra.mxu0 0.0
  %4959 = vmatprep.subr.mxu0 0.0
  %4960 = vmatpush2.msra.mxu0 0.0
  %4961 = vmatprep.mubr.f32.mxu0 0.0
  %4962 = vmatmul.mubr.f32.gmra.mxu0 %v4892
  %v4963 = vpop.f32.mrf.mxu0
  %v4964 = vadd.f32 0.0, %v4963
  %v4965 = vpop.f32.mrf.mxu0
  %4966 = vmatprep.mubr.f32.mxu0 0.0
  %4967 = vmatmul.mubr.f32.gmra.mxu0 %v4895
  %v4968 = vpop.f32.mrf.mxu0
  %v4969 = vadd.f32 0.0, %v4968
  %v4970 = vpop.f32.mrf.mxu0
  %4971 = vdwg.mxu0
  %v4973 = vsel %vm539, %v4681, 0
  %v4976 = vsel %vm539, %v4686, 0
  %4978 = vmatprep.subr.mxu0 0.0
  %4979 = vmatpush1.msra.mxu0 0.0
  %4980 = vmatprep.subr.mxu0 0.0
  %4981 = vmatpush1.msra.mxu0 0.0
  %4982 = vmatprep.subr.mxu0 0.0
  %4983 = vmatpush1.msra.mxu0 0.0
  %4984 = vmatprep.subr.mxu0 0.0
  %4985 = vmatpush1.msra.mxu0 0.0
  %4986 = vmatprep.subr.mxu0 0.0
  %4987 = vmatpush1.msra.mxu0 0.0
  %4988 = vmatprep.subr.mxu0 0.0
  %4989 = vmatpush1.msra.mxu0 0.0
  %4990 = vmatprep.subr.mxu0 0.0
  %4991 = vmatpush1.msra.mxu0 0.0
  %4992 = vmatprep.subr.mxu0 0.0
  %4993 = vmatpush1.msra.mxu0 0.0
  %4994 = vmatprep.subr.mxu0 0.0
  %4995 = vmatpush1.msra.mxu0 0.0
  %4996 = vmatprep.subr.mxu0 0.0
  %4997 = vmatpush1.msra.mxu0 0.0
  %4998 = vmatprep.subr.mxu0 0.0
  %4999 = vmatpush1.msra.mxu0 0.0
  %5000 = vmatprep.subr.mxu0 0.0
  %5001 = vmatpush1.msra.mxu0 0.0
  %5002 = vmatprep.subr.mxu0 0.0
  %5003 = vmatpush1.msra.mxu0 0.0
  %5004 = vmatprep.subr.mxu0 0.0
  %5005 = vmatpush1.msra.mxu0 0.0
  %5006 = vmatprep.subr.mxu0 0.0
  %5007 = vmatpush1.msra.mxu0 0.0
  %5008 = vmatprep.subr.mxu0 0.0
  %5009 = vmatpush1.msra.mxu0 %v4490
  %5010 = vmatprep.subr.mxu0 0.0
  %5011 = vmatpush2.msra.mxu0 0.0
  %5012 = vmatprep.subr.mxu0 0.0
  %5013 = vmatpush2.msra.mxu0 0.0
  %5014 = vmatprep.subr.mxu0 0.0
  %5015 = vmatpush2.msra.mxu0 0.0
  %5016 = vmatprep.subr.mxu0 0.0
  %5017 = vmatpush2.msra.mxu0 0.0
  %5018 = vmatprep.subr.mxu0 0.0
  %5019 = vmatpush2.msra.mxu0 0.0
  %5020 = vmatprep.subr.mxu0 0.0
  %5021 = vmatpush2.msra.mxu0 0.0
  %5022 = vmatprep.subr.mxu0 0.0
  %5023 = vmatpush2.msra.mxu0 0.0
  %5024 = vmatprep.subr.mxu0 0.0
  %5025 = vmatpush2.msra.mxu0 0.0
  %5026 = vmatprep.subr.mxu0 0.0
  %5027 = vmatpush2.msra.mxu0 0.0
  %5028 = vmatprep.subr.mxu0 0.0
  %5029 = vmatpush2.msra.mxu0 0.0
  %5030 = vmatprep.subr.mxu0 0.0
  %5031 = vmatpush2.msra.mxu0 0.0
  %5032 = vmatprep.subr.mxu0 0.0
  %5033 = vmatpush2.msra.mxu0 0.0
  %5034 = vmatprep.subr.mxu0 0.0
  %5035 = vmatpush2.msra.mxu0 0.0
  %5036 = vmatprep.subr.mxu0 0.0
  %5037 = vmatpush2.msra.mxu0 0.0
  %5038 = vmatprep.subr.mxu0 0.0
  %5039 = vmatpush2.msra.mxu0 0.0
  %5040 = vmatprep.subr.mxu0 0.0
  %5041 = vmatpush2.msra.mxu0 0.0
  %5042 = vmatprep.mubr.f32.mxu0 0.0
  %5043 = vmatmul.mubr.f32.gmra.mxu0 %v4973
  %v5044 = vpop.f32.mrf.mxu0
  %v5045 = vadd.f32 %v4964, %v5044
  %v5046 = vpop.f32.mrf.mxu0
  %5047 = vmatprep.mubr.f32.mxu0 0.0
  %5048 = vmatmul.mubr.f32.gmra.mxu0 %v4976
  %v5049 = vpop.f32.mrf.mxu0
  %v5050 = vadd.f32 %v4969, %v5049
  %v5051 = vpop.f32.mrf.mxu0
  %5052 = vdwg.mxu0
  %5053 = vrot.lane.b32.xlu0 %v4387, 112
  %v5054 = vpop.permute.xlu0 %5053
  %5055 = vrot.lane.b32.xlu0 %v4392, 112
  %v5056 = vpop.permute.xlu0 %5055
  %5057 = vrot.lane.b32.xlu0 %v4387, 80
  %v5058 = vpop.permute.xlu0 %5057
  %5059 = vrot.lane.b32.xlu0 %v4392, 80
  %v5060 = vpop.permute.xlu0 %5059
  %v5061 = vsel %vm539, %v5054, 0
  %v5063 = vsel %vm539, %v5056, 0
  %v5065 = vsel %vm539, %v5058, 0
  %v5067 = vsel %vm539, %v5060, 0
  %5069 = vmatprep.subr.mxu0 0.0
  %5070 = vmatpush1.xpose.msra.mxu0 0.0
  %5071 = vmatprep.subr.mxu0 0.0
  %5072 = vmatpush1.xpose.msra.mxu0 0.0
  %5073 = vmatprep.subr.mxu0 0.0
  %5074 = vmatpush1.xpose.msra.mxu0 0.0
  %5075 = vmatprep.subr.mxu0 0.0
  %5076 = vmatpush1.xpose.msra.mxu0 0.0
  %5077 = vmatprep.subr.mxu0 0.0
  %5078 = vmatpush1.xpose.msra.mxu0 0.0
  %5079 = vmatprep.subr.mxu0 0.0
  %5080 = vmatpush1.xpose.msra.mxu0 0.0
  %5081 = vmatprep.subr.mxu0 0.0
  %5082 = vmatpush1.xpose.msra.mxu0 0.0
  %5083 = vmatprep.subr.mxu0 0.0
  %5084 = vmatpush1.xpose.msra.mxu0 0.0
  %5085 = vmatprep.subr.mxu0 0.0
  %5086 = vmatpush1.xpose.msra.mxu0 0.0
  %5087 = vmatprep.subr.mxu0 0.0
  %5088 = vmatpush1.xpose.msra.mxu0 0.0
  %5089 = vmatprep.subr.mxu0 0.0
  %5090 = vmatpush1.xpose.msra.mxu0 0.0
  %5091 = vmatprep.subr.mxu0 0.0
  %5092 = vmatpush1.xpose.msra.mxu0 0.0
  %5093 = vmatprep.subr.mxu0 0.0
  %5094 = vmatpush1.xpose.msra.mxu0 0.0
  %5095 = vmatprep.subr.mxu0 0.0
  %5096 = vmatpush1.xpose.msra.mxu0 0.0
  %5097 = vmatprep.subr.mxu0 0.0
  %5098 = vmatpush1.xpose.msra.mxu0 %v5067
  %5099 = vmatprep.subr.mxu0 0.0
  %5100 = vmatpush1.xpose.msra.mxu0 %v5065
  %5101 = vmatprep.subr.mxu0 0.0
  %5102 = vmatpush2.xpose.msra.mxu0 0.0
  %5103 = vmatprep.subr.mxu0 0.0
  %5104 = vmatpush2.xpose.msra.mxu0 0.0
  %5105 = vmatprep.subr.mxu0 0.0
  %5106 = vmatpush2.xpose.msra.mxu0 0.0
  %5107 = vmatprep.subr.mxu0 0.0
  %5108 = vmatpush2.xpose.msra.mxu0 0.0
  %5109 = vmatprep.subr.mxu0 0.0
  %5110 = vmatpush2.xpose.msra.mxu0 0.0
  %5111 = vmatprep.subr.mxu0 0.0
  %5112 = vmatpush2.xpose.msra.mxu0 0.0
  %5113 = vmatprep.subr.mxu0 0.0
  %5114 = vmatpush2.xpose.msra.mxu0 0.0
  %5115 = vmatprep.subr.mxu0 0.0
  %5116 = vmatpush2.xpose.msra.mxu0 0.0
  %5117 = vmatprep.subr.mxu0 0.0
  %5118 = vmatpush2.xpose.msra.mxu0 0.0
  %5119 = vmatprep.subr.mxu0 0.0
  %5120 = vmatpush2.xpose.msra.mxu0 0.0
  %5121 = vmatprep.subr.mxu0 0.0
  %5122 = vmatpush2.xpose.msra.mxu0 0.0
  %5123 = vmatprep.subr.mxu0 0.0
  %5124 = vmatpush2.xpose.msra.mxu0 0.0
  %5125 = vmatprep.subr.mxu0 0.0
  %5126 = vmatpush2.xpose.msra.mxu0 0.0
  %5127 = vmatprep.subr.mxu0 0.0
  %5128 = vmatpush2.xpose.msra.mxu0 0.0
  %5129 = vmatprep.subr.mxu0 0.0
  %5130 = vmatpush2.xpose.msra.mxu0 0.0
  %5131 = vmatprep.subr.mxu0 0.0
  %5132 = vmatpush2.xpose.msra.mxu0 0.0
  %5133 = vmatprep.mubr.f32.mxu0 0.0
  %5134 = vmatmul.mubr.f32.gmra.mxu0 %v5061
  %v5135 = vpop.f32.mrf.mxu0
  %v5136 = vadd.f32 %v83, %v5135
  %v5137 = vpop.f32.mrf.mxu0
  %5138 = vmatprep.mubr.f32.mxu0 0.0
  %5139 = vmatmul.mubr.f32.gmra.mxu0 %v5063
  %v5140 = vpop.f32.mrf.mxu0
  %v5141 = vadd.f32 %v84, %v5140
  %v5142 = vpop.f32.mrf.mxu0
  %5143 = vdwg.mxu0
  %v5144 = vsel %vm4585, %v5136, -inf
  %5145 = vmax.xlane.f32.xlu0 %v5144
  %v5146 = vpop.xlane.xlu0 %5145
  %v5147 = vsel %vm4585, %v5141, -inf
  %5148 = vmax.xlane.f32.xlu0 %v5147
  %v5149 = vpop.xlane.xlu0 %5148
  %v5150 = vsub.f32 %v5136, %v5146
  %v5151 = vsub.f32 %v5141, %v5149
  %v5152 = vmul.f32 %v5150, 1.442695
  %v5153 = vpow.pop %v5152
  %v5154 = vmul.f32 %v5151, 1.442695
  %v5155 = vpow.pop %v5154
  %v5156 = vsel %vm4585, %v5153, 0.0
  %5157 = vadd.xlane.f32.xlu0 %v5156
  %v5158 = vpop.xlane.xlu0 %5157
  %v5159 = vsel %vm4585, %v5155, 0.0
  %5160 = vadd.xlane.f32.xlu0 %v5159
  %v5161 = vpop.xlane.xlu0 %5160
  %v5162 = vrcp.pop %v5158
  %v5163 = vrcp.pop %v5161
  %v5164 = vmul.f32 %v5153, %v5162
  %v5165 = vmul.f32 %v5155, %v5163
  %5166 = vrot.lane.b32.xlu0 %v4481, 112
  %v5167 = vpop.permute.xlu0 %5166
  %5168 = vrot.lane.b32.xlu0 %v4486, 112
  %v5169 = vpop.permute.xlu0 %5168
  %v5173 = vsel %vm4585, %v5164, 0
  %v5176 = vsel %vm4585, %v5165, 0
  %5178 = vmatprep.subr.mxu0 0.0
  %5179 = vmatpush1.msra.mxu0 0.0
  %5180 = vmatprep.subr.mxu0 0.0
  %5181 = vmatpush1.msra.mxu0 0.0
  %5182 = vmatprep.subr.mxu0 0.0
  %5183 = vmatpush1.msra.mxu0 0.0
  %5184 = vmatprep.subr.mxu0 0.0
  %5185 = vmatpush1.msra.mxu0 0.0
  %5186 = vmatprep.subr.mxu0 0.0
  %5187 = vmatpush1.msra.mxu0 0.0
  %5188 = vmatprep.subr.mxu0 0.0
  %5189 = vmatpush1.msra.mxu0 0.0
  %5190 = vmatprep.subr.mxu0 0.0
  %5191 = vmatpush1.msra.mxu0 0.0
  %5192 = vmatprep.subr.mxu0 0.0
  %5193 = vmatpush1.msra.mxu0 0.0
  %5194 = vmatprep.subr.mxu0 0.0
  %5195 = vmatpush1.msra.mxu0 0.0
  %5196 = vmatprep.subr.mxu0 0.0
  %5197 = vmatpush1.msra.mxu0 0.0
  %5198 = vmatprep.subr.mxu0 0.0
  %5199 = vmatpush1.msra.mxu0 0.0
  %5200 = vmatprep.subr.mxu0 0.0
  %5201 = vmatpush1.msra.mxu0 0.0
  %5202 = vmatprep.subr.mxu0 0.0
  %5203 = vmatpush1.msra.mxu0 0.0
  %5204 = vmatprep.subr.mxu0 0.0
  %5205 = vmatpush1.msra.mxu0 0.0
  %5206 = vmatprep.subr.mxu0 0.0
  %5207 = vmatpush1.msra.mxu0 %v5169
  %5208 = vmatprep.subr.mxu0 0.0
  %5209 = vmatpush1.msra.mxu0 %v5167
  %5210 = vmatprep.subr.mxu0 0.0
  %5211 = vmatpush2.msra.mxu0 0.0
  %5212 = vmatprep.subr.mxu0 0.0
  %5213 = vmatpush2.msra.mxu0 0.0
  %5214 = vmatprep.subr.mxu0 0.0
  %5215 = vmatpush2.msra.mxu0 0.0
  %5216 = vmatprep.subr.mxu0 0.0
  %5217 = vmatpush2.msra.mxu0 0.0
  %5218 = vmatprep.subr.mxu0 0.0
  %5219 = vmatpush2.msra.mxu0 0.0
  %5220 = vmatprep.subr.mxu0 0.0
  %5221 = vmatpush2.msra.mxu0 0.0
  %5222 = vmatprep.subr.mxu0 0.0
  %5223 = vmatpush2.msra.mxu0 0.0
  %5224 = vmatprep.subr.mxu0 0.0
  %5225 = vmatpush2.msra.mxu0 0.0
  %5226 = vmatprep.subr.mxu0 0.0
  %5227 = vmatpush2.msra.mxu0 0.0
  %5228 = vmatprep.subr.mxu0 0.0
  %5229 = vmatpush2.msra.mxu0 0.0
  %5230 = vmatprep.subr.mxu0 0.0
  %5231 = vmatpush2.msra.mxu0 0.0
  %5232 = vmatprep.subr.mxu0 0.0
  %5233 = vmatpush2.msra.mxu0 0.0
  %5234 = vmatprep.subr.mxu0 0.0
  %5235 = vmatpush2.msra.mxu0 0.0
  %5236 = vmatprep.subr.mxu0 0.0
  %5237 = vmatpush2.msra.mxu0 0.0
  %5238 = vmatprep.subr.mxu0 0.0
  %5239 = vmatpush2.msra.mxu0 0.0
  %5240 = vmatprep.subr.mxu0 0.0
  %5241 = vmatpush2.msra.mxu0 0.0
  %5242 = vmatprep.mubr.f32.mxu0 0.0
  %5243 = vmatmul.mubr.f32.gmra.mxu0 %v5173
  %v5244 = vpop.f32.mrf.mxu0
  %v5245 = vadd.f32 0.0, %v5244
  %v5246 = vpop.f32.mrf.mxu0
  %5247 = vmatprep.mubr.f32.mxu0 0.0
  %5248 = vmatmul.mubr.f32.gmra.mxu0 %v5176
  %v5249 = vpop.f32.mrf.mxu0
  %v5250 = vadd.f32 0.0, %v5249
  %v5251 = vpop.f32.mrf.mxu0
  %5252 = vdwg.mxu0
  %v5254 = vsel %vm539, %v5245, 0
  %v5257 = vsel %vm539, %v5250, 0
  %5259 = vmatprep.subr.mxu0 0.0
  %5260 = vmatpush1.msra.mxu0 0.0
  %5261 = vmatprep.subr.mxu0 0.0
  %5262 = vmatpush1.msra.mxu0 0.0
  %5263 = vmatprep.subr.mxu0 0.0
  %5264 = vmatpush1.msra.mxu0 0.0
  %5265 = vmatprep.subr.mxu0 0.0
  %5266 = vmatpush1.msra.mxu0 0.0
  %5267 = vmatprep.subr.mxu0 0.0
  %5268 = vmatpush1.msra.mxu0 0.0
  %5269 = vmatprep.subr.mxu0 0.0
  %5270 = vmatpush1.msra.mxu0 0.0
  %5271 = vmatprep.subr.mxu0 0.0
  %5272 = vmatpush1.msra.mxu0 0.0
  %5273 = vmatprep.subr.mxu0 0.0
  %5274 = vmatpush1.msra.mxu0 0.0
  %5275 = vmatprep.subr.mxu0 0.0
  %5276 = vmatpush1.msra.mxu0 0.0
  %5277 = vmatprep.subr.mxu0 0.0
  %5278 = vmatpush1.msra.mxu0 0.0
  %5279 = vmatprep.subr.mxu0 0.0
  %5280 = vmatpush1.msra.mxu0 0.0
  %5281 = vmatprep.subr.mxu0 0.0
  %5282 = vmatpush1.msra.mxu0 0.0
  %5283 = vmatprep.subr.mxu0 0.0
  %5284 = vmatpush1.msra.mxu0 0.0
  %5285 = vmatprep.subr.mxu0 0.0
  %5286 = vmatpush1.msra.mxu0 0.0
  %5287 = vmatprep.subr.mxu0 0.0
  %5288 = vmatpush1.msra.mxu0 0.0
  %5289 = vmatprep.subr.mxu0 0.0
  %5290 = vmatpush1.msra.mxu0 %v4492
  %5291 = vmatprep.subr.mxu0 0.0
  %5292 = vmatpush2.msra.mxu0 0.0
  %5293 = vmatprep.subr.mxu0 0.0
  %5294 = vmatpush2.msra.mxu0 0.0
  %5295 = vmatprep.subr.mxu0 0.0
  %5296 = vmatpush2.msra.mxu0 0.0
  %5297 = vmatprep.subr.mxu0 0.0
  %5298 = vmatpush2.msra.mxu0 0.0
  %5299 = vmatprep.subr.mxu0 0.0
  %5300 = vmatpush2.msra.mxu0 0.0
  %5301 = vmatprep.subr.mxu0 0.0
  %5302 = vmatpush2.msra.mxu0 0.0
  %5303 = vmatprep.subr.mxu0 0.0
  %5304 = vmatpush2.msra.mxu0 0.0
  %5305 = vmatprep.subr.mxu0 0.0
  %5306 = vmatpush2.msra.mxu0 0.0
  %5307 = vmatprep.subr.mxu0 0.0
  %5308 = vmatpush2.msra.mxu0 0.0
  %5309 = vmatprep.subr.mxu0 0.0
  %5310 = vmatpush2.msra.mxu0 0.0
  %5311 = vmatprep.subr.mxu0 0.0
  %5312 = vmatpush2.msra.mxu0 0.0
  %5313 = vmatprep.subr.mxu0 0.0
  %5314 = vmatpush2.msra.mxu0 0.0
  %5315 = vmatprep.subr.mxu0 0.0
  %5316 = vmatpush2.msra.mxu0 0.0
  %5317 = vmatprep.subr.mxu0 0.0
  %5318 = vmatpush2.msra.mxu0 0.0
  %5319 = vmatprep.subr.mxu0 0.0
  %5320 = vmatpush2.msra.mxu0 0.0
  %5321 = vmatprep.subr.mxu0 0.0
  %5322 = vmatpush2.msra.mxu0 0.0
  %5323 = vmatprep.mubr.f32.mxu0 0.0
  %5324 = vmatmul.mubr.f32.gmra.mxu0 %v5254
  %v5325 = vpop.f32.mrf.mxu0
  %v5326 = vadd.f32 0.0, %v5325
  %v5327 = vpop.f32.mrf.mxu0
  %5328 = vmatprep.mubr.f32.mxu0 0.0
  %5329 = vmatmul.mubr.f32.gmra.mxu0 %v5257
  %v5330 = vpop.f32.mrf.mxu0
  %v5331 = vadd.f32 0.0, %v5330
  %v5332 = vpop.f32.mrf.mxu0
  %5333 = vdwg.mxu0
  %v5334 = vadd.f32 %v5045, %v5326
  %v5335 = vadd.f32 %v5050, %v5331
  %5336 = vrot.lane.b32.xlu0 %v4387, 104
  %v5337 = vpop.permute.xlu0 %5336
  %5338 = vrot.lane.b32.xlu0 %v4392, 104
  %v5339 = vpop.permute.xlu0 %5338
  %5340 = vrot.lane.b32.xlu0 %v4387, 72
  %v5341 = vpop.permute.xlu0 %5340
  %5342 = vrot.lane.b32.xlu0 %v4392, 72
  %v5343 = vpop.permute.xlu0 %5342
  %v5344 = vsel %vm539, %v5337, 0
  %v5346 = vsel %vm539, %v5339, 0
  %v5348 = vsel %vm539, %v5341, 0
  %v5350 = vsel %vm539, %v5343, 0
  %5352 = vmatprep.subr.mxu0 0.0
  %5353 = vmatpush1.xpose.msra.mxu0 0.0
  %5354 = vmatprep.subr.mxu0 0.0
  %5355 = vmatpush1.xpose.msra.mxu0 0.0
  %5356 = vmatprep.subr.mxu0 0.0
  %5357 = vmatpush1.xpose.msra.mxu0 0.0
  %5358 = vmatprep.subr.mxu0 0.0
  %5359 = vmatpush1.xpose.msra.mxu0 0.0
  %5360 = vmatprep.subr.mxu0 0.0
  %5361 = vmatpush1.xpose.msra.mxu0 0.0
  %5362 = vmatprep.subr.mxu0 0.0
  %5363 = vmatpush1.xpose.msra.mxu0 0.0
  %5364 = vmatprep.subr.mxu0 0.0
  %5365 = vmatpush1.xpose.msra.mxu0 0.0
  %5366 = vmatprep.subr.mxu0 0.0
  %5367 = vmatpush1.xpose.msra.mxu0 0.0
  %5368 = vmatprep.subr.mxu0 0.0
  %5369 = vmatpush1.xpose.msra.mxu0 0.0
  %5370 = vmatprep.subr.mxu0 0.0
  %5371 = vmatpush1.xpose.msra.mxu0 0.0
  %5372 = vmatprep.subr.mxu0 0.0
  %5373 = vmatpush1.xpose.msra.mxu0 0.0
  %5374 = vmatprep.subr.mxu0 0.0
  %5375 = vmatpush1.xpose.msra.mxu0 0.0
  %5376 = vmatprep.subr.mxu0 0.0
  %5377 = vmatpush1.xpose.msra.mxu0 0.0
  %5378 = vmatprep.subr.mxu0 0.0
  %5379 = vmatpush1.xpose.msra.mxu0 0.0
  %5380 = vmatprep.subr.mxu0 0.0
  %5381 = vmatpush1.xpose.msra.mxu0 %v5350
  %5382 = vmatprep.subr.mxu0 0.0
  %5383 = vmatpush1.xpose.msra.mxu0 %v5348
  %5384 = vmatprep.subr.mxu0 0.0
  %5385 = vmatpush2.xpose.msra.mxu0 0.0
  %5386 = vmatprep.subr.mxu0 0.0
  %5387 = vmatpush2.xpose.msra.mxu0 0.0
  %5388 = vmatprep.subr.mxu0 0.0
  %5389 = vmatpush2.xpose.msra.mxu0 0.0
  %5390 = vmatprep.subr.mxu0 0.0
  %5391 = vmatpush2.xpose.msra.mxu0 0.0
  %5392 = vmatprep.subr.mxu0 0.0
  %5393 = vmatpush2.xpose.msra.mxu0 0.0
  %5394 = vmatprep.subr.mxu0 0.0
  %5395 = vmatpush2.xpose.msra.mxu0 0.0
  %5396 = vmatprep.subr.mxu0 0.0
  %5397 = vmatpush2.xpose.msra.mxu0 0.0
  %5398 = vmatprep.subr.mxu0 0.0
  %5399 = vmatpush2.xpose.msra.mxu0 0.0
  %5400 = vmatprep.subr.mxu0 0.0
  %5401 = vmatpush2.xpose.msra.mxu0 0.0
  %5402 = vmatprep.subr.mxu0 0.0
  %5403 = vmatpush2.xpose.msra.mxu0 0.0
  %5404 = vmatprep.subr.mxu0 0.0
  %5405 = vmatpush2.xpose.msra.mxu0 0.0
  %5406 = vmatprep.subr.mxu0 0.0
  %5407 = vmatpush2.xpose.msra.mxu0 0.0
  %5408 = vmatprep.subr.mxu0 0.0
  %5409 = vmatpush2.xpose.msra.mxu0 0.0
  %5410 = vmatprep.subr.mxu0 0.0
  %5411 = vmatpush2.xpose.msra.mxu0 0.0
  %5412 = vmatprep.subr.mxu0 0.0
  %5413 = vmatpush2.xpose.msra.mxu0 0.0
  %5414 = vmatprep.subr.mxu0 0.0
  %5415 = vmatpush2.xpose.msra.mxu0 0.0
  %5416 = vmatprep.mubr.f32.mxu0 0.0
  %5417 = vmatmul.mubr.f32.gmra.mxu0 %v5344
  %v5418 = vpop.f32.mrf.mxu0
  %v5419 = vadd.f32 %v83, %v5418
  %v5420 = vpop.f32.mrf.mxu0
  %5421 = vmatprep.mubr.f32.mxu0 0.0
  %5422 = vmatmul.mubr.f32.gmra.mxu0 %v5346
  %v5423 = vpop.f32.mrf.mxu0
  %v5424 = vadd.f32 %v84, %v5423
  %v5425 = vpop.f32.mrf.mxu0
  %5426 = vdwg.mxu0
  %v5427 = vsel %vm4585, %v5419, -inf
  %5428 = vmax.xlane.f32.xlu0 %v5427
  %v5429 = vpop.xlane.xlu0 %5428
  %v5430 = vsel %vm4585, %v5424, -inf
  %5431 = vmax.xlane.f32.xlu0 %v5430
  %v5432 = vpop.xlane.xlu0 %5431
  %v5433 = vsub.f32 %v5419, %v5429
  %v5434 = vsub.f32 %v5424, %v5432
  %v5435 = vmul.f32 %v5433, 1.442695
  %v5436 = vpow.pop %v5435
  %v5437 = vmul.f32 %v5434, 1.442695
  %v5438 = vpow.pop %v5437
  %v5439 = vsel %vm4585, %v5436, 0.0
  %5440 = vadd.xlane.f32.xlu0 %v5439
  %v5441 = vpop.xlane.xlu0 %5440
  %v5442 = vsel %vm4585, %v5438, 0.0
  %5443 = vadd.xlane.f32.xlu0 %v5442
  %v5444 = vpop.xlane.xlu0 %5443
  %v5445 = vrcp.pop %v5441
  %v5446 = vrcp.pop %v5444
  %v5447 = vmul.f32 %v5436, %v5445
  %v5448 = vmul.f32 %v5438, %v5446
  %5449 = vrot.lane.b32.xlu0 %v4481, 104
  %v5450 = vpop.permute.xlu0 %5449
  %5451 = vrot.lane.b32.xlu0 %v4486, 104
  %v5452 = vpop.permute.xlu0 %5451
  %v5456 = vsel %vm4585, %v5447, 0
  %v5459 = vsel %vm4585, %v5448, 0
  %5461 = vmatprep.subr.mxu0 0.0
  %5462 = vmatpush1.msra.mxu0 0.0
  %5463 = vmatprep.subr.mxu0 0.0
  %5464 = vmatpush1.msra.mxu0 0.0
  %5465 = vmatprep.subr.mxu0 0.0
  %5466 = vmatpush1.msra.mxu0 0.0
  %5467 = vmatprep.subr.mxu0 0.0
  %5468 = vmatpush1.msra.mxu0 0.0
  %5469 = vmatprep.subr.mxu0 0.0
  %5470 = vmatpush1.msra.mxu0 0.0
  %5471 = vmatprep.subr.mxu0 0.0
  %5472 = vmatpush1.msra.mxu0 0.0
  %5473 = vmatprep.subr.mxu0 0.0
  %5474 = vmatpush1.msra.mxu0 0.0
  %5475 = vmatprep.subr.mxu0 0.0
  %5476 = vmatpush1.msra.mxu0 0.0
  %5477 = vmatprep.subr.mxu0 0.0
  %5478 = vmatpush1.msra.mxu0 0.0
  %5479 = vmatprep.subr.mxu0 0.0
  %5480 = vmatpush1.msra.mxu0 0.0
  %5481 = vmatprep.subr.mxu0 0.0
  %5482 = vmatpush1.msra.mxu0 0.0
  %5483 = vmatprep.subr.mxu0 0.0
  %5484 = vmatpush1.msra.mxu0 0.0
  %5485 = vmatprep.subr.mxu0 0.0
  %5486 = vmatpush1.msra.mxu0 0.0
  %5487 = vmatprep.subr.mxu0 0.0
  %5488 = vmatpush1.msra.mxu0 0.0
  %5489 = vmatprep.subr.mxu0 0.0
  %5490 = vmatpush1.msra.mxu0 %v5452
  %5491 = vmatprep.subr.mxu0 0.0
  %5492 = vmatpush1.msra.mxu0 %v5450
  %5493 = vmatprep.subr.mxu0 0.0
  %5494 = vmatpush2.msra.mxu0 0.0
  %5495 = vmatprep.subr.mxu0 0.0
  %5496 = vmatpush2.msra.mxu0 0.0
  %5497 = vmatprep.subr.mxu0 0.0
  %5498 = vmatpush2.msra.mxu0 0.0
  %5499 = vmatprep.subr.mxu0 0.0
  %5500 = vmatpush2.msra.mxu0 0.0
  %5501 = vmatprep.subr.mxu0 0.0
  %5502 = vmatpush2.msra.mxu0 0.0
  %5503 = vmatprep.subr.mxu0 0.0
  %5504 = vmatpush2.msra.mxu0 0.0
  %5505 = vmatprep.subr.mxu0 0.0
  %5506 = vmatpush2.msra.mxu0 0.0
  %5507 = vmatprep.subr.mxu0 0.0
  %5508 = vmatpush2.msra.mxu0 0.0
  %5509 = vmatprep.subr.mxu0 0.0
  %5510 = vmatpush2.msra.mxu0 0.0
  %5511 = vmatprep.subr.mxu0 0.0
  %5512 = vmatpush2.msra.mxu0 0.0
  %5513 = vmatprep.subr.mxu0 0.0
  %5514 = vmatpush2.msra.mxu0 0.0
  %5515 = vmatprep.subr.mxu0 0.0
  %5516 = vmatpush2.msra.mxu0 0.0
  %5517 = vmatprep.subr.mxu0 0.0
  %5518 = vmatpush2.msra.mxu0 0.0
  %5519 = vmatprep.subr.mxu0 0.0
  %5520 = vmatpush2.msra.mxu0 0.0
  %5521 = vmatprep.subr.mxu0 0.0
  %5522 = vmatpush2.msra.mxu0 0.0
  %5523 = vmatprep.subr.mxu0 0.0
  %5524 = vmatpush2.msra.mxu0 0.0
  %5525 = vmatprep.mubr.f32.mxu0 0.0
  %5526 = vmatmul.mubr.f32.gmra.mxu0 %v5456
  %v5527 = vpop.f32.mrf.mxu0
  %v5528 = vadd.f32 0.0, %v5527
  %v5529 = vpop.f32.mrf.mxu0
  %5530 = vmatprep.mubr.f32.mxu0 0.0
  %5531 = vmatmul.mubr.f32.gmra.mxu0 %v5459
  %v5532 = vpop.f32.mrf.mxu0
  %v5533 = vadd.f32 0.0, %v5532
  %v5534 = vpop.f32.mrf.mxu0
  %5535 = vdwg.mxu0
  %v5537 = vsel %vm539, %v5528, 0
  %v5540 = vsel %vm539, %v5533, 0
  %5542 = vmatprep.subr.mxu0 0.0
  %5543 = vmatpush1.msra.mxu0 0.0
  %5544 = vmatprep.subr.mxu0 0.0
  %5545 = vmatpush1.msra.mxu0 0.0
  %5546 = vmatprep.subr.mxu0 0.0
  %5547 = vmatpush1.msra.mxu0 0.0
  %5548 = vmatprep.subr.mxu0 0.0
  %5549 = vmatpush1.msra.mxu0 0.0
  %5550 = vmatprep.subr.mxu0 0.0
  %5551 = vmatpush1.msra.mxu0 0.0
  %5552 = vmatprep.subr.mxu0 0.0
  %5553 = vmatpush1.msra.mxu0 0.0
  %5554 = vmatprep.subr.mxu0 0.0
  %5555 = vmatpush1.msra.mxu0 0.0
  %5556 = vmatprep.subr.mxu0 0.0
  %5557 = vmatpush1.msra.mxu0 0.0
  %5558 = vmatprep.subr.mxu0 0.0
  %5559 = vmatpush1.msra.mxu0 0.0
  %5560 = vmatprep.subr.mxu0 0.0
  %5561 = vmatpush1.msra.mxu0 0.0
  %5562 = vmatprep.subr.mxu0 0.0
  %5563 = vmatpush1.msra.mxu0 0.0
  %5564 = vmatprep.subr.mxu0 0.0
  %5565 = vmatpush1.msra.mxu0 0.0
  %5566 = vmatprep.subr.mxu0 0.0
  %5567 = vmatpush1.msra.mxu0 0.0
  %5568 = vmatprep.subr.mxu0 0.0
  %5569 = vmatpush1.msra.mxu0 0.0
  %5570 = vmatprep.subr.mxu0 0.0
  %5571 = vmatpush1.msra.mxu0 0.0
  %5572 = vmatprep.subr.mxu0 0.0
  %5573 = vmatpush1.msra.mxu0 %v4493
  %5574 = vmatprep.subr.mxu0 0.0
  %5575 = vmatpush2.msra.mxu0 0.0
  %5576 = vmatprep.subr.mxu0 0.0
  %5577 = vmatpush2.msra.mxu0 0.0
  %5578 = vmatprep.subr.mxu0 0.0
  %5579 = vmatpush2.msra.mxu0 0.0
  %5580 = vmatprep.subr.mxu0 0.0
  %5581 = vmatpush2.msra.mxu0 0.0
  %5582 = vmatprep.subr.mxu0 0.0
  %5583 = vmatpush2.msra.mxu0 0.0
  %5584 = vmatprep.subr.mxu0 0.0
  %5585 = vmatpush2.msra.mxu0 0.0
  %5586 = vmatprep.subr.mxu0 0.0
  %5587 = vmatpush2.msra.mxu0 0.0
  %5588 = vmatprep.subr.mxu0 0.0
  %5589 = vmatpush2.msra.mxu0 0.0
  %5590 = vmatprep.subr.mxu0 0.0
  %5591 = vmatpush2.msra.mxu0 0.0
  %5592 = vmatprep.subr.mxu0 0.0
  %5593 = vmatpush2.msra.mxu0 0.0
  %5594 = vmatprep.subr.mxu0 0.0
  %5595 = vmatpush2.msra.mxu0 0.0
  %5596 = vmatprep.subr.mxu0 0.0
  %5597 = vmatpush2.msra.mxu0 0.0
  %5598 = vmatprep.subr.mxu0 0.0
  %5599 = vmatpush2.msra.mxu0 0.0
  %5600 = vmatprep.subr.mxu0 0.0
  %5601 = vmatpush2.msra.mxu0 0.0
  %5602 = vmatprep.subr.mxu0 0.0
  %5603 = vmatpush2.msra.mxu0 0.0
  %5604 = vmatprep.subr.mxu0 0.0
  %5605 = vmatpush2.msra.mxu0 0.0
  %5606 = vmatprep.mubr.f32.mxu0 0.0
  %5607 = vmatmul.mubr.f32.gmra.mxu0 %v5537
  %v5608 = vpop.f32.mrf.mxu0
  %v5609 = vadd.f32 0.0, %v5608
  %v5610 = vpop.f32.mrf.mxu0
  %5611 = vmatprep.mubr.f32.mxu0 0.0
  %5612 = vmatmul.mubr.f32.gmra.mxu0 %v5540
  %v5613 = vpop.f32.mrf.mxu0
  %v5614 = vadd.f32 0.0, %v5613
  %v5615 = vpop.f32.mrf.mxu0
  %5616 = vdwg.mxu0
  %v5617 = vadd.f32 %v5334, %v5609
  %v5618 = vadd.f32 %v5335, %v5614
  %v5620 = vlaneseq
  %v5621 = vshrl.u32 %v5620, 7
  %v5622 = vsub.s32 0, %v5621
  %v5623 = vrot.slane %v4495, %v5622
  %v5625 = vadd.f32 %v5617, %v5623
  %v5626 = vadd.f32 %v5618, %v5623
  %v5627 = vadd.f32 %v247, %v5625
  %v5628 = vadd.f32 %v252, %v5626
  %s5629 = scalar_lea.vmem %s6, 24
  %v5630 = vld [vmem:[%s5629] sm:$0x1]
  %s5631 = scalar_lea.vmem %s6, 25
  %v5632 = vld [vmem:[%s5631] sm:$0x1]
  %v5633 = vsel %vm100, %v5627, 0.0
  %5634 = vadd.xlane.f32.xlu0 %v5633
  %v5635 = vpop.xlane.xlu0 %5634
  %v5636 = vsel %vm100, %v5628, 0.0
  %5637 = vadd.xlane.f32.xlu0 %v5636
  %v5638 = vpop.xlane.xlu0 %5637
  %v5639 = vmul.f32 %v5635, %v269
  %v5640 = vmul.f32 %v5638, %v269
  %v5641 = vsub.f32 %v5627, %v5639
  %v5642 = vsub.f32 %v5628, %v5640
  %v5643 = vmul.f32 %v5641, %v5641
  %v5644 = vmul.f32 %v5642, %v5642
  %v5645 = vsel %vm100, %v5643, 0.0
  %5646 = vadd.xlane.f32.xlu0 %v5645
  %v5647 = vpop.xlane.xlu0 %5646
  %v5648 = vsel %vm100, %v5644, 0.0
  %5649 = vadd.xlane.f32.xlu0 %v5648
  %v5650 = vpop.xlane.xlu0 %5649
  %v5651 = vmul.f32 %v5647, %v269
  %v5652 = vmul.f32 %v5650, %v269
  %v5653 = vadd.f32 %v5651, 1e-05
  %v5654 = vadd.f32 %v5652, 1e-05
  %v5655 = vrsqrt.pop %v5653
  %v5656 = vrsqrt.pop %v5654
  %v5657 = vmul.f32 %v5641, %v5655
  %v5658 = vmul.f32 %v5642, %v5656
  %v5660 = vlaneseq
  %v5661 = vshrl.u32 %v5660, 7
  %v5662 = vsub.s32 0, %v5661
  %v5663 = vrot.slane %v5630, %v5662
  %v5665 = vmul.f32 %v5657, %v5663
  %v5666 = vmul.f32 %v5658, %v5663
  %v5668 = vlaneseq
  %v5669 = vshrl.u32 %v5668, 7
  %v5670 = vsub.s32 0, %v5669
  %v5671 = vrot.slane %v5632, %v5670
  %v5673 = vadd.f32 %v5665, %v5671
  %v5674 = vadd.f32 %v5666, %v5671
  %v5675 = vadd.f32 %v5673, %v43
  %v5676 = vadd.f32 %v5674, %v44
  %s5677 = scalar_lea.vmem %s5, 256
  %v5678 = vld [vmem:[%s5677] sm:$0xff]
  %v5679 = vld [vmem:[%s5677 + $0x8] sm:$0xff]
  %v5680 = vld [vmem:[%s5677 + $0x10] sm:$0xff]
  %v5681 = vld [vmem:[%s5677 + $0x18] sm:$0xff]
  %s5682 = scalar_lea.vmem %s6, 20
  %v5683 = vld [vmem:[%s5682] sm:$0x1]
  %v5685 = vlaneseq
  %v5686 = vshrl.u32 %v5685, 7
  %v5687 = vsub.s32 0, %v5686
  %v5688 = vrot.slane %v5683, %v5687
  %v5691 = vsel %vm100, %v5675, 0
  %v5694 = vsel %vm100, %v5676, 0
  %5696 = vmatprep.subr.mxu0 0.0
  %5697 = vmatpush1.msra.mxu0 0.0
  %5698 = vmatprep.subr.mxu0 0.0
  %5699 = vmatpush1.msra.mxu0 0.0
  %5700 = vmatprep.subr.mxu0 0.0
  %5701 = vmatpush1.msra.mxu0 0.0
  %5702 = vmatprep.subr.mxu0 0.0
  %5703 = vmatpush1.msra.mxu0 0.0
  %5704 = vmatprep.subr.mxu0 0.0
  %5705 = vmatpush1.msra.mxu0 0.0
  %5706 = vmatprep.subr.mxu0 0.0
  %5707 = vmatpush1.msra.mxu0 0.0
  %5708 = vmatprep.subr.mxu0 0.0
  %5709 = vmatpush1.msra.mxu0 0.0
  %5710 = vmatprep.subr.mxu0 0.0
  %5711 = vmatpush1.msra.mxu0 0.0
  %5712 = vmatprep.subr.mxu0 0.0
  %5713 = vmatpush1.msra.mxu0 0.0
  %5714 = vmatprep.subr.mxu0 0.0
  %5715 = vmatpush1.msra.mxu0 0.0
  %5716 = vmatprep.subr.mxu0 0.0
  %5717 = vmatpush1.msra.mxu0 0.0
  %5718 = vmatprep.subr.mxu0 0.0
  %5719 = vmatpush1.msra.mxu0 0.0
  %5720 = vmatprep.subr.mxu0 0.0
  %5721 = vmatpush1.msra.mxu0 %v5681
  %5722 = vmatprep.subr.mxu0 0.0
  %5723 = vmatpush1.msra.mxu0 %v5680
  %5724 = vmatprep.subr.mxu0 0.0
  %5725 = vmatpush1.msra.mxu0 %v5679
  %5726 = vmatprep.subr.mxu0 0.0
  %5727 = vmatpush1.msra.mxu0 %v5678
  %5728 = vmatprep.subr.mxu0 0.0
  %5729 = vmatpush2.msra.mxu0 0.0
  %5730 = vmatprep.subr.mxu0 0.0
  %5731 = vmatpush2.msra.mxu0 0.0
  %5732 = vmatprep.subr.mxu0 0.0
  %5733 = vmatpush2.msra.mxu0 0.0
  %5734 = vmatprep.subr.mxu0 0.0
  %5735 = vmatpush2.msra.mxu0 0.0
  %5736 = vmatprep.subr.mxu0 0.0
  %5737 = vmatpush2.msra.mxu0 0.0
  %5738 = vmatprep.subr.mxu0 0.0
  %5739 = vmatpush2.msra.mxu0 0.0
  %5740 = vmatprep.subr.mxu0 0.0
  %5741 = vmatpush2.msra.mxu0 0.0
  %5742 = vmatprep.subr.mxu0 0.0
  %5743 = vmatpush2.msra.mxu0 0.0
  %5744 = vmatprep.subr.mxu0 0.0
  %5745 = vmatpush2.msra.mxu0 0.0
  %5746 = vmatprep.subr.mxu0 0.0
  %5747 = vmatpush2.msra.mxu0 0.0
  %5748 = vmatprep.subr.mxu0 0.0
  %5749 = vmatpush2.msra.mxu0 0.0
  %5750 = vmatprep.subr.mxu0 0.0
  %5751 = vmatpush2.msra.mxu0 0.0
  %5752 = vmatprep.subr.mxu0 0.0
  %5753 = vmatpush2.msra.mxu0 0.0
  %5754 = vmatprep.subr.mxu0 0.0
  %5755 = vmatpush2.msra.mxu0 0.0
  %5756 = vmatprep.subr.mxu0 0.0
  %5757 = vmatpush2.msra.mxu0 0.0
  %5758 = vmatprep.subr.mxu0 0.0
  %5759 = vmatpush2.msra.mxu0 0.0
  %5760 = vmatprep.mubr.f32.mxu0 0.0
  %5761 = vmatmul.mubr.f32.gmra.mxu0 %v5691
  %v5762 = vpop.f32.mrf.mxu0
  %v5763 = vadd.f32 %v5688, %v5762
  %v5764 = vpop.f32.mrf.mxu0
  %5765 = vmatprep.mubr.f32.mxu0 0.0
  %5766 = vmatmul.mubr.f32.gmra.mxu0 %v5694
  %v5767 = vpop.f32.mrf.mxu0
  %v5768 = vadd.f32 %v5688, %v5767
  %v5769 = vpop.f32.mrf.mxu0
  %5770 = vdwg.mxu0
  %s5771 = scalar_lea.vmem %s5, 288
  %v5772 = vld [vmem:[%s5771] sm:$0xff]
  %v5773 = vld [vmem:[%s5771 + $0x8] sm:$0xff]
  %v5774 = vld [vmem:[%s5771 + $0x10] sm:$0xff]
  %v5775 = vld [vmem:[%s5771 + $0x18] sm:$0xff]
  %s5776 = scalar_lea.vmem %s6, 21
  %v5777 = vld [vmem:[%s5776] sm:$0x1]
  %v5779 = vsel %vm539, %v5763, 0
  %v5782 = vsel %vm539, %v5768, 0
  %v5785 = vsel %vm539, %v4138, 0
  %v5788 = vsel %vm539, %v4143, 0
  %v5791 = vsel %vm539, %v4148, 0
  %5793 = vmatprep.subr.mxu0 0.0
  %5794 = vmatpush1.xpose.msra.mxu0 0.0
  %5795 = vmatprep.subr.mxu0 0.0
  %5796 = vmatpush1.xpose.msra.mxu0 0.0
  %5797 = vmatprep.subr.mxu0 0.0
  %5798 = vmatpush1.xpose.msra.mxu0 0.0
  %5799 = vmatprep.subr.mxu0 0.0
  %5800 = vmatpush1.xpose.msra.mxu0 0.0
  %5801 = vmatprep.subr.mxu0 0.0
  %5802 = vmatpush1.xpose.msra.mxu0 0.0
  %5803 = vmatprep.subr.mxu0 0.0
  %5804 = vmatpush1.xpose.msra.mxu0 0.0
  %5805 = vmatprep.subr.mxu0 0.0
  %5806 = vmatpush1.xpose.msra.mxu0 0.0
  %5807 = vmatprep.subr.mxu0 0.0
  %5808 = vmatpush1.xpose.msra.mxu0 0.0
  %5809 = vmatprep.subr.mxu0 0.0
  %5810 = vmatpush1.xpose.msra.mxu0 0.0
  %5811 = vmatprep.subr.mxu0 0.0
  %5812 = vmatpush1.xpose.msra.mxu0 0.0
  %5813 = vmatprep.subr.mxu0 0.0
  %5814 = vmatpush1.xpose.msra.mxu0 0.0
  %5815 = vmatprep.subr.mxu0 0.0
  %5816 = vmatpush1.xpose.msra.mxu0 0.0
  %5817 = vmatprep.subr.mxu0 0.0
  %5818 = vmatpush1.xpose.msra.mxu0 0.0
  %5819 = vmatprep.subr.mxu0 0.0
  %5820 = vmatpush1.xpose.msra.mxu0 %v5791
  %5821 = vmatprep.subr.mxu0 0.0
  %5822 = vmatpush1.xpose.msra.mxu0 %v5788
  %5823 = vmatprep.subr.mxu0 0.0
  %5824 = vmatpush1.xpose.msra.mxu0 %v5785
  %5825 = vmatprep.subr.mxu0 0.0
  %5826 = vmatpush2.xpose.msra.mxu0 0.0
  %5827 = vmatprep.subr.mxu0 0.0
  %5828 = vmatpush2.xpose.msra.mxu0 0.0
  %5829 = vmatprep.subr.mxu0 0.0
  %5830 = vmatpush2.xpose.msra.mxu0 0.0
  %5831 = vmatprep.subr.mxu0 0.0
  %5832 = vmatpush2.xpose.msra.mxu0 0.0
  %5833 = vmatprep.subr.mxu0 0.0
  %5834 = vmatpush2.xpose.msra.mxu0 0.0
  %5835 = vmatprep.subr.mxu0 0.0
  %5836 = vmatpush2.xpose.msra.mxu0 0.0
  %5837 = vmatprep.subr.mxu0 0.0
  %5838 = vmatpush2.xpose.msra.mxu0 0.0
  %5839 = vmatprep.subr.mxu0 0.0
  %5840 = vmatpush2.xpose.msra.mxu0 0.0
  %5841 = vmatprep.subr.mxu0 0.0
  %5842 = vmatpush2.xpose.msra.mxu0 0.0
  %5843 = vmatprep.subr.mxu0 0.0
  %5844 = vmatpush2.xpose.msra.mxu0 0.0
  %5845 = vmatprep.subr.mxu0 0.0
  %5846 = vmatpush2.xpose.msra.mxu0 0.0
  %5847 = vmatprep.subr.mxu0 0.0
  %5848 = vmatpush2.xpose.msra.mxu0 0.0
  %5849 = vmatprep.subr.mxu0 0.0
  %5850 = vmatpush2.xpose.msra.mxu0 0.0
  %5851 = vmatprep.subr.mxu0 0.0
  %5852 = vmatpush2.xpose.msra.mxu0 0.0
  %5853 = vmatprep.subr.mxu0 0.0
  %5854 = vmatpush2.xpose.msra.mxu0 0.0
  %5855 = vmatprep.subr.mxu0 0.0
  %5856 = vmatpush2.xpose.msra.mxu0 0.0
  %5857 = vmatprep.mubr.f32.mxu0 0.0
  %5858 = vmatmul.mubr.f32.gmra.mxu0 %v5779
  %v5859 = vpop.f32.mrf.mxu0
  %v5860 = vadd.f32 %v87, %v5859
  %v5861 = vpop.f32.mrf.mxu0
  %5862 = vmatprep.mubr.f32.mxu0 0.0
  %5863 = vmatmul.mubr.f32.gmra.mxu0 %v5782
  %v5864 = vpop.f32.mrf.mxu0
  %v5865 = vadd.f32 %v88, %v5864
  %v5866 = vpop.f32.mrf.mxu0
  %5867 = vdwg.mxu0
  %v5868 = vsel %vm632, %v5860, -inf
  %5869 = vmax.xlane.f32.xlu0 %v5868
  %v5870 = vpop.xlane.xlu0 %5869
  %v5871 = vsel %vm632, %v5865, -inf
  %5872 = vmax.xlane.f32.xlu0 %v5871
  %v5873 = vpop.xlane.xlu0 %5872
  %v5874 = vsub.f32 %v5860, %v5870
  %v5875 = vsub.f32 %v5865, %v5873
  %v5876 = vmul.f32 %v5874, 1.442695
  %v5877 = vpow.pop %v5876
  %v5878 = vmul.f32 %v5875, 1.442695
  %v5879 = vpow.pop %v5878
  %v5880 = vsel %vm632, %v5877, 0.0
  %5881 = vadd.xlane.f32.xlu0 %v5880
  %v5882 = vpop.xlane.xlu0 %5881
  %v5883 = vsel %vm632, %v5879, 0.0
  %5884 = vadd.xlane.f32.xlu0 %v5883
  %v5885 = vpop.xlane.xlu0 %5884
  %v5886 = vrcp.pop %v5882
  %v5887 = vrcp.pop %v5885
  %v5888 = vmul.f32 %v5877, %v5886
  %v5889 = vmul.f32 %v5879, %v5887
  %v5891 = vsel %vm632, %v5888, 0
  %v5894 = vsel %vm632, %v5889, 0
  %v5897 = vsel %vm676, %v4250, 0
  %5899 = vmatprep.subr.mxu0 0.0
  %5900 = vmatpush1.msra.mxu0 0.0
  %5901 = vmatprep.subr.mxu0 0.0
  %5902 = vmatpush1.msra.mxu0 0.0
  %5903 = vmatprep.subr.mxu0 0.0
  %5904 = vmatpush1.msra.mxu0 0.0
  %5905 = vmatprep.subr.mxu0 0.0
  %5906 = vmatpush1.msra.mxu0 0.0
  %5907 = vmatprep.subr.mxu0 0.0
  %5908 = vmatpush1.msra.mxu0 0.0
  %5909 = vmatprep.subr.mxu0 0.0
  %5910 = vmatpush1.msra.mxu0 0.0
  %5911 = vmatprep.subr.mxu0 0.0
  %5912 = vmatpush1.msra.mxu0 0.0
  %5913 = vmatprep.subr.mxu0 0.0
  %5914 = vmatpush1.msra.mxu0 0.0
  %5915 = vmatprep.subr.mxu0 0.0
  %5916 = vmatpush1.msra.mxu0 0.0
  %5917 = vmatprep.subr.mxu0 0.0
  %5918 = vmatpush1.msra.mxu0 0.0
  %5919 = vmatprep.subr.mxu0 0.0
  %5920 = vmatpush1.msra.mxu0 0.0
  %5921 = vmatprep.subr.mxu0 0.0
  %5922 = vmatpush1.msra.mxu0 0.0
  %5923 = vmatprep.subr.mxu0 0.0
  %5924 = vmatpush1.msra.mxu0 0.0
  %5925 = vmatprep.subr.mxu0 0.0
  %5926 = vmatpush1.msra.mxu0 %v5897
  %5927 = vmatprep.subr.mxu0 0.0
  %5928 = vmatpush1.msra.mxu0 %v4245
  %5929 = vmatprep.subr.mxu0 0.0
  %5930 = vmatpush1.msra.mxu0 %v4240
  %5931 = vmatprep.subr.mxu0 0.0
  %5932 = vmatpush2.msra.mxu0 0.0
  %5933 = vmatprep.subr.mxu0 0.0
  %5934 = vmatpush2.msra.mxu0 0.0
  %5935 = vmatprep.subr.mxu0 0.0
  %5936 = vmatpush2.msra.mxu0 0.0
  %5937 = vmatprep.subr.mxu0 0.0
  %5938 = vmatpush2.msra.mxu0 0.0
  %5939 = vmatprep.subr.mxu0 0.0
  %5940 = vmatpush2.msra.mxu0 0.0
  %5941 = vmatprep.subr.mxu0 0.0
  %5942 = vmatpush2.msra.mxu0 0.0
  %5943 = vmatprep.subr.mxu0 0.0
  %5944 = vmatpush2.msra.mxu0 0.0
  %5945 = vmatprep.subr.mxu0 0.0
  %5946 = vmatpush2.msra.mxu0 0.0
  %5947 = vmatprep.subr.mxu0 0.0
  %5948 = vmatpush2.msra.mxu0 0.0
  %5949 = vmatprep.subr.mxu0 0.0
  %5950 = vmatpush2.msra.mxu0 0.0
  %5951 = vmatprep.subr.mxu0 0.0
  %5952 = vmatpush2.msra.mxu0 0.0
  %5953 = vmatprep.subr.mxu0 0.0
  %5954 = vmatpush2.msra.mxu0 0.0
  %5955 = vmatprep.subr.mxu0 0.0
  %5956 = vmatpush2.msra.mxu0 0.0
  %5957 = vmatprep.subr.mxu0 0.0
  %5958 = vmatpush2.msra.mxu0 0.0
  %5959 = vmatprep.subr.mxu0 0.0
  %5960 = vmatpush2.msra.mxu0 0.0
  %5961 = vmatprep.subr.mxu0 0.0
  %5962 = vmatpush2.msra.mxu0 0.0
  %5963 = vmatprep.mubr.f32.mxu0 0.0
  %5964 = vmatmul.mubr.f32.gmra.mxu0 %v5891
  %v5965 = vpop.f32.mrf.mxu0
  %v5966 = vadd.f32 0.0, %v5965
  %v5967 = vpop.f32.mrf.mxu0
  %5968 = vmatprep.mubr.f32.mxu0 0.0
  %5969 = vmatmul.mubr.f32.gmra.mxu0 %v5894
  %v5970 = vpop.f32.mrf.mxu0
  %v5971 = vadd.f32 0.0, %v5970
  %v5972 = vpop.f32.mrf.mxu0
  %5973 = vdwg.mxu0
  %5974 = vrot.lane.b32.xlu0 %v5763, 120
  %v5975 = vpop.permute.xlu0 %5974
  %5976 = vrot.lane.b32.xlu0 %v5768, 120
  %v5977 = vpop.permute.xlu0 %5976
  %5978 = vrot.lane.b32.xlu0 %v4138, 120
  %v5979 = vpop.permute.xlu0 %5978
  %5980 = vrot.lane.b32.xlu0 %v4143, 120
  %v5981 = vpop.permute.xlu0 %5980
  %5982 = vrot.lane.b32.xlu0 %v4148, 120
  %v5983 = vpop.permute.xlu0 %5982
  %v5984 = vsel %vm539, %v5975, 0
  %v5986 = vsel %vm539, %v5977, 0
  %v5988 = vsel %vm539, %v5979, 0
  %v5990 = vsel %vm539, %v5981, 0
  %v5992 = vsel %vm539, %v5983, 0
  %5994 = vmatprep.subr.mxu0 0.0
  %5995 = vmatpush1.xpose.msra.mxu0 0.0
  %5996 = vmatprep.subr.mxu0 0.0
  %5997 = vmatpush1.xpose.msra.mxu0 0.0
  %5998 = vmatprep.subr.mxu0 0.0
  %5999 = vmatpush1.xpose.msra.mxu0 0.0
  %6000 = vmatprep.subr.mxu0 0.0
  %6001 = vmatpush1.xpose.msra.mxu0 0.0
  %6002 = vmatprep.subr.mxu0 0.0
  %6003 = vmatpush1.xpose.msra.mxu0 0.0
  %6004 = vmatprep.subr.mxu0 0.0
  %6005 = vmatpush1.xpose.msra.mxu0 0.0
  %6006 = vmatprep.subr.mxu0 0.0
  %6007 = vmatpush1.xpose.msra.mxu0 0.0
  %6008 = vmatprep.subr.mxu0 0.0
  %6009 = vmatpush1.xpose.msra.mxu0 0.0
  %6010 = vmatprep.subr.mxu0 0.0
  %6011 = vmatpush1.xpose.msra.mxu0 0.0
  %6012 = vmatprep.subr.mxu0 0.0
  %6013 = vmatpush1.xpose.msra.mxu0 0.0
  %6014 = vmatprep.subr.mxu0 0.0
  %6015 = vmatpush1.xpose.msra.mxu0 0.0
  %6016 = vmatprep.subr.mxu0 0.0
  %6017 = vmatpush1.xpose.msra.mxu0 0.0
  %6018 = vmatprep.subr.mxu0 0.0
  %6019 = vmatpush1.xpose.msra.mxu0 0.0
  %6020 = vmatprep.subr.mxu0 0.0
  %6021 = vmatpush1.xpose.msra.mxu0 %v5992
  %6022 = vmatprep.subr.mxu0 0.0
  %6023 = vmatpush1.xpose.msra.mxu0 %v5990
  %6024 = vmatprep.subr.mxu0 0.0
  %6025 = vmatpush1.xpose.msra.mxu0 %v5988
  %6026 = vmatprep.subr.mxu0 0.0
  %6027 = vmatpush2.xpose.msra.mxu0 0.0
  %6028 = vmatprep.subr.mxu0 0.0
  %6029 = vmatpush2.xpose.msra.mxu0 0.0
  %6030 = vmatprep.subr.mxu0 0.0
  %6031 = vmatpush2.xpose.msra.mxu0 0.0
  %6032 = vmatprep.subr.mxu0 0.0
  %6033 = vmatpush2.xpose.msra.mxu0 0.0
  %6034 = vmatprep.subr.mxu0 0.0
  %6035 = vmatpush2.xpose.msra.mxu0 0.0
  %6036 = vmatprep.subr.mxu0 0.0
  %6037 = vmatpush2.xpose.msra.mxu0 0.0
  %6038 = vmatprep.subr.mxu0 0.0
  %6039 = vmatpush2.xpose.msra.mxu0 0.0
  %6040 = vmatprep.subr.mxu0 0.0
  %6041 = vmatpush2.xpose.msra.mxu0 0.0
  %6042 = vmatprep.subr.mxu0 0.0
  %6043 = vmatpush2.xpose.msra.mxu0 0.0
  %6044 = vmatprep.subr.mxu0 0.0
  %6045 = vmatpush2.xpose.msra.mxu0 0.0
  %6046 = vmatprep.subr.mxu0 0.0
  %6047 = vmatpush2.xpose.msra.mxu0 0.0
  %6048 = vmatprep.subr.mxu0 0.0
  %6049 = vmatpush2.xpose.msra.mxu0 0.0
  %6050 = vmatprep.subr.mxu0 0.0
  %6051 = vmatpush2.xpose.msra.mxu0 0.0
  %6052 = vmatprep.subr.mxu0 0.0
  %6053 = vmatpush2.xpose.msra.mxu0 0.0
  %6054 = vmatprep.subr.mxu0 0.0
  %6055 = vmatpush2.xpose.msra.mxu0 0.0
  %6056 = vmatprep.subr.mxu0 0.0
  %6057 = vmatpush2.xpose.msra.mxu0 0.0
  %6058 = vmatprep.mubr.f32.mxu0 0.0
  %6059 = vmatmul.mubr.f32.gmra.mxu0 %v5984
  %v6060 = vpop.f32.mrf.mxu0
  %v6061 = vadd.f32 %v87, %v6060
  %v6062 = vpop.f32.mrf.mxu0
  %6063 = vmatprep.mubr.f32.mxu0 0.0
  %6064 = vmatmul.mubr.f32.gmra.mxu0 %v5986
  %v6065 = vpop.f32.mrf.mxu0
  %v6066 = vadd.f32 %v88, %v6065
  %v6067 = vpop.f32.mrf.mxu0
  %6068 = vdwg.mxu0
  %v6069 = vsel %vm632, %v6061, -inf
  %6070 = vmax.xlane.f32.xlu0 %v6069
  %v6071 = vpop.xlane.xlu0 %6070
  %v6072 = vsel %vm632, %v6066, -inf
  %6073 = vmax.xlane.f32.xlu0 %v6072
  %v6074 = vpop.xlane.xlu0 %6073
  %v6075 = vsub.f32 %v6061, %v6071
  %v6076 = vsub.f32 %v6066, %v6074
  %v6077 = vmul.f32 %v6075, 1.442695
  %v6078 = vpow.pop %v6077
  %v6079 = vmul.f32 %v6076, 1.442695
  %v6080 = vpow.pop %v6079
  %v6081 = vsel %vm632, %v6078, 0.0
  %6082 = vadd.xlane.f32.xlu0 %v6081
  %v6083 = vpop.xlane.xlu0 %6082
  %v6084 = vsel %vm632, %v6080, 0.0
  %6085 = vadd.xlane.f32.xlu0 %v6084
  %v6086 = vpop.xlane.xlu0 %6085
  %v6087 = vrcp.pop %v6083
  %v6088 = vrcp.pop %v6086
  %v6089 = vmul.f32 %v6078, %v6087
  %v6090 = vmul.f32 %v6080, %v6088
  %6093 = vrot.lane.b32.xlu0 %v4240, 120
  %v6094 = vpop.permute.xlu0 %6093
  %6095 = vrot.lane.b32.xlu0 %v4245, 120
  %v6096 = vpop.permute.xlu0 %6095
  %6097 = vrot.lane.b32.xlu0 %v4250, 120
  %v6098 = vpop.permute.xlu0 %6097
  %v6102 = vsel %vm632, %v6089, 0
  %v6105 = vsel %vm632, %v6090, 0
  %v6107 = vsel %vm676, %v6098, 0
  %6109 = vmatprep.subr.mxu0 0.0
  %6110 = vmatpush1.msra.mxu0 0.0
  %6111 = vmatprep.subr.mxu0 0.0
  %6112 = vmatpush1.msra.mxu0 0.0
  %6113 = vmatprep.subr.mxu0 0.0
  %6114 = vmatpush1.msra.mxu0 0.0
  %6115 = vmatprep.subr.mxu0 0.0
  %6116 = vmatpush1.msra.mxu0 0.0
  %6117 = vmatprep.subr.mxu0 0.0
  %6118 = vmatpush1.msra.mxu0 0.0
  %6119 = vmatprep.subr.mxu0 0.0
  %6120 = vmatpush1.msra.mxu0 0.0
  %6121 = vmatprep.subr.mxu0 0.0
  %6122 = vmatpush1.msra.mxu0 0.0
  %6123 = vmatprep.subr.mxu0 0.0
  %6124 = vmatpush1.msra.mxu0 0.0
  %6125 = vmatprep.subr.mxu0 0.0
  %6126 = vmatpush1.msra.mxu0 0.0
  %6127 = vmatprep.subr.mxu0 0.0
  %6128 = vmatpush1.msra.mxu0 0.0
  %6129 = vmatprep.subr.mxu0 0.0
  %6130 = vmatpush1.msra.mxu0 0.0
  %6131 = vmatprep.subr.mxu0 0.0
  %6132 = vmatpush1.msra.mxu0 0.0
  %6133 = vmatprep.subr.mxu0 0.0
  %6134 = vmatpush1.msra.mxu0 0.0
  %6135 = vmatprep.subr.mxu0 0.0
  %6136 = vmatpush1.msra.mxu0 %v6107
  %6137 = vmatprep.subr.mxu0 0.0
  %6138 = vmatpush1.msra.mxu0 %v6096
  %6139 = vmatprep.subr.mxu0 0.0
  %6140 = vmatpush1.msra.mxu0 %v6094
  %6141 = vmatprep.subr.mxu0 0.0
  %6142 = vmatpush2.msra.mxu0 0.0
  %6143 = vmatprep.subr.mxu0 0.0
  %6144 = vmatpush2.msra.mxu0 0.0
  %6145 = vmatprep.subr.mxu0 0.0
  %6146 = vmatpush2.msra.mxu0 0.0
  %6147 = vmatprep.subr.mxu0 0.0
  %6148 = vmatpush2.msra.mxu0 0.0
  %6149 = vmatprep.subr.mxu0 0.0
  %6150 = vmatpush2.msra.mxu0 0.0
  %6151 = vmatprep.subr.mxu0 0.0
  %6152 = vmatpush2.msra.mxu0 0.0
  %6153 = vmatprep.subr.mxu0 0.0
  %6154 = vmatpush2.msra.mxu0 0.0
  %6155 = vmatprep.subr.mxu0 0.0
  %6156 = vmatpush2.msra.mxu0 0.0
  %6157 = vmatprep.subr.mxu0 0.0
  %6158 = vmatpush2.msra.mxu0 0.0
  %6159 = vmatprep.subr.mxu0 0.0
  %6160 = vmatpush2.msra.mxu0 0.0
  %6161 = vmatprep.subr.mxu0 0.0
  %6162 = vmatpush2.msra.mxu0 0.0
  %6163 = vmatprep.subr.mxu0 0.0
  %6164 = vmatpush2.msra.mxu0 0.0
  %6165 = vmatprep.subr.mxu0 0.0
  %6166 = vmatpush2.msra.mxu0 0.0
  %6167 = vmatprep.subr.mxu0 0.0
  %6168 = vmatpush2.msra.mxu0 0.0
  %6169 = vmatprep.subr.mxu0 0.0
  %6170 = vmatpush2.msra.mxu0 0.0
  %6171 = vmatprep.subr.mxu0 0.0
  %6172 = vmatpush2.msra.mxu0 0.0
  %6173 = vmatprep.mubr.f32.mxu0 0.0
  %6174 = vmatmul.mubr.f32.gmra.mxu0 %v6102
  %v6175 = vpop.f32.mrf.mxu0
  %v6176 = vadd.f32 0.0, %v6175
  %v6177 = vpop.f32.mrf.mxu0
  %6178 = vmatprep.mubr.f32.mxu0 0.0
  %6179 = vmatmul.mubr.f32.gmra.mxu0 %v6105
  %v6180 = vpop.f32.mrf.mxu0
  %v6181 = vadd.f32 0.0, %v6180
  %v6182 = vpop.f32.mrf.mxu0
  %6183 = vdwg.mxu0
  %v6185 = vsel %vm539, %v6176, 0
  %v6188 = vsel %vm539, %v6181, 0
  %6190 = vmatprep.subr.mxu0 0.0
  %6191 = vmatpush1.msra.mxu0 0.0
  %6192 = vmatprep.subr.mxu0 0.0
  %6193 = vmatpush1.msra.mxu0 0.0
  %6194 = vmatprep.subr.mxu0 0.0
  %6195 = vmatpush1.msra.mxu0 0.0
  %6196 = vmatprep.subr.mxu0 0.0
  %6197 = vmatpush1.msra.mxu0 0.0
  %6198 = vmatprep.subr.mxu0 0.0
  %6199 = vmatpush1.msra.mxu0 0.0
  %6200 = vmatprep.subr.mxu0 0.0
  %6201 = vmatpush1.msra.mxu0 0.0
  %6202 = vmatprep.subr.mxu0 0.0
  %6203 = vmatpush1.msra.mxu0 0.0
  %6204 = vmatprep.subr.mxu0 0.0
  %6205 = vmatpush1.msra.mxu0 0.0
  %6206 = vmatprep.subr.mxu0 0.0
  %6207 = vmatpush1.msra.mxu0 0.0
  %6208 = vmatprep.subr.mxu0 0.0
  %6209 = vmatpush1.msra.mxu0 0.0
  %6210 = vmatprep.subr.mxu0 0.0
  %6211 = vmatpush1.msra.mxu0 0.0
  %6212 = vmatprep.subr.mxu0 0.0
  %6213 = vmatpush1.msra.mxu0 0.0
  %6214 = vmatprep.subr.mxu0 0.0
  %6215 = vmatpush1.msra.mxu0 0.0
  %6216 = vmatprep.subr.mxu0 0.0
  %6217 = vmatpush1.msra.mxu0 0.0
  %6218 = vmatprep.subr.mxu0 0.0
  %6219 = vmatpush1.msra.mxu0 0.0
  %6220 = vmatprep.subr.mxu0 0.0
  %6221 = vmatpush1.msra.mxu0 %v5773
  %6222 = vmatprep.subr.mxu0 0.0
  %6223 = vmatpush2.msra.mxu0 0.0
  %6224 = vmatprep.subr.mxu0 0.0
  %6225 = vmatpush2.msra.mxu0 0.0
  %6226 = vmatprep.subr.mxu0 0.0
  %6227 = vmatpush2.msra.mxu0 0.0
  %6228 = vmatprep.subr.mxu0 0.0
  %6229 = vmatpush2.msra.mxu0 0.0
  %6230 = vmatprep.subr.mxu0 0.0
  %6231 = vmatpush2.msra.mxu0 0.0
  %6232 = vmatprep.subr.mxu0 0.0
  %6233 = vmatpush2.msra.mxu0 0.0
  %6234 = vmatprep.subr.mxu0 0.0
  %6235 = vmatpush2.msra.mxu0 0.0
  %6236 = vmatprep.subr.mxu0 0.0
  %6237 = vmatpush2.msra.mxu0 0.0
  %6238 = vmatprep.subr.mxu0 0.0
  %6239 = vmatpush2.msra.mxu0 0.0
  %6240 = vmatprep.subr.mxu0 0.0
  %6241 = vmatpush2.msra.mxu0 0.0
  %6242 = vmatprep.subr.mxu0 0.0
  %6243 = vmatpush2.msra.mxu0 0.0
  %6244 = vmatprep.subr.mxu0 0.0
  %6245 = vmatpush2.msra.mxu0 0.0
  %6246 = vmatprep.subr.mxu0 0.0
  %6247 = vmatpush2.msra.mxu0 0.0
  %6248 = vmatprep.subr.mxu0 0.0
  %6249 = vmatpush2.msra.mxu0 0.0
  %6250 = vmatprep.subr.mxu0 0.0
  %6251 = vmatpush2.msra.mxu0 0.0
  %6252 = vmatprep.subr.mxu0 0.0
  %6253 = vmatpush2.msra.mxu0 0.0
  %6254 = vmatprep.mubr.f32.mxu0 0.0
  %6255 = vmatmul.mubr.f32.gmra.mxu0 %v6185
  %v6256 = vpop.f32.mrf.mxu0
  %v6257 = vadd.f32 0.0, %v6256
  %v6258 = vpop.f32.mrf.mxu0
  %6259 = vmatprep.mubr.f32.mxu0 0.0
  %6260 = vmatmul.mubr.f32.gmra.mxu0 %v6188
  %v6261 = vpop.f32.mrf.mxu0
  %v6262 = vadd.f32 0.0, %v6261
  %v6263 = vpop.f32.mrf.mxu0
  %6264 = vdwg.mxu0
  %v6266 = vsel %vm539, %v5966, 0
  %v6269 = vsel %vm539, %v5971, 0
  %6271 = vmatprep.subr.mxu0 0.0
  %6272 = vmatpush1.msra.mxu0 0.0
  %6273 = vmatprep.subr.mxu0 0.0
  %6274 = vmatpush1.msra.mxu0 0.0
  %6275 = vmatprep.subr.mxu0 0.0
  %6276 = vmatpush1.msra.mxu0 0.0
  %6277 = vmatprep.subr.mxu0 0.0
  %6278 = vmatpush1.msra.mxu0 0.0
  %6279 = vmatprep.subr.mxu0 0.0
  %6280 = vmatpush1.msra.mxu0 0.0
  %6281 = vmatprep.subr.mxu0 0.0
  %6282 = vmatpush1.msra.mxu0 0.0
  %6283 = vmatprep.subr.mxu0 0.0
  %6284 = vmatpush1.msra.mxu0 0.0
  %6285 = vmatprep.subr.mxu0 0.0
  %6286 = vmatpush1.msra.mxu0 0.0
  %6287 = vmatprep.subr.mxu0 0.0
  %6288 = vmatpush1.msra.mxu0 0.0
  %6289 = vmatprep.subr.mxu0 0.0
  %6290 = vmatpush1.msra.mxu0 0.0
  %6291 = vmatprep.subr.mxu0 0.0
  %6292 = vmatpush1.msra.mxu0 0.0
  %6293 = vmatprep.subr.mxu0 0.0
  %6294 = vmatpush1.msra.mxu0 0.0
  %6295 = vmatprep.subr.mxu0 0.0
  %6296 = vmatpush1.msra.mxu0 0.0
  %6297 = vmatprep.subr.mxu0 0.0
  %6298 = vmatpush1.msra.mxu0 0.0
  %6299 = vmatprep.subr.mxu0 0.0
  %6300 = vmatpush1.msra.mxu0 0.0
  %6301 = vmatprep.subr.mxu0 0.0
  %6302 = vmatpush1.msra.mxu0 %v5772
  %6303 = vmatprep.subr.mxu0 0.0
  %6304 = vmatpush2.msra.mxu0 0.0
  %6305 = vmatprep.subr.mxu0 0.0
  %6306 = vmatpush2.msra.mxu0 0.0
  %6307 = vmatprep.subr.mxu0 0.0
  %6308 = vmatpush2.msra.mxu0 0.0
  %6309 = vmatprep.subr.mxu0 0.0
  %6310 = vmatpush2.msra.mxu0 0.0
  %6311 = vmatprep.subr.mxu0 0.0
  %6312 = vmatpush2.msra.mxu0 0.0
  %6313 = vmatprep.subr.mxu0 0.0
  %6314 = vmatpush2.msra.mxu0 0.0
  %6315 = vmatprep.subr.mxu0 0.0
  %6316 = vmatpush2.msra.mxu0 0.0
  %6317 = vmatprep.subr.mxu0 0.0
  %6318 = vmatpush2.msra.mxu0 0.0
  %6319 = vmatprep.subr.mxu0 0.0
  %6320 = vmatpush2.msra.mxu0 0.0
  %6321 = vmatprep.subr.mxu0 0.0
  %6322 = vmatpush2.msra.mxu0 0.0
  %6323 = vmatprep.subr.mxu0 0.0
  %6324 = vmatpush2.msra.mxu0 0.0
  %6325 = vmatprep.subr.mxu0 0.0
  %6326 = vmatpush2.msra.mxu0 0.0
  %6327 = vmatprep.subr.mxu0 0.0
  %6328 = vmatpush2.msra.mxu0 0.0
  %6329 = vmatprep.subr.mxu0 0.0
  %6330 = vmatpush2.msra.mxu0 0.0
  %6331 = vmatprep.subr.mxu0 0.0
  %6332 = vmatpush2.msra.mxu0 0.0
  %6333 = vmatprep.subr.mxu0 0.0
  %6334 = vmatpush2.msra.mxu0 0.0
  %6335 = vmatprep.mubr.f32.mxu0 0.0
  %6336 = vmatmul.mubr.f32.gmra.mxu0 %v6266
  %v6337 = vpop.f32.mrf.mxu0
  %v6338 = vadd.f32 %v6257, %v6337
  %v6339 = vpop.f32.mrf.mxu0
  %6340 = vmatprep.mubr.f32.mxu0 0.0
  %6341 = vmatmul.mubr.f32.gmra.mxu0 %v6269
  %v6342 = vpop.f32.mrf.mxu0
  %v6343 = vadd.f32 %v6262, %v6342
  %v6344 = vpop.f32.mrf.mxu0
  %6345 = vdwg.mxu0
  %6346 = vrot.lane.b32.xlu0 %v5763, 112
  %v6347 = vpop.permute.xlu0 %6346
  %6348 = vrot.lane.b32.xlu0 %v5768, 112
  %v6349 = vpop.permute.xlu0 %6348
  %6350 = vrot.lane.b32.xlu0 %v4138, 112
  %v6351 = vpop.permute.xlu0 %6350
  %6352 = vrot.lane.b32.xlu0 %v4143, 112
  %v6353 = vpop.permute.xlu0 %6352
  %6354 = vrot.lane.b32.xlu0 %v4148, 112
  %v6355 = vpop.permute.xlu0 %6354
  %v6356 = vsel %vm539, %v6347, 0
  %v6358 = vsel %vm539, %v6349, 0
  %v6360 = vsel %vm539, %v6351, 0
  %v6362 = vsel %vm539, %v6353, 0
  %v6364 = vsel %vm539, %v6355, 0
  %6366 = vmatprep.subr.mxu0 0.0
  %6367 = vmatpush1.xpose.msra.mxu0 0.0
  %6368 = vmatprep.subr.mxu0 0.0
  %6369 = vmatpush1.xpose.msra.mxu0 0.0
  %6370 = vmatprep.subr.mxu0 0.0
  %6371 = vmatpush1.xpose.msra.mxu0 0.0
  %6372 = vmatprep.subr.mxu0 0.0
  %6373 = vmatpush1.xpose.msra.mxu0 0.0
  %6374 = vmatprep.subr.mxu0 0.0
  %6375 = vmatpush1.xpose.msra.mxu0 0.0
  %6376 = vmatprep.subr.mxu0 0.0
  %6377 = vmatpush1.xpose.msra.mxu0 0.0
  %6378 = vmatprep.subr.mxu0 0.0
  %6379 = vmatpush1.xpose.msra.mxu0 0.0
  %6380 = vmatprep.subr.mxu0 0.0
  %6381 = vmatpush1.xpose.msra.mxu0 0.0
  %6382 = vmatprep.subr.mxu0 0.0
  %6383 = vmatpush1.xpose.msra.mxu0 0.0
  %6384 = vmatprep.subr.mxu0 0.0
  %6385 = vmatpush1.xpose.msra.mxu0 0.0
  %6386 = vmatprep.subr.mxu0 0.0
  %6387 = vmatpush1.xpose.msra.mxu0 0.0
  %6388 = vmatprep.subr.mxu0 0.0
  %6389 = vmatpush1.xpose.msra.mxu0 0.0
  %6390 = vmatprep.subr.mxu0 0.0
  %6391 = vmatpush1.xpose.msra.mxu0 0.0
  %6392 = vmatprep.subr.mxu0 0.0
  %6393 = vmatpush1.xpose.msra.mxu0 %v6364
  %6394 = vmatprep.subr.mxu0 0.0
  %6395 = vmatpush1.xpose.msra.mxu0 %v6362
  %6396 = vmatprep.subr.mxu0 0.0
  %6397 = vmatpush1.xpose.msra.mxu0 %v6360
  %6398 = vmatprep.subr.mxu0 0.0
  %6399 = vmatpush2.xpose.msra.mxu0 0.0
  %6400 = vmatprep.subr.mxu0 0.0
  %6401 = vmatpush2.xpose.msra.mxu0 0.0
  %6402 = vmatprep.subr.mxu0 0.0
  %6403 = vmatpush2.xpose.msra.mxu0 0.0
  %6404 = vmatprep.subr.mxu0 0.0
  %6405 = vmatpush2.xpose.msra.mxu0 0.0
  %6406 = vmatprep.subr.mxu0 0.0
  %6407 = vmatpush2.xpose.msra.mxu0 0.0
  %6408 = vmatprep.subr.mxu0 0.0
  %6409 = vmatpush2.xpose.msra.mxu0 0.0
  %6410 = vmatprep.subr.mxu0 0.0
  %6411 = vmatpush2.xpose.msra.mxu0 0.0
  %6412 = vmatprep.subr.mxu0 0.0
  %6413 = vmatpush2.xpose.msra.mxu0 0.0
  %6414 = vmatprep.subr.mxu0 0.0
  %6415 = vmatpush2.xpose.msra.mxu0 0.0
  %6416 = vmatprep.subr.mxu0 0.0
  %6417 = vmatpush2.xpose.msra.mxu0 0.0
  %6418 = vmatprep.subr.mxu0 0.0
  %6419 = vmatpush2.xpose.msra.mxu0 0.0
  %6420 = vmatprep.subr.mxu0 0.0
  %6421 = vmatpush2.xpose.msra.mxu0 0.0
  %6422 = vmatprep.subr.mxu0 0.0
  %6423 = vmatpush2.xpose.msra.mxu0 0.0
  %6424 = vmatprep.subr.mxu0 0.0
  %6425 = vmatpush2.xpose.msra.mxu0 0.0
  %6426 = vmatprep.subr.mxu0 0.0
  %6427 = vmatpush2.xpose.msra.mxu0 0.0
  %6428 = vmatprep.subr.mxu0 0.0
  %6429 = vmatpush2.xpose.msra.mxu0 0.0
  %6430 = vmatprep.mubr.f32.mxu0 0.0
  %6431 = vmatmul.mubr.f32.gmra.mxu0 %v6356
  %v6432 = vpop.f32.mrf.mxu0
  %v6433 = vadd.f32 %v87, %v6432
  %v6434 = vpop.f32.mrf.mxu0
  %6435 = vmatprep.mubr.f32.mxu0 0.0
  %6436 = vmatmul.mubr.f32.gmra.mxu0 %v6358
  %v6437 = vpop.f32.mrf.mxu0
  %v6438 = vadd.f32 %v88, %v6437
  %v6439 = vpop.f32.mrf.mxu0
  %6440 = vdwg.mxu0
  %v6441 = vsel %vm632, %v6433, -inf
  %6442 = vmax.xlane.f32.xlu0 %v6441
  %v6443 = vpop.xlane.xlu0 %6442
  %v6444 = vsel %vm632, %v6438, -inf
  %6445 = vmax.xlane.f32.xlu0 %v6444
  %v6446 = vpop.xlane.xlu0 %6445
  %v6447 = vsub.f32 %v6433, %v6443
  %v6448 = vsub.f32 %v6438, %v6446
  %v6449 = vmul.f32 %v6447, 1.442695
  %v6450 = vpow.pop %v6449
  %v6451 = vmul.f32 %v6448, 1.442695
  %v6452 = vpow.pop %v6451
  %v6453 = vsel %vm632, %v6450, 0.0
  %6454 = vadd.xlane.f32.xlu0 %v6453
  %v6455 = vpop.xlane.xlu0 %6454
  %v6456 = vsel %vm632, %v6452, 0.0
  %6457 = vadd.xlane.f32.xlu0 %v6456
  %v6458 = vpop.xlane.xlu0 %6457
  %v6459 = vrcp.pop %v6455
  %v6460 = vrcp.pop %v6458
  %v6461 = vmul.f32 %v6450, %v6459
  %v6462 = vmul.f32 %v6452, %v6460
  %6463 = vrot.lane.b32.xlu0 %v4240, 112
  %v6464 = vpop.permute.xlu0 %6463
  %6465 = vrot.lane.b32.xlu0 %v4245, 112
  %v6466 = vpop.permute.xlu0 %6465
  %6467 = vrot.lane.b32.xlu0 %v4250, 112
  %v6468 = vpop.permute.xlu0 %6467
  %v6472 = vsel %vm632, %v6461, 0
  %v6475 = vsel %vm632, %v6462, 0
  %v6477 = vsel %vm676, %v6468, 0
  %6479 = vmatprep.subr.mxu0 0.0
  %6480 = vmatpush1.msra.mxu0 0.0
  %6481 = vmatprep.subr.mxu0 0.0
  %6482 = vmatpush1.msra.mxu0 0.0
  %6483 = vmatprep.subr.mxu0 0.0
  %6484 = vmatpush1.msra.mxu0 0.0
  %6485 = vmatprep.subr.mxu0 0.0
  %6486 = vmatpush1.msra.mxu0 0.0
  %6487 = vmatprep.subr.mxu0 0.0
  %6488 = vmatpush1.msra.mxu0 0.0
  %6489 = vmatprep.subr.mxu0 0.0
  %6490 = vmatpush1.msra.mxu0 0.0
  %6491 = vmatprep.subr.mxu0 0.0
  %6492 = vmatpush1.msra.mxu0 0.0
  %6493 = vmatprep.subr.mxu0 0.0
  %6494 = vmatpush1.msra.mxu0 0.0
  %6495 = vmatprep.subr.mxu0 0.0
  %6496 = vmatpush1.msra.mxu0 0.0
  %6497 = vmatprep.subr.mxu0 0.0
  %6498 = vmatpush1.msra.mxu0 0.0
  %6499 = vmatprep.subr.mxu0 0.0
  %6500 = vmatpush1.msra.mxu0 0.0
  %6501 = vmatprep.subr.mxu0 0.0
  %6502 = vmatpush1.msra.mxu0 0.0
  %6503 = vmatprep.subr.mxu0 0.0
  %6504 = vmatpush1.msra.mxu0 0.0
  %6505 = vmatprep.subr.mxu0 0.0
  %6506 = vmatpush1.msra.mxu0 %v6477
  %6507 = vmatprep.subr.mxu0 0.0
  %6508 = vmatpush1.msra.mxu0 %v6466
  %6509 = vmatprep.subr.mxu0 0.0
  %6510 = vmatpush1.msra.mxu0 %v6464
  %6511 = vmatprep.subr.mxu0 0.0
  %6512 = vmatpush2.msra.mxu0 0.0
  %6513 = vmatprep.subr.mxu0 0.0
  %6514 = vmatpush2.msra.mxu0 0.0
  %6515 = vmatprep.subr.mxu0 0.0
  %6516 = vmatpush2.msra.mxu0 0.0
  %6517 = vmatprep.subr.mxu0 0.0
  %6518 = vmatpush2.msra.mxu0 0.0
  %6519 = vmatprep.subr.mxu0 0.0
  %6520 = vmatpush2.msra.mxu0 0.0
  %6521 = vmatprep.subr.mxu0 0.0
  %6522 = vmatpush2.msra.mxu0 0.0
  %6523 = vmatprep.subr.mxu0 0.0
  %6524 = vmatpush2.msra.mxu0 0.0
  %6525 = vmatprep.subr.mxu0 0.0
  %6526 = vmatpush2.msra.mxu0 0.0
  %6527 = vmatprep.subr.mxu0 0.0
  %6528 = vmatpush2.msra.mxu0 0.0
  %6529 = vmatprep.subr.mxu0 0.0
  %6530 = vmatpush2.msra.mxu0 0.0
  %6531 = vmatprep.subr.mxu0 0.0
  %6532 = vmatpush2.msra.mxu0 0.0
  %6533 = vmatprep.subr.mxu0 0.0
  %6534 = vmatpush2.msra.mxu0 0.0
  %6535 = vmatprep.subr.mxu0 0.0
  %6536 = vmatpush2.msra.mxu0 0.0
  %6537 = vmatprep.subr.mxu0 0.0
  %6538 = vmatpush2.msra.mxu0 0.0
  %6539 = vmatprep.subr.mxu0 0.0
  %6540 = vmatpush2.msra.mxu0 0.0
  %6541 = vmatprep.subr.mxu0 0.0
  %6542 = vmatpush2.msra.mxu0 0.0
  %6543 = vmatprep.mubr.f32.mxu0 0.0
  %6544 = vmatmul.mubr.f32.gmra.mxu0 %v6472
  %v6545 = vpop.f32.mrf.mxu0
  %v6546 = vadd.f32 0.0, %v6545
  %v6547 = vpop.f32.mrf.mxu0
  %6548 = vmatprep.mubr.f32.mxu0 0.0
  %6549 = vmatmul.mubr.f32.gmra.mxu0 %v6475
  %v6550 = vpop.f32.mrf.mxu0
  %v6551 = vadd.f32 0.0, %v6550
  %v6552 = vpop.f32.mrf.mxu0
  %6553 = vdwg.mxu0
  %v6555 = vsel %vm539, %v6546, 0
  %v6558 = vsel %vm539, %v6551, 0
  %6560 = vmatprep.subr.mxu0 0.0
  %6561 = vmatpush1.msra.mxu0 0.0
  %6562 = vmatprep.subr.mxu0 0.0
  %6563 = vmatpush1.msra.mxu0 0.0
  %6564 = vmatprep.subr.mxu0 0.0
  %6565 = vmatpush1.msra.mxu0 0.0
  %6566 = vmatprep.subr.mxu0 0.0
  %6567 = vmatpush1.msra.mxu0 0.0
  %6568 = vmatprep.subr.mxu0 0.0
  %6569 = vmatpush1.msra.mxu0 0.0
  %6570 = vmatprep.subr.mxu0 0.0
  %6571 = vmatpush1.msra.mxu0 0.0
  %6572 = vmatprep.subr.mxu0 0.0
  %6573 = vmatpush1.msra.mxu0 0.0
  %6574 = vmatprep.subr.mxu0 0.0
  %6575 = vmatpush1.msra.mxu0 0.0
  %6576 = vmatprep.subr.mxu0 0.0
  %6577 = vmatpush1.msra.mxu0 0.0
  %6578 = vmatprep.subr.mxu0 0.0
  %6579 = vmatpush1.msra.mxu0 0.0
  %6580 = vmatprep.subr.mxu0 0.0
  %6581 = vmatpush1.msra.mxu0 0.0
  %6582 = vmatprep.subr.mxu0 0.0
  %6583 = vmatpush1.msra.mxu0 0.0
  %6584 = vmatprep.subr.mxu0 0.0
  %6585 = vmatpush1.msra.mxu0 0.0
  %6586 = vmatprep.subr.mxu0 0.0
  %6587 = vmatpush1.msra.mxu0 0.0
  %6588 = vmatprep.subr.mxu0 0.0
  %6589 = vmatpush1.msra.mxu0 0.0
  %6590 = vmatprep.subr.mxu0 0.0
  %6591 = vmatpush1.msra.mxu0 %v5774
  %6592 = vmatprep.subr.mxu0 0.0
  %6593 = vmatpush2.msra.mxu0 0.0
  %6594 = vmatprep.subr.mxu0 0.0
  %6595 = vmatpush2.msra.mxu0 0.0
  %6596 = vmatprep.subr.mxu0 0.0
  %6597 = vmatpush2.msra.mxu0 0.0
  %6598 = vmatprep.subr.mxu0 0.0
  %6599 = vmatpush2.msra.mxu0 0.0
  %6600 = vmatprep.subr.mxu0 0.0
  %6601 = vmatpush2.msra.mxu0 0.0
  %6602 = vmatprep.subr.mxu0 0.0
  %6603 = vmatpush2.msra.mxu0 0.0
  %6604 = vmatprep.subr.mxu0 0.0
  %6605 = vmatpush2.msra.mxu0 0.0
  %6606 = vmatprep.subr.mxu0 0.0
  %6607 = vmatpush2.msra.mxu0 0.0
  %6608 = vmatprep.subr.mxu0 0.0
  %6609 = vmatpush2.msra.mxu0 0.0
  %6610 = vmatprep.subr.mxu0 0.0
  %6611 = vmatpush2.msra.mxu0 0.0
  %6612 = vmatprep.subr.mxu0 0.0
  %6613 = vmatpush2.msra.mxu0 0.0
  %6614 = vmatprep.subr.mxu0 0.0
  %6615 = vmatpush2.msra.mxu0 0.0
  %6616 = vmatprep.subr.mxu0 0.0
  %6617 = vmatpush2.msra.mxu0 0.0
  %6618 = vmatprep.subr.mxu0 0.0
  %6619 = vmatpush2.msra.mxu0 0.0
  %6620 = vmatprep.subr.mxu0 0.0
  %6621 = vmatpush2.msra.mxu0 0.0
  %6622 = vmatprep.subr.mxu0 0.0
  %6623 = vmatpush2.msra.mxu0 0.0
  %6624 = vmatprep.mubr.f32.mxu0 0.0
  %6625 = vmatmul.mubr.f32.gmra.mxu0 %v6555
  %v6626 = vpop.f32.mrf.mxu0
  %v6627 = vadd.f32 0.0, %v6626
  %v6628 = vpop.f32.mrf.mxu0
  %6629 = vmatprep.mubr.f32.mxu0 0.0
  %6630 = vmatmul.mubr.f32.gmra.mxu0 %v6558
  %v6631 = vpop.f32.mrf.mxu0
  %v6632 = vadd.f32 0.0, %v6631
  %v6633 = vpop.f32.mrf.mxu0
  %6634 = vdwg.mxu0
  %v6635 = vadd.f32 %v6338, %v6627
  %v6636 = vadd.f32 %v6343, %v6632
  %6637 = vrot.lane.b32.xlu0 %v5763, 104
  %v6638 = vpop.permute.xlu0 %6637
  %6639 = vrot.lane.b32.xlu0 %v5768, 104
  %v6640 = vpop.permute.xlu0 %6639
  %6641 = vrot.lane.b32.xlu0 %v4138, 104
  %v6642 = vpop.permute.xlu0 %6641
  %6643 = vrot.lane.b32.xlu0 %v4143, 104
  %v6644 = vpop.permute.xlu0 %6643
  %6645 = vrot.lane.b32.xlu0 %v4148, 104
  %v6646 = vpop.permute.xlu0 %6645
  %v6647 = vsel %vm539, %v6638, 0
  %v6649 = vsel %vm539, %v6640, 0
  %v6651 = vsel %vm539, %v6642, 0
  %v6653 = vsel %vm539, %v6644, 0
  %v6655 = vsel %vm539, %v6646, 0
  %6657 = vmatprep.subr.mxu0 0.0
  %6658 = vmatpush1.xpose.msra.mxu0 0.0
  %6659 = vmatprep.subr.mxu0 0.0
  %6660 = vmatpush1.xpose.msra.mxu0 0.0
  %6661 = vmatprep.subr.mxu0 0.0
  %6662 = vmatpush1.xpose.msra.mxu0 0.0
  %6663 = vmatprep.subr.mxu0 0.0
  %6664 = vmatpush1.xpose.msra.mxu0 0.0
  %6665 = vmatprep.subr.mxu0 0.0
  %6666 = vmatpush1.xpose.msra.mxu0 0.0
  %6667 = vmatprep.subr.mxu0 0.0
  %6668 = vmatpush1.xpose.msra.mxu0 0.0
  %6669 = vmatprep.subr.mxu0 0.0
  %6670 = vmatpush1.xpose.msra.mxu0 0.0
  %6671 = vmatprep.subr.mxu0 0.0
  %6672 = vmatpush1.xpose.msra.mxu0 0.0
  %6673 = vmatprep.subr.mxu0 0.0
  %6674 = vmatpush1.xpose.msra.mxu0 0.0
  %6675 = vmatprep.subr.mxu0 0.0
  %6676 = vmatpush1.xpose.msra.mxu0 0.0
  %6677 = vmatprep.subr.mxu0 0.0
  %6678 = vmatpush1.xpose.msra.mxu0 0.0
  %6679 = vmatprep.subr.mxu0 0.0
  %6680 = vmatpush1.xpose.msra.mxu0 0.0
  %6681 = vmatprep.subr.mxu0 0.0
  %6682 = vmatpush1.xpose.msra.mxu0 0.0
  %6683 = vmatprep.subr.mxu0 0.0
  %6684 = vmatpush1.xpose.msra.mxu0 %v6655
  %6685 = vmatprep.subr.mxu0 0.0
  %6686 = vmatpush1.xpose.msra.mxu0 %v6653
  %6687 = vmatprep.subr.mxu0 0.0
  %6688 = vmatpush1.xpose.msra.mxu0 %v6651
  %6689 = vmatprep.subr.mxu0 0.0
  %6690 = vmatpush2.xpose.msra.mxu0 0.0
  %6691 = vmatprep.subr.mxu0 0.0
  %6692 = vmatpush2.xpose.msra.mxu0 0.0
  %6693 = vmatprep.subr.mxu0 0.0
  %6694 = vmatpush2.xpose.msra.mxu0 0.0
  %6695 = vmatprep.subr.mxu0 0.0
  %6696 = vmatpush2.xpose.msra.mxu0 0.0
  %6697 = vmatprep.subr.mxu0 0.0
  %6698 = vmatpush2.xpose.msra.mxu0 0.0
  %6699 = vmatprep.subr.mxu0 0.0
  %6700 = vmatpush2.xpose.msra.mxu0 0.0
  %6701 = vmatprep.subr.mxu0 0.0
  %6702 = vmatpush2.xpose.msra.mxu0 0.0
  %6703 = vmatprep.subr.mxu0 0.0
  %6704 = vmatpush2.xpose.msra.mxu0 0.0
  %6705 = vmatprep.subr.mxu0 0.0
  %6706 = vmatpush2.xpose.msra.mxu0 0.0
  %6707 = vmatprep.subr.mxu0 0.0
  %6708 = vmatpush2.xpose.msra.mxu0 0.0
  %6709 = vmatprep.subr.mxu0 0.0
  %6710 = vmatpush2.xpose.msra.mxu0 0.0
  %6711 = vmatprep.subr.mxu0 0.0
  %6712 = vmatpush2.xpose.msra.mxu0 0.0
  %6713 = vmatprep.subr.mxu0 0.0
  %6714 = vmatpush2.xpose.msra.mxu0 0.0
  %6715 = vmatprep.subr.mxu0 0.0
  %6716 = vmatpush2.xpose.msra.mxu0 0.0
  %6717 = vmatprep.subr.mxu0 0.0
  %6718 = vmatpush2.xpose.msra.mxu0 0.0
  %6719 = vmatprep.subr.mxu0 0.0
  %6720 = vmatpush2.xpose.msra.mxu0 0.0
  %6721 = vmatprep.mubr.f32.mxu0 0.0
  %6722 = vmatmul.mubr.f32.gmra.mxu0 %v6647
  %v6723 = vpop.f32.mrf.mxu0
  %v6724 = vadd.f32 %v87, %v6723
  %v6725 = vpop.f32.mrf.mxu0
  %6726 = vmatprep.mubr.f32.mxu0 0.0
  %6727 = vmatmul.mubr.f32.gmra.mxu0 %v6649
  %v6728 = vpop.f32.mrf.mxu0
  %v6729 = vadd.f32 %v88, %v6728
  %v6730 = vpop.f32.mrf.mxu0
  %6731 = vdwg.mxu0
  %v6732 = vsel %vm632, %v6724, -inf
  %6733 = vmax.xlane.f32.xlu0 %v6732
  %v6734 = vpop.xlane.xlu0 %6733
  %v6735 = vsel %vm632, %v6729, -inf
  %6736 = vmax.xlane.f32.xlu0 %v6735
  %v6737 = vpop.xlane.xlu0 %6736
  %v6738 = vsub.f32 %v6724, %v6734
  %v6739 = vsub.f32 %v6729, %v6737
  %v6740 = vmul.f32 %v6738, 1.442695
  %v6741 = vpow.pop %v6740
  %v6742 = vmul.f32 %v6739, 1.442695
  %v6743 = vpow.pop %v6742
  %v6744 = vsel %vm632, %v6741, 0.0
  %6745 = vadd.xlane.f32.xlu0 %v6744
  %v6746 = vpop.xlane.xlu0 %6745
  %v6747 = vsel %vm632, %v6743, 0.0
  %6748 = vadd.xlane.f32.xlu0 %v6747
  %v6749 = vpop.xlane.xlu0 %6748
  %v6750 = vrcp.pop %v6746
  %v6751 = vrcp.pop %v6749
  %v6752 = vmul.f32 %v6741, %v6750
  %v6753 = vmul.f32 %v6743, %v6751
  %6754 = vrot.lane.b32.xlu0 %v4240, 104
  %v6755 = vpop.permute.xlu0 %6754
  %6756 = vrot.lane.b32.xlu0 %v4245, 104
  %v6757 = vpop.permute.xlu0 %6756
  %6758 = vrot.lane.b32.xlu0 %v4250, 104
  %v6759 = vpop.permute.xlu0 %6758
  %v6763 = vsel %vm632, %v6752, 0
  %v6766 = vsel %vm632, %v6753, 0
  %v6768 = vsel %vm676, %v6759, 0
  %6770 = vmatprep.subr.mxu0 0.0
  %6771 = vmatpush1.msra.mxu0 0.0
  %6772 = vmatprep.subr.mxu0 0.0
  %6773 = vmatpush1.msra.mxu0 0.0
  %6774 = vmatprep.subr.mxu0 0.0
  %6775 = vmatpush1.msra.mxu0 0.0
  %6776 = vmatprep.subr.mxu0 0.0
  %6777 = vmatpush1.msra.mxu0 0.0
  %6778 = vmatprep.subr.mxu0 0.0
  %6779 = vmatpush1.msra.mxu0 0.0
  %6780 = vmatprep.subr.mxu0 0.0
  %6781 = vmatpush1.msra.mxu0 0.0
  %6782 = vmatprep.subr.mxu0 0.0
  %6783 = vmatpush1.msra.mxu0 0.0
  %6784 = vmatprep.subr.mxu0 0.0
  %6785 = vmatpush1.msra.mxu0 0.0
  %6786 = vmatprep.subr.mxu0 0.0
  %6787 = vmatpush1.msra.mxu0 0.0
  %6788 = vmatprep.subr.mxu0 0.0
  %6789 = vmatpush1.msra.mxu0 0.0
  %6790 = vmatprep.subr.mxu0 0.0
  %6791 = vmatpush1.msra.mxu0 0.0
  %6792 = vmatprep.subr.mxu0 0.0
  %6793 = vmatpush1.msra.mxu0 0.0
  %6794 = vmatprep.subr.mxu0 0.0
  %6795 = vmatpush1.msra.mxu0 0.0
  %6796 = vmatprep.subr.mxu0 0.0
  %6797 = vmatpush1.msra.mxu0 %v6768
  %6798 = vmatprep.subr.mxu0 0.0
  %6799 = vmatpush1.msra.mxu0 %v6757
  %6800 = vmatprep.subr.mxu0 0.0
  %6801 = vmatpush1.msra.mxu0 %v6755
  %6802 = vmatprep.subr.mxu0 0.0
  %6803 = vmatpush2.msra.mxu0 0.0
  %6804 = vmatprep.subr.mxu0 0.0
  %6805 = vmatpush2.msra.mxu0 0.0
  %6806 = vmatprep.subr.mxu0 0.0
  %6807 = vmatpush2.msra.mxu0 0.0
  %6808 = vmatprep.subr.mxu0 0.0
  %6809 = vmatpush2.msra.mxu0 0.0
  %6810 = vmatprep.subr.mxu0 0.0
  %6811 = vmatpush2.msra.mxu0 0.0
  %6812 = vmatprep.subr.mxu0 0.0
  %6813 = vmatpush2.msra.mxu0 0.0
  %6814 = vmatprep.subr.mxu0 0.0
  %6815 = vmatpush2.msra.mxu0 0.0
  %6816 = vmatprep.subr.mxu0 0.0
  %6817 = vmatpush2.msra.mxu0 0.0
  %6818 = vmatprep.subr.mxu0 0.0
  %6819 = vmatpush2.msra.mxu0 0.0
  %6820 = vmatprep.subr.mxu0 0.0
  %6821 = vmatpush2.msra.mxu0 0.0
  %6822 = vmatprep.subr.mxu0 0.0
  %6823 = vmatpush2.msra.mxu0 0.0
  %6824 = vmatprep.subr.mxu0 0.0
  %6825 = vmatpush2.msra.mxu0 0.0
  %6826 = vmatprep.subr.mxu0 0.0
  %6827 = vmatpush2.msra.mxu0 0.0
  %6828 = vmatprep.subr.mxu0 0.0
  %6829 = vmatpush2.msra.mxu0 0.0
  %6830 = vmatprep.subr.mxu0 0.0
  %6831 = vmatpush2.msra.mxu0 0.0
  %6832 = vmatprep.subr.mxu0 0.0
  %6833 = vmatpush2.msra.mxu0 0.0
  %6834 = vmatprep.mubr.f32.mxu0 0.0
  %6835 = vmatmul.mubr.f32.gmra.mxu0 %v6763
  %v6836 = vpop.f32.mrf.mxu0
  %v6837 = vadd.f32 0.0, %v6836
  %v6838 = vpop.f32.mrf.mxu0
  %6839 = vmatprep.mubr.f32.mxu0 0.0
  %6840 = vmatmul.mubr.f32.gmra.mxu0 %v6766
  %v6841 = vpop.f32.mrf.mxu0
  %v6842 = vadd.f32 0.0, %v6841
  %v6843 = vpop.f32.mrf.mxu0
  %6844 = vdwg.mxu0
  %v6846 = vsel %vm539, %v6837, 0
  %v6849 = vsel %vm539, %v6842, 0
  %6851 = vmatprep.subr.mxu0 0.0
  %6852 = vmatpush1.msra.mxu0 0.0
  %6853 = vmatprep.subr.mxu0 0.0
  %6854 = vmatpush1.msra.mxu0 0.0
  %6855 = vmatprep.subr.mxu0 0.0
  %6856 = vmatpush1.msra.mxu0 0.0
  %6857 = vmatprep.subr.mxu0 0.0
  %6858 = vmatpush1.msra.mxu0 0.0
  %6859 = vmatprep.subr.mxu0 0.0
  %6860 = vmatpush1.msra.mxu0 0.0
  %6861 = vmatprep.subr.mxu0 0.0
  %6862 = vmatpush1.msra.mxu0 0.0
  %6863 = vmatprep.subr.mxu0 0.0
  %6864 = vmatpush1.msra.mxu0 0.0
  %6865 = vmatprep.subr.mxu0 0.0
  %6866 = vmatpush1.msra.mxu0 0.0
  %6867 = vmatprep.subr.mxu0 0.0
  %6868 = vmatpush1.msra.mxu0 0.0
  %6869 = vmatprep.subr.mxu0 0.0
  %6870 = vmatpush1.msra.mxu0 0.0
  %6871 = vmatprep.subr.mxu0 0.0
  %6872 = vmatpush1.msra.mxu0 0.0
  %6873 = vmatprep.subr.mxu0 0.0
  %6874 = vmatpush1.msra.mxu0 0.0
  %6875 = vmatprep.subr.mxu0 0.0
  %6876 = vmatpush1.msra.mxu0 0.0
  %6877 = vmatprep.subr.mxu0 0.0
  %6878 = vmatpush1.msra.mxu0 0.0
  %6879 = vmatprep.subr.mxu0 0.0
  %6880 = vmatpush1.msra.mxu0 0.0
  %6881 = vmatprep.subr.mxu0 0.0
  %6882 = vmatpush1.msra.mxu0 %v5775
  %6883 = vmatprep.subr.mxu0 0.0
  %6884 = vmatpush2.msra.mxu0 0.0
  %6885 = vmatprep.subr.mxu0 0.0
  %6886 = vmatpush2.msra.mxu0 0.0
  %6887 = vmatprep.subr.mxu0 0.0
  %6888 = vmatpush2.msra.mxu0 0.0
  %6889 = vmatprep.subr.mxu0 0.0
  %6890 = vmatpush2.msra.mxu0 0.0
  %6891 = vmatprep.subr.mxu0 0.0
  %6892 = vmatpush2.msra.mxu0 0.0
  %6893 = vmatprep.subr.mxu0 0.0
  %6894 = vmatpush2.msra.mxu0 0.0
  %6895 = vmatprep.subr.mxu0 0.0
  %6896 = vmatpush2.msra.mxu0 0.0
  %6897 = vmatprep.subr.mxu0 0.0
  %6898 = vmatpush2.msra.mxu0 0.0
  %6899 = vmatprep.subr.mxu0 0.0
  %6900 = vmatpush2.msra.mxu0 0.0
  %6901 = vmatprep.subr.mxu0 0.0
  %6902 = vmatpush2.msra.mxu0 0.0
  %6903 = vmatprep.subr.mxu0 0.0
  %6904 = vmatpush2.msra.mxu0 0.0
  %6905 = vmatprep.subr.mxu0 0.0
  %6906 = vmatpush2.msra.mxu0 0.0
  %6907 = vmatprep.subr.mxu0 0.0
  %6908 = vmatpush2.msra.mxu0 0.0
  %6909 = vmatprep.subr.mxu0 0.0
  %6910 = vmatpush2.msra.mxu0 0.0
  %6911 = vmatprep.subr.mxu0 0.0
  %6912 = vmatpush2.msra.mxu0 0.0
  %6913 = vmatprep.subr.mxu0 0.0
  %6914 = vmatpush2.msra.mxu0 0.0
  %6915 = vmatprep.mubr.f32.mxu0 0.0
  %6916 = vmatmul.mubr.f32.gmra.mxu0 %v6846
  %v6917 = vpop.f32.mrf.mxu0
  %v6918 = vadd.f32 0.0, %v6917
  %v6919 = vpop.f32.mrf.mxu0
  %6920 = vmatprep.mubr.f32.mxu0 0.0
  %6921 = vmatmul.mubr.f32.gmra.mxu0 %v6849
  %v6922 = vpop.f32.mrf.mxu0
  %v6923 = vadd.f32 0.0, %v6922
  %v6924 = vpop.f32.mrf.mxu0
  %6925 = vdwg.mxu0
  %v6926 = vadd.f32 %v6635, %v6918
  %v6927 = vadd.f32 %v6636, %v6923
  %v6929 = vlaneseq
  %v6930 = vshrl.u32 %v6929, 7
  %v6931 = vsub.s32 0, %v6930
  %v6932 = vrot.slane %v5777, %v6931
  %v6934 = vadd.f32 %v6926, %v6932
  %v6935 = vadd.f32 %v6927, %v6932
  %v6936 = vadd.f32 %v5627, %v6934
  %v6937 = vadd.f32 %v5628, %v6935
  %s6938 = scalar_lea.vmem %s6, 26
  %v6939 = vld [vmem:[%s6938] sm:$0x1]
  %s6940 = scalar_lea.vmem %s6, 27
  %v6941 = vld [vmem:[%s6940] sm:$0x1]
  %v6942 = vsel %vm100, %v6936, 0.0
  %6943 = vadd.xlane.f32.xlu0 %v6942
  %v6944 = vpop.xlane.xlu0 %6943
  %v6945 = vsel %vm100, %v6937, 0.0
  %6946 = vadd.xlane.f32.xlu0 %v6945
  %v6947 = vpop.xlane.xlu0 %6946
  %v6948 = vmul.f32 %v6944, %v269
  %v6949 = vmul.f32 %v6947, %v269
  %v6950 = vsub.f32 %v6936, %v6948
  %v6951 = vsub.f32 %v6937, %v6949
  %v6952 = vmul.f32 %v6950, %v6950
  %v6953 = vmul.f32 %v6951, %v6951
  %v6954 = vsel %vm100, %v6952, 0.0
  %6955 = vadd.xlane.f32.xlu0 %v6954
  %v6956 = vpop.xlane.xlu0 %6955
  %v6957 = vsel %vm100, %v6953, 0.0
  %6958 = vadd.xlane.f32.xlu0 %v6957
  %v6959 = vpop.xlane.xlu0 %6958
  %v6960 = vmul.f32 %v6956, %v269
  %v6961 = vmul.f32 %v6959, %v269
  %v6962 = vadd.f32 %v6960, 1e-05
  %v6963 = vadd.f32 %v6961, 1e-05
  %v6964 = vrsqrt.pop %v6962
  %v6965 = vrsqrt.pop %v6963
  %v6966 = vmul.f32 %v6950, %v6964
  %v6967 = vmul.f32 %v6951, %v6965
  %v6969 = vlaneseq
  %v6970 = vshrl.u32 %v6969, 7
  %v6971 = vsub.s32 0, %v6970
  %v6972 = vrot.slane %v6939, %v6971
  %v6974 = vmul.f32 %v6966, %v6972
  %v6975 = vmul.f32 %v6967, %v6972
  %v6977 = vlaneseq
  %v6978 = vshrl.u32 %v6977, 7
  %v6979 = vsub.s32 0, %v6978
  %v6980 = vrot.slane %v6941, %v6979
  %v6982 = vadd.f32 %v6974, %v6980
  %v6983 = vadd.f32 %v6975, %v6980
  %s6984 = scalar_lea.vmem %s7, 160
  %v6985 = vld [vmem:[%s6984] sm:$0xff]
  %v6986 = vld [vmem:[%s6984 + $0x8] sm:$0xff]
  %v6987 = vld [vmem:[%s6984 + $0x10] sm:$0xff]
  %v6988 = vld [vmem:[%s6984 + $0x18] sm:$0xff]
  %s6989 = scalar_lea.vmem %s8, 5
  %v6990 = vld [vmem:[%s6989] sm:$0x1]
  %v6992 = vlaneseq
  %v6993 = vshrl.u32 %v6992, 7
  %v6994 = vsub.s32 0, %v6993
  %v6995 = vrot.slane %v6990, %v6994
  %v6998 = vsel %vm100, %v6982, 0
  %v7001 = vsel %vm100, %v6983, 0
  %7003 = vmatprep.subr.mxu0 0.0
  %7004 = vmatpush1.msra.mxu0 0.0
  %7005 = vmatprep.subr.mxu0 0.0
  %7006 = vmatpush1.msra.mxu0 0.0
  %7007 = vmatprep.subr.mxu0 0.0
  %7008 = vmatpush1.msra.mxu0 0.0
  %7009 = vmatprep.subr.mxu0 0.0
  %7010 = vmatpush1.msra.mxu0 0.0
  %7011 = vmatprep.subr.mxu0 0.0
  %7012 = vmatpush1.msra.mxu0 0.0
  %7013 = vmatprep.subr.mxu0 0.0
  %7014 = vmatpush1.msra.mxu0 0.0
  %7015 = vmatprep.subr.mxu0 0.0
  %7016 = vmatpush1.msra.mxu0 0.0
  %7017 = vmatprep.subr.mxu0 0.0
  %7018 = vmatpush1.msra.mxu0 0.0
  %7019 = vmatprep.subr.mxu0 0.0
  %7020 = vmatpush1.msra.mxu0 0.0
  %7021 = vmatprep.subr.mxu0 0.0
  %7022 = vmatpush1.msra.mxu0 0.0
  %7023 = vmatprep.subr.mxu0 0.0
  %7024 = vmatpush1.msra.mxu0 0.0
  %7025 = vmatprep.subr.mxu0 0.0
  %7026 = vmatpush1.msra.mxu0 0.0
  %7027 = vmatprep.subr.mxu0 0.0
  %7028 = vmatpush1.msra.mxu0 %v6988
  %7029 = vmatprep.subr.mxu0 0.0
  %7030 = vmatpush1.msra.mxu0 %v6987
  %7031 = vmatprep.subr.mxu0 0.0
  %7032 = vmatpush1.msra.mxu0 %v6986
  %7033 = vmatprep.subr.mxu0 0.0
  %7034 = vmatpush1.msra.mxu0 %v6985
  %7035 = vmatprep.subr.mxu0 0.0
  %7036 = vmatpush2.msra.mxu0 0.0
  %7037 = vmatprep.subr.mxu0 0.0
  %7038 = vmatpush2.msra.mxu0 0.0
  %7039 = vmatprep.subr.mxu0 0.0
  %7040 = vmatpush2.msra.mxu0 0.0
  %7041 = vmatprep.subr.mxu0 0.0
  %7042 = vmatpush2.msra.mxu0 0.0
  %7043 = vmatprep.subr.mxu0 0.0
  %7044 = vmatpush2.msra.mxu0 0.0
  %7045 = vmatprep.subr.mxu0 0.0
  %7046 = vmatpush2.msra.mxu0 0.0
  %7047 = vmatprep.subr.mxu0 0.0
  %7048 = vmatpush2.msra.mxu0 0.0
  %7049 = vmatprep.subr.mxu0 0.0
  %7050 = vmatpush2.msra.mxu0 0.0
  %7051 = vmatprep.subr.mxu0 0.0
  %7052 = vmatpush2.msra.mxu0 0.0
  %7053 = vmatprep.subr.mxu0 0.0
  %7054 = vmatpush2.msra.mxu0 0.0
  %7055 = vmatprep.subr.mxu0 0.0
  %7056 = vmatpush2.msra.mxu0 0.0
  %7057 = vmatprep.subr.mxu0 0.0
  %7058 = vmatpush2.msra.mxu0 0.0
  %7059 = vmatprep.subr.mxu0 0.0
  %7060 = vmatpush2.msra.mxu0 0.0
  %7061 = vmatprep.subr.mxu0 0.0
  %7062 = vmatpush2.msra.mxu0 0.0
  %7063 = vmatprep.subr.mxu0 0.0
  %7064 = vmatpush2.msra.mxu0 0.0
  %7065 = vmatprep.subr.mxu0 0.0
  %7066 = vmatpush2.msra.mxu0 0.0
  %7067 = vmatprep.mubr.f32.mxu0 0.0
  %7068 = vmatmul.mubr.f32.gmra.mxu0 %v6998
  %v7069 = vpop.f32.mrf.mxu0
  %v7070 = vadd.f32 %v6995, %v7069
  %v7071 = vpop.f32.mrf.mxu0
  %7072 = vmatprep.mubr.f32.mxu0 0.0
  %7073 = vmatmul.mubr.f32.gmra.mxu0 %v7001
  %v7074 = vpop.f32.mrf.mxu0
  %v7075 = vadd.f32 %v6995, %v7074
  %v7076 = vpop.f32.mrf.mxu0
  %7077 = vdwg.mxu0
  %v7078 = vmax.f32 %v7070, 0.0
  %v7079 = vmax.f32 %v7075, 0.0
  %s7080 = scalar_lea.vmem %s9, 128
  %v7081 = vld [vmem:[%s7080] sm:$0xff]
  %v7082 = vld [vmem:[%s7080 + $0x8] sm:$0xff]
  %v7083 = vld [vmem:[%s7080 + $0x10] sm:$0xff]
  %v7084 = vld [vmem:[%s7080 + $0x18] sm:$0xff]
  %v7085 = vld [vmem:[%s7080 + $0x20] sm:$0xff]
  %v7086 = vld [vmem:[%s7080 + $0x28] sm:$0xff]
  %v7087 = vld [vmem:[%s7080 + $0x30] sm:$0xff]
  %v7088 = vld [vmem:[%s7080 + $0x38] sm:$0xff]
  %v7090 = vsel %vm2018, %v7078, 0
  %v7093 = vsel %vm2018, %v7079, 0
  %7095 = vmatprep.subr.mxu0 0.0
  %7096 = vmatpush1.msra.mxu0 0.0
  %7097 = vmatprep.subr.mxu0 0.0
  %7098 = vmatpush1.msra.mxu0 0.0
  %7099 = vmatprep.subr.mxu0 0.0
  %7100 = vmatpush1.msra.mxu0 0.0
  %7101 = vmatprep.subr.mxu0 0.0
  %7102 = vmatpush1.msra.mxu0 0.0
  %7103 = vmatprep.subr.mxu0 0.0
  %7104 = vmatpush1.msra.mxu0 0.0
  %7105 = vmatprep.subr.mxu0 0.0
  %7106 = vmatpush1.msra.mxu0 0.0
  %7107 = vmatprep.subr.mxu0 0.0
  %7108 = vmatpush1.msra.mxu0 0.0
  %7109 = vmatprep.subr.mxu0 0.0
  %7110 = vmatpush1.msra.mxu0 0.0
  %7111 = vmatprep.subr.mxu0 0.0
  %7112 = vmatpush1.msra.mxu0 %v7088
  %7113 = vmatprep.subr.mxu0 0.0
  %7114 = vmatpush1.msra.mxu0 %v7087
  %7115 = vmatprep.subr.mxu0 0.0
  %7116 = vmatpush1.msra.mxu0 %v7086
  %7117 = vmatprep.subr.mxu0 0.0
  %7118 = vmatpush1.msra.mxu0 %v7085
  %7119 = vmatprep.subr.mxu0 0.0
  %7120 = vmatpush1.msra.mxu0 %v7084
  %7121 = vmatprep.subr.mxu0 0.0
  %7122 = vmatpush1.msra.mxu0 %v7083
  %7123 = vmatprep.subr.mxu0 0.0
  %7124 = vmatpush1.msra.mxu0 %v7082
  %7125 = vmatprep.subr.mxu0 0.0
  %7126 = vmatpush1.msra.mxu0 %v7081
  %7127 = vmatprep.subr.mxu0 0.0
  %7128 = vmatpush2.msra.mxu0 0.0
  %7129 = vmatprep.subr.mxu0 0.0
  %7130 = vmatpush2.msra.mxu0 0.0
  %7131 = vmatprep.subr.mxu0 0.0
  %7132 = vmatpush2.msra.mxu0 0.0
  %7133 = vmatprep.subr.mxu0 0.0
  %7134 = vmatpush2.msra.mxu0 0.0
  %7135 = vmatprep.subr.mxu0 0.0
  %7136 = vmatpush2.msra.mxu0 0.0
  %7137 = vmatprep.subr.mxu0 0.0
  %7138 = vmatpush2.msra.mxu0 0.0
  %7139 = vmatprep.subr.mxu0 0.0
  %7140 = vmatpush2.msra.mxu0 0.0
  %7141 = vmatprep.subr.mxu0 0.0
  %7142 = vmatpush2.msra.mxu0 0.0
  %7143 = vmatprep.subr.mxu0 0.0
  %7144 = vmatpush2.msra.mxu0 0.0
  %7145 = vmatprep.subr.mxu0 0.0
  %7146 = vmatpush2.msra.mxu0 0.0
  %7147 = vmatprep.subr.mxu0 0.0
  %7148 = vmatpush2.msra.mxu0 0.0
  %7149 = vmatprep.subr.mxu0 0.0
  %7150 = vmatpush2.msra.mxu0 0.0
  %7151 = vmatprep.subr.mxu0 0.0
  %7152 = vmatpush2.msra.mxu0 0.0
  %7153 = vmatprep.subr.mxu0 0.0
  %7154 = vmatpush2.msra.mxu0 0.0
  %7155 = vmatprep.subr.mxu0 0.0
  %7156 = vmatpush2.msra.mxu0 0.0
  %7157 = vmatprep.subr.mxu0 0.0
  %7158 = vmatpush2.msra.mxu0 0.0
  %7159 = vmatprep.mubr.f32.mxu0 0.0
  %7160 = vmatmul.mubr.f32.gmra.mxu0 %v7090
  %v7161 = vpop.f32.mrf.mxu0
  %v7162 = vadd.f32 0.0, %v7161
  %v7163 = vpop.f32.mrf.mxu0
  %7164 = vmatprep.mubr.f32.mxu0 0.0
  %7165 = vmatmul.mubr.f32.gmra.mxu0 %v7093
  %v7166 = vpop.f32.mrf.mxu0
  %v7167 = vadd.f32 0.0, %v7166
  %v7168 = vpop.f32.mrf.mxu0
  %7169 = vdwg.mxu0
  %v7170 = vadd.f32 %v6936, %v7162
  %v7171 = vadd.f32 %v6937, %v7167
  %s7172 = scalar_lea.vmem %s6, 28
  %v7173 = vld [vmem:[%s7172] sm:$0x1]
  %v7175 = vlaneseq
  %v7176 = vshrl.u32 %v7175, 7
  %v7177 = vsub.s32 0, %v7176
  %v7178 = vrot.slane %v7173, %v7177
  %v7180 = vadd.f32 %v7170, %v7178
  %v7181 = vadd.f32 %v7171, %v7178
  %s7182 = scalar_lea.vmem %s6, 33
  %v7183 = vld [vmem:[%s7182] sm:$0x1]
  %s7184 = scalar_lea.vmem %s6, 34
  %v7185 = vld [vmem:[%s7184] sm:$0x1]
  %v7186 = vsel %vm100, %v7180, 0.0
  %7187 = vadd.xlane.f32.xlu0 %v7186
  %v7188 = vpop.xlane.xlu0 %7187
  %v7189 = vsel %vm100, %v7181, 0.0
  %7190 = vadd.xlane.f32.xlu0 %v7189
  %v7191 = vpop.xlane.xlu0 %7190
  %v7192 = vmul.f32 %v7188, %v269
  %v7193 = vmul.f32 %v7191, %v269
  %v7194 = vsub.f32 %v7180, %v7192
  %v7195 = vsub.f32 %v7181, %v7193
  %v7196 = vmul.f32 %v7194, %v7194
  %v7197 = vmul.f32 %v7195, %v7195
  %v7198 = vsel %vm100, %v7196, 0.0
  %7199 = vadd.xlane.f32.xlu0 %v7198
  %v7200 = vpop.xlane.xlu0 %7199
  %v7201 = vsel %vm100, %v7197, 0.0
  %7202 = vadd.xlane.f32.xlu0 %v7201
  %v7203 = vpop.xlane.xlu0 %7202
  %v7204 = vmul.f32 %v7200, %v269
  %v7205 = vmul.f32 %v7203, %v269
  %v7206 = vadd.f32 %v7204, 1e-05
  %v7207 = vadd.f32 %v7205, 1e-05
  %v7208 = vrsqrt.pop %v7206
  %v7209 = vrsqrt.pop %v7207
  %v7210 = vmul.f32 %v7194, %v7208
  %v7211 = vmul.f32 %v7195, %v7209
  %v7213 = vlaneseq
  %v7214 = vshrl.u32 %v7213, 7
  %v7215 = vsub.s32 0, %v7214
  %v7216 = vrot.slane %v7183, %v7215
  %v7218 = vmul.f32 %v7210, %v7216
  %v7219 = vmul.f32 %v7211, %v7216
  %v7221 = vlaneseq
  %v7222 = vshrl.u32 %v7221, 7
  %v7223 = vsub.s32 0, %v7222
  %v7224 = vrot.slane %v7185, %v7223
  %v7226 = vadd.f32 %v7218, %v7224
  %v7227 = vadd.f32 %v7219, %v7224
  %v7228 = vadd.f32 %v7226, %v43
  %v7229 = vadd.f32 %v7227, %v44
  %s7230 = scalar_lea.vmem %s7, 192
  %v7231 = vld [vmem:[%s7230] sm:$0xff]
  %v7232 = vld [vmem:[%s7230 + $0x8] sm:$0xff]
  %v7233 = vld [vmem:[%s7230 + $0x10] sm:$0xff]
  %v7234 = vld [vmem:[%s7230 + $0x18] sm:$0xff]
  %s7235 = scalar_lea.vmem %s8, 6
  %v7236 = vld [vmem:[%s7235] sm:$0x1]
  %v7238 = vlaneseq
  %v7239 = vshrl.u32 %v7238, 7
  %v7240 = vsub.s32 0, %v7239
  %v7241 = vrot.slane %v7236, %v7240
  %v7244 = vsel %vm100, %v7228, 0
  %v7247 = vsel %vm100, %v7229, 0
  %7249 = vmatprep.subr.mxu0 0.0
  %7250 = vmatpush1.msra.mxu0 0.0
  %7251 = vmatprep.subr.mxu0 0.0
  %7252 = vmatpush1.msra.mxu0 0.0
  %7253 = vmatprep.subr.mxu0 0.0
  %7254 = vmatpush1.msra.mxu0 0.0
  %7255 = vmatprep.subr.mxu0 0.0
  %7256 = vmatpush1.msra.mxu0 0.0
  %7257 = vmatprep.subr.mxu0 0.0
  %7258 = vmatpush1.msra.mxu0 0.0
  %7259 = vmatprep.subr.mxu0 0.0
  %7260 = vmatpush1.msra.mxu0 0.0
  %7261 = vmatprep.subr.mxu0 0.0
  %7262 = vmatpush1.msra.mxu0 0.0
  %7263 = vmatprep.subr.mxu0 0.0
  %7264 = vmatpush1.msra.mxu0 0.0
  %7265 = vmatprep.subr.mxu0 0.0
  %7266 = vmatpush1.msra.mxu0 0.0
  %7267 = vmatprep.subr.mxu0 0.0
  %7268 = vmatpush1.msra.mxu0 0.0
  %7269 = vmatprep.subr.mxu0 0.0
  %7270 = vmatpush1.msra.mxu0 0.0
  %7271 = vmatprep.subr.mxu0 0.0
  %7272 = vmatpush1.msra.mxu0 0.0
  %7273 = vmatprep.subr.mxu0 0.0
  %7274 = vmatpush1.msra.mxu0 %v7234
  %7275 = vmatprep.subr.mxu0 0.0
  %7276 = vmatpush1.msra.mxu0 %v7233
  %7277 = vmatprep.subr.mxu0 0.0
  %7278 = vmatpush1.msra.mxu0 %v7232
  %7279 = vmatprep.subr.mxu0 0.0
  %7280 = vmatpush1.msra.mxu0 %v7231
  %7281 = vmatprep.subr.mxu0 0.0
  %7282 = vmatpush2.msra.mxu0 0.0
  %7283 = vmatprep.subr.mxu0 0.0
  %7284 = vmatpush2.msra.mxu0 0.0
  %7285 = vmatprep.subr.mxu0 0.0
  %7286 = vmatpush2.msra.mxu0 0.0
  %7287 = vmatprep.subr.mxu0 0.0
  %7288 = vmatpush2.msra.mxu0 0.0
  %7289 = vmatprep.subr.mxu0 0.0
  %7290 = vmatpush2.msra.mxu0 0.0
  %7291 = vmatprep.subr.mxu0 0.0
  %7292 = vmatpush2.msra.mxu0 0.0
  %7293 = vmatprep.subr.mxu0 0.0
  %7294 = vmatpush2.msra.mxu0 0.0
  %7295 = vmatprep.subr.mxu0 0.0
  %7296 = vmatpush2.msra.mxu0 0.0
  %7297 = vmatprep.subr.mxu0 0.0
  %7298 = vmatpush2.msra.mxu0 0.0
  %7299 = vmatprep.subr.mxu0 0.0
  %7300 = vmatpush2.msra.mxu0 0.0
  %7301 = vmatprep.subr.mxu0 0.0
  %7302 = vmatpush2.msra.mxu0 0.0
  %7303 = vmatprep.subr.mxu0 0.0
  %7304 = vmatpush2.msra.mxu0 0.0
  %7305 = vmatprep.subr.mxu0 0.0
  %7306 = vmatpush2.msra.mxu0 0.0
  %7307 = vmatprep.subr.mxu0 0.0
  %7308 = vmatpush2.msra.mxu0 0.0
  %7309 = vmatprep.subr.mxu0 0.0
  %7310 = vmatpush2.msra.mxu0 0.0
  %7311 = vmatprep.subr.mxu0 0.0
  %7312 = vmatpush2.msra.mxu0 0.0
  %7313 = vmatprep.mubr.f32.mxu0 0.0
  %7314 = vmatmul.mubr.f32.gmra.mxu0 %v7244
  %v7315 = vpop.f32.mrf.mxu0
  %v7316 = vadd.f32 %v7241, %v7315
  %v7317 = vpop.f32.mrf.mxu0
  %7318 = vmatprep.mubr.f32.mxu0 0.0
  %7319 = vmatmul.mubr.f32.gmra.mxu0 %v7247
  %v7320 = vpop.f32.mrf.mxu0
  %v7321 = vadd.f32 %v7241, %v7320
  %v7322 = vpop.f32.mrf.mxu0
  %7323 = vdwg.mxu0
  %s7324 = scalar_lea.vmem %s5, 320
  %v7325 = vld [vmem:[%s7324] sm:$0xff]
  %v7326 = vld [vmem:[%s7324 + $0x8] sm:$0xff]
  %v7327 = vld [vmem:[%s7324 + $0x10] sm:$0xff]
  %v7328 = vld [vmem:[%s7324 + $0x18] sm:$0xff]
  %s7329 = scalar_lea.vmem %s6, 29
  %v7330 = vld [vmem:[%s7329] sm:$0x1]
  %v7332 = vlaneseq
  %v7333 = vshrl.u32 %v7332, 7
  %v7334 = vsub.s32 0, %v7333
  %v7335 = vrot.slane %v7330, %v7334
  %v7338 = vsel %vm100, %v7226, 0
  %v7341 = vsel %vm100, %v7227, 0
  %7343 = vmatprep.subr.mxu0 0.0
  %7344 = vmatpush1.msra.mxu0 0.0
  %7345 = vmatprep.subr.mxu0 0.0
  %7346 = vmatpush1.msra.mxu0 0.0
  %7347 = vmatprep.subr.mxu0 0.0
  %7348 = vmatpush1.msra.mxu0 0.0
  %7349 = vmatprep.subr.mxu0 0.0
  %7350 = vmatpush1.msra.mxu0 0.0
  %7351 = vmatprep.subr.mxu0 0.0
  %7352 = vmatpush1.msra.mxu0 0.0
  %7353 = vmatprep.subr.mxu0 0.0
  %7354 = vmatpush1.msra.mxu0 0.0
  %7355 = vmatprep.subr.mxu0 0.0
  %7356 = vmatpush1.msra.mxu0 0.0
  %7357 = vmatprep.subr.mxu0 0.0
  %7358 = vmatpush1.msra.mxu0 0.0
  %7359 = vmatprep.subr.mxu0 0.0
  %7360 = vmatpush1.msra.mxu0 0.0
  %7361 = vmatprep.subr.mxu0 0.0
  %7362 = vmatpush1.msra.mxu0 0.0
  %7363 = vmatprep.subr.mxu0 0.0
  %7364 = vmatpush1.msra.mxu0 0.0
  %7365 = vmatprep.subr.mxu0 0.0
  %7366 = vmatpush1.msra.mxu0 0.0
  %7367 = vmatprep.subr.mxu0 0.0
  %7368 = vmatpush1.msra.mxu0 %v7328
  %7369 = vmatprep.subr.mxu0 0.0
  %7370 = vmatpush1.msra.mxu0 %v7327
  %7371 = vmatprep.subr.mxu0 0.0
  %7372 = vmatpush1.msra.mxu0 %v7326
  %7373 = vmatprep.subr.mxu0 0.0
  %7374 = vmatpush1.msra.mxu0 %v7325
  %7375 = vmatprep.subr.mxu0 0.0
  %7376 = vmatpush2.msra.mxu0 0.0
  %7377 = vmatprep.subr.mxu0 0.0
  %7378 = vmatpush2.msra.mxu0 0.0
  %7379 = vmatprep.subr.mxu0 0.0
  %7380 = vmatpush2.msra.mxu0 0.0
  %7381 = vmatprep.subr.mxu0 0.0
  %7382 = vmatpush2.msra.mxu0 0.0
  %7383 = vmatprep.subr.mxu0 0.0
  %7384 = vmatpush2.msra.mxu0 0.0
  %7385 = vmatprep.subr.mxu0 0.0
  %7386 = vmatpush2.msra.mxu0 0.0
  %7387 = vmatprep.subr.mxu0 0.0
  %7388 = vmatpush2.msra.mxu0 0.0
  %7389 = vmatprep.subr.mxu0 0.0
  %7390 = vmatpush2.msra.mxu0 0.0
  %7391 = vmatprep.subr.mxu0 0.0
  %7392 = vmatpush2.msra.mxu0 0.0
  %7393 = vmatprep.subr.mxu0 0.0
  %7394 = vmatpush2.msra.mxu0 0.0
  %7395 = vmatprep.subr.mxu0 0.0
  %7396 = vmatpush2.msra.mxu0 0.0
  %7397 = vmatprep.subr.mxu0 0.0
  %7398 = vmatpush2.msra.mxu0 0.0
  %7399 = vmatprep.subr.mxu0 0.0
  %7400 = vmatpush2.msra.mxu0 0.0
  %7401 = vmatprep.subr.mxu0 0.0
  %7402 = vmatpush2.msra.mxu0 0.0
  %7403 = vmatprep.subr.mxu0 0.0
  %7404 = vmatpush2.msra.mxu0 0.0
  %7405 = vmatprep.subr.mxu0 0.0
  %7406 = vmatpush2.msra.mxu0 0.0
  %7407 = vmatprep.mubr.f32.mxu0 0.0
  %7408 = vmatmul.mubr.f32.gmra.mxu0 %v7338
  %v7409 = vpop.f32.mrf.mxu0
  %v7410 = vadd.f32 %v7335, %v7409
  %v7411 = vpop.f32.mrf.mxu0
  %7412 = vmatprep.mubr.f32.mxu0 0.0
  %7413 = vmatmul.mubr.f32.gmra.mxu0 %v7341
  %v7414 = vpop.f32.mrf.mxu0
  %v7415 = vadd.f32 %v7335, %v7414
  %v7416 = vpop.f32.mrf.mxu0
  %7417 = vdwg.mxu0
  %s7418 = scalar_lea.vmem %s5, 352
  %v7419 = vld [vmem:[%s7418] sm:$0xff]
  %v7420 = vld [vmem:[%s7418 + $0x8] sm:$0xff]
  %v7421 = vld [vmem:[%s7418 + $0x10] sm:$0xff]
  %v7422 = vld [vmem:[%s7418 + $0x18] sm:$0xff]
  %s7423 = scalar_lea.vmem %s6, 30
  %v7424 = vld [vmem:[%s7423] sm:$0x1]
  %7427 = vrot.lane.b32.xlu0 %v7316, 96
  %v7428 = vpop.permute.xlu0 %7427
  %7429 = vrot.lane.b32.xlu0 %v7321, 96
  %v7430 = vpop.permute.xlu0 %7429
  %v7431 = vsel %vm539, %v7316, 0
  %v7433 = vsel %vm539, %v7321, 0
  %v7435 = vsel %vm539, %v7428, 0
  %v7437 = vsel %vm539, %v7430, 0
  %7439 = vmatprep.subr.mxu0 0.0
  %7440 = vmatpush1.xpose.msra.mxu0 0.0
  %7441 = vmatprep.subr.mxu0 0.0
  %7442 = vmatpush1.xpose.msra.mxu0 0.0
  %7443 = vmatprep.subr.mxu0 0.0
  %7444 = vmatpush1.xpose.msra.mxu0 0.0
  %7445 = vmatprep.subr.mxu0 0.0
  %7446 = vmatpush1.xpose.msra.mxu0 0.0
  %7447 = vmatprep.subr.mxu0 0.0
  %7448 = vmatpush1.xpose.msra.mxu0 0.0
  %7449 = vmatprep.subr.mxu0 0.0
  %7450 = vmatpush1.xpose.msra.mxu0 0.0
  %7451 = vmatprep.subr.mxu0 0.0
  %7452 = vmatpush1.xpose.msra.mxu0 0.0
  %7453 = vmatprep.subr.mxu0 0.0
  %7454 = vmatpush1.xpose.msra.mxu0 0.0
  %7455 = vmatprep.subr.mxu0 0.0
  %7456 = vmatpush1.xpose.msra.mxu0 0.0
  %7457 = vmatprep.subr.mxu0 0.0
  %7458 = vmatpush1.xpose.msra.mxu0 0.0
  %7459 = vmatprep.subr.mxu0 0.0
  %7460 = vmatpush1.xpose.msra.mxu0 0.0
  %7461 = vmatprep.subr.mxu0 0.0
  %7462 = vmatpush1.xpose.msra.mxu0 0.0
  %7463 = vmatprep.subr.mxu0 0.0
  %7464 = vmatpush1.xpose.msra.mxu0 0.0
  %7465 = vmatprep.subr.mxu0 0.0
  %7466 = vmatpush1.xpose.msra.mxu0 0.0
  %7467 = vmatprep.subr.mxu0 0.0
  %7468 = vmatpush1.xpose.msra.mxu0 %v7437
  %7469 = vmatprep.subr.mxu0 0.0
  %7470 = vmatpush1.xpose.msra.mxu0 %v7435
  %7471 = vmatprep.subr.mxu0 0.0
  %7472 = vmatpush2.xpose.msra.mxu0 0.0
  %7473 = vmatprep.subr.mxu0 0.0
  %7474 = vmatpush2.xpose.msra.mxu0 0.0
  %7475 = vmatprep.subr.mxu0 0.0
  %7476 = vmatpush2.xpose.msra.mxu0 0.0
  %7477 = vmatprep.subr.mxu0 0.0
  %7478 = vmatpush2.xpose.msra.mxu0 0.0
  %7479 = vmatprep.subr.mxu0 0.0
  %7480 = vmatpush2.xpose.msra.mxu0 0.0
  %7481 = vmatprep.subr.mxu0 0.0
  %7482 = vmatpush2.xpose.msra.mxu0 0.0
  %7483 = vmatprep.subr.mxu0 0.0
  %7484 = vmatpush2.xpose.msra.mxu0 0.0
  %7485 = vmatprep.subr.mxu0 0.0
  %7486 = vmatpush2.xpose.msra.mxu0 0.0
  %7487 = vmatprep.subr.mxu0 0.0
  %7488 = vmatpush2.xpose.msra.mxu0 0.0
  %7489 = vmatprep.subr.mxu0 0.0
  %7490 = vmatpush2.xpose.msra.mxu0 0.0
  %7491 = vmatprep.subr.mxu0 0.0
  %7492 = vmatpush2.xpose.msra.mxu0 0.0
  %7493 = vmatprep.subr.mxu0 0.0
  %7494 = vmatpush2.xpose.msra.mxu0 0.0
  %7495 = vmatprep.subr.mxu0 0.0
  %7496 = vmatpush2.xpose.msra.mxu0 0.0
  %7497 = vmatprep.subr.mxu0 0.0
  %7498 = vmatpush2.xpose.msra.mxu0 0.0
  %7499 = vmatprep.subr.mxu0 0.0
  %7500 = vmatpush2.xpose.msra.mxu0 0.0
  %7501 = vmatprep.subr.mxu0 0.0
  %7502 = vmatpush2.xpose.msra.mxu0 0.0
  %7503 = vmatprep.mubr.f32.mxu0 0.0
  %7504 = vmatmul.mubr.f32.gmra.mxu0 %v7431
  %v7505 = vpop.f32.mrf.mxu0
  %v7506 = vadd.f32 %v83, %v7505
  %v7507 = vpop.f32.mrf.mxu0
  %7508 = vmatprep.mubr.f32.mxu0 0.0
  %7509 = vmatmul.mubr.f32.gmra.mxu0 %v7433
  %v7510 = vpop.f32.mrf.mxu0
  %v7511 = vadd.f32 %v84, %v7510
  %v7512 = vpop.f32.mrf.mxu0
  %7513 = vdwg.mxu0
  %v7514 = vsel %vm4585, %v7506, -inf
  %7515 = vmax.xlane.f32.xlu0 %v7514
  %v7516 = vpop.xlane.xlu0 %7515
  %v7517 = vsel %vm4585, %v7511, -inf
  %7518 = vmax.xlane.f32.xlu0 %v7517
  %v7519 = vpop.xlane.xlu0 %7518
  %v7520 = vsub.f32 %v7506, %v7516
  %v7521 = vsub.f32 %v7511, %v7519
  %v7522 = vmul.f32 %v7520, 1.442695
  %v7523 = vpow.pop %v7522
  %v7524 = vmul.f32 %v7521, 1.442695
  %v7525 = vpow.pop %v7524
  %v7526 = vsel %vm4585, %v7523, 0.0
  %7527 = vadd.xlane.f32.xlu0 %v7526
  %v7528 = vpop.xlane.xlu0 %7527
  %v7529 = vsel %vm4585, %v7525, 0.0
  %7530 = vadd.xlane.f32.xlu0 %v7529
  %v7531 = vpop.xlane.xlu0 %7530
  %v7532 = vrcp.pop %v7528
  %v7533 = vrcp.pop %v7531
  %v7534 = vmul.f32 %v7523, %v7532
  %v7535 = vmul.f32 %v7525, %v7533
  %v7537 = vsel %vm4585, %v7534, 0
  %v7540 = vsel %vm4585, %v7535, 0
  %7542 = vmatprep.subr.mxu0 0.0
  %7543 = vmatpush1.msra.mxu0 0.0
  %7544 = vmatprep.subr.mxu0 0.0
  %7545 = vmatpush1.msra.mxu0 0.0
  %7546 = vmatprep.subr.mxu0 0.0
  %7547 = vmatpush1.msra.mxu0 0.0
  %7548 = vmatprep.subr.mxu0 0.0
  %7549 = vmatpush1.msra.mxu0 0.0
  %7550 = vmatprep.subr.mxu0 0.0
  %7551 = vmatpush1.msra.mxu0 0.0
  %7552 = vmatprep.subr.mxu0 0.0
  %7553 = vmatpush1.msra.mxu0 0.0
  %7554 = vmatprep.subr.mxu0 0.0
  %7555 = vmatpush1.msra.mxu0 0.0
  %7556 = vmatprep.subr.mxu0 0.0
  %7557 = vmatpush1.msra.mxu0 0.0
  %7558 = vmatprep.subr.mxu0 0.0
  %7559 = vmatpush1.msra.mxu0 0.0
  %7560 = vmatprep.subr.mxu0 0.0
  %7561 = vmatpush1.msra.mxu0 0.0
  %7562 = vmatprep.subr.mxu0 0.0
  %7563 = vmatpush1.msra.mxu0 0.0
  %7564 = vmatprep.subr.mxu0 0.0
  %7565 = vmatpush1.msra.mxu0 0.0
  %7566 = vmatprep.subr.mxu0 0.0
  %7567 = vmatpush1.msra.mxu0 0.0
  %7568 = vmatprep.subr.mxu0 0.0
  %7569 = vmatpush1.msra.mxu0 0.0
  %7570 = vmatprep.subr.mxu0 0.0
  %7571 = vmatpush1.msra.mxu0 %v7415
  %7572 = vmatprep.subr.mxu0 0.0
  %7573 = vmatpush1.msra.mxu0 %v7410
  %7574 = vmatprep.subr.mxu0 0.0
  %7575 = vmatpush2.msra.mxu0 0.0
  %7576 = vmatprep.subr.mxu0 0.0
  %7577 = vmatpush2.msra.mxu0 0.0
  %7578 = vmatprep.subr.mxu0 0.0
  %7579 = vmatpush2.msra.mxu0 0.0
  %7580 = vmatprep.subr.mxu0 0.0
  %7581 = vmatpush2.msra.mxu0 0.0
  %7582 = vmatprep.subr.mxu0 0.0
  %7583 = vmatpush2.msra.mxu0 0.0
  %7584 = vmatprep.subr.mxu0 0.0
  %7585 = vmatpush2.msra.mxu0 0.0
  %7586 = vmatprep.subr.mxu0 0.0
  %7587 = vmatpush2.msra.mxu0 0.0
  %7588 = vmatprep.subr.mxu0 0.0
  %7589 = vmatpush2.msra.mxu0 0.0
  %7590 = vmatprep.subr.mxu0 0.0
  %7591 = vmatpush2.msra.mxu0 0.0
  %7592 = vmatprep.subr.mxu0 0.0
  %7593 = vmatpush2.msra.mxu0 0.0
  %7594 = vmatprep.subr.mxu0 0.0
  %7595 = vmatpush2.msra.mxu0 0.0
  %7596 = vmatprep.subr.mxu0 0.0
  %7597 = vmatpush2.msra.mxu0 0.0
  %7598 = vmatprep.subr.mxu0 0.0
  %7599 = vmatpush2.msra.mxu0 0.0
  %7600 = vmatprep.subr.mxu0 0.0
  %7601 = vmatpush2.msra.mxu0 0.0
  %7602 = vmatprep.subr.mxu0 0.0
  %7603 = vmatpush2.msra.mxu0 0.0
  %7604 = vmatprep.subr.mxu0 0.0
  %7605 = vmatpush2.msra.mxu0 0.0
  %7606 = vmatprep.mubr.f32.mxu0 0.0
  %7607 = vmatmul.mubr.f32.gmra.mxu0 %v7537
  %v7608 = vpop.f32.mrf.mxu0
  %v7609 = vadd.f32 0.0, %v7608
  %v7610 = vpop.f32.mrf.mxu0
  %7611 = vmatprep.mubr.f32.mxu0 0.0
  %7612 = vmatmul.mubr.f32.gmra.mxu0 %v7540
  %v7613 = vpop.f32.mrf.mxu0
  %v7614 = vadd.f32 0.0, %v7613
  %v7615 = vpop.f32.mrf.mxu0
  %7616 = vdwg.mxu0
  %7617 = vrot.lane.b32.xlu0 %v7316, 120
  %v7618 = vpop.permute.xlu0 %7617
  %7619 = vrot.lane.b32.xlu0 %v7321, 120
  %v7620 = vpop.permute.xlu0 %7619
  %7621 = vrot.lane.b32.xlu0 %v7316, 88
  %v7622 = vpop.permute.xlu0 %7621
  %7623 = vrot.lane.b32.xlu0 %v7321, 88
  %v7624 = vpop.permute.xlu0 %7623
  %v7625 = vsel %vm539, %v7618, 0
  %v7627 = vsel %vm539, %v7620, 0
  %v7629 = vsel %vm539, %v7622, 0
  %v7631 = vsel %vm539, %v7624, 0
  %7633 = vmatprep.subr.mxu0 0.0
  %7634 = vmatpush1.xpose.msra.mxu0 0.0
  %7635 = vmatprep.subr.mxu0 0.0
  %7636 = vmatpush1.xpose.msra.mxu0 0.0
  %7637 = vmatprep.subr.mxu0 0.0
  %7638 = vmatpush1.xpose.msra.mxu0 0.0
  %7639 = vmatprep.subr.mxu0 0.0
  %7640 = vmatpush1.xpose.msra.mxu0 0.0
  %7641 = vmatprep.subr.mxu0 0.0
  %7642 = vmatpush1.xpose.msra.mxu0 0.0
  %7643 = vmatprep.subr.mxu0 0.0
  %7644 = vmatpush1.xpose.msra.mxu0 0.0
  %7645 = vmatprep.subr.mxu0 0.0
  %7646 = vmatpush1.xpose.msra.mxu0 0.0
  %7647 = vmatprep.subr.mxu0 0.0
  %7648 = vmatpush1.xpose.msra.mxu0 0.0
  %7649 = vmatprep.subr.mxu0 0.0
  %7650 = vmatpush1.xpose.msra.mxu0 0.0
  %7651 = vmatprep.subr.mxu0 0.0
  %7652 = vmatpush1.xpose.msra.mxu0 0.0
  %7653 = vmatprep.subr.mxu0 0.0
  %7654 = vmatpush1.xpose.msra.mxu0 0.0
  %7655 = vmatprep.subr.mxu0 0.0
  %7656 = vmatpush1.xpose.msra.mxu0 0.0
  %7657 = vmatprep.subr.mxu0 0.0
  %7658 = vmatpush1.xpose.msra.mxu0 0.0
  %7659 = vmatprep.subr.mxu0 0.0
  %7660 = vmatpush1.xpose.msra.mxu0 0.0
  %7661 = vmatprep.subr.mxu0 0.0
  %7662 = vmatpush1.xpose.msra.mxu0 %v7631
  %7663 = vmatprep.subr.mxu0 0.0
  %7664 = vmatpush1.xpose.msra.mxu0 %v7629
  %7665 = vmatprep.subr.mxu0 0.0
  %7666 = vmatpush2.xpose.msra.mxu0 0.0
  %7667 = vmatprep.subr.mxu0 0.0
  %7668 = vmatpush2.xpose.msra.mxu0 0.0
  %7669 = vmatprep.subr.mxu0 0.0
  %7670 = vmatpush2.xpose.msra.mxu0 0.0
  %7671 = vmatprep.subr.mxu0 0.0
  %7672 = vmatpush2.xpose.msra.mxu0 0.0
  %7673 = vmatprep.subr.mxu0 0.0
  %7674 = vmatpush2.xpose.msra.mxu0 0.0
  %7675 = vmatprep.subr.mxu0 0.0
  %7676 = vmatpush2.xpose.msra.mxu0 0.0
  %7677 = vmatprep.subr.mxu0 0.0
  %7678 = vmatpush2.xpose.msra.mxu0 0.0
  %7679 = vmatprep.subr.mxu0 0.0
  %7680 = vmatpush2.xpose.msra.mxu0 0.0
  %7681 = vmatprep.subr.mxu0 0.0
  %7682 = vmatpush2.xpose.msra.mxu0 0.0
  %7683 = vmatprep.subr.mxu0 0.0
  %7684 = vmatpush2.xpose.msra.mxu0 0.0
  %7685 = vmatprep.subr.mxu0 0.0
  %7686 = vmatpush2.xpose.msra.mxu0 0.0
  %7687 = vmatprep.subr.mxu0 0.0
  %7688 = vmatpush2.xpose.msra.mxu0 0.0
  %7689 = vmatprep.subr.mxu0 0.0
  %7690 = vmatpush2.xpose.msra.mxu0 0.0
  %7691 = vmatprep.subr.mxu0 0.0
  %7692 = vmatpush2.xpose.msra.mxu0 0.0
  %7693 = vmatprep.subr.mxu0 0.0
  %7694 = vmatpush2.xpose.msra.mxu0 0.0
  %7695 = vmatprep.subr.mxu0 0.0
  %7696 = vmatpush2.xpose.msra.mxu0 0.0
  %7697 = vmatprep.mubr.f32.mxu0 0.0
  %7698 = vmatmul.mubr.f32.gmra.mxu0 %v7625
  %v7699 = vpop.f32.mrf.mxu0
  %v7700 = vadd.f32 %v83, %v7699
  %v7701 = vpop.f32.mrf.mxu0
  %7702 = vmatprep.mubr.f32.mxu0 0.0
  %7703 = vmatmul.mubr.f32.gmra.mxu0 %v7627
  %v7704 = vpop.f32.mrf.mxu0
  %v7705 = vadd.f32 %v84, %v7704
  %v7706 = vpop.f32.mrf.mxu0
  %7707 = vdwg.mxu0
  %v7708 = vsel %vm4585, %v7700, -inf
  %7709 = vmax.xlane.f32.xlu0 %v7708
  %v7710 = vpop.xlane.xlu0 %7709
  %v7711 = vsel %vm4585, %v7705, -inf
  %7712 = vmax.xlane.f32.xlu0 %v7711
  %v7713 = vpop.xlane.xlu0 %7712
  %v7714 = vsub.f32 %v7700, %v7710
  %v7715 = vsub.f32 %v7705, %v7713
  %v7716 = vmul.f32 %v7714, 1.442695
  %v7717 = vpow.pop %v7716
  %v7718 = vmul.f32 %v7715, 1.442695
  %v7719 = vpow.pop %v7718
  %v7720 = vsel %vm4585, %v7717, 0.0
  %7721 = vadd.xlane.f32.xlu0 %v7720
  %v7722 = vpop.xlane.xlu0 %7721
  %v7723 = vsel %vm4585, %v7719, 0.0
  %7724 = vadd.xlane.f32.xlu0 %v7723
  %v7725 = vpop.xlane.xlu0 %7724
  %v7726 = vrcp.pop %v7722
  %v7727 = vrcp.pop %v7725
  %v7728 = vmul.f32 %v7717, %v7726
  %v7729 = vmul.f32 %v7719, %v7727
  %7732 = vrot.lane.b32.xlu0 %v7410, 120
  %v7733 = vpop.permute.xlu0 %7732
  %7734 = vrot.lane.b32.xlu0 %v7415, 120
  %v7735 = vpop.permute.xlu0 %7734
  %v7739 = vsel %vm4585, %v7728, 0
  %v7742 = vsel %vm4585, %v7729, 0
  %7744 = vmatprep.subr.mxu0 0.0
  %7745 = vmatpush1.msra.mxu0 0.0
  %7746 = vmatprep.subr.mxu0 0.0
  %7747 = vmatpush1.msra.mxu0 0.0
  %7748 = vmatprep.subr.mxu0 0.0
  %7749 = vmatpush1.msra.mxu0 0.0
  %7750 = vmatprep.subr.mxu0 0.0
  %7751 = vmatpush1.msra.mxu0 0.0
  %7752 = vmatprep.subr.mxu0 0.0
  %7753 = vmatpush1.msra.mxu0 0.0
  %7754 = vmatprep.subr.mxu0 0.0
  %7755 = vmatpush1.msra.mxu0 0.0
  %7756 = vmatprep.subr.mxu0 0.0
  %7757 = vmatpush1.msra.mxu0 0.0
  %7758 = vmatprep.subr.mxu0 0.0
  %7759 = vmatpush1.msra.mxu0 0.0
  %7760 = vmatprep.subr.mxu0 0.0
  %7761 = vmatpush1.msra.mxu0 0.0
  %7762 = vmatprep.subr.mxu0 0.0
  %7763 = vmatpush1.msra.mxu0 0.0
  %7764 = vmatprep.subr.mxu0 0.0
  %7765 = vmatpush1.msra.mxu0 0.0
  %7766 = vmatprep.subr.mxu0 0.0
  %7767 = vmatpush1.msra.mxu0 0.0
  %7768 = vmatprep.subr.mxu0 0.0
  %7769 = vmatpush1.msra.mxu0 0.0
  %7770 = vmatprep.subr.mxu0 0.0
  %7771 = vmatpush1.msra.mxu0 0.0
  %7772 = vmatprep.subr.mxu0 0.0
  %7773 = vmatpush1.msra.mxu0 %v7735
  %7774 = vmatprep.subr.mxu0 0.0
  %7775 = vmatpush1.msra.mxu0 %v7733
  %7776 = vmatprep.subr.mxu0 0.0
  %7777 = vmatpush2.msra.mxu0 0.0
  %7778 = vmatprep.subr.mxu0 0.0
  %7779 = vmatpush2.msra.mxu0 0.0
  %7780 = vmatprep.subr.mxu0 0.0
  %7781 = vmatpush2.msra.mxu0 0.0
  %7782 = vmatprep.subr.mxu0 0.0
  %7783 = vmatpush2.msra.mxu0 0.0
  %7784 = vmatprep.subr.mxu0 0.0
  %7785 = vmatpush2.msra.mxu0 0.0
  %7786 = vmatprep.subr.mxu0 0.0
  %7787 = vmatpush2.msra.mxu0 0.0
  %7788 = vmatprep.subr.mxu0 0.0
  %7789 = vmatpush2.msra.mxu0 0.0
  %7790 = vmatprep.subr.mxu0 0.0
  %7791 = vmatpush2.msra.mxu0 0.0
  %7792 = vmatprep.subr.mxu0 0.0
  %7793 = vmatpush2.msra.mxu0 0.0
  %7794 = vmatprep.subr.mxu0 0.0
  %7795 = vmatpush2.msra.mxu0 0.0
  %7796 = vmatprep.subr.mxu0 0.0
  %7797 = vmatpush2.msra.mxu0 0.0
  %7798 = vmatprep.subr.mxu0 0.0
  %7799 = vmatpush2.msra.mxu0 0.0
  %7800 = vmatprep.subr.mxu0 0.0
  %7801 = vmatpush2.msra.mxu0 0.0
  %7802 = vmatprep.subr.mxu0 0.0
  %7803 = vmatpush2.msra.mxu0 0.0
  %7804 = vmatprep.subr.mxu0 0.0
  %7805 = vmatpush2.msra.mxu0 0.0
  %7806 = vmatprep.subr.mxu0 0.0
  %7807 = vmatpush2.msra.mxu0 0.0
  %7808 = vmatprep.mubr.f32.mxu0 0.0
  %7809 = vmatmul.mubr.f32.gmra.mxu0 %v7739
  %v7810 = vpop.f32.mrf.mxu0
  %v7811 = vadd.f32 0.0, %v7810
  %v7812 = vpop.f32.mrf.mxu0
  %7813 = vmatprep.mubr.f32.mxu0 0.0
  %7814 = vmatmul.mubr.f32.gmra.mxu0 %v7742
  %v7815 = vpop.f32.mrf.mxu0
  %v7816 = vadd.f32 0.0, %v7815
  %v7817 = vpop.f32.mrf.mxu0
  %7818 = vdwg.mxu0
  %v7820 = vsel %vm539, %v7811, 0
  %v7823 = vsel %vm539, %v7816, 0
  %7825 = vmatprep.subr.mxu0 0.0
  %7826 = vmatpush1.msra.mxu0 0.0
  %7827 = vmatprep.subr.mxu0 0.0
  %7828 = vmatpush1.msra.mxu0 0.0
  %7829 = vmatprep.subr.mxu0 0.0
  %7830 = vmatpush1.msra.mxu0 0.0
  %7831 = vmatprep.subr.mxu0 0.0
  %7832 = vmatpush1.msra.mxu0 0.0
  %7833 = vmatprep.subr.mxu0 0.0
  %7834 = vmatpush1.msra.mxu0 0.0
  %7835 = vmatprep.subr.mxu0 0.0
  %7836 = vmatpush1.msra.mxu0 0.0
  %7837 = vmatprep.subr.mxu0 0.0
  %7838 = vmatpush1.msra.mxu0 0.0
  %7839 = vmatprep.subr.mxu0 0.0
  %7840 = vmatpush1.msra.mxu0 0.0
  %7841 = vmatprep.subr.mxu0 0.0
  %7842 = vmatpush1.msra.mxu0 0.0
  %7843 = vmatprep.subr.mxu0 0.0
  %7844 = vmatpush1.msra.mxu0 0.0
  %7845 = vmatprep.subr.mxu0 0.0
  %7846 = vmatpush1.msra.mxu0 0.0
  %7847 = vmatprep.subr.mxu0 0.0
  %7848 = vmatpush1.msra.mxu0 0.0
  %7849 = vmatprep.subr.mxu0 0.0
  %7850 = vmatpush1.msra.mxu0 0.0
  %7851 = vmatprep.subr.mxu0 0.0
  %7852 = vmatpush1.msra.mxu0 0.0
  %7853 = vmatprep.subr.mxu0 0.0
  %7854 = vmatpush1.msra.mxu0 0.0
  %7855 = vmatprep.subr.mxu0 0.0
  %7856 = vmatpush1.msra.mxu0 %v7420
  %7857 = vmatprep.subr.mxu0 0.0
  %7858 = vmatpush2.msra.mxu0 0.0
  %7859 = vmatprep.subr.mxu0 0.0
  %7860 = vmatpush2.msra.mxu0 0.0
  %7861 = vmatprep.subr.mxu0 0.0
  %7862 = vmatpush2.msra.mxu0 0.0
  %7863 = vmatprep.subr.mxu0 0.0
  %7864 = vmatpush2.msra.mxu0 0.0
  %7865 = vmatprep.subr.mxu0 0.0
  %7866 = vmatpush2.msra.mxu0 0.0
  %7867 = vmatprep.subr.mxu0 0.0
  %7868 = vmatpush2.msra.mxu0 0.0
  %7869 = vmatprep.subr.mxu0 0.0
  %7870 = vmatpush2.msra.mxu0 0.0
  %7871 = vmatprep.subr.mxu0 0.0
  %7872 = vmatpush2.msra.mxu0 0.0
  %7873 = vmatprep.subr.mxu0 0.0
  %7874 = vmatpush2.msra.mxu0 0.0
  %7875 = vmatprep.subr.mxu0 0.0
  %7876 = vmatpush2.msra.mxu0 0.0
  %7877 = vmatprep.subr.mxu0 0.0
  %7878 = vmatpush2.msra.mxu0 0.0
  %7879 = vmatprep.subr.mxu0 0.0
  %7880 = vmatpush2.msra.mxu0 0.0
  %7881 = vmatprep.subr.mxu0 0.0
  %7882 = vmatpush2.msra.mxu0 0.0
  %7883 = vmatprep.subr.mxu0 0.0
  %7884 = vmatpush2.msra.mxu0 0.0
  %7885 = vmatprep.subr.mxu0 0.0
  %7886 = vmatpush2.msra.mxu0 0.0
  %7887 = vmatprep.subr.mxu0 0.0
  %7888 = vmatpush2.msra.mxu0 0.0
  %7889 = vmatprep.mubr.f32.mxu0 0.0
  %7890 = vmatmul.mubr.f32.gmra.mxu0 %v7820
  %v7891 = vpop.f32.mrf.mxu0
  %v7892 = vadd.f32 0.0, %v7891
  %v7893 = vpop.f32.mrf.mxu0
  %7894 = vmatprep.mubr.f32.mxu0 0.0
  %7895 = vmatmul.mubr.f32.gmra.mxu0 %v7823
  %v7896 = vpop.f32.mrf.mxu0
  %v7897 = vadd.f32 0.0, %v7896
  %v7898 = vpop.f32.mrf.mxu0
  %7899 = vdwg.mxu0
  %v7901 = vsel %vm539, %v7609, 0
  %v7904 = vsel %vm539, %v7614, 0
  %7906 = vmatprep.subr.mxu0 0.0
  %7907 = vmatpush1.msra.mxu0 0.0
  %7908 = vmatprep.subr.mxu0 0.0
  %7909 = vmatpush1.msra.mxu0 0.0
  %7910 = vmatprep.subr.mxu0 0.0
  %7911 = vmatpush1.msra.mxu0 0.0
  %7912 = vmatprep.subr.mxu0 0.0
  %7913 = vmatpush1.msra.mxu0 0.0
  %7914 = vmatprep.subr.mxu0 0.0
  %7915 = vmatpush1.msra.mxu0 0.0
  %7916 = vmatprep.subr.mxu0 0.0
  %7917 = vmatpush1.msra.mxu0 0.0
  %7918 = vmatprep.subr.mxu0 0.0
  %7919 = vmatpush1.msra.mxu0 0.0
  %7920 = vmatprep.subr.mxu0 0.0
  %7921 = vmatpush1.msra.mxu0 0.0
  %7922 = vmatprep.subr.mxu0 0.0
  %7923 = vmatpush1.msra.mxu0 0.0
  %7924 = vmatprep.subr.mxu0 0.0
  %7925 = vmatpush1.msra.mxu0 0.0
  %7926 = vmatprep.subr.mxu0 0.0
  %7927 = vmatpush1.msra.mxu0 0.0
  %7928 = vmatprep.subr.mxu0 0.0
  %7929 = vmatpush1.msra.mxu0 0.0
  %7930 = vmatprep.subr.mxu0 0.0
  %7931 = vmatpush1.msra.mxu0 0.0
  %7932 = vmatprep.subr.mxu0 0.0
  %7933 = vmatpush1.msra.mxu0 0.0
  %7934 = vmatprep.subr.mxu0 0.0
  %7935 = vmatpush1.msra.mxu0 0.0
  %7936 = vmatprep.subr.mxu0 0.0
  %7937 = vmatpush1.msra.mxu0 %v7419
  %7938 = vmatprep.subr.mxu0 0.0
  %7939 = vmatpush2.msra.mxu0 0.0
  %7940 = vmatprep.subr.mxu0 0.0
  %7941 = vmatpush2.msra.mxu0 0.0
  %7942 = vmatprep.subr.mxu0 0.0
  %7943 = vmatpush2.msra.mxu0 0.0
  %7944 = vmatprep.subr.mxu0 0.0
  %7945 = vmatpush2.msra.mxu0 0.0
  %7946 = vmatprep.subr.mxu0 0.0
  %7947 = vmatpush2.msra.mxu0 0.0
  %7948 = vmatprep.subr.mxu0 0.0
  %7949 = vmatpush2.msra.mxu0 0.0
  %7950 = vmatprep.subr.mxu0 0.0
  %7951 = vmatpush2.msra.mxu0 0.0
  %7952 = vmatprep.subr.mxu0 0.0
  %7953 = vmatpush2.msra.mxu0 0.0
  %7954 = vmatprep.subr.mxu0 0.0
  %7955 = vmatpush2.msra.mxu0 0.0
  %7956 = vmatprep.subr.mxu0 0.0
  %7957 = vmatpush2.msra.mxu0 0.0
  %7958 = vmatprep.subr.mxu0 0.0
  %7959 = vmatpush2.msra.mxu0 0.0
  %7960 = vmatprep.subr.mxu0 0.0
  %7961 = vmatpush2.msra.mxu0 0.0
  %7962 = vmatprep.subr.mxu0 0.0
  %7963 = vmatpush2.msra.mxu0 0.0
  %7964 = vmatprep.subr.mxu0 0.0
  %7965 = vmatpush2.msra.mxu0 0.0
  %7966 = vmatprep.subr.mxu0 0.0
  %7967 = vmatpush2.msra.mxu0 0.0
  %7968 = vmatprep.subr.mxu0 0.0
  %7969 = vmatpush2.msra.mxu0 0.0
  %7970 = vmatprep.mubr.f32.mxu0 0.0
  %7971 = vmatmul.mubr.f32.gmra.mxu0 %v7901
  %v7972 = vpop.f32.mrf.mxu0
  %v7973 = vadd.f32 %v7892, %v7972
  %v7974 = vpop.f32.mrf.mxu0
  %7975 = vmatprep.mubr.f32.mxu0 0.0
  %7976 = vmatmul.mubr.f32.gmra.mxu0 %v7904
  %v7977 = vpop.f32.mrf.mxu0
  %v7978 = vadd.f32 %v7897, %v7977
  %v7979 = vpop.f32.mrf.mxu0
  %7980 = vdwg.mxu0
  %7981 = vrot.lane.b32.xlu0 %v7316, 112
  %v7982 = vpop.permute.xlu0 %7981
  %7983 = vrot.lane.b32.xlu0 %v7321, 112
  %v7984 = vpop.permute.xlu0 %7983
  %7985 = vrot.lane.b32.xlu0 %v7316, 80
  %v7986 = vpop.permute.xlu0 %7985
  %7987 = vrot.lane.b32.xlu0 %v7321, 80
  %v7988 = vpop.permute.xlu0 %7987
  %v7989 = vsel %vm539, %v7982, 0
  %v7991 = vsel %vm539, %v7984, 0
  %v7993 = vsel %vm539, %v7986, 0
  %v7995 = vsel %vm539, %v7988, 0
  %7997 = vmatprep.subr.mxu0 0.0
  %7998 = vmatpush1.xpose.msra.mxu0 0.0
  %7999 = vmatprep.subr.mxu0 0.0
  %8000 = vmatpush1.xpose.msra.mxu0 0.0
  %8001 = vmatprep.subr.mxu0 0.0
  %8002 = vmatpush1.xpose.msra.mxu0 0.0
  %8003 = vmatprep.subr.mxu0 0.0
  %8004 = vmatpush1.xpose.msra.mxu0 0.0
  %8005 = vmatprep.subr.mxu0 0.0
  %8006 = vmatpush1.xpose.msra.mxu0 0.0
  %8007 = vmatprep.subr.mxu0 0.0
  %8008 = vmatpush1.xpose.msra.mxu0 0.0
  %8009 = vmatprep.subr.mxu0 0.0
  %8010 = vmatpush1.xpose.msra.mxu0 0.0
  %8011 = vmatprep.subr.mxu0 0.0
  %8012 = vmatpush1.xpose.msra.mxu0 0.0
  %8013 = vmatprep.subr.mxu0 0.0
  %8014 = vmatpush1.xpose.msra.mxu0 0.0
  %8015 = vmatprep.subr.mxu0 0.0
  %8016 = vmatpush1.xpose.msra.mxu0 0.0
  %8017 = vmatprep.subr.mxu0 0.0
  %8018 = vmatpush1.xpose.msra.mxu0 0.0
  %8019 = vmatprep.subr.mxu0 0.0
  %8020 = vmatpush1.xpose.msra.mxu0 0.0
  %8021 = vmatprep.subr.mxu0 0.0
  %8022 = vmatpush1.xpose.msra.mxu0 0.0
  %8023 = vmatprep.subr.mxu0 0.0
  %8024 = vmatpush1.xpose.msra.mxu0 0.0
  %8025 = vmatprep.subr.mxu0 0.0
  %8026 = vmatpush1.xpose.msra.mxu0 %v7995
  %8027 = vmatprep.subr.mxu0 0.0
  %8028 = vmatpush1.xpose.msra.mxu0 %v7993
  %8029 = vmatprep.subr.mxu0 0.0
  %8030 = vmatpush2.xpose.msra.mxu0 0.0
  %8031 = vmatprep.subr.mxu0 0.0
  %8032 = vmatpush2.xpose.msra.mxu0 0.0
  %8033 = vmatprep.subr.mxu0 0.0
  %8034 = vmatpush2.xpose.msra.mxu0 0.0
  %8035 = vmatprep.subr.mxu0 0.0
  %8036 = vmatpush2.xpose.msra.mxu0 0.0
  %8037 = vmatprep.subr.mxu0 0.0
  %8038 = vmatpush2.xpose.msra.mxu0 0.0
  %8039 = vmatprep.subr.mxu0 0.0
  %8040 = vmatpush2.xpose.msra.mxu0 0.0
  %8041 = vmatprep.subr.mxu0 0.0
  %8042 = vmatpush2.xpose.msra.mxu0 0.0
  %8043 = vmatprep.subr.mxu0 0.0
  %8044 = vmatpush2.xpose.msra.mxu0 0.0
  %8045 = vmatprep.subr.mxu0 0.0
  %8046 = vmatpush2.xpose.msra.mxu0 0.0
  %8047 = vmatprep.subr.mxu0 0.0
  %8048 = vmatpush2.xpose.msra.mxu0 0.0
  %8049 = vmatprep.subr.mxu0 0.0
  %8050 = vmatpush2.xpose.msra.mxu0 0.0
  %8051 = vmatprep.subr.mxu0 0.0
  %8052 = vmatpush2.xpose.msra.mxu0 0.0
  %8053 = vmatprep.subr.mxu0 0.0
  %8054 = vmatpush2.xpose.msra.mxu0 0.0
  %8055 = vmatprep.subr.mxu0 0.0
  %8056 = vmatpush2.xpose.msra.mxu0 0.0
  %8057 = vmatprep.subr.mxu0 0.0
  %8058 = vmatpush2.xpose.msra.mxu0 0.0
  %8059 = vmatprep.subr.mxu0 0.0
  %8060 = vmatpush2.xpose.msra.mxu0 0.0
  %8061 = vmatprep.mubr.f32.mxu0 0.0
  %8062 = vmatmul.mubr.f32.gmra.mxu0 %v7989
  %v8063 = vpop.f32.mrf.mxu0
  %v8064 = vadd.f32 %v83, %v8063
  %v8065 = vpop.f32.mrf.mxu0
  %8066 = vmatprep.mubr.f32.mxu0 0.0
  %8067 = vmatmul.mubr.f32.gmra.mxu0 %v7991
  %v8068 = vpop.f32.mrf.mxu0
  %v8069 = vadd.f32 %v84, %v8068
  %v8070 = vpop.f32.mrf.mxu0
  %8071 = vdwg.mxu0
  %v8072 = vsel %vm4585, %v8064, -inf
  %8073 = vmax.xlane.f32.xlu0 %v8072
  %v8074 = vpop.xlane.xlu0 %8073
  %v8075 = vsel %vm4585, %v8069, -inf
  %8076 = vmax.xlane.f32.xlu0 %v8075
  %v8077 = vpop.xlane.xlu0 %8076
  %v8078 = vsub.f32 %v8064, %v8074
  %v8079 = vsub.f32 %v8069, %v8077
  %v8080 = vmul.f32 %v8078, 1.442695
  %v8081 = vpow.pop %v8080
  %v8082 = vmul.f32 %v8079, 1.442695
  %v8083 = vpow.pop %v8082
  %v8084 = vsel %vm4585, %v8081, 0.0
  %8085 = vadd.xlane.f32.xlu0 %v8084
  %v8086 = vpop.xlane.xlu0 %8085
  %v8087 = vsel %vm4585, %v8083, 0.0
  %8088 = vadd.xlane.f32.xlu0 %v8087
  %v8089 = vpop.xlane.xlu0 %8088
  %v8090 = vrcp.pop %v8086
  %v8091 = vrcp.pop %v8089
  %v8092 = vmul.f32 %v8081, %v8090
  %v8093 = vmul.f32 %v8083, %v8091
  %8094 = vrot.lane.b32.xlu0 %v7410, 112
  %v8095 = vpop.permute.xlu0 %8094
  %8096 = vrot.lane.b32.xlu0 %v7415, 112
  %v8097 = vpop.permute.xlu0 %8096
  %v8101 = vsel %vm4585, %v8092, 0
  %v8104 = vsel %vm4585, %v8093, 0
  %8106 = vmatprep.subr.mxu0 0.0
  %8107 = vmatpush1.msra.mxu0 0.0
  %8108 = vmatprep.subr.mxu0 0.0
  %8109 = vmatpush1.msra.mxu0 0.0
  %8110 = vmatprep.subr.mxu0 0.0
  %8111 = vmatpush1.msra.mxu0 0.0
  %8112 = vmatprep.subr.mxu0 0.0
  %8113 = vmatpush1.msra.mxu0 0.0
  %8114 = vmatprep.subr.mxu0 0.0
  %8115 = vmatpush1.msra.mxu0 0.0
  %8116 = vmatprep.subr.mxu0 0.0
  %8117 = vmatpush1.msra.mxu0 0.0
  %8118 = vmatprep.subr.mxu0 0.0
  %8119 = vmatpush1.msra.mxu0 0.0
  %8120 = vmatprep.subr.mxu0 0.0
  %8121 = vmatpush1.msra.mxu0 0.0
  %8122 = vmatprep.subr.mxu0 0.0
  %8123 = vmatpush1.msra.mxu0 0.0
  %8124 = vmatprep.subr.mxu0 0.0
  %8125 = vmatpush1.msra.mxu0 0.0
  %8126 = vmatprep.subr.mxu0 0.0
  %8127 = vmatpush1.msra.mxu0 0.0
  %8128 = vmatprep.subr.mxu0 0.0
  %8129 = vmatpush1.msra.mxu0 0.0
  %8130 = vmatprep.subr.mxu0 0.0
  %8131 = vmatpush1.msra.mxu0 0.0
  %8132 = vmatprep.subr.mxu0 0.0
  %8133 = vmatpush1.msra.mxu0 0.0
  %8134 = vmatprep.subr.mxu0 0.0
  %8135 = vmatpush1.msra.mxu0 %v8097
  %8136 = vmatprep.subr.mxu0 0.0
  %8137 = vmatpush1.msra.mxu0 %v8095
  %8138 = vmatprep.subr.mxu0 0.0
  %8139 = vmatpush2.msra.mxu0 0.0
  %8140 = vmatprep.subr.mxu0 0.0
  %8141 = vmatpush2.msra.mxu0 0.0
  %8142 = vmatprep.subr.mxu0 0.0
  %8143 = vmatpush2.msra.mxu0 0.0
  %8144 = vmatprep.subr.mxu0 0.0
  %8145 = vmatpush2.msra.mxu0 0.0
  %8146 = vmatprep.subr.mxu0 0.0
  %8147 = vmatpush2.msra.mxu0 0.0
  %8148 = vmatprep.subr.mxu0 0.0
  %8149 = vmatpush2.msra.mxu0 0.0
  %8150 = vmatprep.subr.mxu0 0.0
  %8151 = vmatpush2.msra.mxu0 0.0
  %8152 = vmatprep.subr.mxu0 0.0
  %8153 = vmatpush2.msra.mxu0 0.0
  %8154 = vmatprep.subr.mxu0 0.0
  %8155 = vmatpush2.msra.mxu0 0.0
  %8156 = vmatprep.subr.mxu0 0.0
  %8157 = vmatpush2.msra.mxu0 0.0
  %8158 = vmatprep.subr.mxu0 0.0
  %8159 = vmatpush2.msra.mxu0 0.0
  %8160 = vmatprep.subr.mxu0 0.0
  %8161 = vmatpush2.msra.mxu0 0.0
  %8162 = vmatprep.subr.mxu0 0.0
  %8163 = vmatpush2.msra.mxu0 0.0
  %8164 = vmatprep.subr.mxu0 0.0
  %8165 = vmatpush2.msra.mxu0 0.0
  %8166 = vmatprep.subr.mxu0 0.0
  %8167 = vmatpush2.msra.mxu0 0.0
  %8168 = vmatprep.subr.mxu0 0.0
  %8169 = vmatpush2.msra.mxu0 0.0
  %8170 = vmatprep.mubr.f32.mxu0 0.0
  %8171 = vmatmul.mubr.f32.gmra.mxu0 %v8101
  %v8172 = vpop.f32.mrf.mxu0
  %v8173 = vadd.f32 0.0, %v8172
  %v8174 = vpop.f32.mrf.mxu0
  %8175 = vmatprep.mubr.f32.mxu0 0.0
  %8176 = vmatmul.mubr.f32.gmra.mxu0 %v8104
  %v8177 = vpop.f32.mrf.mxu0
  %v8178 = vadd.f32 0.0, %v8177
  %v8179 = vpop.f32.mrf.mxu0
  %8180 = vdwg.mxu0
  %v8182 = vsel %vm539, %v8173, 0
  %v8185 = vsel %vm539, %v8178, 0
  %8187 = vmatprep.subr.mxu0 0.0
  %8188 = vmatpush1.msra.mxu0 0.0
  %8189 = vmatprep.subr.mxu0 0.0
  %8190 = vmatpush1.msra.mxu0 0.0
  %8191 = vmatprep.subr.mxu0 0.0
  %8192 = vmatpush1.msra.mxu0 0.0
  %8193 = vmatprep.subr.mxu0 0.0
  %8194 = vmatpush1.msra.mxu0 0.0
  %8195 = vmatprep.subr.mxu0 0.0
  %8196 = vmatpush1.msra.mxu0 0.0
  %8197 = vmatprep.subr.mxu0 0.0
  %8198 = vmatpush1.msra.mxu0 0.0
  %8199 = vmatprep.subr.mxu0 0.0
  %8200 = vmatpush1.msra.mxu0 0.0
  %8201 = vmatprep.subr.mxu0 0.0
  %8202 = vmatpush1.msra.mxu0 0.0
  %8203 = vmatprep.subr.mxu0 0.0
  %8204 = vmatpush1.msra.mxu0 0.0
  %8205 = vmatprep.subr.mxu0 0.0
  %8206 = vmatpush1.msra.mxu0 0.0
  %8207 = vmatprep.subr.mxu0 0.0
  %8208 = vmatpush1.msra.mxu0 0.0
  %8209 = vmatprep.subr.mxu0 0.0
  %8210 = vmatpush1.msra.mxu0 0.0
  %8211 = vmatprep.subr.mxu0 0.0
  %8212 = vmatpush1.msra.mxu0 0.0
  %8213 = vmatprep.subr.mxu0 0.0
  %8214 = vmatpush1.msra.mxu0 0.0
  %8215 = vmatprep.subr.mxu0 0.0
  %8216 = vmatpush1.msra.mxu0 0.0
  %8217 = vmatprep.subr.mxu0 0.0
  %8218 = vmatpush1.msra.mxu0 %v7421
  %8219 = vmatprep.subr.mxu0 0.0
  %8220 = vmatpush2.msra.mxu0 0.0
  %8221 = vmatprep.subr.mxu0 0.0
  %8222 = vmatpush2.msra.mxu0 0.0
  %8223 = vmatprep.subr.mxu0 0.0
  %8224 = vmatpush2.msra.mxu0 0.0
  %8225 = vmatprep.subr.mxu0 0.0
  %8226 = vmatpush2.msra.mxu0 0.0
  %8227 = vmatprep.subr.mxu0 0.0
  %8228 = vmatpush2.msra.mxu0 0.0
  %8229 = vmatprep.subr.mxu0 0.0
  %8230 = vmatpush2.msra.mxu0 0.0
  %8231 = vmatprep.subr.mxu0 0.0
  %8232 = vmatpush2.msra.mxu0 0.0
  %8233 = vmatprep.subr.mxu0 0.0
  %8234 = vmatpush2.msra.mxu0 0.0
  %8235 = vmatprep.subr.mxu0 0.0
  %8236 = vmatpush2.msra.mxu0 0.0
  %8237 = vmatprep.subr.mxu0 0.0
  %8238 = vmatpush2.msra.mxu0 0.0
  %8239 = vmatprep.subr.mxu0 0.0
  %8240 = vmatpush2.msra.mxu0 0.0
  %8241 = vmatprep.subr.mxu0 0.0
  %8242 = vmatpush2.msra.mxu0 0.0
  %8243 = vmatprep.subr.mxu0 0.0
  %8244 = vmatpush2.msra.mxu0 0.0
  %8245 = vmatprep.subr.mxu0 0.0
  %8246 = vmatpush2.msra.mxu0 0.0
  %8247 = vmatprep.subr.mxu0 0.0
  %8248 = vmatpush2.msra.mxu0 0.0
  %8249 = vmatprep.subr.mxu0 0.0
  %8250 = vmatpush2.msra.mxu0 0.0
  %8251 = vmatprep.mubr.f32.mxu0 0.0
  %8252 = vmatmul.mubr.f32.gmra.mxu0 %v8182
  %v8253 = vpop.f32.mrf.mxu0
  %v8254 = vadd.f32 0.0, %v8253
  %v8255 = vpop.f32.mrf.mxu0
  %8256 = vmatprep.mubr.f32.mxu0 0.0
  %8257 = vmatmul.mubr.f32.gmra.mxu0 %v8185
  %v8258 = vpop.f32.mrf.mxu0
  %v8259 = vadd.f32 0.0, %v8258
  %v8260 = vpop.f32.mrf.mxu0
  %8261 = vdwg.mxu0
  %v8262 = vadd.f32 %v7973, %v8254
  %v8263 = vadd.f32 %v7978, %v8259
  %8264 = vrot.lane.b32.xlu0 %v7316, 104
  %v8265 = vpop.permute.xlu0 %8264
  %8266 = vrot.lane.b32.xlu0 %v7321, 104
  %v8267 = vpop.permute.xlu0 %8266
  %8268 = vrot.lane.b32.xlu0 %v7316, 72
  %v8269 = vpop.permute.xlu0 %8268
  %8270 = vrot.lane.b32.xlu0 %v7321, 72
  %v8271 = vpop.permute.xlu0 %8270
  %v8272 = vsel %vm539, %v8265, 0
  %v8274 = vsel %vm539, %v8267, 0
  %v8276 = vsel %vm539, %v8269, 0
  %v8278 = vsel %vm539, %v8271, 0
  %8280 = vmatprep.subr.mxu0 0.0
  %8281 = vmatpush1.xpose.msra.mxu0 0.0
  %8282 = vmatprep.subr.mxu0 0.0
  %8283 = vmatpush1.xpose.msra.mxu0 0.0
  %8284 = vmatprep.subr.mxu0 0.0
  %8285 = vmatpush1.xpose.msra.mxu0 0.0
  %8286 = vmatprep.subr.mxu0 0.0
  %8287 = vmatpush1.xpose.msra.mxu0 0.0
  %8288 = vmatprep.subr.mxu0 0.0
  %8289 = vmatpush1.xpose.msra.mxu0 0.0
  %8290 = vmatprep.subr.mxu0 0.0
  %8291 = vmatpush1.xpose.msra.mxu0 0.0
  %8292 = vmatprep.subr.mxu0 0.0
  %8293 = vmatpush1.xpose.msra.mxu0 0.0
  %8294 = vmatprep.subr.mxu0 0.0
  %8295 = vmatpush1.xpose.msra.mxu0 0.0
  %8296 = vmatprep.subr.mxu0 0.0
  %8297 = vmatpush1.xpose.msra.mxu0 0.0
  %8298 = vmatprep.subr.mxu0 0.0
  %8299 = vmatpush1.xpose.msra.mxu0 0.0
  %8300 = vmatprep.subr.mxu0 0.0
  %8301 = vmatpush1.xpose.msra.mxu0 0.0
  %8302 = vmatprep.subr.mxu0 0.0
  %8303 = vmatpush1.xpose.msra.mxu0 0.0
  %8304 = vmatprep.subr.mxu0 0.0
  %8305 = vmatpush1.xpose.msra.mxu0 0.0
  %8306 = vmatprep.subr.mxu0 0.0
  %8307 = vmatpush1.xpose.msra.mxu0 0.0
  %8308 = vmatprep.subr.mxu0 0.0
  %8309 = vmatpush1.xpose.msra.mxu0 %v8278
  %8310 = vmatprep.subr.mxu0 0.0
  %8311 = vmatpush1.xpose.msra.mxu0 %v8276
  %8312 = vmatprep.subr.mxu0 0.0
  %8313 = vmatpush2.xpose.msra.mxu0 0.0
  %8314 = vmatprep.subr.mxu0 0.0
  %8315 = vmatpush2.xpose.msra.mxu0 0.0
  %8316 = vmatprep.subr.mxu0 0.0
  %8317 = vmatpush2.xpose.msra.mxu0 0.0
  %8318 = vmatprep.subr.mxu0 0.0
  %8319 = vmatpush2.xpose.msra.mxu0 0.0
  %8320 = vmatprep.subr.mxu0 0.0
  %8321 = vmatpush2.xpose.msra.mxu0 0.0
  %8322 = vmatprep.subr.mxu0 0.0
  %8323 = vmatpush2.xpose.msra.mxu0 0.0
  %8324 = vmatprep.subr.mxu0 0.0
  %8325 = vmatpush2.xpose.msra.mxu0 0.0
  %8326 = vmatprep.subr.mxu0 0.0
  %8327 = vmatpush2.xpose.msra.mxu0 0.0
  %8328 = vmatprep.subr.mxu0 0.0
  %8329 = vmatpush2.xpose.msra.mxu0 0.0
  %8330 = vmatprep.subr.mxu0 0.0
  %8331 = vmatpush2.xpose.msra.mxu0 0.0
  %8332 = vmatprep.subr.mxu0 0.0
  %8333 = vmatpush2.xpose.msra.mxu0 0.0
  %8334 = vmatprep.subr.mxu0 0.0
  %8335 = vmatpush2.xpose.msra.mxu0 0.0
  %8336 = vmatprep.subr.mxu0 0.0
  %8337 = vmatpush2.xpose.msra.mxu0 0.0
  %8338 = vmatprep.subr.mxu0 0.0
  %8339 = vmatpush2.xpose.msra.mxu0 0.0
  %8340 = vmatprep.subr.mxu0 0.0
  %8341 = vmatpush2.xpose.msra.mxu0 0.0
  %8342 = vmatprep.subr.mxu0 0.0
  %8343 = vmatpush2.xpose.msra.mxu0 0.0
  %8344 = vmatprep.mubr.f32.mxu0 0.0
  %8345 = vmatmul.mubr.f32.gmra.mxu0 %v8272
  %v8346 = vpop.f32.mrf.mxu0
  %v8347 = vadd.f32 %v83, %v8346
  %v8348 = vpop.f32.mrf.mxu0
  %8349 = vmatprep.mubr.f32.mxu0 0.0
  %8350 = vmatmul.mubr.f32.gmra.mxu0 %v8274
  %v8351 = vpop.f32.mrf.mxu0
  %v8352 = vadd.f32 %v84, %v8351
  %v8353 = vpop.f32.mrf.mxu0
  %8354 = vdwg.mxu0
  %v8355 = vsel %vm4585, %v8347, -inf
  %8356 = vmax.xlane.f32.xlu0 %v8355
  %v8357 = vpop.xlane.xlu0 %8356
  %v8358 = vsel %vm4585, %v8352, -inf
  %8359 = vmax.xlane.f32.xlu0 %v8358
  %v8360 = vpop.xlane.xlu0 %8359
  %v8361 = vsub.f32 %v8347, %v8357
  %v8362 = vsub.f32 %v8352, %v8360
  %v8363 = vmul.f32 %v8361, 1.442695
  %v8364 = vpow.pop %v8363
  %v8365 = vmul.f32 %v8362, 1.442695
  %v8366 = vpow.pop %v8365
  %v8367 = vsel %vm4585, %v8364, 0.0
  %8368 = vadd.xlane.f32.xlu0 %v8367
  %v8369 = vpop.xlane.xlu0 %8368
  %v8370 = vsel %vm4585, %v8366, 0.0
  %8371 = vadd.xlane.f32.xlu0 %v8370
  %v8372 = vpop.xlane.xlu0 %8371
  %v8373 = vrcp.pop %v8369
  %v8374 = vrcp.pop %v8372
  %v8375 = vmul.f32 %v8364, %v8373
  %v8376 = vmul.f32 %v8366, %v8374
  %8377 = vrot.lane.b32.xlu0 %v7410, 104
  %v8378 = vpop.permute.xlu0 %8377
  %8379 = vrot.lane.b32.xlu0 %v7415, 104
  %v8380 = vpop.permute.xlu0 %8379
  %v8384 = vsel %vm4585, %v8375, 0
  %v8387 = vsel %vm4585, %v8376, 0
  %8389 = vmatprep.subr.mxu0 0.0
  %8390 = vmatpush1.msra.mxu0 0.0
  %8391 = vmatprep.subr.mxu0 0.0
  %8392 = vmatpush1.msra.mxu0 0.0
  %8393 = vmatprep.subr.mxu0 0.0
  %8394 = vmatpush1.msra.mxu0 0.0
  %8395 = vmatprep.subr.mxu0 0.0
  %8396 = vmatpush1.msra.mxu0 0.0
  %8397 = vmatprep.subr.mxu0 0.0
  %8398 = vmatpush1.msra.mxu0 0.0
  %8399 = vmatprep.subr.mxu0 0.0
  %8400 = vmatpush1.msra.mxu0 0.0
  %8401 = vmatprep.subr.mxu0 0.0
  %8402 = vmatpush1.msra.mxu0 0.0
  %8403 = vmatprep.subr.mxu0 0.0
  %8404 = vmatpush1.msra.mxu0 0.0
  %8405 = vmatprep.subr.mxu0 0.0
  %8406 = vmatpush1.msra.mxu0 0.0
  %8407 = vmatprep.subr.mxu0 0.0
  %8408 = vmatpush1.msra.mxu0 0.0
  %8409 = vmatprep.subr.mxu0 0.0
  %8410 = vmatpush1.msra.mxu0 0.0
  %8411 = vmatprep.subr.mxu0 0.0
  %8412 = vmatpush1.msra.mxu0 0.0
  %8413 = vmatprep.subr.mxu0 0.0
  %8414 = vmatpush1.msra.mxu0 0.0
  %8415 = vmatprep.subr.mxu0 0.0
  %8416 = vmatpush1.msra.mxu0 0.0
  %8417 = vmatprep.subr.mxu0 0.0
  %8418 = vmatpush1.msra.mxu0 %v8380
  %8419 = vmatprep.subr.mxu0 0.0
  %8420 = vmatpush1.msra.mxu0 %v8378
  %8421 = vmatprep.subr.mxu0 0.0
  %8422 = vmatpush2.msra.mxu0 0.0
  %8423 = vmatprep.subr.mxu0 0.0
  %8424 = vmatpush2.msra.mxu0 0.0
  %8425 = vmatprep.subr.mxu0 0.0
  %8426 = vmatpush2.msra.mxu0 0.0
  %8427 = vmatprep.subr.mxu0 0.0
  %8428 = vmatpush2.msra.mxu0 0.0
  %8429 = vmatprep.subr.mxu0 0.0
  %8430 = vmatpush2.msra.mxu0 0.0
  %8431 = vmatprep.subr.mxu0 0.0
  %8432 = vmatpush2.msra.mxu0 0.0
  %8433 = vmatprep.subr.mxu0 0.0
  %8434 = vmatpush2.msra.mxu0 0.0
  %8435 = vmatprep.subr.mxu0 0.0
  %8436 = vmatpush2.msra.mxu0 0.0
  %8437 = vmatprep.subr.mxu0 0.0
  %8438 = vmatpush2.msra.mxu0 0.0
  %8439 = vmatprep.subr.mxu0 0.0
  %8440 = vmatpush2.msra.mxu0 0.0
  %8441 = vmatprep.subr.mxu0 0.0
  %8442 = vmatpush2.msra.mxu0 0.0
  %8443 = vmatprep.subr.mxu0 0.0
  %8444 = vmatpush2.msra.mxu0 0.0
  %8445 = vmatprep.subr.mxu0 0.0
  %8446 = vmatpush2.msra.mxu0 0.0
  %8447 = vmatprep.subr.mxu0 0.0
  %8448 = vmatpush2.msra.mxu0 0.0
  %8449 = vmatprep.subr.mxu0 0.0
  %8450 = vmatpush2.msra.mxu0 0.0
  %8451 = vmatprep.subr.mxu0 0.0
  %8452 = vmatpush2.msra.mxu0 0.0
  %8453 = vmatprep.mubr.f32.mxu0 0.0
  %8454 = vmatmul.mubr.f32.gmra.mxu0 %v8384
  %v8455 = vpop.f32.mrf.mxu0
  %v8456 = vadd.f32 0.0, %v8455
  %v8457 = vpop.f32.mrf.mxu0
  %8458 = vmatprep.mubr.f32.mxu0 0.0
  %8459 = vmatmul.mubr.f32.gmra.mxu0 %v8387
  %v8460 = vpop.f32.mrf.mxu0
  %v8461 = vadd.f32 0.0, %v8460
  %v8462 = vpop.f32.mrf.mxu0
  %8463 = vdwg.mxu0
  %v8465 = vsel %vm539, %v8456, 0
  %v8468 = vsel %vm539, %v8461, 0
  %8470 = vmatprep.subr.mxu0 0.0
  %8471 = vmatpush1.msra.mxu0 0.0
  %8472 = vmatprep.subr.mxu0 0.0
  %8473 = vmatpush1.msra.mxu0 0.0
  %8474 = vmatprep.subr.mxu0 0.0
  %8475 = vmatpush1.msra.mxu0 0.0
  %8476 = vmatprep.subr.mxu0 0.0
  %8477 = vmatpush1.msra.mxu0 0.0
  %8478 = vmatprep.subr.mxu0 0.0
  %8479 = vmatpush1.msra.mxu0 0.0
  %8480 = vmatprep.subr.mxu0 0.0
  %8481 = vmatpush1.msra.mxu0 0.0
  %8482 = vmatprep.subr.mxu0 0.0
  %8483 = vmatpush1.msra.mxu0 0.0
  %8484 = vmatprep.subr.mxu0 0.0
  %8485 = vmatpush1.msra.mxu0 0.0
  %8486 = vmatprep.subr.mxu0 0.0
  %8487 = vmatpush1.msra.mxu0 0.0
  %8488 = vmatprep.subr.mxu0 0.0
  %8489 = vmatpush1.msra.mxu0 0.0
  %8490 = vmatprep.subr.mxu0 0.0
  %8491 = vmatpush1.msra.mxu0 0.0
  %8492 = vmatprep.subr.mxu0 0.0
  %8493 = vmatpush1.msra.mxu0 0.0
  %8494 = vmatprep.subr.mxu0 0.0
  %8495 = vmatpush1.msra.mxu0 0.0
  %8496 = vmatprep.subr.mxu0 0.0
  %8497 = vmatpush1.msra.mxu0 0.0
  %8498 = vmatprep.subr.mxu0 0.0
  %8499 = vmatpush1.msra.mxu0 0.0
  %8500 = vmatprep.subr.mxu0 0.0
  %8501 = vmatpush1.msra.mxu0 %v7422
  %8502 = vmatprep.subr.mxu0 0.0
  %8503 = vmatpush2.msra.mxu0 0.0
  %8504 = vmatprep.subr.mxu0 0.0
  %8505 = vmatpush2.msra.mxu0 0.0
  %8506 = vmatprep.subr.mxu0 0.0
  %8507 = vmatpush2.msra.mxu0 0.0
  %8508 = vmatprep.subr.mxu0 0.0
  %8509 = vmatpush2.msra.mxu0 0.0
  %8510 = vmatprep.subr.mxu0 0.0
  %8511 = vmatpush2.msra.mxu0 0.0
  %8512 = vmatprep.subr.mxu0 0.0
  %8513 = vmatpush2.msra.mxu0 0.0
  %8514 = vmatprep.subr.mxu0 0.0
  %8515 = vmatpush2.msra.mxu0 0.0
  %8516 = vmatprep.subr.mxu0 0.0
  %8517 = vmatpush2.msra.mxu0 0.0
  %8518 = vmatprep.subr.mxu0 0.0
  %8519 = vmatpush2.msra.mxu0 0.0
  %8520 = vmatprep.subr.mxu0 0.0
  %8521 = vmatpush2.msra.mxu0 0.0
  %8522 = vmatprep.subr.mxu0 0.0
  %8523 = vmatpush2.msra.mxu0 0.0
  %8524 = vmatprep.subr.mxu0 0.0
  %8525 = vmatpush2.msra.mxu0 0.0
  %8526 = vmatprep.subr.mxu0 0.0
  %8527 = vmatpush2.msra.mxu0 0.0
  %8528 = vmatprep.subr.mxu0 0.0
  %8529 = vmatpush2.msra.mxu0 0.0
  %8530 = vmatprep.subr.mxu0 0.0
  %8531 = vmatpush2.msra.mxu0 0.0
  %8532 = vmatprep.subr.mxu0 0.0
  %8533 = vmatpush2.msra.mxu0 0.0
  %8534 = vmatprep.mubr.f32.mxu0 0.0
  %8535 = vmatmul.mubr.f32.gmra.mxu0 %v8465
  %v8536 = vpop.f32.mrf.mxu0
  %v8537 = vadd.f32 0.0, %v8536
  %v8538 = vpop.f32.mrf.mxu0
  %8539 = vmatprep.mubr.f32.mxu0 0.0
  %8540 = vmatmul.mubr.f32.gmra.mxu0 %v8468
  %v8541 = vpop.f32.mrf.mxu0
  %v8542 = vadd.f32 0.0, %v8541
  %v8543 = vpop.f32.mrf.mxu0
  %8544 = vdwg.mxu0
  %v8545 = vadd.f32 %v8262, %v8537
  %v8546 = vadd.f32 %v8263, %v8542
  %v8548 = vlaneseq
  %v8549 = vshrl.u32 %v8548, 7
  %v8550 = vsub.s32 0, %v8549
  %v8551 = vrot.slane %v7424, %v8550
  %v8553 = vadd.f32 %v8545, %v8551
  %v8554 = vadd.f32 %v8546, %v8551
  %v8555 = vadd.f32 %v7180, %v8553
  %v8556 = vadd.f32 %v7181, %v8554
  %s8557 = scalar_lea.vmem %s6, 35
  %v8558 = vld [vmem:[%s8557] sm:$0x1]
  %s8559 = scalar_lea.vmem %s6, 36
  %v8560 = vld [vmem:[%s8559] sm:$0x1]
  %v8561 = vsel %vm100, %v8555, 0.0
  %8562 = vadd.xlane.f32.xlu0 %v8561
  %v8563 = vpop.xlane.xlu0 %8562
  %v8564 = vsel %vm100, %v8556, 0.0
  %8565 = vadd.xlane.f32.xlu0 %v8564
  %v8566 = vpop.xlane.xlu0 %8565
  %v8567 = vmul.f32 %v8563, %v269
  %v8568 = vmul.f32 %v8566, %v269
  %v8569 = vsub.f32 %v8555, %v8567
  %v8570 = vsub.f32 %v8556, %v8568
  %v8571 = vmul.f32 %v8569, %v8569
  %v8572 = vmul.f32 %v8570, %v8570
  %v8573 = vsel %vm100, %v8571, 0.0
  %8574 = vadd.xlane.f32.xlu0 %v8573
  %v8575 = vpop.xlane.xlu0 %8574
  %v8576 = vsel %vm100, %v8572, 0.0
  %8577 = vadd.xlane.f32.xlu0 %v8576
  %v8578 = vpop.xlane.xlu0 %8577
  %v8579 = vmul.f32 %v8575, %v269
  %v8580 = vmul.f32 %v8578, %v269
  %v8581 = vadd.f32 %v8579, 1e-05
  %v8582 = vadd.f32 %v8580, 1e-05
  %v8583 = vrsqrt.pop %v8581
  %v8584 = vrsqrt.pop %v8582
  %v8585 = vmul.f32 %v8569, %v8583
  %v8586 = vmul.f32 %v8570, %v8584
  %v8588 = vlaneseq
  %v8589 = vshrl.u32 %v8588, 7
  %v8590 = vsub.s32 0, %v8589
  %v8591 = vrot.slane %v8558, %v8590
  %v8593 = vmul.f32 %v8585, %v8591
  %v8594 = vmul.f32 %v8586, %v8591
  %v8596 = vlaneseq
  %v8597 = vshrl.u32 %v8596, 7
  %v8598 = vsub.s32 0, %v8597
  %v8599 = vrot.slane %v8560, %v8598
  %v8601 = vadd.f32 %v8593, %v8599
  %v8602 = vadd.f32 %v8594, %v8599
  %v8603 = vadd.f32 %v8601, %v43
  %v8604 = vadd.f32 %v8602, %v44
  %s8605 = scalar_lea.vmem %s5, 384
  %v8606 = vld [vmem:[%s8605] sm:$0xff]
  %v8607 = vld [vmem:[%s8605 + $0x8] sm:$0xff]
  %v8608 = vld [vmem:[%s8605 + $0x10] sm:$0xff]
  %v8609 = vld [vmem:[%s8605 + $0x18] sm:$0xff]
  %s8610 = scalar_lea.vmem %s6, 31
  %v8611 = vld [vmem:[%s8610] sm:$0x1]
  %v8613 = vlaneseq
  %v8614 = vshrl.u32 %v8613, 7
  %v8615 = vsub.s32 0, %v8614
  %v8616 = vrot.slane %v8611, %v8615
  %v8619 = vsel %vm100, %v8603, 0
  %v8622 = vsel %vm100, %v8604, 0
  %8624 = vmatprep.subr.mxu0 0.0
  %8625 = vmatpush1.msra.mxu0 0.0
  %8626 = vmatprep.subr.mxu0 0.0
  %8627 = vmatpush1.msra.mxu0 0.0
  %8628 = vmatprep.subr.mxu0 0.0
  %8629 = vmatpush1.msra.mxu0 0.0
  %8630 = vmatprep.subr.mxu0 0.0
  %8631 = vmatpush1.msra.mxu0 0.0
  %8632 = vmatprep.subr.mxu0 0.0
  %8633 = vmatpush1.msra.mxu0 0.0
  %8634 = vmatprep.subr.mxu0 0.0
  %8635 = vmatpush1.msra.mxu0 0.0
  %8636 = vmatprep.subr.mxu0 0.0
  %8637 = vmatpush1.msra.mxu0 0.0
  %8638 = vmatprep.subr.mxu0 0.0
  %8639 = vmatpush1.msra.mxu0 0.0
  %8640 = vmatprep.subr.mxu0 0.0
  %8641 = vmatpush1.msra.mxu0 0.0
  %8642 = vmatprep.subr.mxu0 0.0
  %8643 = vmatpush1.msra.mxu0 0.0
  %8644 = vmatprep.subr.mxu0 0.0
  %8645 = vmatpush1.msra.mxu0 0.0
  %8646 = vmatprep.subr.mxu0 0.0
  %8647 = vmatpush1.msra.mxu0 0.0
  %8648 = vmatprep.subr.mxu0 0.0
  %8649 = vmatpush1.msra.mxu0 %v8609
  %8650 = vmatprep.subr.mxu0 0.0
  %8651 = vmatpush1.msra.mxu0 %v8608
  %8652 = vmatprep.subr.mxu0 0.0
  %8653 = vmatpush1.msra.mxu0 %v8607
  %8654 = vmatprep.subr.mxu0 0.0
  %8655 = vmatpush1.msra.mxu0 %v8606
  %8656 = vmatprep.subr.mxu0 0.0
  %8657 = vmatpush2.msra.mxu0 0.0
  %8658 = vmatprep.subr.mxu0 0.0
  %8659 = vmatpush2.msra.mxu0 0.0
  %8660 = vmatprep.subr.mxu0 0.0
  %8661 = vmatpush2.msra.mxu0 0.0
  %8662 = vmatprep.subr.mxu0 0.0
  %8663 = vmatpush2.msra.mxu0 0.0
  %8664 = vmatprep.subr.mxu0 0.0
  %8665 = vmatpush2.msra.mxu0 0.0
  %8666 = vmatprep.subr.mxu0 0.0
  %8667 = vmatpush2.msra.mxu0 0.0
  %8668 = vmatprep.subr.mxu0 0.0
  %8669 = vmatpush2.msra.mxu0 0.0
  %8670 = vmatprep.subr.mxu0 0.0
  %8671 = vmatpush2.msra.mxu0 0.0
  %8672 = vmatprep.subr.mxu0 0.0
  %8673 = vmatpush2.msra.mxu0 0.0
  %8674 = vmatprep.subr.mxu0 0.0
  %8675 = vmatpush2.msra.mxu0 0.0
  %8676 = vmatprep.subr.mxu0 0.0
  %8677 = vmatpush2.msra.mxu0 0.0
  %8678 = vmatprep.subr.mxu0 0.0
  %8679 = vmatpush2.msra.mxu0 0.0
  %8680 = vmatprep.subr.mxu0 0.0
  %8681 = vmatpush2.msra.mxu0 0.0
  %8682 = vmatprep.subr.mxu0 0.0
  %8683 = vmatpush2.msra.mxu0 0.0
  %8684 = vmatprep.subr.mxu0 0.0
  %8685 = vmatpush2.msra.mxu0 0.0
  %8686 = vmatprep.subr.mxu0 0.0
  %8687 = vmatpush2.msra.mxu0 0.0
  %8688 = vmatprep.mubr.f32.mxu0 0.0
  %8689 = vmatmul.mubr.f32.gmra.mxu0 %v8619
  %v8690 = vpop.f32.mrf.mxu0
  %v8691 = vadd.f32 %v8616, %v8690
  %v8692 = vpop.f32.mrf.mxu0
  %8693 = vmatprep.mubr.f32.mxu0 0.0
  %8694 = vmatmul.mubr.f32.gmra.mxu0 %v8622
  %v8695 = vpop.f32.mrf.mxu0
  %v8696 = vadd.f32 %v8616, %v8695
  %v8697 = vpop.f32.mrf.mxu0
  %8698 = vdwg.mxu0
  %s8699 = scalar_lea.vmem %s5, 416
  %v8700 = vld [vmem:[%s8699] sm:$0xff]
  %v8701 = vld [vmem:[%s8699 + $0x8] sm:$0xff]
  %v8702 = vld [vmem:[%s8699 + $0x10] sm:$0xff]
  %v8703 = vld [vmem:[%s8699 + $0x18] sm:$0xff]
  %s8704 = scalar_lea.vmem %s6, 32
  %v8705 = vld [vmem:[%s8704] sm:$0x1]
  %8706 = vrot.lane.b32.xlu0 %v4138, 96
  %v8707 = vpop.permute.xlu0 %8706
  %8708 = vrot.lane.b32.xlu0 %v4143, 96
  %v8709 = vpop.permute.xlu0 %8708
  %8710 = vrot.lane.b32.xlu0 %v4148, 96
  %v8711 = vpop.permute.xlu0 %8710
  %v8713 = vsel %vm539, %v8691, 0
  %v8716 = vsel %vm539, %v8696, 0
  %v8718 = vsel %vm539, %v8707, 0
  %v8720 = vsel %vm539, %v8709, 0
  %v8722 = vsel %vm539, %v8711, 0
  %8724 = vmatprep.subr.mxu0 0.0
  %8725 = vmatpush1.xpose.msra.mxu0 0.0
  %8726 = vmatprep.subr.mxu0 0.0
  %8727 = vmatpush1.xpose.msra.mxu0 0.0
  %8728 = vmatprep.subr.mxu0 0.0
  %8729 = vmatpush1.xpose.msra.mxu0 0.0
  %8730 = vmatprep.subr.mxu0 0.0
  %8731 = vmatpush1.xpose.msra.mxu0 0.0
  %8732 = vmatprep.subr.mxu0 0.0
  %8733 = vmatpush1.xpose.msra.mxu0 0.0
  %8734 = vmatprep.subr.mxu0 0.0
  %8735 = vmatpush1.xpose.msra.mxu0 0.0
  %8736 = vmatprep.subr.mxu0 0.0
  %8737 = vmatpush1.xpose.msra.mxu0 0.0
  %8738 = vmatprep.subr.mxu0 0.0
  %8739 = vmatpush1.xpose.msra.mxu0 0.0
  %8740 = vmatprep.subr.mxu0 0.0
  %8741 = vmatpush1.xpose.msra.mxu0 0.0
  %8742 = vmatprep.subr.mxu0 0.0
  %8743 = vmatpush1.xpose.msra.mxu0 0.0
  %8744 = vmatprep.subr.mxu0 0.0
  %8745 = vmatpush1.xpose.msra.mxu0 0.0
  %8746 = vmatprep.subr.mxu0 0.0
  %8747 = vmatpush1.xpose.msra.mxu0 0.0
  %8748 = vmatprep.subr.mxu0 0.0
  %8749 = vmatpush1.xpose.msra.mxu0 0.0
  %8750 = vmatprep.subr.mxu0 0.0
  %8751 = vmatpush1.xpose.msra.mxu0 %v8722
  %8752 = vmatprep.subr.mxu0 0.0
  %8753 = vmatpush1.xpose.msra.mxu0 %v8720
  %8754 = vmatprep.subr.mxu0 0.0
  %8755 = vmatpush1.xpose.msra.mxu0 %v8718
  %8756 = vmatprep.subr.mxu0 0.0
  %8757 = vmatpush2.xpose.msra.mxu0 0.0
  %8758 = vmatprep.subr.mxu0 0.0
  %8759 = vmatpush2.xpose.msra.mxu0 0.0
  %8760 = vmatprep.subr.mxu0 0.0
  %8761 = vmatpush2.xpose.msra.mxu0 0.0
  %8762 = vmatprep.subr.mxu0 0.0
  %8763 = vmatpush2.xpose.msra.mxu0 0.0
  %8764 = vmatprep.subr.mxu0 0.0
  %8765 = vmatpush2.xpose.msra.mxu0 0.0
  %8766 = vmatprep.subr.mxu0 0.0
  %8767 = vmatpush2.xpose.msra.mxu0 0.0
  %8768 = vmatprep.subr.mxu0 0.0
  %8769 = vmatpush2.xpose.msra.mxu0 0.0
  %8770 = vmatprep.subr.mxu0 0.0
  %8771 = vmatpush2.xpose.msra.mxu0 0.0
  %8772 = vmatprep.subr.mxu0 0.0
  %8773 = vmatpush2.xpose.msra.mxu0 0.0
  %8774 = vmatprep.subr.mxu0 0.0
  %8775 = vmatpush2.xpose.msra.mxu0 0.0
  %8776 = vmatprep.subr.mxu0 0.0
  %8777 = vmatpush2.xpose.msra.mxu0 0.0
  %8778 = vmatprep.subr.mxu0 0.0
  %8779 = vmatpush2.xpose.msra.mxu0 0.0
  %8780 = vmatprep.subr.mxu0 0.0
  %8781 = vmatpush2.xpose.msra.mxu0 0.0
  %8782 = vmatprep.subr.mxu0 0.0
  %8783 = vmatpush2.xpose.msra.mxu0 0.0
  %8784 = vmatprep.subr.mxu0 0.0
  %8785 = vmatpush2.xpose.msra.mxu0 0.0
  %8786 = vmatprep.subr.mxu0 0.0
  %8787 = vmatpush2.xpose.msra.mxu0 0.0
  %8788 = vmatprep.mubr.f32.mxu0 0.0
  %8789 = vmatmul.mubr.f32.gmra.mxu0 %v8713
  %v8790 = vpop.f32.mrf.mxu0
  %v8791 = vadd.f32 %v87, %v8790
  %v8792 = vpop.f32.mrf.mxu0
  %8793 = vmatprep.mubr.f32.mxu0 0.0
  %8794 = vmatmul.mubr.f32.gmra.mxu0 %v8716
  %v8795 = vpop.f32.mrf.mxu0
  %v8796 = vadd.f32 %v88, %v8795
  %v8797 = vpop.f32.mrf.mxu0
  %8798 = vdwg.mxu0
  %v8799 = vsel %vm632, %v8791, -inf
  %8800 = vmax.xlane.f32.xlu0 %v8799
  %v8801 = vpop.xlane.xlu0 %8800
  %v8802 = vsel %vm632, %v8796, -inf
  %8803 = vmax.xlane.f32.xlu0 %v8802
  %v8804 = vpop.xlane.xlu0 %8803
  %v8805 = vsub.f32 %v8791, %v8801
  %v8806 = vsub.f32 %v8796, %v8804
  %v8807 = vmul.f32 %v8805, 1.442695
  %v8808 = vpow.pop %v8807
  %v8809 = vmul.f32 %v8806, 1.442695
  %v8810 = vpow.pop %v8809
  %v8811 = vsel %vm632, %v8808, 0.0
  %8812 = vadd.xlane.f32.xlu0 %v8811
  %v8813 = vpop.xlane.xlu0 %8812
  %v8814 = vsel %vm632, %v8810, 0.0
  %8815 = vadd.xlane.f32.xlu0 %v8814
  %v8816 = vpop.xlane.xlu0 %8815
  %v8817 = vrcp.pop %v8813
  %v8818 = vrcp.pop %v8816
  %v8819 = vmul.f32 %v8808, %v8817
  %v8820 = vmul.f32 %v8810, %v8818
  %8821 = vrot.lane.b32.xlu0 %v4240, 96
  %v8822 = vpop.permute.xlu0 %8821
  %8823 = vrot.lane.b32.xlu0 %v4245, 96
  %v8824 = vpop.permute.xlu0 %8823
  %8825 = vrot.lane.b32.xlu0 %v4250, 96
  %v8826 = vpop.permute.xlu0 %8825
  %v8830 = vsel %vm632, %v8819, 0
  %v8833 = vsel %vm632, %v8820, 0
  %v8835 = vsel %vm676, %v8826, 0
  %8837 = vmatprep.subr.mxu0 0.0
  %8838 = vmatpush1.msra.mxu0 0.0
  %8839 = vmatprep.subr.mxu0 0.0
  %8840 = vmatpush1.msra.mxu0 0.0
  %8841 = vmatprep.subr.mxu0 0.0
  %8842 = vmatpush1.msra.mxu0 0.0
  %8843 = vmatprep.subr.mxu0 0.0
  %8844 = vmatpush1.msra.mxu0 0.0
  %8845 = vmatprep.subr.mxu0 0.0
  %8846 = vmatpush1.msra.mxu0 0.0
  %8847 = vmatprep.subr.mxu0 0.0
  %8848 = vmatpush1.msra.mxu0 0.0
  %8849 = vmatprep.subr.mxu0 0.0
  %8850 = vmatpush1.msra.mxu0 0.0
  %8851 = vmatprep.subr.mxu0 0.0
  %8852 = vmatpush1.msra.mxu0 0.0
  %8853 = vmatprep.subr.mxu0 0.0
  %8854 = vmatpush1.msra.mxu0 0.0
  %8855 = vmatprep.subr.mxu0 0.0
  %8856 = vmatpush1.msra.mxu0 0.0
  %8857 = vmatprep.subr.mxu0 0.0
  %8858 = vmatpush1.msra.mxu0 0.0
  %8859 = vmatprep.subr.mxu0 0.0
  %8860 = vmatpush1.msra.mxu0 0.0
  %8861 = vmatprep.subr.mxu0 0.0
  %8862 = vmatpush1.msra.mxu0 0.0
  %8863 = vmatprep.subr.mxu0 0.0
  %8864 = vmatpush1.msra.mxu0 %v8835
  %8865 = vmatprep.subr.mxu0 0.0
  %8866 = vmatpush1.msra.mxu0 %v8824
  %8867 = vmatprep.subr.mxu0 0.0
  %8868 = vmatpush1.msra.mxu0 %v8822
  %8869 = vmatprep.subr.mxu0 0.0
  %8870 = vmatpush2.msra.mxu0 0.0
  %8871 = vmatprep.subr.mxu0 0.0
  %8872 = vmatpush2.msra.mxu0 0.0
  %8873 = vmatprep.subr.mxu0 0.0
  %8874 = vmatpush2.msra.mxu0 0.0
  %8875 = vmatprep.subr.mxu0 0.0
  %8876 = vmatpush2.msra.mxu0 0.0
  %8877 = vmatprep.subr.mxu0 0.0
  %8878 = vmatpush2.msra.mxu0 0.0
  %8879 = vmatprep.subr.mxu0 0.0
  %8880 = vmatpush2.msra.mxu0 0.0
  %8881 = vmatprep.subr.mxu0 0.0
  %8882 = vmatpush2.msra.mxu0 0.0
  %8883 = vmatprep.subr.mxu0 0.0
  %8884 = vmatpush2.msra.mxu0 0.0
  %8885 = vmatprep.subr.mxu0 0.0
  %8886 = vmatpush2.msra.mxu0 0.0
  %8887 = vmatprep.subr.mxu0 0.0
  %8888 = vmatpush2.msra.mxu0 0.0
  %8889 = vmatprep.subr.mxu0 0.0
  %8890 = vmatpush2.msra.mxu0 0.0
  %8891 = vmatprep.subr.mxu0 0.0
  %8892 = vmatpush2.msra.mxu0 0.0
  %8893 = vmatprep.subr.mxu0 0.0
  %8894 = vmatpush2.msra.mxu0 0.0
  %8895 = vmatprep.subr.mxu0 0.0
  %8896 = vmatpush2.msra.mxu0 0.0
  %8897 = vmatprep.subr.mxu0 0.0
  %8898 = vmatpush2.msra.mxu0 0.0
  %8899 = vmatprep.subr.mxu0 0.0
  %8900 = vmatpush2.msra.mxu0 0.0
  %8901 = vmatprep.mubr.f32.mxu0 0.0
  %8902 = vmatmul.mubr.f32.gmra.mxu0 %v8830
  %v8903 = vpop.f32.mrf.mxu0
  %v8904 = vadd.f32 0.0, %v8903
  %v8905 = vpop.f32.mrf.mxu0
  %8906 = vmatprep.mubr.f32.mxu0 0.0
  %8907 = vmatmul.mubr.f32.gmra.mxu0 %v8833
  %v8908 = vpop.f32.mrf.mxu0
  %v8909 = vadd.f32 0.0, %v8908
  %v8910 = vpop.f32.mrf.mxu0
  %8911 = vdwg.mxu0
  %8912 = vrot.lane.b32.xlu0 %v8691, 120
  %v8913 = vpop.permute.xlu0 %8912
  %8914 = vrot.lane.b32.xlu0 %v8696, 120
  %v8915 = vpop.permute.xlu0 %8914
  %8916 = vrot.lane.b32.xlu0 %v4138, 88
  %v8917 = vpop.permute.xlu0 %8916
  %8918 = vrot.lane.b32.xlu0 %v4143, 88
  %v8919 = vpop.permute.xlu0 %8918
  %8920 = vrot.lane.b32.xlu0 %v4148, 88
  %v8921 = vpop.permute.xlu0 %8920
  %v8922 = vsel %vm539, %v8913, 0
  %v8924 = vsel %vm539, %v8915, 0
  %v8926 = vsel %vm539, %v8917, 0
  %v8928 = vsel %vm539, %v8919, 0
  %v8930 = vsel %vm539, %v8921, 0
  %8932 = vmatprep.subr.mxu0 0.0
  %8933 = vmatpush1.xpose.msra.mxu0 0.0
  %8934 = vmatprep.subr.mxu0 0.0
  %8935 = vmatpush1.xpose.msra.mxu0 0.0
  %8936 = vmatprep.subr.mxu0 0.0
  %8937 = vmatpush1.xpose.msra.mxu0 0.0
  %8938 = vmatprep.subr.mxu0 0.0
  %8939 = vmatpush1.xpose.msra.mxu0 0.0
  %8940 = vmatprep.subr.mxu0 0.0
  %8941 = vmatpush1.xpose.msra.mxu0 0.0
  %8942 = vmatprep.subr.mxu0 0.0
  %8943 = vmatpush1.xpose.msra.mxu0 0.0
  %8944 = vmatprep.subr.mxu0 0.0
  %8945 = vmatpush1.xpose.msra.mxu0 0.0
  %8946 = vmatprep.subr.mxu0 0.0
  %8947 = vmatpush1.xpose.msra.mxu0 0.0
  %8948 = vmatprep.subr.mxu0 0.0
  %8949 = vmatpush1.xpose.msra.mxu0 0.0
  %8950 = vmatprep.subr.mxu0 0.0
  %8951 = vmatpush1.xpose.msra.mxu0 0.0
  %8952 = vmatprep.subr.mxu0 0.0
  %8953 = vmatpush1.xpose.msra.mxu0 0.0
  %8954 = vmatprep.subr.mxu0 0.0
  %8955 = vmatpush1.xpose.msra.mxu0 0.0
  %8956 = vmatprep.subr.mxu0 0.0
  %8957 = vmatpush1.xpose.msra.mxu0 0.0
  %8958 = vmatprep.subr.mxu0 0.0
  %8959 = vmatpush1.xpose.msra.mxu0 %v8930
  %8960 = vmatprep.subr.mxu0 0.0
  %8961 = vmatpush1.xpose.msra.mxu0 %v8928
  %8962 = vmatprep.subr.mxu0 0.0
  %8963 = vmatpush1.xpose.msra.mxu0 %v8926
  %8964 = vmatprep.subr.mxu0 0.0
  %8965 = vmatpush2.xpose.msra.mxu0 0.0
  %8966 = vmatprep.subr.mxu0 0.0
  %8967 = vmatpush2.xpose.msra.mxu0 0.0
  %8968 = vmatprep.subr.mxu0 0.0
  %8969 = vmatpush2.xpose.msra.mxu0 0.0
  %8970 = vmatprep.subr.mxu0 0.0
  %8971 = vmatpush2.xpose.msra.mxu0 0.0
  %8972 = vmatprep.subr.mxu0 0.0
  %8973 = vmatpush2.xpose.msra.mxu0 0.0
  %8974 = vmatprep.subr.mxu0 0.0
  %8975 = vmatpush2.xpose.msra.mxu0 0.0
  %8976 = vmatprep.subr.mxu0 0.0
  %8977 = vmatpush2.xpose.msra.mxu0 0.0
  %8978 = vmatprep.subr.mxu0 0.0
  %8979 = vmatpush2.xpose.msra.mxu0 0.0
  %8980 = vmatprep.subr.mxu0 0.0
  %8981 = vmatpush2.xpose.msra.mxu0 0.0
  %8982 = vmatprep.subr.mxu0 0.0
  %8983 = vmatpush2.xpose.msra.mxu0 0.0
  %8984 = vmatprep.subr.mxu0 0.0
  %8985 = vmatpush2.xpose.msra.mxu0 0.0
  %8986 = vmatprep.subr.mxu0 0.0
  %8987 = vmatpush2.xpose.msra.mxu0 0.0
  %8988 = vmatprep.subr.mxu0 0.0
  %8989 = vmatpush2.xpose.msra.mxu0 0.0
  %8990 = vmatprep.subr.mxu0 0.0
  %8991 = vmatpush2.xpose.msra.mxu0 0.0
  %8992 = vmatprep.subr.mxu0 0.0
  %8993 = vmatpush2.xpose.msra.mxu0 0.0
  %8994 = vmatprep.subr.mxu0 0.0
  %8995 = vmatpush2.xpose.msra.mxu0 0.0
  %8996 = vmatprep.mubr.f32.mxu0 0.0
  %8997 = vmatmul.mubr.f32.gmra.mxu0 %v8922
  %v8998 = vpop.f32.mrf.mxu0
  %v8999 = vadd.f32 %v87, %v8998
  %v9000 = vpop.f32.mrf.mxu0
  %9001 = vmatprep.mubr.f32.mxu0 0.0
  %9002 = vmatmul.mubr.f32.gmra.mxu0 %v8924
  %v9003 = vpop.f32.mrf.mxu0
  %v9004 = vadd.f32 %v88, %v9003
  %v9005 = vpop.f32.mrf.mxu0
  %9006 = vdwg.mxu0
  %v9007 = vsel %vm632, %v8999, -inf
  %9008 = vmax.xlane.f32.xlu0 %v9007
  %v9009 = vpop.xlane.xlu0 %9008
  %v9010 = vsel %vm632, %v9004, -inf
  %9011 = vmax.xlane.f32.xlu0 %v9010
  %v9012 = vpop.xlane.xlu0 %9011
  %v9013 = vsub.f32 %v8999, %v9009
  %v9014 = vsub.f32 %v9004, %v9012
  %v9015 = vmul.f32 %v9013, 1.442695
  %v9016 = vpow.pop %v9015
  %v9017 = vmul.f32 %v9014, 1.442695
  %v9018 = vpow.pop %v9017
  %v9019 = vsel %vm632, %v9016, 0.0
  %9020 = vadd.xlane.f32.xlu0 %v9019
  %v9021 = vpop.xlane.xlu0 %9020
  %v9022 = vsel %vm632, %v9018, 0.0
  %9023 = vadd.xlane.f32.xlu0 %v9022
  %v9024 = vpop.xlane.xlu0 %9023
  %v9025 = vrcp.pop %v9021
  %v9026 = vrcp.pop %v9024
  %v9027 = vmul.f32 %v9016, %v9025
  %v9028 = vmul.f32 %v9018, %v9026
  %9029 = vrot.lane.b32.xlu0 %v4240, 88
  %v9030 = vpop.permute.xlu0 %9029
  %9031 = vrot.lane.b32.xlu0 %v4245, 88
  %v9032 = vpop.permute.xlu0 %9031
  %9033 = vrot.lane.b32.xlu0 %v4250, 88
  %v9034 = vpop.permute.xlu0 %9033
  %v9038 = vsel %vm632, %v9027, 0
  %v9041 = vsel %vm632, %v9028, 0
  %v9043 = vsel %vm676, %v9034, 0
  %9045 = vmatprep.subr.mxu0 0.0
  %9046 = vmatpush1.msra.mxu0 0.0
  %9047 = vmatprep.subr.mxu0 0.0
  %9048 = vmatpush1.msra.mxu0 0.0
  %9049 = vmatprep.subr.mxu0 0.0
  %9050 = vmatpush1.msra.mxu0 0.0
  %9051 = vmatprep.subr.mxu0 0.0
  %9052 = vmatpush1.msra.mxu0 0.0
  %9053 = vmatprep.subr.mxu0 0.0
  %9054 = vmatpush1.msra.mxu0 0.0
  %9055 = vmatprep.subr.mxu0 0.0
  %9056 = vmatpush1.msra.mxu0 0.0
  %9057 = vmatprep.subr.mxu0 0.0
  %9058 = vmatpush1.msra.mxu0 0.0
  %9059 = vmatprep.subr.mxu0 0.0
  %9060 = vmatpush1.msra.mxu0 0.0
  %9061 = vmatprep.subr.mxu0 0.0
  %9062 = vmatpush1.msra.mxu0 0.0
  %9063 = vmatprep.subr.mxu0 0.0
  %9064 = vmatpush1.msra.mxu0 0.0
  %9065 = vmatprep.subr.mxu0 0.0
  %9066 = vmatpush1.msra.mxu0 0.0
  %9067 = vmatprep.subr.mxu0 0.0
  %9068 = vmatpush1.msra.mxu0 0.0
  %9069 = vmatprep.subr.mxu0 0.0
  %9070 = vmatpush1.msra.mxu0 0.0
  %9071 = vmatprep.subr.mxu0 0.0
  %9072 = vmatpush1.msra.mxu0 %v9043
  %9073 = vmatprep.subr.mxu0 0.0
  %9074 = vmatpush1.msra.mxu0 %v9032
  %9075 = vmatprep.subr.mxu0 0.0
  %9076 = vmatpush1.msra.mxu0 %v9030
  %9077 = vmatprep.subr.mxu0 0.0
  %9078 = vmatpush2.msra.mxu0 0.0
  %9079 = vmatprep.subr.mxu0 0.0
  %9080 = vmatpush2.msra.mxu0 0.0
  %9081 = vmatprep.subr.mxu0 0.0
  %9082 = vmatpush2.msra.mxu0 0.0
  %9083 = vmatprep.subr.mxu0 0.0
  %9084 = vmatpush2.msra.mxu0 0.0
  %9085 = vmatprep.subr.mxu0 0.0
  %9086 = vmatpush2.msra.mxu0 0.0
  %9087 = vmatprep.subr.mxu0 0.0
  %9088 = vmatpush2.msra.mxu0 0.0
  %9089 = vmatprep.subr.mxu0 0.0
  %9090 = vmatpush2.msra.mxu0 0.0
  %9091 = vmatprep.subr.mxu0 0.0
  %9092 = vmatpush2.msra.mxu0 0.0
  %9093 = vmatprep.subr.mxu0 0.0
  %9094 = vmatpush2.msra.mxu0 0.0
  %9095 = vmatprep.subr.mxu0 0.0
  %9096 = vmatpush2.msra.mxu0 0.0
  %9097 = vmatprep.subr.mxu0 0.0
  %9098 = vmatpush2.msra.mxu0 0.0
  %9099 = vmatprep.subr.mxu0 0.0
  %9100 = vmatpush2.msra.mxu0 0.0
  %9101 = vmatprep.subr.mxu0 0.0
  %9102 = vmatpush2.msra.mxu0 0.0
  %9103 = vmatprep.subr.mxu0 0.0
  %9104 = vmatpush2.msra.mxu0 0.0
  %9105 = vmatprep.subr.mxu0 0.0
  %9106 = vmatpush2.msra.mxu0 0.0
  %9107 = vmatprep.subr.mxu0 0.0
  %9108 = vmatpush2.msra.mxu0 0.0
  %9109 = vmatprep.mubr.f32.mxu0 0.0
  %9110 = vmatmul.mubr.f32.gmra.mxu0 %v9038
  %v9111 = vpop.f32.mrf.mxu0
  %v9112 = vadd.f32 0.0, %v9111
  %v9113 = vpop.f32.mrf.mxu0
  %9114 = vmatprep.mubr.f32.mxu0 0.0
  %9115 = vmatmul.mubr.f32.gmra.mxu0 %v9041
  %v9116 = vpop.f32.mrf.mxu0
  %v9117 = vadd.f32 0.0, %v9116
  %v9118 = vpop.f32.mrf.mxu0
  %9119 = vdwg.mxu0
  %v9121 = vsel %vm539, %v9112, 0
  %v9124 = vsel %vm539, %v9117, 0
  %9126 = vmatprep.subr.mxu0 0.0
  %9127 = vmatpush1.msra.mxu0 0.0
  %9128 = vmatprep.subr.mxu0 0.0
  %9129 = vmatpush1.msra.mxu0 0.0
  %9130 = vmatprep.subr.mxu0 0.0
  %9131 = vmatpush1.msra.mxu0 0.0
  %9132 = vmatprep.subr.mxu0 0.0
  %9133 = vmatpush1.msra.mxu0 0.0
  %9134 = vmatprep.subr.mxu0 0.0
  %9135 = vmatpush1.msra.mxu0 0.0
  %9136 = vmatprep.subr.mxu0 0.0
  %9137 = vmatpush1.msra.mxu0 0.0
  %9138 = vmatprep.subr.mxu0 0.0
  %9139 = vmatpush1.msra.mxu0 0.0
  %9140 = vmatprep.subr.mxu0 0.0
  %9141 = vmatpush1.msra.mxu0 0.0
  %9142 = vmatprep.subr.mxu0 0.0
  %9143 = vmatpush1.msra.mxu0 0.0
  %9144 = vmatprep.subr.mxu0 0.0
  %9145 = vmatpush1.msra.mxu0 0.0
  %9146 = vmatprep.subr.mxu0 0.0
  %9147 = vmatpush1.msra.mxu0 0.0
  %9148 = vmatprep.subr.mxu0 0.0
  %9149 = vmatpush1.msra.mxu0 0.0
  %9150 = vmatprep.subr.mxu0 0.0
  %9151 = vmatpush1.msra.mxu0 0.0
  %9152 = vmatprep.subr.mxu0 0.0
  %9153 = vmatpush1.msra.mxu0 0.0
  %9154 = vmatprep.subr.mxu0 0.0
  %9155 = vmatpush1.msra.mxu0 0.0
  %9156 = vmatprep.subr.mxu0 0.0
  %9157 = vmatpush1.msra.mxu0 %v8701
  %9158 = vmatprep.subr.mxu0 0.0
  %9159 = vmatpush2.msra.mxu0 0.0
  %9160 = vmatprep.subr.mxu0 0.0
  %9161 = vmatpush2.msra.mxu0 0.0
  %9162 = vmatprep.subr.mxu0 0.0
  %9163 = vmatpush2.msra.mxu0 0.0
  %9164 = vmatprep.subr.mxu0 0.0
  %9165 = vmatpush2.msra.mxu0 0.0
  %9166 = vmatprep.subr.mxu0 0.0
  %9167 = vmatpush2.msra.mxu0 0.0
  %9168 = vmatprep.subr.mxu0 0.0
  %9169 = vmatpush2.msra.mxu0 0.0
  %9170 = vmatprep.subr.mxu0 0.0
  %9171 = vmatpush2.msra.mxu0 0.0
  %9172 = vmatprep.subr.mxu0 0.0
  %9173 = vmatpush2.msra.mxu0 0.0
  %9174 = vmatprep.subr.mxu0 0.0
  %9175 = vmatpush2.msra.mxu0 0.0
  %9176 = vmatprep.subr.mxu0 0.0
  %9177 = vmatpush2.msra.mxu0 0.0
  %9178 = vmatprep.subr.mxu0 0.0
  %9179 = vmatpush2.msra.mxu0 0.0
  %9180 = vmatprep.subr.mxu0 0.0
  %9181 = vmatpush2.msra.mxu0 0.0
  %9182 = vmatprep.subr.mxu0 0.0
  %9183 = vmatpush2.msra.mxu0 0.0
  %9184 = vmatprep.subr.mxu0 0.0
  %9185 = vmatpush2.msra.mxu0 0.0
  %9186 = vmatprep.subr.mxu0 0.0
  %9187 = vmatpush2.msra.mxu0 0.0
  %9188 = vmatprep.subr.mxu0 0.0
  %9189 = vmatpush2.msra.mxu0 0.0
  %9190 = vmatprep.mubr.f32.mxu0 0.0
  %9191 = vmatmul.mubr.f32.gmra.mxu0 %v9121
  %v9192 = vpop.f32.mrf.mxu0
  %v9193 = vadd.f32 0.0, %v9192
  %v9194 = vpop.f32.mrf.mxu0
  %9195 = vmatprep.mubr.f32.mxu0 0.0
  %9196 = vmatmul.mubr.f32.gmra.mxu0 %v9124
  %v9197 = vpop.f32.mrf.mxu0
  %v9198 = vadd.f32 0.0, %v9197
  %v9199 = vpop.f32.mrf.mxu0
  %9200 = vdwg.mxu0
  %v9202 = vsel %vm539, %v8904, 0
  %v9205 = vsel %vm539, %v8909, 0
  %9207 = vmatprep.subr.mxu0 0.0
  %9208 = vmatpush1.msra.mxu0 0.0
  %9209 = vmatprep.subr.mxu0 0.0
  %9210 = vmatpush1.msra.mxu0 0.0
  %9211 = vmatprep.subr.mxu0 0.0
  %9212 = vmatpush1.msra.mxu0 0.0
  %9213 = vmatprep.subr.mxu0 0.0
  %9214 = vmatpush1.msra.mxu0 0.0
  %9215 = vmatprep.subr.mxu0 0.0
  %9216 = vmatpush1.msra.mxu0 0.0
  %9217 = vmatprep.subr.mxu0 0.0
  %9218 = vmatpush1.msra.mxu0 0.0
  %9219 = vmatprep.subr.mxu0 0.0
  %9220 = vmatpush1.msra.mxu0 0.0
  %9221 = vmatprep.subr.mxu0 0.0
  %9222 = vmatpush1.msra.mxu0 0.0
  %9223 = vmatprep.subr.mxu0 0.0
  %9224 = vmatpush1.msra.mxu0 0.0
  %9225 = vmatprep.subr.mxu0 0.0
  %9226 = vmatpush1.msra.mxu0 0.0
  %9227 = vmatprep.subr.mxu0 0.0
  %9228 = vmatpush1.msra.mxu0 0.0
  %9229 = vmatprep.subr.mxu0 0.0
  %9230 = vmatpush1.msra.mxu0 0.0
  %9231 = vmatprep.subr.mxu0 0.0
  %9232 = vmatpush1.msra.mxu0 0.0
  %9233 = vmatprep.subr.mxu0 0.0
  %9234 = vmatpush1.msra.mxu0 0.0
  %9235 = vmatprep.subr.mxu0 0.0
  %9236 = vmatpush1.msra.mxu0 0.0
  %9237 = vmatprep.subr.mxu0 0.0
  %9238 = vmatpush1.msra.mxu0 %v8700
  %9239 = vmatprep.subr.mxu0 0.0
  %9240 = vmatpush2.msra.mxu0 0.0
  %9241 = vmatprep.subr.mxu0 0.0
  %9242 = vmatpush2.msra.mxu0 0.0
  %9243 = vmatprep.subr.mxu0 0.0
  %9244 = vmatpush2.msra.mxu0 0.0
  %9245 = vmatprep.subr.mxu0 0.0
  %9246 = vmatpush2.msra.mxu0 0.0
  %9247 = vmatprep.subr.mxu0 0.0
  %9248 = vmatpush2.msra.mxu0 0.0
  %9249 = vmatprep.subr.mxu0 0.0
  %9250 = vmatpush2.msra.mxu0 0.0
  %9251 = vmatprep.subr.mxu0 0.0
  %9252 = vmatpush2.msra.mxu0 0.0
  %9253 = vmatprep.subr.mxu0 0.0
  %9254 = vmatpush2.msra.mxu0 0.0
  %9255 = vmatprep.subr.mxu0 0.0
  %9256 = vmatpush2.msra.mxu0 0.0
  %9257 = vmatprep.subr.mxu0 0.0
  %9258 = vmatpush2.msra.mxu0 0.0
  %9259 = vmatprep.subr.mxu0 0.0
  %9260 = vmatpush2.msra.mxu0 0.0
  %9261 = vmatprep.subr.mxu0 0.0
  %9262 = vmatpush2.msra.mxu0 0.0
  %9263 = vmatprep.subr.mxu0 0.0
  %9264 = vmatpush2.msra.mxu0 0.0
  %9265 = vmatprep.subr.mxu0 0.0
  %9266 = vmatpush2.msra.mxu0 0.0
  %9267 = vmatprep.subr.mxu0 0.0
  %9268 = vmatpush2.msra.mxu0 0.0
  %9269 = vmatprep.subr.mxu0 0.0
  %9270 = vmatpush2.msra.mxu0 0.0
  %9271 = vmatprep.mubr.f32.mxu0 0.0
  %9272 = vmatmul.mubr.f32.gmra.mxu0 %v9202
  %v9273 = vpop.f32.mrf.mxu0
  %v9274 = vadd.f32 %v9193, %v9273
  %v9275 = vpop.f32.mrf.mxu0
  %9276 = vmatprep.mubr.f32.mxu0 0.0
  %9277 = vmatmul.mubr.f32.gmra.mxu0 %v9205
  %v9278 = vpop.f32.mrf.mxu0
  %v9279 = vadd.f32 %v9198, %v9278
  %v9280 = vpop.f32.mrf.mxu0
  %9281 = vdwg.mxu0
  %9282 = vrot.lane.b32.xlu0 %v8691, 112
  %v9283 = vpop.permute.xlu0 %9282
  %9284 = vrot.lane.b32.xlu0 %v8696, 112
  %v9285 = vpop.permute.xlu0 %9284
  %9286 = vrot.lane.b32.xlu0 %v4138, 80
  %v9287 = vpop.permute.xlu0 %9286
  %9288 = vrot.lane.b32.xlu0 %v4143, 80
  %v9289 = vpop.permute.xlu0 %9288
  %9290 = vrot.lane.b32.xlu0 %v4148, 80
  %v9291 = vpop.permute.xlu0 %9290
  %v9292 = vsel %vm539, %v9283, 0
  %v9294 = vsel %vm539, %v9285, 0
  %v9296 = vsel %vm539, %v9287, 0
  %v9298 = vsel %vm539, %v9289, 0
  %v9300 = vsel %vm539, %v9291, 0
  %9302 = vmatprep.subr.mxu0 0.0
  %9303 = vmatpush1.xpose.msra.mxu0 0.0
  %9304 = vmatprep.subr.mxu0 0.0
  %9305 = vmatpush1.xpose.msra.mxu0 0.0
  %9306 = vmatprep.subr.mxu0 0.0
  %9307 = vmatpush1.xpose.msra.mxu0 0.0
  %9308 = vmatprep.subr.mxu0 0.0
  %9309 = vmatpush1.xpose.msra.mxu0 0.0
  %9310 = vmatprep.subr.mxu0 0.0
  %9311 = vmatpush1.xpose.msra.mxu0 0.0
  %9312 = vmatprep.subr.mxu0 0.0
  %9313 = vmatpush1.xpose.msra.mxu0 0.0
  %9314 = vmatprep.subr.mxu0 0.0
  %9315 = vmatpush1.xpose.msra.mxu0 0.0
  %9316 = vmatprep.subr.mxu0 0.0
  %9317 = vmatpush1.xpose.msra.mxu0 0.0
  %9318 = vmatprep.subr.mxu0 0.0
  %9319 = vmatpush1.xpose.msra.mxu0 0.0
  %9320 = vmatprep.subr.mxu0 0.0
  %9321 = vmatpush1.xpose.msra.mxu0 0.0
  %9322 = vmatprep.subr.mxu0 0.0
  %9323 = vmatpush1.xpose.msra.mxu0 0.0
  %9324 = vmatprep.subr.mxu0 0.0
  %9325 = vmatpush1.xpose.msra.mxu0 0.0
  %9326 = vmatprep.subr.mxu0 0.0
  %9327 = vmatpush1.xpose.msra.mxu0 0.0
  %9328 = vmatprep.subr.mxu0 0.0
  %9329 = vmatpush1.xpose.msra.mxu0 %v9300
  %9330 = vmatprep.subr.mxu0 0.0
  %9331 = vmatpush1.xpose.msra.mxu0 %v9298
  %9332 = vmatprep.subr.mxu0 0.0
  %9333 = vmatpush1.xpose.msra.mxu0 %v9296
  %9334 = vmatprep.subr.mxu0 0.0
  %9335 = vmatpush2.xpose.msra.mxu0 0.0
  %9336 = vmatprep.subr.mxu0 0.0
  %9337 = vmatpush2.xpose.msra.mxu0 0.0
  %9338 = vmatprep.subr.mxu0 0.0
  %9339 = vmatpush2.xpose.msra.mxu0 0.0
  %9340 = vmatprep.subr.mxu0 0.0
  %9341 = vmatpush2.xpose.msra.mxu0 0.0
  %9342 = vmatprep.subr.mxu0 0.0
  %9343 = vmatpush2.xpose.msra.mxu0 0.0
  %9344 = vmatprep.subr.mxu0 0.0
  %9345 = vmatpush2.xpose.msra.mxu0 0.0
  %9346 = vmatprep.subr.mxu0 0.0
  %9347 = vmatpush2.xpose.msra.mxu0 0.0
  %9348 = vmatprep.subr.mxu0 0.0
  %9349 = vmatpush2.xpose.msra.mxu0 0.0
  %9350 = vmatprep.subr.mxu0 0.0
  %9351 = vmatpush2.xpose.msra.mxu0 0.0
  %9352 = vmatprep.subr.mxu0 0.0
  %9353 = vmatpush2.xpose.msra.mxu0 0.0
  %9354 = vmatprep.subr.mxu0 0.0
  %9355 = vmatpush2.xpose.msra.mxu0 0.0
  %9356 = vmatprep.subr.mxu0 0.0
  %9357 = vmatpush2.xpose.msra.mxu0 0.0
  %9358 = vmatprep.subr.mxu0 0.0
  %9359 = vmatpush2.xpose.msra.mxu0 0.0
  %9360 = vmatprep.subr.mxu0 0.0
  %9361 = vmatpush2.xpose.msra.mxu0 0.0
  %9362 = vmatprep.subr.mxu0 0.0
  %9363 = vmatpush2.xpose.msra.mxu0 0.0
  %9364 = vmatprep.subr.mxu0 0.0
  %9365 = vmatpush2.xpose.msra.mxu0 0.0
  %9366 = vmatprep.mubr.f32.mxu0 0.0
  %9367 = vmatmul.mubr.f32.gmra.mxu0 %v9292
  %v9368 = vpop.f32.mrf.mxu0
  %v9369 = vadd.f32 %v87, %v9368
  %v9370 = vpop.f32.mrf.mxu0
  %9371 = vmatprep.mubr.f32.mxu0 0.0
  %9372 = vmatmul.mubr.f32.gmra.mxu0 %v9294
  %v9373 = vpop.f32.mrf.mxu0
  %v9374 = vadd.f32 %v88, %v9373
  %v9375 = vpop.f32.mrf.mxu0
  %9376 = vdwg.mxu0
  %v9377 = vsel %vm632, %v9369, -inf
  %9378 = vmax.xlane.f32.xlu0 %v9377
  %v9379 = vpop.xlane.xlu0 %9378
  %v9380 = vsel %vm632, %v9374, -inf
  %9381 = vmax.xlane.f32.xlu0 %v9380
  %v9382 = vpop.xlane.xlu0 %9381
  %v9383 = vsub.f32 %v9369, %v9379
  %v9384 = vsub.f32 %v9374, %v9382
  %v9385 = vmul.f32 %v9383, 1.442695
  %v9386 = vpow.pop %v9385
  %v9387 = vmul.f32 %v9384, 1.442695
  %v9388 = vpow.pop %v9387
  %v9389 = vsel %vm632, %v9386, 0.0
  %9390 = vadd.xlane.f32.xlu0 %v9389
  %v9391 = vpop.xlane.xlu0 %9390
  %v9392 = vsel %vm632, %v9388, 0.0
  %9393 = vadd.xlane.f32.xlu0 %v9392
  %v9394 = vpop.xlane.xlu0 %9393
  %v9395 = vrcp.pop %v9391
  %v9396 = vrcp.pop %v9394
  %v9397 = vmul.f32 %v9386, %v9395
  %v9398 = vmul.f32 %v9388, %v9396
  %9399 = vrot.lane.b32.xlu0 %v4240, 80
  %v9400 = vpop.permute.xlu0 %9399
  %9401 = vrot.lane.b32.xlu0 %v4245, 80
  %v9402 = vpop.permute.xlu0 %9401
  %9403 = vrot.lane.b32.xlu0 %v4250, 80
  %v9404 = vpop.permute.xlu0 %9403
  %v9408 = vsel %vm632, %v9397, 0
  %v9411 = vsel %vm632, %v9398, 0
  %v9413 = vsel %vm676, %v9404, 0
  %9415 = vmatprep.subr.mxu0 0.0
  %9416 = vmatpush1.msra.mxu0 0.0
  %9417 = vmatprep.subr.mxu0 0.0
  %9418 = vmatpush1.msra.mxu0 0.0
  %9419 = vmatprep.subr.mxu0 0.0
  %9420 = vmatpush1.msra.mxu0 0.0
  %9421 = vmatprep.subr.mxu0 0.0
  %9422 = vmatpush1.msra.mxu0 0.0
  %9423 = vmatprep.subr.mxu0 0.0
  %9424 = vmatpush1.msra.mxu0 0.0
  %9425 = vmatprep.subr.mxu0 0.0
  %9426 = vmatpush1.msra.mxu0 0.0
  %9427 = vmatprep.subr.mxu0 0.0
  %9428 = vmatpush1.msra.mxu0 0.0
  %9429 = vmatprep.subr.mxu0 0.0
  %9430 = vmatpush1.msra.mxu0 0.0
  %9431 = vmatprep.subr.mxu0 0.0
  %9432 = vmatpush1.msra.mxu0 0.0
  %9433 = vmatprep.subr.mxu0 0.0
  %9434 = vmatpush1.msra.mxu0 0.0
  %9435 = vmatprep.subr.mxu0 0.0
  %9436 = vmatpush1.msra.mxu0 0.0
  %9437 = vmatprep.subr.mxu0 0.0
  %9438 = vmatpush1.msra.mxu0 0.0
  %9439 = vmatprep.subr.mxu0 0.0
  %9440 = vmatpush1.msra.mxu0 0.0
  %9441 = vmatprep.subr.mxu0 0.0
  %9442 = vmatpush1.msra.mxu0 %v9413
  %9443 = vmatprep.subr.mxu0 0.0
  %9444 = vmatpush1.msra.mxu0 %v9402
  %9445 = vmatprep.subr.mxu0 0.0
  %9446 = vmatpush1.msra.mxu0 %v9400
  %9447 = vmatprep.subr.mxu0 0.0
  %9448 = vmatpush2.msra.mxu0 0.0
  %9449 = vmatprep.subr.mxu0 0.0
  %9450 = vmatpush2.msra.mxu0 0.0
  %9451 = vmatprep.subr.mxu0 0.0
  %9452 = vmatpush2.msra.mxu0 0.0
  %9453 = vmatprep.subr.mxu0 0.0
  %9454 = vmatpush2.msra.mxu0 0.0
  %9455 = vmatprep.subr.mxu0 0.0
  %9456 = vmatpush2.msra.mxu0 0.0
  %9457 = vmatprep.subr.mxu0 0.0
  %9458 = vmatpush2.msra.mxu0 0.0
  %9459 = vmatprep.subr.mxu0 0.0
  %9460 = vmatpush2.msra.mxu0 0.0
  %9461 = vmatprep.subr.mxu0 0.0
  %9462 = vmatpush2.msra.mxu0 0.0
  %9463 = vmatprep.subr.mxu0 0.0
  %9464 = vmatpush2.msra.mxu0 0.0
  %9465 = vmatprep.subr.mxu0 0.0
  %9466 = vmatpush2.msra.mxu0 0.0
  %9467 = vmatprep.subr.mxu0 0.0
  %9468 = vmatpush2.msra.mxu0 0.0
  %9469 = vmatprep.subr.mxu0 0.0
  %9470 = vmatpush2.msra.mxu0 0.0
  %9471 = vmatprep.subr.mxu0 0.0
  %9472 = vmatpush2.msra.mxu0 0.0
  %9473 = vmatprep.subr.mxu0 0.0
  %9474 = vmatpush2.msra.mxu0 0.0
  %9475 = vmatprep.subr.mxu0 0.0
  %9476 = vmatpush2.msra.mxu0 0.0
  %9477 = vmatprep.subr.mxu0 0.0
  %9478 = vmatpush2.msra.mxu0 0.0
  %9479 = vmatprep.mubr.f32.mxu0 0.0
  %9480 = vmatmul.mubr.f32.gmra.mxu0 %v9408
  %v9481 = vpop.f32.mrf.mxu0
  %v9482 = vadd.f32 0.0, %v9481
  %v9483 = vpop.f32.mrf.mxu0
  %9484 = vmatprep.mubr.f32.mxu0 0.0
  %9485 = vmatmul.mubr.f32.gmra.mxu0 %v9411
  %v9486 = vpop.f32.mrf.mxu0
  %v9487 = vadd.f32 0.0, %v9486
  %v9488 = vpop.f32.mrf.mxu0
  %9489 = vdwg.mxu0
  %v9491 = vsel %vm539, %v9482, 0
  %v9494 = vsel %vm539, %v9487, 0
  %9496 = vmatprep.subr.mxu0 0.0
  %9497 = vmatpush1.msra.mxu0 0.0
  %9498 = vmatprep.subr.mxu0 0.0
  %9499 = vmatpush1.msra.mxu0 0.0
  %9500 = vmatprep.subr.mxu0 0.0
  %9501 = vmatpush1.msra.mxu0 0.0
  %9502 = vmatprep.subr.mxu0 0.0
  %9503 = vmatpush1.msra.mxu0 0.0
  %9504 = vmatprep.subr.mxu0 0.0
  %9505 = vmatpush1.msra.mxu0 0.0
  %9506 = vmatprep.subr.mxu0 0.0
  %9507 = vmatpush1.msra.mxu0 0.0
  %9508 = vmatprep.subr.mxu0 0.0
  %9509 = vmatpush1.msra.mxu0 0.0
  %9510 = vmatprep.subr.mxu0 0.0
  %9511 = vmatpush1.msra.mxu0 0.0
  %9512 = vmatprep.subr.mxu0 0.0
  %9513 = vmatpush1.msra.mxu0 0.0
  %9514 = vmatprep.subr.mxu0 0.0
  %9515 = vmatpush1.msra.mxu0 0.0
  %9516 = vmatprep.subr.mxu0 0.0
  %9517 = vmatpush1.msra.mxu0 0.0
  %9518 = vmatprep.subr.mxu0 0.0
  %9519 = vmatpush1.msra.mxu0 0.0
  %9520 = vmatprep.subr.mxu0 0.0
  %9521 = vmatpush1.msra.mxu0 0.0
  %9522 = vmatprep.subr.mxu0 0.0
  %9523 = vmatpush1.msra.mxu0 0.0
  %9524 = vmatprep.subr.mxu0 0.0
  %9525 = vmatpush1.msra.mxu0 0.0
  %9526 = vmatprep.subr.mxu0 0.0
  %9527 = vmatpush1.msra.mxu0 %v8702
  %9528 = vmatprep.subr.mxu0 0.0
  %9529 = vmatpush2.msra.mxu0 0.0
  %9530 = vmatprep.subr.mxu0 0.0
  %9531 = vmatpush2.msra.mxu0 0.0
  %9532 = vmatprep.subr.mxu0 0.0
  %9533 = vmatpush2.msra.mxu0 0.0
  %9534 = vmatprep.subr.mxu0 0.0
  %9535 = vmatpush2.msra.mxu0 0.0
  %9536 = vmatprep.subr.mxu0 0.0
  %9537 = vmatpush2.msra.mxu0 0.0
  %9538 = vmatprep.subr.mxu0 0.0
  %9539 = vmatpush2.msra.mxu0 0.0
  %9540 = vmatprep.subr.mxu0 0.0
  %9541 = vmatpush2.msra.mxu0 0.0
  %9542 = vmatprep.subr.mxu0 0.0
  %9543 = vmatpush2.msra.mxu0 0.0
  %9544 = vmatprep.subr.mxu0 0.0
  %9545 = vmatpush2.msra.mxu0 0.0
  %9546 = vmatprep.subr.mxu0 0.0
  %9547 = vmatpush2.msra.mxu0 0.0
  %9548 = vmatprep.subr.mxu0 0.0
  %9549 = vmatpush2.msra.mxu0 0.0
  %9550 = vmatprep.subr.mxu0 0.0
  %9551 = vmatpush2.msra.mxu0 0.0
  %9552 = vmatprep.subr.mxu0 0.0
  %9553 = vmatpush2.msra.mxu0 0.0
  %9554 = vmatprep.subr.mxu0 0.0
  %9555 = vmatpush2.msra.mxu0 0.0
  %9556 = vmatprep.subr.mxu0 0.0
  %9557 = vmatpush2.msra.mxu0 0.0
  %9558 = vmatprep.subr.mxu0 0.0
  %9559 = vmatpush2.msra.mxu0 0.0
  %9560 = vmatprep.mubr.f32.mxu0 0.0
  %9561 = vmatmul.mubr.f32.gmra.mxu0 %v9491
  %v9562 = vpop.f32.mrf.mxu0
  %v9563 = vadd.f32 0.0, %v9562
  %v9564 = vpop.f32.mrf.mxu0
  %9565 = vmatprep.mubr.f32.mxu0 0.0
  %9566 = vmatmul.mubr.f32.gmra.mxu0 %v9494
  %v9567 = vpop.f32.mrf.mxu0
  %v9568 = vadd.f32 0.0, %v9567
  %v9569 = vpop.f32.mrf.mxu0
  %9570 = vdwg.mxu0
  %v9571 = vadd.f32 %v9274, %v9563
  %v9572 = vadd.f32 %v9279, %v9568
  %9573 = vrot.lane.b32.xlu0 %v8691, 104
  %v9574 = vpop.permute.xlu0 %9573
  %9575 = vrot.lane.b32.xlu0 %v8696, 104
  %v9576 = vpop.permute.xlu0 %9575
  %9577 = vrot.lane.b32.xlu0 %v4138, 72
  %v9578 = vpop.permute.xlu0 %9577
  %9579 = vrot.lane.b32.xlu0 %v4143, 72
  %v9580 = vpop.permute.xlu0 %9579
  %9581 = vrot.lane.b32.xlu0 %v4148, 72
  %v9582 = vpop.permute.xlu0 %9581
  %v9583 = vsel %vm539, %v9574, 0
  %v9585 = vsel %vm539, %v9576, 0
  %v9587 = vsel %vm539, %v9578, 0
  %v9589 = vsel %vm539, %v9580, 0
  %v9591 = vsel %vm539, %v9582, 0
  %9593 = vmatprep.subr.mxu0 0.0
  %9594 = vmatpush1.xpose.msra.mxu0 0.0
  %9595 = vmatprep.subr.mxu0 0.0
  %9596 = vmatpush1.xpose.msra.mxu0 0.0
  %9597 = vmatprep.subr.mxu0 0.0
  %9598 = vmatpush1.xpose.msra.mxu0 0.0
  %9599 = vmatprep.subr.mxu0 0.0
  %9600 = vmatpush1.xpose.msra.mxu0 0.0
  %9601 = vmatprep.subr.mxu0 0.0
  %9602 = vmatpush1.xpose.msra.mxu0 0.0
  %9603 = vmatprep.subr.mxu0 0.0
  %9604 = vmatpush1.xpose.msra.mxu0 0.0
  %9605 = vmatprep.subr.mxu0 0.0
  %9606 = vmatpush1.xpose.msra.mxu0 0.0
  %9607 = vmatprep.subr.mxu0 0.0
  %9608 = vmatpush1.xpose.msra.mxu0 0.0
  %9609 = vmatprep.subr.mxu0 0.0
  %9610 = vmatpush1.xpose.msra.mxu0 0.0
  %9611 = vmatprep.subr.mxu0 0.0
  %9612 = vmatpush1.xpose.msra.mxu0 0.0
  %9613 = vmatprep.subr.mxu0 0.0
  %9614 = vmatpush1.xpose.msra.mxu0 0.0
  %9615 = vmatprep.subr.mxu0 0.0
  %9616 = vmatpush1.xpose.msra.mxu0 0.0
  %9617 = vmatprep.subr.mxu0 0.0
  %9618 = vmatpush1.xpose.msra.mxu0 0.0
  %9619 = vmatprep.subr.mxu0 0.0
  %9620 = vmatpush1.xpose.msra.mxu0 %v9591
  %9621 = vmatprep.subr.mxu0 0.0
  %9622 = vmatpush1.xpose.msra.mxu0 %v9589
  %9623 = vmatprep.subr.mxu0 0.0
  %9624 = vmatpush1.xpose.msra.mxu0 %v9587
  %9625 = vmatprep.subr.mxu0 0.0
  %9626 = vmatpush2.xpose.msra.mxu0 0.0
  %9627 = vmatprep.subr.mxu0 0.0
  %9628 = vmatpush2.xpose.msra.mxu0 0.0
  %9629 = vmatprep.subr.mxu0 0.0
  %9630 = vmatpush2.xpose.msra.mxu0 0.0
  %9631 = vmatprep.subr.mxu0 0.0
  %9632 = vmatpush2.xpose.msra.mxu0 0.0
  %9633 = vmatprep.subr.mxu0 0.0
  %9634 = vmatpush2.xpose.msra.mxu0 0.0
  %9635 = vmatprep.subr.mxu0 0.0
  %9636 = vmatpush2.xpose.msra.mxu0 0.0
  %9637 = vmatprep.subr.mxu0 0.0
  %9638 = vmatpush2.xpose.msra.mxu0 0.0
  %9639 = vmatprep.subr.mxu0 0.0
  %9640 = vmatpush2.xpose.msra.mxu0 0.0
  %9641 = vmatprep.subr.mxu0 0.0
  %9642 = vmatpush2.xpose.msra.mxu0 0.0
  %9643 = vmatprep.subr.mxu0 0.0
  %9644 = vmatpush2.xpose.msra.mxu0 0.0
  %9645 = vmatprep.subr.mxu0 0.0
  %9646 = vmatpush2.xpose.msra.mxu0 0.0
  %9647 = vmatprep.subr.mxu0 0.0
  %9648 = vmatpush2.xpose.msra.mxu0 0.0
  %9649 = vmatprep.subr.mxu0 0.0
  %9650 = vmatpush2.xpose.msra.mxu0 0.0
  %9651 = vmatprep.subr.mxu0 0.0
  %9652 = vmatpush2.xpose.msra.mxu0 0.0
  %9653 = vmatprep.subr.mxu0 0.0
  %9654 = vmatpush2.xpose.msra.mxu0 0.0
  %9655 = vmatprep.subr.mxu0 0.0
  %9656 = vmatpush2.xpose.msra.mxu0 0.0
  %9657 = vmatprep.mubr.f32.mxu0 0.0
  %9658 = vmatmul.mubr.f32.gmra.mxu0 %v9583
  %v9659 = vpop.f32.mrf.mxu0
  %v9660 = vadd.f32 %v87, %v9659
  %v9661 = vpop.f32.mrf.mxu0
  %9662 = vmatprep.mubr.f32.mxu0 0.0
  %9663 = vmatmul.mubr.f32.gmra.mxu0 %v9585
  %v9664 = vpop.f32.mrf.mxu0
  %v9665 = vadd.f32 %v88, %v9664
  %v9666 = vpop.f32.mrf.mxu0
  %9667 = vdwg.mxu0
  %v9668 = vsel %vm632, %v9660, -inf
  %9669 = vmax.xlane.f32.xlu0 %v9668
  %v9670 = vpop.xlane.xlu0 %9669
  %v9671 = vsel %vm632, %v9665, -inf
  %9672 = vmax.xlane.f32.xlu0 %v9671
  %v9673 = vpop.xlane.xlu0 %9672
  %v9674 = vsub.f32 %v9660, %v9670
  %v9675 = vsub.f32 %v9665, %v9673
  %v9676 = vmul.f32 %v9674, 1.442695
  %v9677 = vpow.pop %v9676
  %v9678 = vmul.f32 %v9675, 1.442695
  %v9679 = vpow.pop %v9678
  %v9680 = vsel %vm632, %v9677, 0.0
  %9681 = vadd.xlane.f32.xlu0 %v9680
  %v9682 = vpop.xlane.xlu0 %9681
  %v9683 = vsel %vm632, %v9679, 0.0
  %9684 = vadd.xlane.f32.xlu0 %v9683
  %v9685 = vpop.xlane.xlu0 %9684
  %v9686 = vrcp.pop %v9682
  %v9687 = vrcp.pop %v9685
  %v9688 = vmul.f32 %v9677, %v9686
  %v9689 = vmul.f32 %v9679, %v9687
  %9690 = vrot.lane.b32.xlu0 %v4240, 72
  %v9691 = vpop.permute.xlu0 %9690
  %9692 = vrot.lane.b32.xlu0 %v4245, 72
  %v9693 = vpop.permute.xlu0 %9692
  %9694 = vrot.lane.b32.xlu0 %v4250, 72
  %v9695 = vpop.permute.xlu0 %9694
  %v9699 = vsel %vm632, %v9688, 0
  %v9702 = vsel %vm632, %v9689, 0
  %v9704 = vsel %vm676, %v9695, 0
  %9706 = vmatprep.subr.mxu0 0.0
  %9707 = vmatpush1.msra.mxu0 0.0
  %9708 = vmatprep.subr.mxu0 0.0
  %9709 = vmatpush1.msra.mxu0 0.0
  %9710 = vmatprep.subr.mxu0 0.0
  %9711 = vmatpush1.msra.mxu0 0.0
  %9712 = vmatprep.subr.mxu0 0.0
  %9713 = vmatpush1.msra.mxu0 0.0
  %9714 = vmatprep.subr.mxu0 0.0
  %9715 = vmatpush1.msra.mxu0 0.0
  %9716 = vmatprep.subr.mxu0 0.0
  %9717 = vmatpush1.msra.mxu0 0.0
  %9718 = vmatprep.subr.mxu0 0.0
  %9719 = vmatpush1.msra.mxu0 0.0
  %9720 = vmatprep.subr.mxu0 0.0
  %9721 = vmatpush1.msra.mxu0 0.0
  %9722 = vmatprep.subr.mxu0 0.0
  %9723 = vmatpush1.msra.mxu0 0.0
  %9724 = vmatprep.subr.mxu0 0.0
  %9725 = vmatpush1.msra.mxu0 0.0
  %9726 = vmatprep.subr.mxu0 0.0
  %9727 = vmatpush1.msra.mxu0 0.0
  %9728 = vmatprep.subr.mxu0 0.0
  %9729 = vmatpush1.msra.mxu0 0.0
  %9730 = vmatprep.subr.mxu0 0.0
  %9731 = vmatpush1.msra.mxu0 0.0
  %9732 = vmatprep.subr.mxu0 0.0
  %9733 = vmatpush1.msra.mxu0 %v9704
  %9734 = vmatprep.subr.mxu0 0.0
  %9735 = vmatpush1.msra.mxu0 %v9693
  %9736 = vmatprep.subr.mxu0 0.0
  %9737 = vmatpush1.msra.mxu0 %v9691
  %9738 = vmatprep.subr.mxu0 0.0
  %9739 = vmatpush2.msra.mxu0 0.0
  %9740 = vmatprep.subr.mxu0 0.0
  %9741 = vmatpush2.msra.mxu0 0.0
  %9742 = vmatprep.subr.mxu0 0.0
  %9743 = vmatpush2.msra.mxu0 0.0
  %9744 = vmatprep.subr.mxu0 0.0
  %9745 = vmatpush2.msra.mxu0 0.0
  %9746 = vmatprep.subr.mxu0 0.0
  %9747 = vmatpush2.msra.mxu0 0.0
  %9748 = vmatprep.subr.mxu0 0.0
  %9749 = vmatpush2.msra.mxu0 0.0
  %9750 = vmatprep.subr.mxu0 0.0
  %9751 = vmatpush2.msra.mxu0 0.0
  %9752 = vmatprep.subr.mxu0 0.0
  %9753 = vmatpush2.msra.mxu0 0.0
  %9754 = vmatprep.subr.mxu0 0.0
  %9755 = vmatpush2.msra.mxu0 0.0
  %9756 = vmatprep.subr.mxu0 0.0
  %9757 = vmatpush2.msra.mxu0 0.0
  %9758 = vmatprep.subr.mxu0 0.0
  %9759 = vmatpush2.msra.mxu0 0.0
  %9760 = vmatprep.subr.mxu0 0.0
  %9761 = vmatpush2.msra.mxu0 0.0
  %9762 = vmatprep.subr.mxu0 0.0
  %9763 = vmatpush2.msra.mxu0 0.0
  %9764 = vmatprep.subr.mxu0 0.0
  %9765 = vmatpush2.msra.mxu0 0.0
  %9766 = vmatprep.subr.mxu0 0.0
  %9767 = vmatpush2.msra.mxu0 0.0
  %9768 = vmatprep.subr.mxu0 0.0
  %9769 = vmatpush2.msra.mxu0 0.0
  %9770 = vmatprep.mubr.f32.mxu0 0.0
  %9771 = vmatmul.mubr.f32.gmra.mxu0 %v9699
  %v9772 = vpop.f32.mrf.mxu0
  %v9773 = vadd.f32 0.0, %v9772
  %v9774 = vpop.f32.mrf.mxu0
  %9775 = vmatprep.mubr.f32.mxu0 0.0
  %9776 = vmatmul.mubr.f32.gmra.mxu0 %v9702
  %v9777 = vpop.f32.mrf.mxu0
  %v9778 = vadd.f32 0.0, %v9777
  %v9779 = vpop.f32.mrf.mxu0
  %9780 = vdwg.mxu0
  %v9782 = vsel %vm539, %v9773, 0
  %v9785 = vsel %vm539, %v9778, 0
  %9787 = vmatprep.subr.mxu0 0.0
  %9788 = vmatpush1.msra.mxu0 0.0
  %9789 = vmatprep.subr.mxu0 0.0
  %9790 = vmatpush1.msra.mxu0 0.0
  %9791 = vmatprep.subr.mxu0 0.0
  %9792 = vmatpush1.msra.mxu0 0.0
  %9793 = vmatprep.subr.mxu0 0.0
  %9794 = vmatpush1.msra.mxu0 0.0
  %9795 = vmatprep.subr.mxu0 0.0
  %9796 = vmatpush1.msra.mxu0 0.0
  %9797 = vmatprep.subr.mxu0 0.0
  %9798 = vmatpush1.msra.mxu0 0.0
  %9799 = vmatprep.subr.mxu0 0.0
  %9800 = vmatpush1.msra.mxu0 0.0
  %9801 = vmatprep.subr.mxu0 0.0
  %9802 = vmatpush1.msra.mxu0 0.0
  %9803 = vmatprep.subr.mxu0 0.0
  %9804 = vmatpush1.msra.mxu0 0.0
  %9805 = vmatprep.subr.mxu0 0.0
  %9806 = vmatpush1.msra.mxu0 0.0
  %9807 = vmatprep.subr.mxu0 0.0
  %9808 = vmatpush1.msra.mxu0 0.0
  %9809 = vmatprep.subr.mxu0 0.0
  %9810 = vmatpush1.msra.mxu0 0.0
  %9811 = vmatprep.subr.mxu0 0.0
  %9812 = vmatpush1.msra.mxu0 0.0
  %9813 = vmatprep.subr.mxu0 0.0
  %9814 = vmatpush1.msra.mxu0 0.0
  %9815 = vmatprep.subr.mxu0 0.0
  %9816 = vmatpush1.msra.mxu0 0.0
  %9817 = vmatprep.subr.mxu0 0.0
  %9818 = vmatpush1.msra.mxu0 %v8703
  %9819 = vmatprep.subr.mxu0 0.0
  %9820 = vmatpush2.msra.mxu0 0.0
  %9821 = vmatprep.subr.mxu0 0.0
  %9822 = vmatpush2.msra.mxu0 0.0
  %9823 = vmatprep.subr.mxu0 0.0
  %9824 = vmatpush2.msra.mxu0 0.0
  %9825 = vmatprep.subr.mxu0 0.0
  %9826 = vmatpush2.msra.mxu0 0.0
  %9827 = vmatprep.subr.mxu0 0.0
  %9828 = vmatpush2.msra.mxu0 0.0
  %9829 = vmatprep.subr.mxu0 0.0
  %9830 = vmatpush2.msra.mxu0 0.0
  %9831 = vmatprep.subr.mxu0 0.0
  %9832 = vmatpush2.msra.mxu0 0.0
  %9833 = vmatprep.subr.mxu0 0.0
  %9834 = vmatpush2.msra.mxu0 0.0
  %9835 = vmatprep.subr.mxu0 0.0
  %9836 = vmatpush2.msra.mxu0 0.0
  %9837 = vmatprep.subr.mxu0 0.0
  %9838 = vmatpush2.msra.mxu0 0.0
  %9839 = vmatprep.subr.mxu0 0.0
  %9840 = vmatpush2.msra.mxu0 0.0
  %9841 = vmatprep.subr.mxu0 0.0
  %9842 = vmatpush2.msra.mxu0 0.0
  %9843 = vmatprep.subr.mxu0 0.0
  %9844 = vmatpush2.msra.mxu0 0.0
  %9845 = vmatprep.subr.mxu0 0.0
  %9846 = vmatpush2.msra.mxu0 0.0
  %9847 = vmatprep.subr.mxu0 0.0
  %9848 = vmatpush2.msra.mxu0 0.0
  %9849 = vmatprep.subr.mxu0 0.0
  %9850 = vmatpush2.msra.mxu0 0.0
  %9851 = vmatprep.mubr.f32.mxu0 0.0
  %9852 = vmatmul.mubr.f32.gmra.mxu0 %v9782
  %v9853 = vpop.f32.mrf.mxu0
  %v9854 = vadd.f32 0.0, %v9853
  %v9855 = vpop.f32.mrf.mxu0
  %9856 = vmatprep.mubr.f32.mxu0 0.0
  %9857 = vmatmul.mubr.f32.gmra.mxu0 %v9785
  %v9858 = vpop.f32.mrf.mxu0
  %v9859 = vadd.f32 0.0, %v9858
  %v9860 = vpop.f32.mrf.mxu0
  %9861 = vdwg.mxu0
  %v9862 = vadd.f32 %v9571, %v9854
  %v9863 = vadd.f32 %v9572, %v9859
  %v9865 = vlaneseq
  %v9866 = vshrl.u32 %v9865, 7
  %v9867 = vsub.s32 0, %v9866
  %v9868 = vrot.slane %v8705, %v9867
  %v9870 = vadd.f32 %v9862, %v9868
  %v9871 = vadd.f32 %v9863, %v9868
  %v9872 = vadd.f32 %v8555, %v9870
  %v9873 = vadd.f32 %v8556, %v9871
  %s9874 = scalar_lea.vmem %s6, 37
  %v9875 = vld [vmem:[%s9874] sm:$0x1]
  %s9876 = scalar_lea.vmem %s6, 38
  %v9877 = vld [vmem:[%s9876] sm:$0x1]
  %v9878 = vsel %vm100, %v9872, 0.0
  %9879 = vadd.xlane.f32.xlu0 %v9878
  %v9880 = vpop.xlane.xlu0 %9879
  %v9881 = vsel %vm100, %v9873, 0.0
  %9882 = vadd.xlane.f32.xlu0 %v9881
  %v9883 = vpop.xlane.xlu0 %9882
  %v9884 = vmul.f32 %v9880, %v269
  %v9885 = vmul.f32 %v9883, %v269
  %v9886 = vsub.f32 %v9872, %v9884
  %v9887 = vsub.f32 %v9873, %v9885
  %v9888 = vmul.f32 %v9886, %v9886
  %v9889 = vmul.f32 %v9887, %v9887
  %v9890 = vsel %vm100, %v9888, 0.0
  %9891 = vadd.xlane.f32.xlu0 %v9890
  %v9892 = vpop.xlane.xlu0 %9891
  %v9893 = vsel %vm100, %v9889, 0.0
  %9894 = vadd.xlane.f32.xlu0 %v9893
  %v9895 = vpop.xlane.xlu0 %9894
  %v9896 = vmul.f32 %v9892, %v269
  %v9897 = vmul.f32 %v9895, %v269
  %v9898 = vadd.f32 %v9896, 1e-05
  %v9899 = vadd.f32 %v9897, 1e-05
  %v9900 = vrsqrt.pop %v9898
  %v9901 = vrsqrt.pop %v9899
  %v9902 = vmul.f32 %v9886, %v9900
  %v9903 = vmul.f32 %v9887, %v9901
  %v9905 = vlaneseq
  %v9906 = vshrl.u32 %v9905, 7
  %v9907 = vsub.s32 0, %v9906
  %v9908 = vrot.slane %v9875, %v9907
  %v9910 = vmul.f32 %v9902, %v9908
  %v9911 = vmul.f32 %v9903, %v9908
  %v9913 = vlaneseq
  %v9914 = vshrl.u32 %v9913, 7
  %v9915 = vsub.s32 0, %v9914
  %v9916 = vrot.slane %v9877, %v9915
  %v9918 = vadd.f32 %v9910, %v9916
  %v9919 = vadd.f32 %v9911, %v9916
  %s9920 = scalar_lea.vmem %s7, 224
  %v9921 = vld [vmem:[%s9920] sm:$0xff]
  %v9922 = vld [vmem:[%s9920 + $0x8] sm:$0xff]
  %v9923 = vld [vmem:[%s9920 + $0x10] sm:$0xff]
  %v9924 = vld [vmem:[%s9920 + $0x18] sm:$0xff]
  %s9925 = scalar_lea.vmem %s8, 7
  %v9926 = vld [vmem:[%s9925] sm:$0x1]
  %v9928 = vlaneseq
  %v9929 = vshrl.u32 %v9928, 7
  %v9930 = vsub.s32 0, %v9929
  %v9931 = vrot.slane %v9926, %v9930
  %v9934 = vsel %vm100, %v9918, 0
  %v9937 = vsel %vm100, %v9919, 0
  %9939 = vmatprep.subr.mxu0 0.0
  %9940 = vmatpush1.msra.mxu0 0.0
  %9941 = vmatprep.subr.mxu0 0.0
  %9942 = vmatpush1.msra.mxu0 0.0
  %9943 = vmatprep.subr.mxu0 0.0
  %9944 = vmatpush1.msra.mxu0 0.0
  %9945 = vmatprep.subr.mxu0 0.0
  %9946 = vmatpush1.msra.mxu0 0.0
  %9947 = vmatprep.subr.mxu0 0.0
  %9948 = vmatpush1.msra.mxu0 0.0
  %9949 = vmatprep.subr.mxu0 0.0
  %9950 = vmatpush1.msra.mxu0 0.0
  %9951 = vmatprep.subr.mxu0 0.0
  %9952 = vmatpush1.msra.mxu0 0.0
  %9953 = vmatprep.subr.mxu0 0.0
  %9954 = vmatpush1.msra.mxu0 0.0
  %9955 = vmatprep.subr.mxu0 0.0
  %9956 = vmatpush1.msra.mxu0 0.0
  %9957 = vmatprep.subr.mxu0 0.0
  %9958 = vmatpush1.msra.mxu0 0.0
  %9959 = vmatprep.subr.mxu0 0.0
  %9960 = vmatpush1.msra.mxu0 0.0
  %9961 = vmatprep.subr.mxu0 0.0
  %9962 = vmatpush1.msra.mxu0 0.0
  %9963 = vmatprep.subr.mxu0 0.0
  %9964 = vmatpush1.msra.mxu0 %v9924
  %9965 = vmatprep.subr.mxu0 0.0
  %9966 = vmatpush1.msra.mxu0 %v9923
  %9967 = vmatprep.subr.mxu0 0.0
  %9968 = vmatpush1.msra.mxu0 %v9922
  %9969 = vmatprep.subr.mxu0 0.0
  %9970 = vmatpush1.msra.mxu0 %v9921
  %9971 = vmatprep.subr.mxu0 0.0
  %9972 = vmatpush2.msra.mxu0 0.0
  %9973 = vmatprep.subr.mxu0 0.0
  %9974 = vmatpush2.msra.mxu0 0.0
  %9975 = vmatprep.subr.mxu0 0.0
  %9976 = vmatpush2.msra.mxu0 0.0
  %9977 = vmatprep.subr.mxu0 0.0
  %9978 = vmatpush2.msra.mxu0 0.0
  %9979 = vmatprep.subr.mxu0 0.0
  %9980 = vmatpush2.msra.mxu0 0.0
  %9981 = vmatprep.subr.mxu0 0.0
  %9982 = vmatpush2.msra.mxu0 0.0
  %9983 = vmatprep.subr.mxu0 0.0
  %9984 = vmatpush2.msra.mxu0 0.0
  %9985 = vmatprep.subr.mxu0 0.0
  %9986 = vmatpush2.msra.mxu0 0.0
  %9987 = vmatprep.subr.mxu0 0.0
  %9988 = vmatpush2.msra.mxu0 0.0
  %9989 = vmatprep.subr.mxu0 0.0
  %9990 = vmatpush2.msra.mxu0 0.0
  %9991 = vmatprep.subr.mxu0 0.0
  %9992 = vmatpush2.msra.mxu0 0.0
  %9993 = vmatprep.subr.mxu0 0.0
  %9994 = vmatpush2.msra.mxu0 0.0
  %9995 = vmatprep.subr.mxu0 0.0
  %9996 = vmatpush2.msra.mxu0 0.0
  %9997 = vmatprep.subr.mxu0 0.0
  %9998 = vmatpush2.msra.mxu0 0.0
  %9999 = vmatprep.subr.mxu0 0.0
  %10000 = vmatpush2.msra.mxu0 0.0
  %10001 = vmatprep.subr.mxu0 0.0
  %10002 = vmatpush2.msra.mxu0 0.0
  %10003 = vmatprep.mubr.f32.mxu0 0.0
  %10004 = vmatmul.mubr.f32.gmra.mxu0 %v9934
  %v10005 = vpop.f32.mrf.mxu0
  %v10006 = vadd.f32 %v9931, %v10005
  %v10007 = vpop.f32.mrf.mxu0
  %10008 = vmatprep.mubr.f32.mxu0 0.0
  %10009 = vmatmul.mubr.f32.gmra.mxu0 %v9937
  %v10010 = vpop.f32.mrf.mxu0
  %v10011 = vadd.f32 %v9931, %v10010
  %v10012 = vpop.f32.mrf.mxu0
  %10013 = vdwg.mxu0
  %v10014 = vmax.f32 %v10006, 0.0
  %v10015 = vmax.f32 %v10011, 0.0
  %s10016 = scalar_lea.vmem %s9, 192
  %v10017 = vld [vmem:[%s10016] sm:$0xff]
  %v10018 = vld [vmem:[%s10016 + $0x8] sm:$0xff]
  %v10019 = vld [vmem:[%s10016 + $0x10] sm:$0xff]
  %v10020 = vld [vmem:[%s10016 + $0x18] sm:$0xff]
  %v10021 = vld [vmem:[%s10016 + $0x20] sm:$0xff]
  %v10022 = vld [vmem:[%s10016 + $0x28] sm:$0xff]
  %v10023 = vld [vmem:[%s10016 + $0x30] sm:$0xff]
  %v10024 = vld [vmem:[%s10016 + $0x38] sm:$0xff]
  %v10026 = vsel %vm2018, %v10014, 0
  %v10029 = vsel %vm2018, %v10015, 0
  %10031 = vmatprep.subr.mxu0 0.0
  %10032 = vmatpush1.msra.mxu0 0.0
  %10033 = vmatprep.subr.mxu0 0.0
  %10034 = vmatpush1.msra.mxu0 0.0
  %10035 = vmatprep.subr.mxu0 0.0
  %10036 = vmatpush1.msra.mxu0 0.0
  %10037 = vmatprep.subr.mxu0 0.0
  %10038 = vmatpush1.msra.mxu0 0.0
  %10039 = vmatprep.subr.mxu0 0.0
  %10040 = vmatpush1.msra.mxu0 0.0
  %10041 = vmatprep.subr.mxu0 0.0
  %10042 = vmatpush1.msra.mxu0 0.0
  %10043 = vmatprep.subr.mxu0 0.0
  %10044 = vmatpush1.msra.mxu0 0.0
  %10045 = vmatprep.subr.mxu0 0.0
  %10046 = vmatpush1.msra.mxu0 0.0
  %10047 = vmatprep.subr.mxu0 0.0
  %10048 = vmatpush1.msra.mxu0 %v10024
  %10049 = vmatprep.subr.mxu0 0.0
  %10050 = vmatpush1.msra.mxu0 %v10023
  %10051 = vmatprep.subr.mxu0 0.0
  %10052 = vmatpush1.msra.mxu0 %v10022
  %10053 = vmatprep.subr.mxu0 0.0
  %10054 = vmatpush1.msra.mxu0 %v10021
  %10055 = vmatprep.subr.mxu0 0.0
  %10056 = vmatpush1.msra.mxu0 %v10020
  %10057 = vmatprep.subr.mxu0 0.0
  %10058 = vmatpush1.msra.mxu0 %v10019
  %10059 = vmatprep.subr.mxu0 0.0
  %10060 = vmatpush1.msra.mxu0 %v10018
  %10061 = vmatprep.subr.mxu0 0.0
  %10062 = vmatpush1.msra.mxu0 %v10017
  %10063 = vmatprep.subr.mxu0 0.0
  %10064 = vmatpush2.msra.mxu0 0.0
  %10065 = vmatprep.subr.mxu0 0.0
  %10066 = vmatpush2.msra.mxu0 0.0
  %10067 = vmatprep.subr.mxu0 0.0
  %10068 = vmatpush2.msra.mxu0 0.0
  %10069 = vmatprep.subr.mxu0 0.0
  %10070 = vmatpush2.msra.mxu0 0.0
  %10071 = vmatprep.subr.mxu0 0.0
  %10072 = vmatpush2.msra.mxu0 0.0
  %10073 = vmatprep.subr.mxu0 0.0
  %10074 = vmatpush2.msra.mxu0 0.0
  %10075 = vmatprep.subr.mxu0 0.0
  %10076 = vmatpush2.msra.mxu0 0.0
  %10077 = vmatprep.subr.mxu0 0.0
  %10078 = vmatpush2.msra.mxu0 0.0
  %10079 = vmatprep.subr.mxu0 0.0
  %10080 = vmatpush2.msra.mxu0 0.0
  %10081 = vmatprep.subr.mxu0 0.0
  %10082 = vmatpush2.msra.mxu0 0.0
  %10083 = vmatprep.subr.mxu0 0.0
  %10084 = vmatpush2.msra.mxu0 0.0
  %10085 = vmatprep.subr.mxu0 0.0
  %10086 = vmatpush2.msra.mxu0 0.0
  %10087 = vmatprep.subr.mxu0 0.0
  %10088 = vmatpush2.msra.mxu0 0.0
  %10089 = vmatprep.subr.mxu0 0.0
  %10090 = vmatpush2.msra.mxu0 0.0
  %10091 = vmatprep.subr.mxu0 0.0
  %10092 = vmatpush2.msra.mxu0 0.0
  %10093 = vmatprep.subr.mxu0 0.0
  %10094 = vmatpush2.msra.mxu0 0.0
  %10095 = vmatprep.mubr.f32.mxu0 0.0
  %10096 = vmatmul.mubr.f32.gmra.mxu0 %v10026
  %v10097 = vpop.f32.mrf.mxu0
  %v10098 = vadd.f32 0.0, %v10097
  %v10099 = vpop.f32.mrf.mxu0
  %10100 = vmatprep.mubr.f32.mxu0 0.0
  %10101 = vmatmul.mubr.f32.gmra.mxu0 %v10029
  %v10102 = vpop.f32.mrf.mxu0
  %v10103 = vadd.f32 0.0, %v10102
  %v10104 = vpop.f32.mrf.mxu0
  %10105 = vdwg.mxu0
  %v10106 = vadd.f32 %v9872, %v10098
  %v10107 = vadd.f32 %v9873, %v10103
  %s10108 = scalar_lea.vmem %s6, 39
  %v10109 = vld [vmem:[%s10108] sm:$0x1]
  %v10111 = vlaneseq
  %v10112 = vshrl.u32 %v10111, 7
  %v10113 = vsub.s32 0, %v10112
  %v10114 = vrot.slane %v10109, %v10113
  %v10116 = vadd.f32 %v10106, %v10114
  %v10117 = vadd.f32 %v10107, %v10114
  %s10118 = scalar_lea.vmem %s6, 40
  %v10119 = vld [vmem:[%s10118] sm:$0x1]
  %s10120 = scalar_lea.vmem %s6, 41
  %v10121 = vld [vmem:[%s10120] sm:$0x1]
  %v10122 = vsel %vm100, %v10116, 0.0
  %10123 = vadd.xlane.f32.xlu0 %v10122
  %v10124 = vpop.xlane.xlu0 %10123
  %v10125 = vsel %vm100, %v10117, 0.0
  %10126 = vadd.xlane.f32.xlu0 %v10125
  %v10127 = vpop.xlane.xlu0 %10126
  %v10128 = vmul.f32 %v10124, %v269
  %v10129 = vmul.f32 %v10127, %v269
  %v10130 = vsub.f32 %v10116, %v10128
  %v10131 = vsub.f32 %v10117, %v10129
  %v10132 = vmul.f32 %v10130, %v10130
  %v10133 = vmul.f32 %v10131, %v10131
  %v10134 = vsel %vm100, %v10132, 0.0
  %10135 = vadd.xlane.f32.xlu0 %v10134
  %v10136 = vpop.xlane.xlu0 %10135
  %v10137 = vsel %vm100, %v10133, 0.0
  %10138 = vadd.xlane.f32.xlu0 %v10137
  %v10139 = vpop.xlane.xlu0 %10138
  %v10140 = vmul.f32 %v10136, %v269
  %v10141 = vmul.f32 %v10139, %v269
  %v10142 = vadd.f32 %v10140, 1e-05
  %v10143 = vadd.f32 %v10141, 1e-05
  %v10144 = vrsqrt.pop %v10142
  %v10145 = vrsqrt.pop %v10143
  %v10146 = vmul.f32 %v10130, %v10144
  %v10147 = vmul.f32 %v10131, %v10145
  %v10149 = vlaneseq
  %v10150 = vshrl.u32 %v10149, 7
  %v10151 = vsub.s32 0, %v10150
  %v10152 = vrot.slane %v10119, %v10151
  %v10154 = vmul.f32 %v10146, %v10152
  %v10155 = vmul.f32 %v10147, %v10152
  %v10157 = vlaneseq
  %v10158 = vshrl.u32 %v10157, 7
  %v10159 = vsub.s32 0, %v10158
  %v10160 = vrot.slane %v10121, %v10159
  %v10162 = vadd.f32 %v10154, %v10160
  %v10163 = vadd.f32 %v10155, %v10160
  %s10164 = scalar_lea.vmem %s5, 32
  %v10165 = vld [vmem:[%s10164] sm:$0xff]
  %v10166 = vld [vmem:[%s10164 + $0x8] sm:$0xff]
  %v10167 = vld [vmem:[%s10164 + $0x10] sm:$0xff]
  %v10168 = vld [vmem:[%s10164 + $0x18] sm:$0xff]
  %s10169 = scalar_lea.vmem %s6, 1
  %v10170 = vld [vmem:[%s10169] sm:$0x1]
  %v10172 = vlaneseq
  %v10173 = vshrl.u32 %v10172, 7
  %v10174 = vsub.s32 0, %v10173
  %v10175 = vrot.slane %v10170, %v10174
  %v10178 = vsel %vm100, %v10162, 0
  %v10181 = vsel %vm100, %v10163, 0
  %10183 = vmatprep.subr.mxu0 0.0
  %10184 = vmatpush1.msra.mxu0 0.0
  %10185 = vmatprep.subr.mxu0 0.0
  %10186 = vmatpush1.msra.mxu0 0.0
  %10187 = vmatprep.subr.mxu0 0.0
  %10188 = vmatpush1.msra.mxu0 0.0
  %10189 = vmatprep.subr.mxu0 0.0
  %10190 = vmatpush1.msra.mxu0 0.0
  %10191 = vmatprep.subr.mxu0 0.0
  %10192 = vmatpush1.msra.mxu0 0.0
  %10193 = vmatprep.subr.mxu0 0.0
  %10194 = vmatpush1.msra.mxu0 0.0
  %10195 = vmatprep.subr.mxu0 0.0
  %10196 = vmatpush1.msra.mxu0 0.0
  %10197 = vmatprep.subr.mxu0 0.0
  %10198 = vmatpush1.msra.mxu0 0.0
  %10199 = vmatprep.subr.mxu0 0.0
  %10200 = vmatpush1.msra.mxu0 0.0
  %10201 = vmatprep.subr.mxu0 0.0
  %10202 = vmatpush1.msra.mxu0 0.0
  %10203 = vmatprep.subr.mxu0 0.0
  %10204 = vmatpush1.msra.mxu0 0.0
  %10205 = vmatprep.subr.mxu0 0.0
  %10206 = vmatpush1.msra.mxu0 0.0
  %10207 = vmatprep.subr.mxu0 0.0
  %10208 = vmatpush1.msra.mxu0 %v10168
  %10209 = vmatprep.subr.mxu0 0.0
  %10210 = vmatpush1.msra.mxu0 %v10167
  %10211 = vmatprep.subr.mxu0 0.0
  %10212 = vmatpush1.msra.mxu0 %v10166
  %10213 = vmatprep.subr.mxu0 0.0
  %10214 = vmatpush1.msra.mxu0 %v10165
  %10215 = vmatprep.subr.mxu0 0.0
  %10216 = vmatpush2.msra.mxu0 0.0
  %10217 = vmatprep.subr.mxu0 0.0
  %10218 = vmatpush2.msra.mxu0 0.0
  %10219 = vmatprep.subr.mxu0 0.0
  %10220 = vmatpush2.msra.mxu0 0.0
  %10221 = vmatprep.subr.mxu0 0.0
  %10222 = vmatpush2.msra.mxu0 0.0
  %10223 = vmatprep.subr.mxu0 0.0
  %10224 = vmatpush2.msra.mxu0 0.0
  %10225 = vmatprep.subr.mxu0 0.0
  %10226 = vmatpush2.msra.mxu0 0.0
  %10227 = vmatprep.subr.mxu0 0.0
  %10228 = vmatpush2.msra.mxu0 0.0
  %10229 = vmatprep.subr.mxu0 0.0
  %10230 = vmatpush2.msra.mxu0 0.0
  %10231 = vmatprep.subr.mxu0 0.0
  %10232 = vmatpush2.msra.mxu0 0.0
  %10233 = vmatprep.subr.mxu0 0.0
  %10234 = vmatpush2.msra.mxu0 0.0
  %10235 = vmatprep.subr.mxu0 0.0
  %10236 = vmatpush2.msra.mxu0 0.0
  %10237 = vmatprep.subr.mxu0 0.0
  %10238 = vmatpush2.msra.mxu0 0.0
  %10239 = vmatprep.subr.mxu0 0.0
  %10240 = vmatpush2.msra.mxu0 0.0
  %10241 = vmatprep.subr.mxu0 0.0
  %10242 = vmatpush2.msra.mxu0 0.0
  %10243 = vmatprep.subr.mxu0 0.0
  %10244 = vmatpush2.msra.mxu0 0.0
  %10245 = vmatprep.subr.mxu0 0.0
  %10246 = vmatpush2.msra.mxu0 0.0
  %10247 = vmatprep.mubr.f32.mxu0 0.0
  %10248 = vmatmul.mubr.f32.gmra.mxu0 %v10178
  %v10249 = vpop.f32.mrf.mxu0
  %v10250 = vadd.f32 %v10175, %v10249
  %v10251 = vpop.f32.mrf.mxu0
  %10252 = vmatprep.mubr.f32.mxu0 0.0
  %10253 = vmatmul.mubr.f32.gmra.mxu0 %v10181
  %v10254 = vpop.f32.mrf.mxu0
  %v10255 = vadd.f32 %v10175, %v10254
  %v10256 = vpop.f32.mrf.mxu0
  %10257 = vdwg.mxu0
  %10258 = vst.msk [vmem:[%s10] sm:$0xff] %vm100, %v10250
  %10259 = vst.msk [vmem:[%s10 + $0x8] sm:$0xff] %vm100, %v10255
  %s10260 = scalar_lea.vmem %s10, 16
  %10261 = vst.msk [vmem:[%s10260] sm:$0xff] %vm100, %v10162
  %10262 = vst.msk [vmem:[%s10260 + $0x8] sm:$0xff] %vm100, %v10163
  %s10263 = scalar_lea.vmem %s10, 32
  %10264 = vst.msk [vmem:[%s10263] sm:$0xff] %vm100, %v247
  %10265 = vst.msk [vmem:[%s10263 + $0x8] sm:$0xff] %vm100, %v252
  // Predicated region
  $region42: #{actor_forward.1} parent=0 // pred_check
    _
  $region43: #{actor_forward.1} parent=0 // pred_check_branch
    %10267 = sbr.rel (0) target = $region45
  $region44: #{actor_forward.1} parent=0 // pred_region
    _
  $region45: #{actor_forward.1} parent=0 // pred_fallthru
    _
  // Predicated region
  $region46: #{actor_forward.1} parent=0 // pred_check
    _
  $region47: #{actor_forward.1} parent=0 // pred_check_branch
    %10269 = sbr.rel (0) target = $region49
  $region48: #{actor_forward.1} parent=0 // pred_region
    _
  $region49: #{actor_forward.1} parent=0 // pred_fallthru
    _

</llo_original>
